<compile_context>
chip_gen: v5e
topology: v5e:2x2
jax: 0.10.0
libtpu: 0.0.40
codegen_flags: <defaults>
</compile_context>

<pallas_src>
import jax
import jax.numpy as jnp
from jax.experimental import pallas as pl
from jax.experimental.pallas import tpu as pltpu


# ---------------------------------------------------------------------------
# Conv 3x3 (same padding) + bias + ReLU
# ---------------------------------------------------------------------------
def _conv3x3_relu_kernel(xp_ref, w_ref, b_ref, o_ref):
    """One image per grid step.

    xp_ref: (1, H+2, W+2, Cin)  zero-padded NHWC input tile, f32
    w_ref : (9, Cin, Cout)      taps ordered k = dh*3 + dw, bf16
    b_ref : (1, Cout)           f32
    o_ref : (1, H, W, Cout)     f32
    """
    _, h, w, cout = o_ref.shape
    cin = xp_ref.shape[3]

    # Bias folded into the accumulator init (saves a full-width VALU add pass).
    acc = jnp.broadcast_to(b_ref[...], (h * w, cout)).astype(jnp.float32)

    for dh in range(3):
        for dw in range(3):
            patch = xp_ref[0, pl.ds(dh, h), pl.ds(dw, w), :]        # (H, W, Cin)
            patch = patch.reshape(h * w, cin).astype(jnp.bfloat16)  # M = H*W
            acc = acc + jnp.dot(patch, w_ref[dh * 3 + dw],
                                preferred_element_type=jnp.float32)

    y = jnp.maximum(acc, 0.0)                                       # fused ReLU
    o_ref[0] = y.reshape(h, w, cout).astype(o_ref.dtype)


def conv3x3_relu(x, w, b):
    """x: (N, H, W, Cin) f32 NHWC; w: (Cout, Cin, 3, 3) PyTorch layout; b: (Cout,)."""
    n, h, wd, cin = x.shape
    cout = w.shape[0]

    # Pad a tiny contraction dim (first conv has Cin=3) with zeros: exact, and
    # keeps the MXU contraction away from degenerate K.
    if cin < 8:
        pad = 8 - cin
        x = jnp.pad(x, ((0, 0), (0, 0), (0, 0), (0, pad)))
        w = jnp.pad(w, ((0, 0), (0, pad), (0, 0), (0, 0)))
        cin = 8

    xp = jnp.pad(x, ((0, 0), (1, 1), (1, 1), (0, 0)))               # "same" padding
    wk = jnp.transpose(w, (2, 3, 1, 0)).reshape(9, cin, cout).astype(jnp.bfloat16)
    bk = b.reshape(1, cout).astype(jnp.float32)

    return pl.pallas_call(
        _conv3x3_relu_kernel,
        out_shape=jax.ShapeDtypeStruct((n, h, wd, cout), jnp.float32),
        grid=(n,),
        in_specs=[
            pl.BlockSpec((1, h + 2, wd + 2, cin), lambda i: (i, 0, 0, 0)),
            pl.BlockSpec((9, cin, cout), lambda i: (0, 0, 0)),      # resident
            pl.BlockSpec((1, cout), lambda i: (0, 0)),              # resident
        ],
        out_specs=pl.BlockSpec((1, h, wd, cout), lambda i: (i, 0, 0, 0)),
        compiler_params=pltpu.CompilerParams(
            dimension_semantics=("parallel",)),
    )(xp, wk, bk)


# ---------------------------------------------------------------------------
# MaxPool 2x2, stride 2
# ---------------------------------------------------------------------------
def _maxpool2x2_kernel(x_ref, o_ref):
    """x_ref: (1, H, Wo, 2C) with horizontal pixel pairs packed along lanes;
    o_ref: (1, Ho, Wo, C)."""
    _, ho, wo, c = o_ref.shape
    for i in range(ho):                                      # static unroll, Ho <= 8
        m = jnp.maximum(x_ref[0, 2 * i], x_ref[0, 2 * i + 1])   # H-direction max
        o_ref[0, i] = jnp.maximum(m[:, :c], m[:, c:])            # W-direction max


def maxpool2x2(x):
    """2x2 / stride-2 max pool. x: (N, H, W, C) f32 NHWC."""
    n, h, wd, c = x.shape
    ho, wo = h // 2, wd // 2
    # Free row-major view: element (n, h, 2*w2 + j, c) -> (n, h, w2, j*C + c),
    # so the W-direction pooling becomes a static lane-slice max in the kernel.
    xv = x.reshape(n, h, wo, 2 * c)
    return pl.pallas_call(
        _maxpool2x2_kernel,
        out_shape=jax.ShapeDtypeStruct((n, ho, wo, c), jnp.float32),
        grid=(n,),
        in_specs=[pl.BlockSpec((1, h, wo, 2 * c), lambda i: (i, 0, 0, 0))],
        out_specs=pl.BlockSpec((1, ho, wo, c), lambda i: (i, 0, 0, 0)),
        compiler_params=pltpu.CompilerParams(
            dimension_semantics=("parallel",)),
    )(xv)


# ---------------------------------------------------------------------------
# Full FeatureExtractor forward (VGG19 features[:12])
# ---------------------------------------------------------------------------
def feature_extractor_pallas(img, params):
    """img: (N, 3, H, W) float32 (NCHW, like the PyTorch module)."""
    (w11, b11), (w12, b12), (w21, b21), (w22, b22), (w31, b31) = params
    x = jnp.transpose(img, (0, 2, 3, 1))          # NHWC for lane-dense channels
    x = conv3x3_relu(x, w11, b11)
    x = conv3x3_relu(x, w12, b12)
    x = maxpool2x2(x)
    x = conv3x3_relu(x, w21, b21)
    x = conv3x3_relu(x, w22, b22)
    x = maxpool2x2(x)
    x = conv3x3_relu(x, w31, b31)
    return jnp.transpose(x, (0, 3, 1, 2))         # back to NCHW


def feature_extractor_reference(img, params):
    """Plain-JAX f32 mirror of VGG19 features[:12] (conv/relu/pool)."""
    x = img
    for i, (wgt, bias) in enumerate(params):
        x = jax.lax.conv_general_dilated(
            x, wgt, window_strides=(1, 1), padding="SAME",
            dimension_numbers=("NCHW", "OIHW", "NCHW"))
        x = jax.nn.relu(x + bias[None, :, None, None])
        if i in (1, 3):                           # pool after conv1_2, conv2_2
            x = jax.lax.reduce_window(x, -jnp.inf, jax.lax.max,
                                      (1, 1, 2, 2), (1, 1, 2, 2), "VALID")
    return x


if __name__ == "__main__":
    key = jax.random.PRNGKey(0)
    batch, h, w = 2, 16, 16
    k_img, k_par = jax.random.split(key)
    img = jax.random.normal(k_img, (batch, 3, h, w), dtype=jnp.float32)

    # VGG19 features[:12] channel plan: 3->64->64 |pool| ->128->128 |pool| ->256
    layer_channels = [(3, 64), (64, 64), (64, 128), (128, 128), (128, 256)]
    params = []
    kp = k_par
    for cin, cout in layer_channels:
        kp, kw, kb = jax.random.split(kp, 3)
        std = (2.0 / (9.0 * cin)) ** 0.5          # He init (ReLU)
        params.append(
            (std * jax.random.normal(kw, (cout, cin, 3, 3), jnp.float32),
             0.01 * jax.random.normal(kb, (cout,), jnp.float32)))

    out = jax.jit(feature_extractor_pallas)(img, params)
    out = jax.block_until_ready(out)

    ref = jax.jit(feature_extractor_reference)(img, params)
    ref = jax.block_until_ready(ref)

    assert out.shape == (batch, 256, h // 4, w // 4), out.shape
    assert bool(jnp.all(jnp.isfinite(out)))

    ref_scale = float(jnp.max(jnp.abs(ref)))
    max_err = float(jnp.max(jnp.abs(out - ref)))
    # bf16 MXU operands (f32 accumulation) across 5 stacked conv layers vs an
    # all-f32 reference: expected error ~0.5-2% of the activation scale.
    assert max_err <= 5e-2 * max(1.0, ref_scale), (max_err, ref_scale)
    print("KERNEL_OK")
</pallas_src>

<mosaic_0001>
module attributes {stable_mosaic.version = 11 : i64} {
  func.func @_conv3x3_relu_kernel(%arg0: i32, %arg1: memref<1x18x18x8xf32, #tpu.memory_space<vmem>>, %arg2: memref<9x8x64xbf16, #tpu.memory_space<vmem>>, %arg3: memref<1x64xf32, #tpu.memory_space<vmem>>, %arg4: memref<1x16x16x64xf32, #tpu.memory_space<vmem>>) attributes {dimension_semantics = [#tpu.dimension_semantics<parallel>], iteration_bounds = array<i64: 2>, scalar_prefetch = 0 : i64, scratch_operands = 0 : i64, tpu.core_type = #tpu.core_type<tc>, window_params = [{transform_indices = @transform_0, window_bounds = array<i64: 1, 18, 18, 8>}, {pipeline_mode = #tpu.pipeline_mode<synchronous>, transform_indices = @transform_1, window_bounds = array<i64: 9, 8, 64>}, {pipeline_mode = #tpu.pipeline_mode<synchronous>, transform_indices = @transform_2, window_bounds = array<i64: 1, 64>}, {transform_indices = @transform_3, window_bounds = array<i64: 1, 16, 16, 64>}]} {
    %c0 = arith.constant 0 : index
    %c0_0 = arith.constant 0 : index
    %0 = vector.load %arg3[%c0, %c0_0] : memref<1x64xf32, #tpu.memory_space<vmem>>, vector<1x64xf32>
    %1 = vector.shape_cast %0 : vector<1x64xf32> to vector<1x64xf32>
    %2 = vector.broadcast %1 : vector<1x64xf32> to vector<256x64xf32>
    %c0_1 = arith.constant 0 : index
    %c0_2 = arith.constant 0 : index
    %c0_3 = arith.constant 0 : index
    %c0_4 = arith.constant 0 : index
    %3 = vector.load %arg1[%c0_1, %c0_2, %c0_3, %c0_4] : memref<1x18x18x8xf32, #tpu.memory_space<vmem>>, vector<1x16x16x8xf32>
    %4 = vector.shape_cast %3 : vector<1x16x16x8xf32> to vector<16x16x8xf32>
    %5 = vector.shape_cast %4 : vector<16x16x8xf32> to vector<256x8xf32>
    %6 = arith.truncf %5 : vector<256x8xf32> to vector<256x8xbf16>
    %c0_5 = arith.constant 0 : index
    %c0_6 = arith.constant 0 : index
    %c0_7 = arith.constant 0 : index
    %7 = vector.load %arg2[%c0_5, %c0_6, %c0_7] : memref<9x8x64xbf16, #tpu.memory_space<vmem>>, vector<1x8x64xbf16>
    %8 = vector.shape_cast %7 : vector<1x8x64xbf16> to vector<8x64xbf16>
    %cst = arith.constant dense<0.000000e+00> : vector<256x64xf32>
    %9 = tpu.matmul %6, %8, %cst {dimension_numbers = #tpu.dot_dimension_numbers<[1], [0], [0], [1], [0, 0, 1, 1], [], []>} : vector<256x8xbf16>, vector<8x64xbf16>, vector<256x64xf32> -> vector<256x64xf32>
    %10 = arith.addf %2, %9 : vector<256x64xf32>
    %c0_8 = arith.constant 0 : index
    %c0_9 = arith.constant 0 : index
    %c1 = arith.constant 1 : index
    %c0_10 = arith.constant 0 : index
    %11 = vector.load %arg1[%c0_8, %c0_9, %c1, %c0_10] : memref<1x18x18x8xf32, #tpu.memory_space<vmem>>, vector<1x16x16x8xf32>
    %12 = vector.shape_cast %11 : vector<1x16x16x8xf32> to vector<16x16x8xf32>
    %13 = vector.shape_cast %12 : vector<16x16x8xf32> to vector<256x8xf32>
    %14 = arith.truncf %13 : vector<256x8xf32> to vector<256x8xbf16>
    %c1_11 = arith.constant 1 : index
    %c0_12 = arith.constant 0 : index
    %c0_13 = arith.constant 0 : index
    %15 = vector.load %arg2[%c1_11, %c0_12, %c0_13] : memref<9x8x64xbf16, #tpu.memory_space<vmem>>, vector<1x8x64xbf16>
    %16 = vector.shape_cast %15 : vector<1x8x64xbf16> to vector<8x64xbf16>
    %cst_14 = arith.constant dense<0.000000e+00> : vector<256x64xf32>
    %17 = tpu.matmul %14, %16, %cst_14 {dimension_numbers = #tpu.dot_dimension_numbers<[1], [0], [0], [1], [0, 0, 1, 1], [], []>} : vector<256x8xbf16>, vector<8x64xbf16>, vector<256x64xf32> -> vector<256x64xf32>
    %18 = arith.addf %10, %17 : vector<256x64xf32>
    %c0_15 = arith.constant 0 : index
    %c0_16 = arith.constant 0 : index
    %c2 = arith.constant 2 : index
    %c0_17 = arith.constant 0 : index
    %19 = vector.load %arg1[%c0_15, %c0_16, %c2, %c0_17] : memref<1x18x18x8xf32, #tpu.memory_space<vmem>>, vector<1x16x16x8xf32>
    %20 = vector.shape_cast %19 : vector<1x16x16x8xf32> to vector<16x16x8xf32>
    %21 = vector.shape_cast %20 : vector<16x16x8xf32> to vector<256x8xf32>
    %22 = arith.truncf %21 : vector<256x8xf32> to vector<256x8xbf16>
    %c2_18 = arith.constant 2 : index
    %c0_19 = arith.constant 0 : index
    %c0_20 = arith.constant 0 : index
    %23 = vector.load %arg2[%c2_18, %c0_19, %c0_20] : memref<9x8x64xbf16, #tpu.memory_space<vmem>>, vector<1x8x64xbf16>
    %24 = vector.shape_cast %23 : vector<1x8x64xbf16> to vector<8x64xbf16>
    %cst_21 = arith.constant dense<0.000000e+00> : vector<256x64xf32>
    %25 = tpu.matmul %22, %24, %cst_21 {dimension_numbers = #tpu.dot_dimension_numbers<[1], [0], [0], [1], [0, 0, 1, 1], [], []>} : vector<256x8xbf16>, vector<8x64xbf16>, vector<256x64xf32> -> vector<256x64xf32>
    %26 = arith.addf %18, %25 : vector<256x64xf32>
    %c0_22 = arith.constant 0 : index
    %c1_23 = arith.constant 1 : index
    %c0_24 = arith.constant 0 : index
    %c0_25 = arith.constant 0 : index
    %27 = vector.load %arg1[%c0_22, %c1_23, %c0_24, %c0_25] : memref<1x18x18x8xf32, #tpu.memory_space<vmem>>, vector<1x16x16x8xf32>
    %28 = vector.shape_cast %27 : vector<1x16x16x8xf32> to vector<16x16x8xf32>
    %29 = vector.shape_cast %28 : vector<16x16x8xf32> to vector<256x8xf32>
    %30 = arith.truncf %29 : vector<256x8xf32> to vector<256x8xbf16>
    %c3 = arith.constant 3 : index
    %c0_26 = arith.constant 0 : index
    %c0_27 = arith.constant 0 : index
    %31 = vector.load %arg2[%c3, %c0_26, %c0_27] : memref<9x8x64xbf16, #tpu.memory_space<vmem>>, vector<1x8x64xbf16>
    %32 = vector.shape_cast %31 : vector<1x8x64xbf16> to vector<8x64xbf16>
    %cst_28 = arith.constant dense<0.000000e+00> : vector<256x64xf32>
    %33 = tpu.matmul %30, %32, %cst_28 {dimension_numbers = #tpu.dot_dimension_numbers<[1], [0], [0], [1], [0, 0, 1, 1], [], []>} : vector<256x8xbf16>, vector<8x64xbf16>, vector<256x64xf32> -> vector<256x64xf32>
    %34 = arith.addf %26, %33 : vector<256x64xf32>
    %c0_29 = arith.constant 0 : index
    %c1_30 = arith.constant 1 : index
    %c1_31 = arith.constant 1 : index
    %c0_32 = arith.constant 0 : index
    %35 = vector.load %arg1[%c0_29, %c1_30, %c1_31, %c0_32] : memref<1x18x18x8xf32, #tpu.memory_space<vmem>>, vector<1x16x16x8xf32>
    %36 = vector.shape_cast %35 : vector<1x16x16x8xf32> to vector<16x16x8xf32>
    %37 = vector.shape_cast %36 : vector<16x16x8xf32> to vector<256x8xf32>
    %38 = arith.truncf %37 : vector<256x8xf32> to vector<256x8xbf16>
    %c4 = arith.constant 4 : index
    %c0_33 = arith.constant 0 : index
    %c0_34 = arith.constant 0 : index
    %39 = vector.load %arg2[%c4, %c0_33, %c0_34] : memref<9x8x64xbf16, #tpu.memory_space<vmem>>, vector<1x8x64xbf16>
    %40 = vector.shape_cast %39 : vector<1x8x64xbf16> to vector<8x64xbf16>
    %cst_35 = arith.constant dense<0.000000e+00> : vector<256x64xf32>
    %41 = tpu.matmul %38, %40, %cst_35 {dimension_numbers = #tpu.dot_dimension_numbers<[1], [0], [0], [1], [0, 0, 1, 1], [], []>} : vector<256x8xbf16>, vector<8x64xbf16>, vector<256x64xf32> -> vector<256x64xf32>
    %42 = arith.addf %34, %41 : vector<256x64xf32>
    %c0_36 = arith.constant 0 : index
    %c1_37 = arith.constant 1 : index
    %c2_38 = arith.constant 2 : index
    %c0_39 = arith.constant 0 : index
    %43 = vector.load %arg1[%c0_36, %c1_37, %c2_38, %c0_39] : memref<1x18x18x8xf32, #tpu.memory_space<vmem>>, vector<1x16x16x8xf32>
    %44 = vector.shape_cast %43 : vector<1x16x16x8xf32> to vector<16x16x8xf32>
    %45 = vector.shape_cast %44 : vector<16x16x8xf32> to vector<256x8xf32>
    %46 = arith.truncf %45 : vector<256x8xf32> to vector<256x8xbf16>
    %c5 = arith.constant 5 : index
    %c0_40 = arith.constant 0 : index
    %c0_41 = arith.constant 0 : index
    %47 = vector.load %arg2[%c5, %c0_40, %c0_41] : memref<9x8x64xbf16, #tpu.memory_space<vmem>>, vector<1x8x64xbf16>
    %48 = vector.shape_cast %47 : vector<1x8x64xbf16> to vector<8x64xbf16>
    %cst_42 = arith.constant dense<0.000000e+00> : vector<256x64xf32>
    %49 = tpu.matmul %46, %48, %cst_42 {dimension_numbers = #tpu.dot_dimension_numbers<[1], [0], [0], [1], [0, 0, 1, 1], [], []>} : vector<256x8xbf16>, vector<8x64xbf16>, vector<256x64xf32> -> vector<256x64xf32>
    %50 = arith.addf %42, %49 : vector<256x64xf32>
    %c0_43 = arith.constant 0 : index
    %c2_44 = arith.constant 2 : index
    %c0_45 = arith.constant 0 : index
    %c0_46 = arith.constant 0 : index
    %51 = vector.load %arg1[%c0_43, %c2_44, %c0_45, %c0_46] : memref<1x18x18x8xf32, #tpu.memory_space<vmem>>, vector<1x16x16x8xf32>
    %52 = vector.shape_cast %51 : vector<1x16x16x8xf32> to vector<16x16x8xf32>
    %53 = vector.shape_cast %52 : vector<16x16x8xf32> to vector<256x8xf32>
    %54 = arith.truncf %53 : vector<256x8xf32> to vector<256x8xbf16>
    %c6 = arith.constant 6 : index
    %c0_47 = arith.constant 0 : index
    %c0_48 = arith.constant 0 : index
    %55 = vector.load %arg2[%c6, %c0_47, %c0_48] : memref<9x8x64xbf16, #tpu.memory_space<vmem>>, vector<1x8x64xbf16>
    %56 = vector.shape_cast %55 : vector<1x8x64xbf16> to vector<8x64xbf16>
    %cst_49 = arith.constant dense<0.000000e+00> : vector<256x64xf32>
    %57 = tpu.matmul %54, %56, %cst_49 {dimension_numbers = #tpu.dot_dimension_numbers<[1], [0], [0], [1], [0, 0, 1, 1], [], []>} : vector<256x8xbf16>, vector<8x64xbf16>, vector<256x64xf32> -> vector<256x64xf32>
    %58 = arith.addf %50, %57 : vector<256x64xf32>
    %c0_50 = arith.constant 0 : index
    %c2_51 = arith.constant 2 : index
    %c1_52 = arith.constant 1 : index
    %c0_53 = arith.constant 0 : index
    %59 = vector.load %arg1[%c0_50, %c2_51, %c1_52, %c0_53] : memref<1x18x18x8xf32, #tpu.memory_space<vmem>>, vector<1x16x16x8xf32>
    %60 = vector.shape_cast %59 : vector<1x16x16x8xf32> to vector<16x16x8xf32>
    %61 = vector.shape_cast %60 : vector<16x16x8xf32> to vector<256x8xf32>
    %62 = arith.truncf %61 : vector<256x8xf32> to vector<256x8xbf16>
    %c7 = arith.constant 7 : index
    %c0_54 = arith.constant 0 : index
    %c0_55 = arith.constant 0 : index
    %63 = vector.load %arg2[%c7, %c0_54, %c0_55] : memref<9x8x64xbf16, #tpu.memory_space<vmem>>, vector<1x8x64xbf16>
    %64 = vector.shape_cast %63 : vector<1x8x64xbf16> to vector<8x64xbf16>
    %cst_56 = arith.constant dense<0.000000e+00> : vector<256x64xf32>
    %65 = tpu.matmul %62, %64, %cst_56 {dimension_numbers = #tpu.dot_dimension_numbers<[1], [0], [0], [1], [0, 0, 1, 1], [], []>} : vector<256x8xbf16>, vector<8x64xbf16>, vector<256x64xf32> -> vector<256x64xf32>
    %66 = arith.addf %58, %65 : vector<256x64xf32>
    %c0_57 = arith.constant 0 : index
    %c2_58 = arith.constant 2 : index
    %c2_59 = arith.constant 2 : index
    %c0_60 = arith.constant 0 : index
    %67 = vector.load %arg1[%c0_57, %c2_58, %c2_59, %c0_60] : memref<1x18x18x8xf32, #tpu.memory_space<vmem>>, vector<1x16x16x8xf32>
    %68 = vector.shape_cast %67 : vector<1x16x16x8xf32> to vector<16x16x8xf32>
    %69 = vector.shape_cast %68 : vector<16x16x8xf32> to vector<256x8xf32>
    %70 = arith.truncf %69 : vector<256x8xf32> to vector<256x8xbf16>
    %c8 = arith.constant 8 : index
    %c0_61 = arith.constant 0 : index
    %c0_62 = arith.constant 0 : index
    %71 = vector.load %arg2[%c8, %c0_61, %c0_62] : memref<9x8x64xbf16, #tpu.memory_space<vmem>>, vector<1x8x64xbf16>
    %72 = vector.shape_cast %71 : vector<1x8x64xbf16> to vector<8x64xbf16>
    %cst_63 = arith.constant dense<0.000000e+00> : vector<256x64xf32>
    %73 = tpu.matmul %70, %72, %cst_63 {dimension_numbers = #tpu.dot_dimension_numbers<[1], [0], [0], [1], [0, 0, 1, 1], [], []>} : vector<256x8xbf16>, vector<8x64xbf16>, vector<256x64xf32> -> vector<256x64xf32>
    %74 = arith.addf %66, %73 : vector<256x64xf32>
    %cst_64 = arith.constant 0.000000e+00 : f32
    %75 = vector.broadcast %cst_64 : f32 to vector<256x64xf32>
    %76 = arith.maximumf %74, %75 : vector<256x64xf32>
    %77 = vector.shape_cast %76 : vector<256x64xf32> to vector<16x16x64xf32>
    %c0_65 = arith.constant 0 : index
    %c0_66 = arith.constant 0 : index
    %c0_67 = arith.constant 0 : index
    %c0_68 = arith.constant 0 : index
    %78 = vector.load %arg4[%c0_65, %c0_66, %c0_67, %c0_68] : memref<1x16x16x64xf32, #tpu.memory_space<vmem>>, vector<1x16x16x64xf32>
    %79 = vector.shape_cast %78 : vector<1x16x16x64xf32> to vector<16x16x64xf32>
    %80 = vector.shape_cast %77 : vector<16x16x64xf32> to vector<1x16x16x64xf32>
    tpu.vector_store %arg4[%c0_65, %c0_66, %c0_67, %c0_68], %80 {strides = array<i32>} : memref<1x16x16x64xf32, #tpu.memory_space<vmem>>, vector<1x16x16x64xf32>,
    return
  }
  func.func @transform_0(%arg0: i32) -> (i32, i32, i32, i32) {
    %c0_i32 = arith.constant 0 : i32
    %c0_i32_0 = arith.constant 0 : i32
    %c0_i32_1 = arith.constant 0 : i32
    %c0_i32_2 = arith.constant 0 : i32
    return %arg0, %c0_i32, %c0_i32_0, %c0_i32_1 : i32, i32, i32, i32
  }
  func.func @transform_1(%arg0: i32) -> (i32, i32, i32) {
    %c0_i32 = arith.constant 0 : i32
    %c0_i32_0 = arith.constant 0 : i32
    %c0_i32_1 = arith.constant 0 : i32
    %c0_i32_2 = arith.constant 0 : i32
    return %c0_i32, %c0_i32_0, %c0_i32_1 : i32, i32, i32
  }
  func.func @transform_2(%arg0: i32) -> (i32, i32) {
    %c0_i32 = arith.constant 0 : i32
    %c0_i32_0 = arith.constant 0 : i32
    %c0_i32_1 = arith.constant 0 : i32
    return %c0_i32, %c0_i32_0 : i32, i32
  }
  func.func @transform_3(%arg0: i32) -> (i32, i32, i32, i32) {
    %c0_i32 = arith.constant 0 : i32
    %c0_i32_0 = arith.constant 0 : i32
    %c0_i32_1 = arith.constant 0 : i32
    %c0_i32_2 = arith.constant 0 : i32
    return %arg0, %c0_i32, %c0_i32_0, %c0_i32_1 : i32, i32, i32, i32
  }
}

module attributes {stable_mosaic.version = 11 : i64} {
  func.func @_conv3x3_relu_kernel(%arg0: i32, %arg1: memref<1x18x18x64xf32, #tpu.memory_space<vmem>>, %arg2: memref<9x64x64xbf16, #tpu.memory_space<vmem>>, %arg3: memref<1x64xf32, #tpu.memory_space<vmem>>, %arg4: memref<1x16x16x64xf32, #tpu.memory_space<vmem>>) attributes {dimension_semantics = [#tpu.dimension_semantics<parallel>], iteration_bounds = array<i64: 2>, scalar_prefetch = 0 : i64, scratch_operands = 0 : i64, tpu.core_type = #tpu.core_type<tc>, window_params = [{transform_indices = @transform_0, window_bounds = array<i64: 1, 18, 18, 64>}, {pipeline_mode = #tpu.pipeline_mode<synchronous>, transform_indices = @transform_1, window_bounds = array<i64: 9, 64, 64>}, {pipeline_mode = #tpu.pipeline_mode<synchronous>, transform_indices = @transform_2, window_bounds = array<i64: 1, 64>}, {transform_indices = @transform_3, window_bounds = array<i64: 1, 16, 16, 64>}]} {
    %c0 = arith.constant 0 : index
    %c0_0 = arith.constant 0 : index
    %0 = vector.load %arg3[%c0, %c0_0] : memref<1x64xf32, #tpu.memory_space<vmem>>, vector<1x64xf32>
    %1 = vector.shape_cast %0 : vector<1x64xf32> to vector<1x64xf32>
    %2 = vector.broadcast %1 : vector<1x64xf32> to vector<256x64xf32>
    %c0_1 = arith.constant 0 : index
    %c0_2 = arith.constant 0 : index
    %c0_3 = arith.constant 0 : index
    %c0_4 = arith.constant 0 : index
    %3 = vector.load %arg1[%c0_1, %c0_2, %c0_3, %c0_4] : memref<1x18x18x64xf32, #tpu.memory_space<vmem>>, vector<1x16x16x64xf32>
    %4 = vector.shape_cast %3 : vector<1x16x16x64xf32> to vector<16x16x64xf32>
    %5 = vector.shape_cast %4 : vector<16x16x64xf32> to vector<256x64xf32>
    %6 = arith.truncf %5 : vector<256x64xf32> to vector<256x64xbf16>
    %c0_5 = arith.constant 0 : index
    %c0_6 = arith.constant 0 : index
    %c0_7 = arith.constant 0 : index
    %7 = vector.load %arg2[%c0_5, %c0_6, %c0_7] : memref<9x64x64xbf16, #tpu.memory_space<vmem>>, vector<1x64x64xbf16>
    %8 = vector.shape_cast %7 : vector<1x64x64xbf16> to vector<64x64xbf16>
    %cst = arith.constant dense<0.000000e+00> : vector<256x64xf32>
    %9 = tpu.matmul %6, %8, %cst {dimension_numbers = #tpu.dot_dimension_numbers<[1], [0], [0], [1], [0, 0, 1, 1], [], []>} : vector<256x64xbf16>, vector<64x64xbf16>, vector<256x64xf32> -> vector<256x64xf32>
    %10 = arith.addf %2, %9 : vector<256x64xf32>
    %c0_8 = arith.constant 0 : index
    %c0_9 = arith.constant 0 : index
    %c1 = arith.constant 1 : index
    %c0_10 = arith.constant 0 : index
    %11 = vector.load %arg1[%c0_8, %c0_9, %c1, %c0_10] : memref<1x18x18x64xf32, #tpu.memory_space<vmem>>, vector<1x16x16x64xf32>
    %12 = vector.shape_cast %11 : vector<1x16x16x64xf32> to vector<16x16x64xf32>
    %13 = vector.shape_cast %12 : vector<16x16x64xf32> to vector<256x64xf32>
    %14 = arith.truncf %13 : vector<256x64xf32> to vector<256x64xbf16>
    %c1_11 = arith.constant 1 : index
    %c0_12 = arith.constant 0 : index
    %c0_13 = arith.constant 0 : index
    %15 = vector.load %arg2[%c1_11, %c0_12, %c0_13] : memref<9x64x64xbf16, #tpu.memory_space<vmem>>, vector<1x64x64xbf16>
    %16 = vector.shape_cast %15 : vector<1x64x64xbf16> to vector<64x64xbf16>
    %cst_14 = arith.constant dense<0.000000e+00> : vector<256x64xf32>
    %17 = tpu.matmul %14, %16, %cst_14 {dimension_numbers = #tpu.dot_dimension_numbers<[1], [0], [0], [1], [0, 0, 1, 1], [], []>} : vector<256x64xbf16>, vector<64x64xbf16>, vector<256x64xf32> -> vector<256x64xf32>
    %18 = arith.addf %10, %17 : vector<256x64xf32>
    %c0_15 = arith.constant 0 : index
    %c0_16 = arith.constant 0 : index
    %c2 = arith.constant 2 : index
    %c0_17 = arith.constant 0 : index
    %19 = vector.load %arg1[%c0_15, %c0_16, %c2, %c0_17] : memref<1x18x18x64xf32, #tpu.memory_space<vmem>>, vector<1x16x16x64xf32>
    %20 = vector.shape_cast %19 : vector<1x16x16x64xf32> to vector<16x16x64xf32>
    %21 = vector.shape_cast %20 : vector<16x16x64xf32> to vector<256x64xf32>
    %22 = arith.truncf %21 : vector<256x64xf32> to vector<256x64xbf16>
    %c2_18 = arith.constant 2 : index
    %c0_19 = arith.constant 0 : index
    %c0_20 = arith.constant 0 : index
    %23 = vector.load %arg2[%c2_18, %c0_19, %c0_20] : memref<9x64x64xbf16, #tpu.memory_space<vmem>>, vector<1x64x64xbf16>
    %24 = vector.shape_cast %23 : vector<1x64x64xbf16> to vector<64x64xbf16>
    %cst_21 = arith.constant dense<0.000000e+00> : vector<256x64xf32>
    %25 = tpu.matmul %22, %24, %cst_21 {dimension_numbers = #tpu.dot_dimension_numbers<[1], [0], [0], [1], [0, 0, 1, 1], [], []>} : vector<256x64xbf16>, vector<64x64xbf16>, vector<256x64xf32> -> vector<256x64xf32>
    %26 = arith.addf %18, %25 : vector<256x64xf32>
    %c0_22 = arith.constant 0 : index
    %c1_23 = arith.constant 1 : index
    %c0_24 = arith.constant 0 : index
    %c0_25 = arith.constant 0 : index
    %27 = vector.load %arg1[%c0_22, %c1_23, %c0_24, %c0_25] : memref<1x18x18x64xf32, #tpu.memory_space<vmem>>, vector<1x16x16x64xf32>
    %28 = vector.shape_cast %27 : vector<1x16x16x64xf32> to vector<16x16x64xf32>
    %29 = vector.shape_cast %28 : vector<16x16x64xf32> to vector<256x64xf32>
    %30 = arith.truncf %29 : vector<256x64xf32> to vector<256x64xbf16>
    %c3 = arith.constant 3 : index
    %c0_26 = arith.constant 0 : index
    %c0_27 = arith.constant 0 : index
    %31 = vector.load %arg2[%c3, %c0_26, %c0_27] : memref<9x64x64xbf16, #tpu.memory_space<vmem>>, vector<1x64x64xbf16>
    %32 = vector.shape_cast %31 : vector<1x64x64xbf16> to vector<64x64xbf16>
    %cst_28 = arith.constant dense<0.000000e+00> : vector<256x64xf32>
    %33 = tpu.matmul %30, %32, %cst_28 {dimension_numbers = #tpu.dot_dimension_numbers<[1], [0], [0], [1], [0, 0, 1, 1], [], []>} : vector<256x64xbf16>, vector<64x64xbf16>, vector<256x64xf32> -> vector<256x64xf32>
    %34 = arith.addf %26, %33 : vector<256x64xf32>
    %c0_29 = arith.constant 0 : index
    %c1_30 = arith.constant 1 : index
    %c1_31 = arith.constant 1 : index
    %c0_32 = arith.constant 0 : index
    %35 = vector.load %arg1[%c0_29, %c1_30, %c1_31, %c0_32] : memref<1x18x18x64xf32, #tpu.memory_space<vmem>>, vector<1x16x16x64xf32>
    %36 = vector.shape_cast %35 : vector<1x16x16x64xf32> to vector<16x16x64xf32>
    %37 = vector.shape_cast %36 : vector<16x16x64xf32> to vector<256x64xf32>
    %38 = arith.truncf %37 : vector<256x64xf32> to vector<256x64xbf16>
    %c4 = arith.constant 4 : index
    %c0_33 = arith.constant 0 : index
    %c0_34 = arith.constant 0 : index
    %39 = vector.load %arg2[%c4, %c0_33, %c0_34] : memref<9x64x64xbf16, #tpu.memory_space<vmem>>, vector<1x64x64xbf16>
    %40 = vector.shape_cast %39 : vector<1x64x64xbf16> to vector<64x64xbf16>
    %cst_35 = arith.constant dense<0.000000e+00> : vector<256x64xf32>
    %41 = tpu.matmul %38, %40, %cst_35 {dimension_numbers = #tpu.dot_dimension_numbers<[1], [0], [0], [1], [0, 0, 1, 1], [], []>} : vector<256x64xbf16>, vector<64x64xbf16>, vector<256x64xf32> -> vector<256x64xf32>
    %42 = arith.addf %34, %41 : vector<256x64xf32>
    %c0_36 = arith.constant 0 : index
    %c1_37 = arith.constant 1 : index
    %c2_38 = arith.constant 2 : index
    %c0_39 = arith.constant 0 : index
    %43 = vector.load %arg1[%c0_36, %c1_37, %c2_38, %c0_39] : memref<1x18x18x64xf32, #tpu.memory_space<vmem>>, vector<1x16x16x64xf32>
    %44 = vector.shape_cast %43 : vector<1x16x16x64xf32> to vector<16x16x64xf32>
    %45 = vector.shape_cast %44 : vector<16x16x64xf32> to vector<256x64xf32>
    %46 = arith.truncf %45 : vector<256x64xf32> to vector<256x64xbf16>
    %c5 = arith.constant 5 : index
    %c0_40 = arith.constant 0 : index
    %c0_41 = arith.constant 0 : index
    %47 = vector.load %arg2[%c5, %c0_40, %c0_41] : memref<9x64x64xbf16, #tpu.memory_space<vmem>>, vector<1x64x64xbf16>
    %48 = vector.shape_cast %47 : vector<1x64x64xbf16> to vector<64x64xbf16>
    %cst_42 = arith.constant dense<0.000000e+00> : vector<256x64xf32>
    %49 = tpu.matmul %46, %48, %cst_42 {dimension_numbers = #tpu.dot_dimension_numbers<[1], [0], [0], [1], [0, 0, 1, 1], [], []>} : vector<256x64xbf16>, vector<64x64xbf16>, vector<256x64xf32> -> vector<256x64xf32>
    %50 = arith.addf %42, %49 : vector<256x64xf32>
    %c0_43 = arith.constant 0 : index
    %c2_44 = arith.constant 2 : index
    %c0_45 = arith.constant 0 : index
    %c0_46 = arith.constant 0 : index
    %51 = vector.load %arg1[%c0_43, %c2_44, %c0_45, %c0_46] : memref<1x18x18x64xf32, #tpu.memory_space<vmem>>, vector<1x16x16x64xf32>
    %52 = vector.shape_cast %51 : vector<1x16x16x64xf32> to vector<16x16x64xf32>
    %53 = vector.shape_cast %52 : vector<16x16x64xf32> to vector<256x64xf32>
    %54 = arith.truncf %53 : vector<256x64xf32> to vector<256x64xbf16>
    %c6 = arith.constant 6 : index
    %c0_47 = arith.constant 0 : index
    %c0_48 = arith.constant 0 : index
    %55 = vector.load %arg2[%c6, %c0_47, %c0_48] : memref<9x64x64xbf16, #tpu.memory_space<vmem>>, vector<1x64x64xbf16>
    %56 = vector.shape_cast %55 : vector<1x64x64xbf16> to vector<64x64xbf16>
    %cst_49 = arith.constant dense<0.000000e+00> : vector<256x64xf32>
    %57 = tpu.matmul %54, %56, %cst_49 {dimension_numbers = #tpu.dot_dimension_numbers<[1], [0], [0], [1], [0, 0, 1, 1], [], []>} : vector<256x64xbf16>, vector<64x64xbf16>, vector<256x64xf32> -> vector<256x64xf32>
    %58 = arith.addf %50, %57 : vector<256x64xf32>
    %c0_50 = arith.constant 0 : index
    %c2_51 = arith.constant 2 : index
    %c1_52 = arith.constant 1 : index
    %c0_53 = arith.constant 0 : index
    %59 = vector.load %arg1[%c0_50, %c2_51, %c1_52, %c0_53] : memref<1x18x18x64xf32, #tpu.memory_space<vmem>>, vector<1x16x16x64xf32>
    %60 = vector.shape_cast %59 : vector<1x16x16x64xf32> to vector<16x16x64xf32>
    %61 = vector.shape_cast %60 : vector<16x16x64xf32> to vector<256x64xf32>
    %62 = arith.truncf %61 : vector<256x64xf32> to vector<256x64xbf16>
    %c7 = arith.constant 7 : index
    %c0_54 = arith.constant 0 : index
    %c0_55 = arith.constant 0 : index
    %63 = vector.load %arg2[%c7, %c0_54, %c0_55] : memref<9x64x64xbf16, #tpu.memory_space<vmem>>, vector<1x64x64xbf16>
    %64 = vector.shape_cast %63 : vector<1x64x64xbf16> to vector<64x64xbf16>
    %cst_56 = arith.constant dense<0.000000e+00> : vector<256x64xf32>
    %65 = tpu.matmul %62, %64, %cst_56 {dimension_numbers = #tpu.dot_dimension_numbers<[1], [0], [0], [1], [0, 0, 1, 1], [], []>} : vector<256x64xbf16>, vector<64x64xbf16>, vector<256x64xf32> -> vector<256x64xf32>
    %66 = arith.addf %58, %65 : vector<256x64xf32>
    %c0_57 = arith.constant 0 : index
    %c2_58 = arith.constant 2 : index
    %c2_59 = arith.constant 2 : index
    %c0_60 = arith.constant 0 : index
    %67 = vector.load %arg1[%c0_57, %c2_58, %c2_59, %c0_60] : memref<1x18x18x64xf32, #tpu.memory_space<vmem>>, vector<1x16x16x64xf32>
    %68 = vector.shape_cast %67 : vector<1x16x16x64xf32> to vector<16x16x64xf32>
    %69 = vector.shape_cast %68 : vector<16x16x64xf32> to vector<256x64xf32>
    %70 = arith.truncf %69 : vector<256x64xf32> to vector<256x64xbf16>
    %c8 = arith.constant 8 : index
    %c0_61 = arith.constant 0 : index
    %c0_62 = arith.constant 0 : index
    %71 = vector.load %arg2[%c8, %c0_61, %c0_62] : memref<9x64x64xbf16, #tpu.memory_space<vmem>>, vector<1x64x64xbf16>
    %72 = vector.shape_cast %71 : vector<1x64x64xbf16> to vector<64x64xbf16>
    %cst_63 = arith.constant dense<0.000000e+00> : vector<256x64xf32>
    %73 = tpu.matmul %70, %72, %cst_63 {dimension_numbers = #tpu.dot_dimension_numbers<[1], [0], [0], [1], [0, 0, 1, 1], [], []>} : vector<256x64xbf16>, vector<64x64xbf16>, vector<256x64xf32> -> vector<256x64xf32>
    %74 = arith.addf %66, %73 : vector<256x64xf32>
    %cst_64 = arith.constant 0.000000e+00 : f32
    %75 = vector.broadcast %cst_64 : f32 to vector<256x64xf32>
    %76 = arith.maximumf %74, %75 : vector<256x64xf32>
    %77 = vector.shape_cast %76 : vector<256x64xf32> to vector<16x16x64xf32>
    %c0_65 = arith.constant 0 : index
    %c0_66 = arith.constant 0 : index
    %c0_67 = arith.constant 0 : index
    %c0_68 = arith.constant 0 : index
    %78 = vector.load %arg4[%c0_65, %c0_66, %c0_67, %c0_68] : memref<1x16x16x64xf32, #tpu.memory_space<vmem>>, vector<1x16x16x64xf32>
    %79 = vector.shape_cast %78 : vector<1x16x16x64xf32> to vector<16x16x64xf32>
    %80 = vector.shape_cast %77 : vector<16x16x64xf32> to vector<1x16x16x64xf32>
    tpu.vector_store %arg4[%c0_65, %c0_66, %c0_67, %c0_68], %80 {strides = array<i32>} : memref<1x16x16x64xf32, #tpu.memory_space<vmem>>, vector<1x16x16x64xf32>,
    return
  }
  func.func @transform_0(%arg0: i32) -> (i32, i32, i32, i32) {
    %c0_i32 = arith.constant 0 : i32
    %c0_i32_0 = arith.constant 0 : i32
    %c0_i32_1 = arith.constant 0 : i32
    %c0_i32_2 = arith.constant 0 : i32
    return %arg0, %c0_i32, %c0_i32_0, %c0_i32_1 : i32, i32, i32, i32
  }
  func.func @transform_1(%arg0: i32) -> (i32, i32, i32) {
    %c0_i32 = arith.constant 0 : i32
    %c0_i32_0 = arith.constant 0 : i32
    %c0_i32_1 = arith.constant 0 : i32
    %c0_i32_2 = arith.constant 0 : i32
    return %c0_i32, %c0_i32_0, %c0_i32_1 : i32, i32, i32
  }
  func.func @transform_2(%arg0: i32) -> (i32, i32) {
    %c0_i32 = arith.constant 0 : i32
    %c0_i32_0 = arith.constant 0 : i32
    %c0_i32_1 = arith.constant 0 : i32
    return %c0_i32, %c0_i32_0 : i32, i32
  }
  func.func @transform_3(%arg0: i32) -> (i32, i32, i32, i32) {
    %c0_i32 = arith.constant 0 : i32
    %c0_i32_0 = arith.constant 0 : i32
    %c0_i32_1 = arith.constant 0 : i32
    %c0_i32_2 = arith.constant 0 : i32
    return %arg0, %c0_i32, %c0_i32_0, %c0_i32_1 : i32, i32, i32, i32
  }
}

module attributes {stable_mosaic.version = 11 : i64} {
  func.func @_maxpool2x2_kernel(%arg0: i32, %arg1: memref<1x16x8x128xf32, #tpu.memory_space<vmem>>, %arg2: memref<1x8x8x64xf32, #tpu.memory_space<vmem>>) attributes {dimension_semantics = [#tpu.dimension_semantics<parallel>], iteration_bounds = array<i64: 2>, scalar_prefetch = 0 : i64, scratch_operands = 0 : i64, tpu.core_type = #tpu.core_type<tc>, window_params = [{transform_indices = @transform_0, window_bounds = array<i64: 1, 16, 8, 128>}, {transform_indices = @transform_1, window_bounds = array<i64: 1, 8, 8, 64>}]} {
    %c0 = arith.constant 0 : index
    %c0_0 = arith.constant 0 : index
    %c0_1 = arith.constant 0 : index
    %c0_2 = arith.constant 0 : index
    %0 = vector.load %arg1[%c0, %c0_0, %c0_1, %c0_2] : memref<1x16x8x128xf32, #tpu.memory_space<vmem>>, vector<1x1x8x128xf32>
    %1 = vector.shape_cast %0 : vector<1x1x8x128xf32> to vector<8x128xf32>
    %c0_3 = arith.constant 0 : index
    %c1 = arith.constant 1 : index
    %c0_4 = arith.constant 0 : index
    %c0_5 = arith.constant 0 : index
    %2 = vector.load %arg1[%c0_3, %c1, %c0_4, %c0_5] : memref<1x16x8x128xf32, #tpu.memory_space<vmem>>, vector<1x1x8x128xf32>
    %3 = vector.shape_cast %2 : vector<1x1x8x128xf32> to vector<8x128xf32>
    %4 = arith.maximumf %1, %3 : vector<8x128xf32>
    %5 = vector.extract_strided_slice %4 {offsets = [0, 0], sizes = [8, 64], strides = [1, 1]} : vector<8x128xf32> to vector<8x64xf32>
    %6 = vector.extract_strided_slice %4 {offsets = [0, 64], sizes = [8, 64], strides = [1, 1]} : vector<8x128xf32> to vector<8x64xf32>
    %7 = arith.maximumf %5, %6 : vector<8x64xf32>
    %c0_6 = arith.constant 0 : index
    %c0_7 = arith.constant 0 : index
    %c0_8 = arith.constant 0 : index
    %c0_9 = arith.constant 0 : index
    %8 = vector.load %arg2[%c0_6, %c0_7, %c0_8, %c0_9] : memref<1x8x8x64xf32, #tpu.memory_space<vmem>>, vector<1x1x8x64xf32>
    %9 = vector.shape_cast %8 : vector<1x1x8x64xf32> to vector<8x64xf32>
    %10 = vector.shape_cast %7 : vector<8x64xf32> to vector<1x1x8x64xf32>
    tpu.vector_store %arg2[%c0_6, %c0_7, %c0_8, %c0_9], %10 {strides = array<i32>} : memref<1x8x8x64xf32, #tpu.memory_space<vmem>>, vector<1x1x8x64xf32>,
    %c0_10 = arith.constant 0 : index
    %c2 = arith.constant 2 : index
    %c0_11 = arith.constant 0 : index
    %c0_12 = arith.constant 0 : index
    %11 = vector.load %arg1[%c0_10, %c2, %c0_11, %c0_12] : memref<1x16x8x128xf32, #tpu.memory_space<vmem>>, vector<1x1x8x128xf32>
    %12 = vector.shape_cast %11 : vector<1x1x8x128xf32> to vector<8x128xf32>
    %c0_13 = arith.constant 0 : index
    %c3 = arith.constant 3 : index
    %c0_14 = arith.constant 0 : index
    %c0_15 = arith.constant 0 : index
    %13 = vector.load %arg1[%c0_13, %c3, %c0_14, %c0_15] : memref<1x16x8x128xf32, #tpu.memory_space<vmem>>, vector<1x1x8x128xf32>
    %14 = vector.shape_cast %13 : vector<1x1x8x128xf32> to vector<8x128xf32>
    %15 = arith.maximumf %12, %14 : vector<8x128xf32>
    %16 = vector.extract_strided_slice %15 {offsets = [0, 0], sizes = [8, 64], strides = [1, 1]} : vector<8x128xf32> to vector<8x64xf32>
    %17 = vector.extract_strided_slice %15 {offsets = [0, 64], sizes = [8, 64], strides = [1, 1]} : vector<8x128xf32> to vector<8x64xf32>
    %18 = arith.maximumf %16, %17 : vector<8x64xf32>
    %c0_16 = arith.constant 0 : index
    %c1_17 = arith.constant 1 : index
    %c0_18 = arith.constant 0 : index
    %c0_19 = arith.constant 0 : index
    %19 = vector.load %arg2[%c0_16, %c1_17, %c0_18, %c0_19] : memref<1x8x8x64xf32, #tpu.memory_space<vmem>>, vector<1x1x8x64xf32>
    %20 = vector.shape_cast %19 : vector<1x1x8x64xf32> to vector<8x64xf32>
    %21 = vector.shape_cast %18 : vector<8x64xf32> to vector<1x1x8x64xf32>
    tpu.vector_store %arg2[%c0_16, %c1_17, %c0_18, %c0_19], %21 {strides = array<i32>} : memref<1x8x8x64xf32, #tpu.memory_space<vmem>>, vector<1x1x8x64xf32>,
    %c0_20 = arith.constant 0 : index
    %c4 = arith.constant 4 : index
    %c0_21 = arith.constant 0 : index
    %c0_22 = arith.constant 0 : index
    %22 = vector.load %arg1[%c0_20, %c4, %c0_21, %c0_22] : memref<1x16x8x128xf32, #tpu.memory_space<vmem>>, vector<1x1x8x128xf32>
    %23 = vector.shape_cast %22 : vector<1x1x8x128xf32> to vector<8x128xf32>
    %c0_23 = arith.constant 0 : index
    %c5 = arith.constant 5 : index
    %c0_24 = arith.constant 0 : index
    %c0_25 = arith.constant 0 : index
    %24 = vector.load %arg1[%c0_23, %c5, %c0_24, %c0_25] : memref<1x16x8x128xf32, #tpu.memory_space<vmem>>, vector<1x1x8x128xf32>
    %25 = vector.shape_cast %24 : vector<1x1x8x128xf32> to vector<8x128xf32>
    %26 = arith.maximumf %23, %25 : vector<8x128xf32>
    %27 = vector.extract_strided_slice %26 {offsets = [0, 0], sizes = [8, 64], strides = [1, 1]} : vector<8x128xf32> to vector<8x64xf32>
    %28 = vector.extract_strided_slice %26 {offsets = [0, 64], sizes = [8, 64], strides = [1, 1]} : vector<8x128xf32> to vector<8x64xf32>
    %29 = arith.maximumf %27, %28 : vector<8x64xf32>
    %c0_26 = arith.constant 0 : index
    %c2_27 = arith.constant 2 : index
    %c0_28 = arith.constant 0 : index
    %c0_29 = arith.constant 0 : index
    %30 = vector.load %arg2[%c0_26, %c2_27, %c0_28, %c0_29] : memref<1x8x8x64xf32, #tpu.memory_space<vmem>>, vector<1x1x8x64xf32>
    %31 = vector.shape_cast %30 : vector<1x1x8x64xf32> to vector<8x64xf32>
    %32 = vector.shape_cast %29 : vector<8x64xf32> to vector<1x1x8x64xf32>
    tpu.vector_store %arg2[%c0_26, %c2_27, %c0_28, %c0_29], %32 {strides = array<i32>} : memref<1x8x8x64xf32, #tpu.memory_space<vmem>>, vector<1x1x8x64xf32>,
    %c0_30 = arith.constant 0 : index
    %c6 = arith.constant 6 : index
    %c0_31 = arith.constant 0 : index
    %c0_32 = arith.constant 0 : index
    %33 = vector.load %arg1[%c0_30, %c6, %c0_31, %c0_32] : memref<1x16x8x128xf32, #tpu.memory_space<vmem>>, vector<1x1x8x128xf32>
    %34 = vector.shape_cast %33 : vector<1x1x8x128xf32> to vector<8x128xf32>
    %c0_33 = arith.constant 0 : index
    %c7 = arith.constant 7 : index
    %c0_34 = arith.constant 0 : index
    %c0_35 = arith.constant 0 : index
    %35 = vector.load %arg1[%c0_33, %c7, %c0_34, %c0_35] : memref<1x16x8x128xf32, #tpu.memory_space<vmem>>, vector<1x1x8x128xf32>
    %36 = vector.shape_cast %35 : vector<1x1x8x128xf32> to vector<8x128xf32>
    %37 = arith.maximumf %34, %36 : vector<8x128xf32>
    %38 = vector.extract_strided_slice %37 {offsets = [0, 0], sizes = [8, 64], strides = [1, 1]} : vector<8x128xf32> to vector<8x64xf32>
    %39 = vector.extract_strided_slice %37 {offsets = [0, 64], sizes = [8, 64], strides = [1, 1]} : vector<8x128xf32> to vector<8x64xf32>
    %40 = arith.maximumf %38, %39 : vector<8x64xf32>
    %c0_36 = arith.constant 0 : index
    %c3_37 = arith.constant 3 : index
    %c0_38 = arith.constant 0 : index
    %c0_39 = arith.constant 0 : index
    %41 = vector.load %arg2[%c0_36, %c3_37, %c0_38, %c0_39] : memref<1x8x8x64xf32, #tpu.memory_space<vmem>>, vector<1x1x8x64xf32>
    %42 = vector.shape_cast %41 : vector<1x1x8x64xf32> to vector<8x64xf32>
    %43 = vector.shape_cast %40 : vector<8x64xf32> to vector<1x1x8x64xf32>
    tpu.vector_store %arg2[%c0_36, %c3_37, %c0_38, %c0_39], %43 {strides = array<i32>} : memref<1x8x8x64xf32, #tpu.memory_space<vmem>>, vector<1x1x8x64xf32>,
    %c0_40 = arith.constant 0 : index
    %c8 = arith.constant 8 : index
    %c0_41 = arith.constant 0 : index
    %c0_42 = arith.constant 0 : index
    %44 = vector.load %arg1[%c0_40, %c8, %c0_41, %c0_42] : memref<1x16x8x128xf32, #tpu.memory_space<vmem>>, vector<1x1x8x128xf32>
    %45 = vector.shape_cast %44 : vector<1x1x8x128xf32> to vector<8x128xf32>
    %c0_43 = arith.constant 0 : index
    %c9 = arith.constant 9 : index
    %c0_44 = arith.constant 0 : index
    %c0_45 = arith.constant 0 : index
    %46 = vector.load %arg1[%c0_43, %c9, %c0_44, %c0_45] : memref<1x16x8x128xf32, #tpu.memory_space<vmem>>, vector<1x1x8x128xf32>
    %47 = vector.shape_cast %46 : vector<1x1x8x128xf32> to vector<8x128xf32>
    %48 = arith.maximumf %45, %47 : vector<8x128xf32>
    %49 = vector.extract_strided_slice %48 {offsets = [0, 0], sizes = [8, 64], strides = [1, 1]} : vector<8x128xf32> to vector<8x64xf32>
    %50 = vector.extract_strided_slice %48 {offsets = [0, 64], sizes = [8, 64], strides = [1, 1]} : vector<8x128xf32> to vector<8x64xf32>
    %51 = arith.maximumf %49, %50 : vector<8x64xf32>
    %c0_46 = arith.constant 0 : index
    %c4_47 = arith.constant 4 : index
    %c0_48 = arith.constant 0 : index
    %c0_49 = arith.constant 0 : index
    %52 = vector.load %arg2[%c0_46, %c4_47, %c0_48, %c0_49] : memref<1x8x8x64xf32, #tpu.memory_space<vmem>>, vector<1x1x8x64xf32>
    %53 = vector.shape_cast %52 : vector<1x1x8x64xf32> to vector<8x64xf32>
    %54 = vector.shape_cast %51 : vector<8x64xf32> to vector<1x1x8x64xf32>
    tpu.vector_store %arg2[%c0_46, %c4_47, %c0_48, %c0_49], %54 {strides = array<i32>} : memref<1x8x8x64xf32, #tpu.memory_space<vmem>>, vector<1x1x8x64xf32>,
    %c0_50 = arith.constant 0 : index
    %c10 = arith.constant 10 : index
    %c0_51 = arith.constant 0 : index
    %c0_52 = arith.constant 0 : index
    %55 = vector.load %arg1[%c0_50, %c10, %c0_51, %c0_52] : memref<1x16x8x128xf32, #tpu.memory_space<vmem>>, vector<1x1x8x128xf32>
    %56 = vector.shape_cast %55 : vector<1x1x8x128xf32> to vector<8x128xf32>
    %c0_53 = arith.constant 0 : index
    %c11 = arith.constant 11 : index
    %c0_54 = arith.constant 0 : index
    %c0_55 = arith.constant 0 : index
    %57 = vector.load %arg1[%c0_53, %c11, %c0_54, %c0_55] : memref<1x16x8x128xf32, #tpu.memory_space<vmem>>, vector<1x1x8x128xf32>
    %58 = vector.shape_cast %57 : vector<1x1x8x128xf32> to vector<8x128xf32>
    %59 = arith.maximumf %56, %58 : vector<8x128xf32>
    %60 = vector.extract_strided_slice %59 {offsets = [0, 0], sizes = [8, 64], strides = [1, 1]} : vector<8x128xf32> to vector<8x64xf32>
    %61 = vector.extract_strided_slice %59 {offsets = [0, 64], sizes = [8, 64], strides = [1, 1]} : vector<8x128xf32> to vector<8x64xf32>
    %62 = arith.maximumf %60, %61 : vector<8x64xf32>
    %c0_56 = arith.constant 0 : index
    %c5_57 = arith.constant 5 : index
    %c0_58 = arith.constant 0 : index
    %c0_59 = arith.constant 0 : index
    %63 = vector.load %arg2[%c0_56, %c5_57, %c0_58, %c0_59] : memref<1x8x8x64xf32, #tpu.memory_space<vmem>>, vector<1x1x8x64xf32>
    %64 = vector.shape_cast %63 : vector<1x1x8x64xf32> to vector<8x64xf32>
    %65 = vector.shape_cast %62 : vector<8x64xf32> to vector<1x1x8x64xf32>
    tpu.vector_store %arg2[%c0_56, %c5_57, %c0_58, %c0_59], %65 {strides = array<i32>} : memref<1x8x8x64xf32, #tpu.memory_space<vmem>>, vector<1x1x8x64xf32>,
    %c0_60 = arith.constant 0 : index
    %c12 = arith.constant 12 : index
    %c0_61 = arith.constant 0 : index
    %c0_62 = arith.constant 0 : index
    %66 = vector.load %arg1[%c0_60, %c12, %c0_61, %c0_62] : memref<1x16x8x128xf32, #tpu.memory_space<vmem>>, vector<1x1x8x128xf32>
    %67 = vector.shape_cast %66 : vector<1x1x8x128xf32> to vector<8x128xf32>
    %c0_63 = arith.constant 0 : index
    %c13 = arith.constant 13 : index
    %c0_64 = arith.constant 0 : index
    %c0_65 = arith.constant 0 : index
    %68 = vector.load %arg1[%c0_63, %c13, %c0_64, %c0_65] : memref<1x16x8x128xf32, #tpu.memory_space<vmem>>, vector<1x1x8x128xf32>
    %69 = vector.shape_cast %68 : vector<1x1x8x128xf32> to vector<8x128xf32>
    %70 = arith.maximumf %67, %69 : vector<8x128xf32>
    %71 = vector.extract_strided_slice %70 {offsets = [0, 0], sizes = [8, 64], strides = [1, 1]} : vector<8x128xf32> to vector<8x64xf32>
    %72 = vector.extract_strided_slice %70 {offsets = [0, 64], sizes = [8, 64], strides = [1, 1]} : vector<8x128xf32> to vector<8x64xf32>
    %73 = arith.maximumf %71, %72 : vector<8x64xf32>
    %c0_66 = arith.constant 0 : index
    %c6_67 = arith.constant 6 : index
    %c0_68 = arith.constant 0 : index
    %c0_69 = arith.constant 0 : index
    %74 = vector.load %arg2[%c0_66, %c6_67, %c0_68, %c0_69] : memref<1x8x8x64xf32, #tpu.memory_space<vmem>>, vector<1x1x8x64xf32>
    %75 = vector.shape_cast %74 : vector<1x1x8x64xf32> to vector<8x64xf32>
    %76 = vector.shape_cast %73 : vector<8x64xf32> to vector<1x1x8x64xf32>
    tpu.vector_store %arg2[%c0_66, %c6_67, %c0_68, %c0_69], %76 {strides = array<i32>} : memref<1x8x8x64xf32, #tpu.memory_space<vmem>>, vector<1x1x8x64xf32>,
    %c0_70 = arith.constant 0 : index
    %c14 = arith.constant 14 : index
    %c0_71 = arith.constant 0 : index
    %c0_72 = arith.constant 0 : index
    %77 = vector.load %arg1[%c0_70, %c14, %c0_71, %c0_72] : memref<1x16x8x128xf32, #tpu.memory_space<vmem>>, vector<1x1x8x128xf32>
    %78 = vector.shape_cast %77 : vector<1x1x8x128xf32> to vector<8x128xf32>
    %c0_73 = arith.constant 0 : index
    %c15 = arith.constant 15 : index
    %c0_74 = arith.constant 0 : index
    %c0_75 = arith.constant 0 : index
    %79 = vector.load %arg1[%c0_73, %c15, %c0_74, %c0_75] : memref<1x16x8x128xf32, #tpu.memory_space<vmem>>, vector<1x1x8x128xf32>
    %80 = vector.shape_cast %79 : vector<1x1x8x128xf32> to vector<8x128xf32>
    %81 = arith.maximumf %78, %80 : vector<8x128xf32>
    %82 = vector.extract_strided_slice %81 {offsets = [0, 0], sizes = [8, 64], strides = [1, 1]} : vector<8x128xf32> to vector<8x64xf32>
    %83 = vector.extract_strided_slice %81 {offsets = [0, 64], sizes = [8, 64], strides = [1, 1]} : vector<8x128xf32> to vector<8x64xf32>
    %84 = arith.maximumf %82, %83 : vector<8x64xf32>
    %c0_76 = arith.constant 0 : index
    %c7_77 = arith.constant 7 : index
    %c0_78 = arith.constant 0 : index
    %c0_79 = arith.constant 0 : index
    %85 = vector.load %arg2[%c0_76, %c7_77, %c0_78, %c0_79] : memref<1x8x8x64xf32, #tpu.memory_space<vmem>>, vector<1x1x8x64xf32>
    %86 = vector.shape_cast %85 : vector<1x1x8x64xf32> to vector<8x64xf32>
    %87 = vector.shape_cast %84 : vector<8x64xf32> to vector<1x1x8x64xf32>
    tpu.vector_store %arg2[%c0_76, %c7_77, %c0_78, %c0_79], %87 {strides = array<i32>} : memref<1x8x8x64xf32, #tpu.memory_space<vmem>>, vector<1x1x8x64xf32>,
    return
  }
  func.func @transform_0(%arg0: i32) -> (i32, i32, i32, i32) {
    %c0_i32 = arith.constant 0 : i32
    %c0_i32_0 = arith.constant 0 : i32
    %c0_i32_1 = arith.constant 0 : i32
    %c0_i32_2 = arith.constant 0 : i32
    return %arg0, %c0_i32, %c0_i32_0, %c0_i32_1 : i32, i32, i32, i32
  }
  func.func @transform_1(%arg0: i32) -> (i32, i32, i32, i32) {
    %c0_i32 = arith.constant 0 : i32
    %c0_i32_0 = arith.constant 0 : i32
    %c0_i32_1 = arith.constant 0 : i32
    %c0_i32_2 = arith.constant 0 : i32
    return %arg0, %c0_i32, %c0_i32_0, %c0_i32_1 : i32, i32, i32, i32
  }
}

module attributes {stable_mosaic.version = 11 : i64} {
  func.func @_conv3x3_relu_kernel(%arg0: i32, %arg1: memref<1x10x10x64xf32, #tpu.memory_space<vmem>>, %arg2: memref<9x64x128xbf16, #tpu.memory_space<vmem>>, %arg3: memref<1x128xf32, #tpu.memory_space<vmem>>, %arg4: memref<1x8x8x128xf32, #tpu.memory_space<vmem>>) attributes {dimension_semantics = [#tpu.dimension_semantics<parallel>], iteration_bounds = array<i64: 2>, scalar_prefetch = 0 : i64, scratch_operands = 0 : i64, tpu.core_type = #tpu.core_type<tc>, window_params = [{transform_indices = @transform_0, window_bounds = array<i64: 1, 10, 10, 64>}, {pipeline_mode = #tpu.pipeline_mode<synchronous>, transform_indices = @transform_1, window_bounds = array<i64: 9, 64, 128>}, {pipeline_mode = #tpu.pipeline_mode<synchronous>, transform_indices = @transform_2, window_bounds = array<i64: 1, 128>}, {transform_indices = @transform_3, window_bounds = array<i64: 1, 8, 8, 128>}]} {
    %c0 = arith.constant 0 : index
    %c0_0 = arith.constant 0 : index
    %0 = vector.load %arg3[%c0, %c0_0] : memref<1x128xf32, #tpu.memory_space<vmem>>, vector<1x128xf32>
    %1 = vector.shape_cast %0 : vector<1x128xf32> to vector<1x128xf32>
    %2 = vector.broadcast %1 : vector<1x128xf32> to vector<64x128xf32>
    %c0_1 = arith.constant 0 : index
    %c0_2 = arith.constant 0 : index
    %c0_3 = arith.constant 0 : index
    %c0_4 = arith.constant 0 : index
    %3 = vector.load %arg1[%c0_1, %c0_2, %c0_3, %c0_4] : memref<1x10x10x64xf32, #tpu.memory_space<vmem>>, vector<1x8x8x64xf32>
    %4 = vector.shape_cast %3 : vector<1x8x8x64xf32> to vector<8x8x64xf32>
    %5 = vector.shape_cast %4 : vector<8x8x64xf32> to vector<64x64xf32>
    %6 = arith.truncf %5 : vector<64x64xf32> to vector<64x64xbf16>
    %c0_5 = arith.constant 0 : index
    %c0_6 = arith.constant 0 : index
    %c0_7 = arith.constant 0 : index
    %7 = vector.load %arg2[%c0_5, %c0_6, %c0_7] : memref<9x64x128xbf16, #tpu.memory_space<vmem>>, vector<1x64x128xbf16>
    %8 = vector.shape_cast %7 : vector<1x64x128xbf16> to vector<64x128xbf16>
    %cst = arith.constant dense<0.000000e+00> : vector<64x128xf32>
    %9 = tpu.matmul %6, %8, %cst {dimension_numbers = #tpu.dot_dimension_numbers<[1], [0], [0], [1], [0, 0, 1, 1], [], []>} : vector<64x64xbf16>, vector<64x128xbf16>, vector<64x128xf32> -> vector<64x128xf32>
    %10 = arith.addf %2, %9 : vector<64x128xf32>
    %c0_8 = arith.constant 0 : index
    %c0_9 = arith.constant 0 : index
    %c1 = arith.constant 1 : index
    %c0_10 = arith.constant 0 : index
    %11 = vector.load %arg1[%c0_8, %c0_9, %c1, %c0_10] : memref<1x10x10x64xf32, #tpu.memory_space<vmem>>, vector<1x8x8x64xf32>
    %12 = vector.shape_cast %11 : vector<1x8x8x64xf32> to vector<8x8x64xf32>
    %13 = vector.shape_cast %12 : vector<8x8x64xf32> to vector<64x64xf32>
    %14 = arith.truncf %13 : vector<64x64xf32> to vector<64x64xbf16>
    %c1_11 = arith.constant 1 : index
    %c0_12 = arith.constant 0 : index
    %c0_13 = arith.constant 0 : index
    %15 = vector.load %arg2[%c1_11, %c0_12, %c0_13] : memref<9x64x128xbf16, #tpu.memory_space<vmem>>, vector<1x64x128xbf16>
    %16 = vector.shape_cast %15 : vector<1x64x128xbf16> to vector<64x128xbf16>
    %cst_14 = arith.constant dense<0.000000e+00> : vector<64x128xf32>
    %17 = tpu.matmul %14, %16, %cst_14 {dimension_numbers = #tpu.dot_dimension_numbers<[1], [0], [0], [1], [0, 0, 1, 1], [], []>} : vector<64x64xbf16>, vector<64x128xbf16>, vector<64x128xf32> -> vector<64x128xf32>
    %18 = arith.addf %10, %17 : vector<64x128xf32>
    %c0_15 = arith.constant 0 : index
    %c0_16 = arith.constant 0 : index
    %c2 = arith.constant 2 : index
    %c0_17 = arith.constant 0 : index
    %19 = vector.load %arg1[%c0_15, %c0_16, %c2, %c0_17] : memref<1x10x10x64xf32, #tpu.memory_space<vmem>>, vector<1x8x8x64xf32>
    %20 = vector.shape_cast %19 : vector<1x8x8x64xf32> to vector<8x8x64xf32>
    %21 = vector.shape_cast %20 : vector<8x8x64xf32> to vector<64x64xf32>
    %22 = arith.truncf %21 : vector<64x64xf32> to vector<64x64xbf16>
    %c2_18 = arith.constant 2 : index
    %c0_19 = arith.constant 0 : index
    %c0_20 = arith.constant 0 : index
    %23 = vector.load %arg2[%c2_18, %c0_19, %c0_20] : memref<9x64x128xbf16, #tpu.memory_space<vmem>>, vector<1x64x128xbf16>
    %24 = vector.shape_cast %23 : vector<1x64x128xbf16> to vector<64x128xbf16>
    %cst_21 = arith.constant dense<0.000000e+00> : vector<64x128xf32>
    %25 = tpu.matmul %22, %24, %cst_21 {dimension_numbers = #tpu.dot_dimension_numbers<[1], [0], [0], [1], [0, 0, 1, 1], [], []>} : vector<64x64xbf16>, vector<64x128xbf16>, vector<64x128xf32> -> vector<64x128xf32>
    %26 = arith.addf %18, %25 : vector<64x128xf32>
    %c0_22 = arith.constant 0 : index
    %c1_23 = arith.constant 1 : index
    %c0_24 = arith.constant 0 : index
    %c0_25 = arith.constant 0 : index
    %27 = vector.load %arg1[%c0_22, %c1_23, %c0_24, %c0_25] : memref<1x10x10x64xf32, #tpu.memory_space<vmem>>, vector<1x8x8x64xf32>
    %28 = vector.shape_cast %27 : vector<1x8x8x64xf32> to vector<8x8x64xf32>
    %29 = vector.shape_cast %28 : vector<8x8x64xf32> to vector<64x64xf32>
    %30 = arith.truncf %29 : vector<64x64xf32> to vector<64x64xbf16>
    %c3 = arith.constant 3 : index
    %c0_26 = arith.constant 0 : index
    %c0_27 = arith.constant 0 : index
    %31 = vector.load %arg2[%c3, %c0_26, %c0_27] : memref<9x64x128xbf16, #tpu.memory_space<vmem>>, vector<1x64x128xbf16>
    %32 = vector.shape_cast %31 : vector<1x64x128xbf16> to vector<64x128xbf16>
    %cst_28 = arith.constant dense<0.000000e+00> : vector<64x128xf32>
    %33 = tpu.matmul %30, %32, %cst_28 {dimension_numbers = #tpu.dot_dimension_numbers<[1], [0], [0], [1], [0, 0, 1, 1], [], []>} : vector<64x64xbf16>, vector<64x128xbf16>, vector<64x128xf32> -> vector<64x128xf32>
    %34 = arith.addf %26, %33 : vector<64x128xf32>
    %c0_29 = arith.constant 0 : index
    %c1_30 = arith.constant 1 : index
    %c1_31 = arith.constant 1 : index
    %c0_32 = arith.constant 0 : index
    %35 = vector.load %arg1[%c0_29, %c1_30, %c1_31, %c0_32] : memref<1x10x10x64xf32, #tpu.memory_space<vmem>>, vector<1x8x8x64xf32>
    %36 = vector.shape_cast %35 : vector<1x8x8x64xf32> to vector<8x8x64xf32>
    %37 = vector.shape_cast %36 : vector<8x8x64xf32> to vector<64x64xf32>
    %38 = arith.truncf %37 : vector<64x64xf32> to vector<64x64xbf16>
    %c4 = arith.constant 4 : index
    %c0_33 = arith.constant 0 : index
    %c0_34 = arith.constant 0 : index
    %39 = vector.load %arg2[%c4, %c0_33, %c0_34] : memref<9x64x128xbf16, #tpu.memory_space<vmem>>, vector<1x64x128xbf16>
    %40 = vector.shape_cast %39 : vector<1x64x128xbf16> to vector<64x128xbf16>
    %cst_35 = arith.constant dense<0.000000e+00> : vector<64x128xf32>
    %41 = tpu.matmul %38, %40, %cst_35 {dimension_numbers = #tpu.dot_dimension_numbers<[1], [0], [0], [1], [0, 0, 1, 1], [], []>} : vector<64x64xbf16>, vector<64x128xbf16>, vector<64x128xf32> -> vector<64x128xf32>
    %42 = arith.addf %34, %41 : vector<64x128xf32>
    %c0_36 = arith.constant 0 : index
    %c1_37 = arith.constant 1 : index
    %c2_38 = arith.constant 2 : index
    %c0_39 = arith.constant 0 : index
    %43 = vector.load %arg1[%c0_36, %c1_37, %c2_38, %c0_39] : memref<1x10x10x64xf32, #tpu.memory_space<vmem>>, vector<1x8x8x64xf32>
    %44 = vector.shape_cast %43 : vector<1x8x8x64xf32> to vector<8x8x64xf32>
    %45 = vector.shape_cast %44 : vector<8x8x64xf32> to vector<64x64xf32>
    %46 = arith.truncf %45 : vector<64x64xf32> to vector<64x64xbf16>
    %c5 = arith.constant 5 : index
    %c0_40 = arith.constant 0 : index
    %c0_41 = arith.constant 0 : index
    %47 = vector.load %arg2[%c5, %c0_40, %c0_41] : memref<9x64x128xbf16, #tpu.memory_space<vmem>>, vector<1x64x128xbf16>
    %48 = vector.shape_cast %47 : vector<1x64x128xbf16> to vector<64x128xbf16>
    %cst_42 = arith.constant dense<0.000000e+00> : vector<64x128xf32>
    %49 = tpu.matmul %46, %48, %cst_42 {dimension_numbers = #tpu.dot_dimension_numbers<[1], [0], [0], [1], [0, 0, 1, 1], [], []>} : vector<64x64xbf16>, vector<64x128xbf16>, vector<64x128xf32> -> vector<64x128xf32>
    %50 = arith.addf %42, %49 : vector<64x128xf32>
    %c0_43 = arith.constant 0 : index
    %c2_44 = arith.constant 2 : index
    %c0_45 = arith.constant 0 : index
    %c0_46 = arith.constant 0 : index
    %51 = vector.load %arg1[%c0_43, %c2_44, %c0_45, %c0_46] : memref<1x10x10x64xf32, #tpu.memory_space<vmem>>, vector<1x8x8x64xf32>
    %52 = vector.shape_cast %51 : vector<1x8x8x64xf32> to vector<8x8x64xf32>
    %53 = vector.shape_cast %52 : vector<8x8x64xf32> to vector<64x64xf32>
    %54 = arith.truncf %53 : vector<64x64xf32> to vector<64x64xbf16>
    %c6 = arith.constant 6 : index
    %c0_47 = arith.constant 0 : index
    %c0_48 = arith.constant 0 : index
    %55 = vector.load %arg2[%c6, %c0_47, %c0_48] : memref<9x64x128xbf16, #tpu.memory_space<vmem>>, vector<1x64x128xbf16>
    %56 = vector.shape_cast %55 : vector<1x64x128xbf16> to vector<64x128xbf16>
    %cst_49 = arith.constant dense<0.000000e+00> : vector<64x128xf32>
    %57 = tpu.matmul %54, %56, %cst_49 {dimension_numbers = #tpu.dot_dimension_numbers<[1], [0], [0], [1], [0, 0, 1, 1], [], []>} : vector<64x64xbf16>, vector<64x128xbf16>, vector<64x128xf32> -> vector<64x128xf32>
    %58 = arith.addf %50, %57 : vector<64x128xf32>
    %c0_50 = arith.constant 0 : index
    %c2_51 = arith.constant 2 : index
    %c1_52 = arith.constant 1 : index
    %c0_53 = arith.constant 0 : index
    %59 = vector.load %arg1[%c0_50, %c2_51, %c1_52, %c0_53] : memref<1x10x10x64xf32, #tpu.memory_space<vmem>>, vector<1x8x8x64xf32>
    %60 = vector.shape_cast %59 : vector<1x8x8x64xf32> to vector<8x8x64xf32>
    %61 = vector.shape_cast %60 : vector<8x8x64xf32> to vector<64x64xf32>
    %62 = arith.truncf %61 : vector<64x64xf32> to vector<64x64xbf16>
    %c7 = arith.constant 7 : index
    %c0_54 = arith.constant 0 : index
    %c0_55 = arith.constant 0 : index
    %63 = vector.load %arg2[%c7, %c0_54, %c0_55] : memref<9x64x128xbf16, #tpu.memory_space<vmem>>, vector<1x64x128xbf16>
    %64 = vector.shape_cast %63 : vector<1x64x128xbf16> to vector<64x128xbf16>
    %cst_56 = arith.constant dense<0.000000e+00> : vector<64x128xf32>
    %65 = tpu.matmul %62, %64, %cst_56 {dimension_numbers = #tpu.dot_dimension_numbers<[1], [0], [0], [1], [0, 0, 1, 1], [], []>} : vector<64x64xbf16>, vector<64x128xbf16>, vector<64x128xf32> -> vector<64x128xf32>
    %66 = arith.addf %58, %65 : vector<64x128xf32>
    %c0_57 = arith.constant 0 : index
    %c2_58 = arith.constant 2 : index
    %c2_59 = arith.constant 2 : index
    %c0_60 = arith.constant 0 : index
    %67 = vector.load %arg1[%c0_57, %c2_58, %c2_59, %c0_60] : memref<1x10x10x64xf32, #tpu.memory_space<vmem>>, vector<1x8x8x64xf32>
    %68 = vector.shape_cast %67 : vector<1x8x8x64xf32> to vector<8x8x64xf32>
    %69 = vector.shape_cast %68 : vector<8x8x64xf32> to vector<64x64xf32>
    %70 = arith.truncf %69 : vector<64x64xf32> to vector<64x64xbf16>
    %c8 = arith.constant 8 : index
    %c0_61 = arith.constant 0 : index
    %c0_62 = arith.constant 0 : index
    %71 = vector.load %arg2[%c8, %c0_61, %c0_62] : memref<9x64x128xbf16, #tpu.memory_space<vmem>>, vector<1x64x128xbf16>
    %72 = vector.shape_cast %71 : vector<1x64x128xbf16> to vector<64x128xbf16>
    %cst_63 = arith.constant dense<0.000000e+00> : vector<64x128xf32>
    %73 = tpu.matmul %70, %72, %cst_63 {dimension_numbers = #tpu.dot_dimension_numbers<[1], [0], [0], [1], [0, 0, 1, 1], [], []>} : vector<64x64xbf16>, vector<64x128xbf16>, vector<64x128xf32> -> vector<64x128xf32>
    %74 = arith.addf %66, %73 : vector<64x128xf32>
    %cst_64 = arith.constant 0.000000e+00 : f32
    %75 = vector.broadcast %cst_64 : f32 to vector<64x128xf32>
    %76 = arith.maximumf %74, %75 : vector<64x128xf32>
    %77 = vector.shape_cast %76 : vector<64x128xf32> to vector<8x8x128xf32>
    %c0_65 = arith.constant 0 : index
    %c0_66 = arith.constant 0 : index
    %c0_67 = arith.constant 0 : index
    %c0_68 = arith.constant 0 : index
    %78 = vector.load %arg4[%c0_65, %c0_66, %c0_67, %c0_68] : memref<1x8x8x128xf32, #tpu.memory_space<vmem>>, vector<1x8x8x128xf32>
    %79 = vector.shape_cast %78 : vector<1x8x8x128xf32> to vector<8x8x128xf32>
    %80 = vector.shape_cast %77 : vector<8x8x128xf32> to vector<1x8x8x128xf32>
    tpu.vector_store %arg4[%c0_65, %c0_66, %c0_67, %c0_68], %80 {strides = array<i32>} : memref<1x8x8x128xf32, #tpu.memory_space<vmem>>, vector<1x8x8x128xf32>,
    return
  }
  func.func @transform_0(%arg0: i32) -> (i32, i32, i32, i32) {
    %c0_i32 = arith.constant 0 : i32
    %c0_i32_0 = arith.constant 0 : i32
    %c0_i32_1 = arith.constant 0 : i32
    %c0_i32_2 = arith.constant 0 : i32
    return %arg0, %c0_i32, %c0_i32_0, %c0_i32_1 : i32, i32, i32, i32
  }
  func.func @transform_1(%arg0: i32) -> (i32, i32, i32) {
    %c0_i32 = arith.constant 0 : i32
    %c0_i32_0 = arith.constant 0 : i32
    %c0_i32_1 = arith.constant 0 : i32
    %c0_i32_2 = arith.constant 0 : i32
    return %c0_i32, %c0_i32_0, %c0_i32_1 : i32, i32, i32
  }
  func.func @transform_2(%arg0: i32) -> (i32, i32) {
    %c0_i32 = arith.constant 0 : i32
    %c0_i32_0 = arith.constant 0 : i32
    %c0_i32_1 = arith.constant 0 : i32
    return %c0_i32, %c0_i32_0 : i32, i32
  }
  func.func @transform_3(%arg0: i32) -> (i32, i32, i32, i32) {
    %c0_i32 = arith.constant 0 : i32
    %c0_i32_0 = arith.constant 0 : i32
    %c0_i32_1 = arith.constant 0 : i32
    %c0_i32_2 = arith.constant 0 : i32
    return %arg0, %c0_i32, %c0_i32_0, %c0_i32_1 : i32, i32, i32, i32
  }
}

module attributes {stable_mosaic.version = 11 : i64} {
  func.func @_conv3x3_relu_kernel(%arg0: i32, %arg1: memref<1x10x10x128xf32, #tpu.memory_space<vmem>>, %arg2: memref<9x128x128xbf16, #tpu.memory_space<vmem>>, %arg3: memref<1x128xf32, #tpu.memory_space<vmem>>, %arg4: memref<1x8x8x128xf32, #tpu.memory_space<vmem>>) attributes {dimension_semantics = [#tpu.dimension_semantics<parallel>], iteration_bounds = array<i64: 2>, scalar_prefetch = 0 : i64, scratch_operands = 0 : i64, tpu.core_type = #tpu.core_type<tc>, window_params = [{transform_indices = @transform_0, window_bounds = array<i64: 1, 10, 10, 128>}, {pipeline_mode = #tpu.pipeline_mode<synchronous>, transform_indices = @transform_1, window_bounds = array<i64: 9, 128, 128>}, {pipeline_mode = #tpu.pipeline_mode<synchronous>, transform_indices = @transform_2, window_bounds = array<i64: 1, 128>}, {transform_indices = @transform_3, window_bounds = array<i64: 1, 8, 8, 128>}]} {
    %c0 = arith.constant 0 : index
    %c0_0 = arith.constant 0 : index
    %0 = vector.load %arg3[%c0, %c0_0] : memref<1x128xf32, #tpu.memory_space<vmem>>, vector<1x128xf32>
    %1 = vector.shape_cast %0 : vector<1x128xf32> to vector<1x128xf32>
    %2 = vector.broadcast %1 : vector<1x128xf32> to vector<64x128xf32>
    %c0_1 = arith.constant 0 : index
    %c0_2 = arith.constant 0 : index
    %c0_3 = arith.constant 0 : index
    %c0_4 = arith.constant 0 : index
    %3 = vector.load %arg1[%c0_1, %c0_2, %c0_3, %c0_4] : memref<1x10x10x128xf32, #tpu.memory_space<vmem>>, vector<1x8x8x128xf32>
    %4 = vector.shape_cast %3 : vector<1x8x8x128xf32> to vector<8x8x128xf32>
    %5 = vector.shape_cast %4 : vector<8x8x128xf32> to vector<64x128xf32>
    %6 = arith.truncf %5 : vector<64x128xf32> to vector<64x128xbf16>
    %c0_5 = arith.constant 0 : index
    %c0_6 = arith.constant 0 : index
    %c0_7 = arith.constant 0 : index
    %7 = vector.load %arg2[%c0_5, %c0_6, %c0_7] : memref<9x128x128xbf16, #tpu.memory_space<vmem>>, vector<1x128x128xbf16>
    %8 = vector.shape_cast %7 : vector<1x128x128xbf16> to vector<128x128xbf16>
    %cst = arith.constant dense<0.000000e+00> : vector<64x128xf32>
    %9 = tpu.matmul %6, %8, %cst {dimension_numbers = #tpu.dot_dimension_numbers<[1], [0], [0], [1], [0, 0, 1, 1], [], []>} : vector<64x128xbf16>, vector<128x128xbf16>, vector<64x128xf32> -> vector<64x128xf32>
    %10 = arith.addf %2, %9 : vector<64x128xf32>
    %c0_8 = arith.constant 0 : index
    %c0_9 = arith.constant 0 : index
    %c1 = arith.constant 1 : index
    %c0_10 = arith.constant 0 : index
    %11 = vector.load %arg1[%c0_8, %c0_9, %c1, %c0_10] : memref<1x10x10x128xf32, #tpu.memory_space<vmem>>, vector<1x8x8x128xf32>
    %12 = vector.shape_cast %11 : vector<1x8x8x128xf32> to vector<8x8x128xf32>
    %13 = vector.shape_cast %12 : vector<8x8x128xf32> to vector<64x128xf32>
    %14 = arith.truncf %13 : vector<64x128xf32> to vector<64x128xbf16>
    %c1_11 = arith.constant 1 : index
    %c0_12 = arith.constant 0 : index
    %c0_13 = arith.constant 0 : index
    %15 = vector.load %arg2[%c1_11, %c0_12, %c0_13] : memref<9x128x128xbf16, #tpu.memory_space<vmem>>, vector<1x128x128xbf16>
    %16 = vector.shape_cast %15 : vector<1x128x128xbf16> to vector<128x128xbf16>
    %cst_14 = arith.constant dense<0.000000e+00> : vector<64x128xf32>
    %17 = tpu.matmul %14, %16, %cst_14 {dimension_numbers = #tpu.dot_dimension_numbers<[1], [0], [0], [1], [0, 0, 1, 1], [], []>} : vector<64x128xbf16>, vector<128x128xbf16>, vector<64x128xf32> -> vector<64x128xf32>
    %18 = arith.addf %10, %17 : vector<64x128xf32>
    %c0_15 = arith.constant 0 : index
    %c0_16 = arith.constant 0 : index
    %c2 = arith.constant 2 : index
    %c0_17 = arith.constant 0 : index
    %19 = vector.load %arg1[%c0_15, %c0_16, %c2, %c0_17] : memref<1x10x10x128xf32, #tpu.memory_space<vmem>>, vector<1x8x8x128xf32>
    %20 = vector.shape_cast %19 : vector<1x8x8x128xf32> to vector<8x8x128xf32>
    %21 = vector.shape_cast %20 : vector<8x8x128xf32> to vector<64x128xf32>
    %22 = arith.truncf %21 : vector<64x128xf32> to vector<64x128xbf16>
    %c2_18 = arith.constant 2 : index
    %c0_19 = arith.constant 0 : index
    %c0_20 = arith.constant 0 : index
    %23 = vector.load %arg2[%c2_18, %c0_19, %c0_20] : memref<9x128x128xbf16, #tpu.memory_space<vmem>>, vector<1x128x128xbf16>
    %24 = vector.shape_cast %23 : vector<1x128x128xbf16> to vector<128x128xbf16>
    %cst_21 = arith.constant dense<0.000000e+00> : vector<64x128xf32>
    %25 = tpu.matmul %22, %24, %cst_21 {dimension_numbers = #tpu.dot_dimension_numbers<[1], [0], [0], [1], [0, 0, 1, 1], [], []>} : vector<64x128xbf16>, vector<128x128xbf16>, vector<64x128xf32> -> vector<64x128xf32>
    %26 = arith.addf %18, %25 : vector<64x128xf32>
    %c0_22 = arith.constant 0 : index
    %c1_23 = arith.constant 1 : index
    %c0_24 = arith.constant 0 : index
    %c0_25 = arith.constant 0 : index
    %27 = vector.load %arg1[%c0_22, %c1_23, %c0_24, %c0_25] : memref<1x10x10x128xf32, #tpu.memory_space<vmem>>, vector<1x8x8x128xf32>
    %28 = vector.shape_cast %27 : vector<1x8x8x128xf32> to vector<8x8x128xf32>
    %29 = vector.shape_cast %28 : vector<8x8x128xf32> to vector<64x128xf32>
    %30 = arith.truncf %29 : vector<64x128xf32> to vector<64x128xbf16>
    %c3 = arith.constant 3 : index
    %c0_26 = arith.constant 0 : index
    %c0_27 = arith.constant 0 : index
    %31 = vector.load %arg2[%c3, %c0_26, %c0_27] : memref<9x128x128xbf16, #tpu.memory_space<vmem>>, vector<1x128x128xbf16>
    %32 = vector.shape_cast %31 : vector<1x128x128xbf16> to vector<128x128xbf16>
    %cst_28 = arith.constant dense<0.000000e+00> : vector<64x128xf32>
    %33 = tpu.matmul %30, %32, %cst_28 {dimension_numbers = #tpu.dot_dimension_numbers<[1], [0], [0], [1], [0, 0, 1, 1], [], []>} : vector<64x128xbf16>, vector<128x128xbf16>, vector<64x128xf32> -> vector<64x128xf32>
    %34 = arith.addf %26, %33 : vector<64x128xf32>
    %c0_29 = arith.constant 0 : index
    %c1_30 = arith.constant 1 : index
    %c1_31 = arith.constant 1 : index
    %c0_32 = arith.constant 0 : index
    %35 = vector.load %arg1[%c0_29, %c1_30, %c1_31, %c0_32] : memref<1x10x10x128xf32, #tpu.memory_space<vmem>>, vector<1x8x8x128xf32>
    %36 = vector.shape_cast %35 : vector<1x8x8x128xf32> to vector<8x8x128xf32>
    %37 = vector.shape_cast %36 : vector<8x8x128xf32> to vector<64x128xf32>
    %38 = arith.truncf %37 : vector<64x128xf32> to vector<64x128xbf16>
    %c4 = arith.constant 4 : index
    %c0_33 = arith.constant 0 : index
    %c0_34 = arith.constant 0 : index
    %39 = vector.load %arg2[%c4, %c0_33, %c0_34] : memref<9x128x128xbf16, #tpu.memory_space<vmem>>, vector<1x128x128xbf16>
    %40 = vector.shape_cast %39 : vector<1x128x128xbf16> to vector<128x128xbf16>
    %cst_35 = arith.constant dense<0.000000e+00> : vector<64x128xf32>
    %41 = tpu.matmul %38, %40, %cst_35 {dimension_numbers = #tpu.dot_dimension_numbers<[1], [0], [0], [1], [0, 0, 1, 1], [], []>} : vector<64x128xbf16>, vector<128x128xbf16>, vector<64x128xf32> -> vector<64x128xf32>
    %42 = arith.addf %34, %41 : vector<64x128xf32>
    %c0_36 = arith.constant 0 : index
    %c1_37 = arith.constant 1 : index
    %c2_38 = arith.constant 2 : index
    %c0_39 = arith.constant 0 : index
    %43 = vector.load %arg1[%c0_36, %c1_37, %c2_38, %c0_39] : memref<1x10x10x128xf32, #tpu.memory_space<vmem>>, vector<1x8x8x128xf32>
    %44 = vector.shape_cast %43 : vector<1x8x8x128xf32> to vector<8x8x128xf32>
    %45 = vector.shape_cast %44 : vector<8x8x128xf32> to vector<64x128xf32>
    %46 = arith.truncf %45 : vector<64x128xf32> to vector<64x128xbf16>
    %c5 = arith.constant 5 : index
    %c0_40 = arith.constant 0 : index
    %c0_41 = arith.constant 0 : index
    %47 = vector.load %arg2[%c5, %c0_40, %c0_41] : memref<9x128x128xbf16, #tpu.memory_space<vmem>>, vector<1x128x128xbf16>
    %48 = vector.shape_cast %47 : vector<1x128x128xbf16> to vector<128x128xbf16>
    %cst_42 = arith.constant dense<0.000000e+00> : vector<64x128xf32>
    %49 = tpu.matmul %46, %48, %cst_42 {dimension_numbers = #tpu.dot_dimension_numbers<[1], [0], [0], [1], [0, 0, 1, 1], [], []>} : vector<64x128xbf16>, vector<128x128xbf16>, vector<64x128xf32> -> vector<64x128xf32>
    %50 = arith.addf %42, %49 : vector<64x128xf32>
    %c0_43 = arith.constant 0 : index
    %c2_44 = arith.constant 2 : index
    %c0_45 = arith.constant 0 : index
    %c0_46 = arith.constant 0 : index
    %51 = vector.load %arg1[%c0_43, %c2_44, %c0_45, %c0_46] : memref<1x10x10x128xf32, #tpu.memory_space<vmem>>, vector<1x8x8x128xf32>
    %52 = vector.shape_cast %51 : vector<1x8x8x128xf32> to vector<8x8x128xf32>
    %53 = vector.shape_cast %52 : vector<8x8x128xf32> to vector<64x128xf32>
    %54 = arith.truncf %53 : vector<64x128xf32> to vector<64x128xbf16>
    %c6 = arith.constant 6 : index
    %c0_47 = arith.constant 0 : index
    %c0_48 = arith.constant 0 : index
    %55 = vector.load %arg2[%c6, %c0_47, %c0_48] : memref<9x128x128xbf16, #tpu.memory_space<vmem>>, vector<1x128x128xbf16>
    %56 = vector.shape_cast %55 : vector<1x128x128xbf16> to vector<128x128xbf16>
    %cst_49 = arith.constant dense<0.000000e+00> : vector<64x128xf32>
    %57 = tpu.matmul %54, %56, %cst_49 {dimension_numbers = #tpu.dot_dimension_numbers<[1], [0], [0], [1], [0, 0, 1, 1], [], []>} : vector<64x128xbf16>, vector<128x128xbf16>, vector<64x128xf32> -> vector<64x128xf32>
    %58 = arith.addf %50, %57 : vector<64x128xf32>
    %c0_50 = arith.constant 0 : index
    %c2_51 = arith.constant 2 : index
    %c1_52 = arith.constant 1 : index
    %c0_53 = arith.constant 0 : index
    %59 = vector.load %arg1[%c0_50, %c2_51, %c1_52, %c0_53] : memref<1x10x10x128xf32, #tpu.memory_space<vmem>>, vector<1x8x8x128xf32>
    %60 = vector.shape_cast %59 : vector<1x8x8x128xf32> to vector<8x8x128xf32>
    %61 = vector.shape_cast %60 : vector<8x8x128xf32> to vector<64x128xf32>
    %62 = arith.truncf %61 : vector<64x128xf32> to vector<64x128xbf16>
    %c7 = arith.constant 7 : index
    %c0_54 = arith.constant 0 : index
    %c0_55 = arith.constant 0 : index
    %63 = vector.load %arg2[%c7, %c0_54, %c0_55] : memref<9x128x128xbf16, #tpu.memory_space<vmem>>, vector<1x128x128xbf16>
    %64 = vector.shape_cast %63 : vector<1x128x128xbf16> to vector<128x128xbf16>
    %cst_56 = arith.constant dense<0.000000e+00> : vector<64x128xf32>
    %65 = tpu.matmul %62, %64, %cst_56 {dimension_numbers = #tpu.dot_dimension_numbers<[1], [0], [0], [1], [0, 0, 1, 1], [], []>} : vector<64x128xbf16>, vector<128x128xbf16>, vector<64x128xf32> -> vector<64x128xf32>
    %66 = arith.addf %58, %65 : vector<64x128xf32>
    %c0_57 = arith.constant 0 : index
    %c2_58 = arith.constant 2 : index
    %c2_59 = arith.constant 2 : index
    %c0_60 = arith.constant 0 : index
    %67 = vector.load %arg1[%c0_57, %c2_58, %c2_59, %c0_60] : memref<1x10x10x128xf32, #tpu.memory_space<vmem>>, vector<1x8x8x128xf32>
    %68 = vector.shape_cast %67 : vector<1x8x8x128xf32> to vector<8x8x128xf32>
    %69 = vector.shape_cast %68 : vector<8x8x128xf32> to vector<64x128xf32>
    %70 = arith.truncf %69 : vector<64x128xf32> to vector<64x128xbf16>
    %c8 = arith.constant 8 : index
    %c0_61 = arith.constant 0 : index
    %c0_62 = arith.constant 0 : index
    %71 = vector.load %arg2[%c8, %c0_61, %c0_62] : memref<9x128x128xbf16, #tpu.memory_space<vmem>>, vector<1x128x128xbf16>
    %72 = vector.shape_cast %71 : vector<1x128x128xbf16> to vector<128x128xbf16>
    %cst_63 = arith.constant dense<0.000000e+00> : vector<64x128xf32>
    %73 = tpu.matmul %70, %72, %cst_63 {dimension_numbers = #tpu.dot_dimension_numbers<[1], [0], [0], [1], [0, 0, 1, 1], [], []>} : vector<64x128xbf16>, vector<128x128xbf16>, vector<64x128xf32> -> vector<64x128xf32>
    %74 = arith.addf %66, %73 : vector<64x128xf32>
    %cst_64 = arith.constant 0.000000e+00 : f32
    %75 = vector.broadcast %cst_64 : f32 to vector<64x128xf32>
    %76 = arith.maximumf %74, %75 : vector<64x128xf32>
    %77 = vector.shape_cast %76 : vector<64x128xf32> to vector<8x8x128xf32>
    %c0_65 = arith.constant 0 : index
    %c0_66 = arith.constant 0 : index
    %c0_67 = arith.constant 0 : index
    %c0_68 = arith.constant 0 : index
    %78 = vector.load %arg4[%c0_65, %c0_66, %c0_67, %c0_68] : memref<1x8x8x128xf32, #tpu.memory_space<vmem>>, vector<1x8x8x128xf32>
    %79 = vector.shape_cast %78 : vector<1x8x8x128xf32> to vector<8x8x128xf32>
    %80 = vector.shape_cast %77 : vector<8x8x128xf32> to vector<1x8x8x128xf32>
    tpu.vector_store %arg4[%c0_65, %c0_66, %c0_67, %c0_68], %80 {strides = array<i32>} : memref<1x8x8x128xf32, #tpu.memory_space<vmem>>, vector<1x8x8x128xf32>,
    return
  }
  func.func @transform_0(%arg0: i32) -> (i32, i32, i32, i32) {
    %c0_i32 = arith.constant 0 : i32
    %c0_i32_0 = arith.constant 0 : i32
    %c0_i32_1 = arith.constant 0 : i32
    %c0_i32_2 = arith.constant 0 : i32
    return %arg0, %c0_i32, %c0_i32_0, %c0_i32_1 : i32, i32, i32, i32
  }
  func.func @transform_1(%arg0: i32) -> (i32, i32, i32) {
    %c0_i32 = arith.constant 0 : i32
    %c0_i32_0 = arith.constant 0 : i32
    %c0_i32_1 = arith.constant 0 : i32
    %c0_i32_2 = arith.constant 0 : i32
    return %c0_i32, %c0_i32_0, %c0_i32_1 : i32, i32, i32
  }
  func.func @transform_2(%arg0: i32) -> (i32, i32) {
    %c0_i32 = arith.constant 0 : i32
    %c0_i32_0 = arith.constant 0 : i32
    %c0_i32_1 = arith.constant 0 : i32
    return %c0_i32, %c0_i32_0 : i32, i32
  }
  func.func @transform_3(%arg0: i32) -> (i32, i32, i32, i32) {
    %c0_i32 = arith.constant 0 : i32
    %c0_i32_0 = arith.constant 0 : i32
    %c0_i32_1 = arith.constant 0 : i32
    %c0_i32_2 = arith.constant 0 : i32
    return %arg0, %c0_i32, %c0_i32_0, %c0_i32_1 : i32, i32, i32, i32
  }
}

module attributes {stable_mosaic.version = 11 : i64} {
  func.func @_maxpool2x2_kernel(%arg0: i32, %arg1: memref<1x8x4x256xf32, #tpu.memory_space<vmem>>, %arg2: memref<1x4x4x128xf32, #tpu.memory_space<vmem>>) attributes {dimension_semantics = [#tpu.dimension_semantics<parallel>], iteration_bounds = array<i64: 2>, scalar_prefetch = 0 : i64, scratch_operands = 0 : i64, tpu.core_type = #tpu.core_type<tc>, window_params = [{transform_indices = @transform_0, window_bounds = array<i64: 1, 8, 4, 256>}, {transform_indices = @transform_1, window_bounds = array<i64: 1, 4, 4, 128>}]} {
    %c0 = arith.constant 0 : index
    %c0_0 = arith.constant 0 : index
    %c0_1 = arith.constant 0 : index
    %c0_2 = arith.constant 0 : index
    %0 = vector.load %arg1[%c0, %c0_0, %c0_1, %c0_2] : memref<1x8x4x256xf32, #tpu.memory_space<vmem>>, vector<1x1x4x256xf32>
    %1 = vector.shape_cast %0 : vector<1x1x4x256xf32> to vector<4x256xf32>
    %c0_3 = arith.constant 0 : index
    %c1 = arith.constant 1 : index
    %c0_4 = arith.constant 0 : index
    %c0_5 = arith.constant 0 : index
    %2 = vector.load %arg1[%c0_3, %c1, %c0_4, %c0_5] : memref<1x8x4x256xf32, #tpu.memory_space<vmem>>, vector<1x1x4x256xf32>
    %3 = vector.shape_cast %2 : vector<1x1x4x256xf32> to vector<4x256xf32>
    %4 = arith.maximumf %1, %3 : vector<4x256xf32>
    %5 = vector.extract_strided_slice %4 {offsets = [0, 0], sizes = [4, 128], strides = [1, 1]} : vector<4x256xf32> to vector<4x128xf32>
    %6 = vector.extract_strided_slice %4 {offsets = [0, 128], sizes = [4, 128], strides = [1, 1]} : vector<4x256xf32> to vector<4x128xf32>
    %7 = arith.maximumf %5, %6 : vector<4x128xf32>
    %c0_6 = arith.constant 0 : index
    %c0_7 = arith.constant 0 : index
    %c0_8 = arith.constant 0 : index
    %c0_9 = arith.constant 0 : index
    %8 = vector.load %arg2[%c0_6, %c0_7, %c0_8, %c0_9] : memref<1x4x4x128xf32, #tpu.memory_space<vmem>>, vector<1x1x4x128xf32>
    %9 = vector.shape_cast %8 : vector<1x1x4x128xf32> to vector<4x128xf32>
    %10 = vector.shape_cast %7 : vector<4x128xf32> to vector<1x1x4x128xf32>
    tpu.vector_store %arg2[%c0_6, %c0_7, %c0_8, %c0_9], %10 {strides = array<i32>} : memref<1x4x4x128xf32, #tpu.memory_space<vmem>>, vector<1x1x4x128xf32>,
    %c0_10 = arith.constant 0 : index
    %c2 = arith.constant 2 : index
    %c0_11 = arith.constant 0 : index
    %c0_12 = arith.constant 0 : index
    %11 = vector.load %arg1[%c0_10, %c2, %c0_11, %c0_12] : memref<1x8x4x256xf32, #tpu.memory_space<vmem>>, vector<1x1x4x256xf32>
    %12 = vector.shape_cast %11 : vector<1x1x4x256xf32> to vector<4x256xf32>
    %c0_13 = arith.constant 0 : index
    %c3 = arith.constant 3 : index
    %c0_14 = arith.constant 0 : index
    %c0_15 = arith.constant 0 : index
    %13 = vector.load %arg1[%c0_13, %c3, %c0_14, %c0_15] : memref<1x8x4x256xf32, #tpu.memory_space<vmem>>, vector<1x1x4x256xf32>
    %14 = vector.shape_cast %13 : vector<1x1x4x256xf32> to vector<4x256xf32>
    %15 = arith.maximumf %12, %14 : vector<4x256xf32>
    %16 = vector.extract_strided_slice %15 {offsets = [0, 0], sizes = [4, 128], strides = [1, 1]} : vector<4x256xf32> to vector<4x128xf32>
    %17 = vector.extract_strided_slice %15 {offsets = [0, 128], sizes = [4, 128], strides = [1, 1]} : vector<4x256xf32> to vector<4x128xf32>
    %18 = arith.maximumf %16, %17 : vector<4x128xf32>
    %c0_16 = arith.constant 0 : index
    %c1_17 = arith.constant 1 : index
    %c0_18 = arith.constant 0 : index
    %c0_19 = arith.constant 0 : index
    %19 = vector.load %arg2[%c0_16, %c1_17, %c0_18, %c0_19] : memref<1x4x4x128xf32, #tpu.memory_space<vmem>>, vector<1x1x4x128xf32>
    %20 = vector.shape_cast %19 : vector<1x1x4x128xf32> to vector<4x128xf32>
    %21 = vector.shape_cast %18 : vector<4x128xf32> to vector<1x1x4x128xf32>
    tpu.vector_store %arg2[%c0_16, %c1_17, %c0_18, %c0_19], %21 {strides = array<i32>} : memref<1x4x4x128xf32, #tpu.memory_space<vmem>>, vector<1x1x4x128xf32>,
    %c0_20 = arith.constant 0 : index
    %c4 = arith.constant 4 : index
    %c0_21 = arith.constant 0 : index
    %c0_22 = arith.constant 0 : index
    %22 = vector.load %arg1[%c0_20, %c4, %c0_21, %c0_22] : memref<1x8x4x256xf32, #tpu.memory_space<vmem>>, vector<1x1x4x256xf32>
    %23 = vector.shape_cast %22 : vector<1x1x4x256xf32> to vector<4x256xf32>
    %c0_23 = arith.constant 0 : index
    %c5 = arith.constant 5 : index
    %c0_24 = arith.constant 0 : index
    %c0_25 = arith.constant 0 : index
    %24 = vector.load %arg1[%c0_23, %c5, %c0_24, %c0_25] : memref<1x8x4x256xf32, #tpu.memory_space<vmem>>, vector<1x1x4x256xf32>
    %25 = vector.shape_cast %24 : vector<1x1x4x256xf32> to vector<4x256xf32>
    %26 = arith.maximumf %23, %25 : vector<4x256xf32>
    %27 = vector.extract_strided_slice %26 {offsets = [0, 0], sizes = [4, 128], strides = [1, 1]} : vector<4x256xf32> to vector<4x128xf32>
    %28 = vector.extract_strided_slice %26 {offsets = [0, 128], sizes = [4, 128], strides = [1, 1]} : vector<4x256xf32> to vector<4x128xf32>
    %29 = arith.maximumf %27, %28 : vector<4x128xf32>
    %c0_26 = arith.constant 0 : index
    %c2_27 = arith.constant 2 : index
    %c0_28 = arith.constant 0 : index
    %c0_29 = arith.constant 0 : index
    %30 = vector.load %arg2[%c0_26, %c2_27, %c0_28, %c0_29] : memref<1x4x4x128xf32, #tpu.memory_space<vmem>>, vector<1x1x4x128xf32>
    %31 = vector.shape_cast %30 : vector<1x1x4x128xf32> to vector<4x128xf32>
    %32 = vector.shape_cast %29 : vector<4x128xf32> to vector<1x1x4x128xf32>
    tpu.vector_store %arg2[%c0_26, %c2_27, %c0_28, %c0_29], %32 {strides = array<i32>} : memref<1x4x4x128xf32, #tpu.memory_space<vmem>>, vector<1x1x4x128xf32>,
    %c0_30 = arith.constant 0 : index
    %c6 = arith.constant 6 : index
    %c0_31 = arith.constant 0 : index
    %c0_32 = arith.constant 0 : index
    %33 = vector.load %arg1[%c0_30, %c6, %c0_31, %c0_32] : memref<1x8x4x256xf32, #tpu.memory_space<vmem>>, vector<1x1x4x256xf32>
    %34 = vector.shape_cast %33 : vector<1x1x4x256xf32> to vector<4x256xf32>
    %c0_33 = arith.constant 0 : index
    %c7 = arith.constant 7 : index
    %c0_34 = arith.constant 0 : index
    %c0_35 = arith.constant 0 : index
    %35 = vector.load %arg1[%c0_33, %c7, %c0_34, %c0_35] : memref<1x8x4x256xf32, #tpu.memory_space<vmem>>, vector<1x1x4x256xf32>
    %36 = vector.shape_cast %35 : vector<1x1x4x256xf32> to vector<4x256xf32>
    %37 = arith.maximumf %34, %36 : vector<4x256xf32>
    %38 = vector.extract_strided_slice %37 {offsets = [0, 0], sizes = [4, 128], strides = [1, 1]} : vector<4x256xf32> to vector<4x128xf32>
    %39 = vector.extract_strided_slice %37 {offsets = [0, 128], sizes = [4, 128], strides = [1, 1]} : vector<4x256xf32> to vector<4x128xf32>
    %40 = arith.maximumf %38, %39 : vector<4x128xf32>
    %c0_36 = arith.constant 0 : index
    %c3_37 = arith.constant 3 : index
    %c0_38 = arith.constant 0 : index
    %c0_39 = arith.constant 0 : index
    %41 = vector.load %arg2[%c0_36, %c3_37, %c0_38, %c0_39] : memref<1x4x4x128xf32, #tpu.memory_space<vmem>>, vector<1x1x4x128xf32>
    %42 = vector.shape_cast %41 : vector<1x1x4x128xf32> to vector<4x128xf32>
    %43 = vector.shape_cast %40 : vector<4x128xf32> to vector<1x1x4x128xf32>
    tpu.vector_store %arg2[%c0_36, %c3_37, %c0_38, %c0_39], %43 {strides = array<i32>} : memref<1x4x4x128xf32, #tpu.memory_space<vmem>>, vector<1x1x4x128xf32>,
    return
  }
  func.func @transform_0(%arg0: i32) -> (i32, i32, i32, i32) {
    %c0_i32 = arith.constant 0 : i32
    %c0_i32_0 = arith.constant 0 : i32
    %c0_i32_1 = arith.constant 0 : i32
    %c0_i32_2 = arith.constant 0 : i32
    return %arg0, %c0_i32, %c0_i32_0, %c0_i32_1 : i32, i32, i32, i32
  }
  func.func @transform_1(%arg0: i32) -> (i32, i32, i32, i32) {
    %c0_i32 = arith.constant 0 : i32
    %c0_i32_0 = arith.constant 0 : i32
    %c0_i32_1 = arith.constant 0 : i32
    %c0_i32_2 = arith.constant 0 : i32
    return %arg0, %c0_i32, %c0_i32_0, %c0_i32_1 : i32, i32, i32, i32
  }
}

module attributes {stable_mosaic.version = 11 : i64} {
  func.func @_conv3x3_relu_kernel(%arg0: i32, %arg1: memref<1x6x6x128xf32, #tpu.memory_space<vmem>>, %arg2: memref<9x128x256xbf16, #tpu.memory_space<vmem>>, %arg3: memref<1x256xf32, #tpu.memory_space<vmem>>, %arg4: memref<1x4x4x256xf32, #tpu.memory_space<vmem>>) attributes {dimension_semantics = [#tpu.dimension_semantics<parallel>], iteration_bounds = array<i64: 2>, scalar_prefetch = 0 : i64, scratch_operands = 0 : i64, tpu.core_type = #tpu.core_type<tc>, window_params = [{transform_indices = @transform_0, window_bounds = array<i64: 1, 6, 6, 128>}, {pipeline_mode = #tpu.pipeline_mode<synchronous>, transform_indices = @transform_1, window_bounds = array<i64: 9, 128, 256>}, {pipeline_mode = #tpu.pipeline_mode<synchronous>, transform_indices = @transform_2, window_bounds = array<i64: 1, 256>}, {transform_indices = @transform_3, window_bounds = array<i64: 1, 4, 4, 256>}]} {
    %c0 = arith.constant 0 : index
    %c0_0 = arith.constant 0 : index
    %0 = vector.load %arg3[%c0, %c0_0] : memref<1x256xf32, #tpu.memory_space<vmem>>, vector<1x256xf32>
    %1 = vector.shape_cast %0 : vector<1x256xf32> to vector<1x256xf32>
    %2 = vector.broadcast %1 : vector<1x256xf32> to vector<16x256xf32>
    %c0_1 = arith.constant 0 : index
    %c0_2 = arith.constant 0 : index
    %c0_3 = arith.constant 0 : index
    %c0_4 = arith.constant 0 : index
    %3 = vector.load %arg1[%c0_1, %c0_2, %c0_3, %c0_4] : memref<1x6x6x128xf32, #tpu.memory_space<vmem>>, vector<1x4x4x128xf32>
    %4 = vector.shape_cast %3 : vector<1x4x4x128xf32> to vector<4x4x128xf32>
    %5 = vector.shape_cast %4 : vector<4x4x128xf32> to vector<16x128xf32>
    %6 = arith.truncf %5 : vector<16x128xf32> to vector<16x128xbf16>
    %c0_5 = arith.constant 0 : index
    %c0_6 = arith.constant 0 : index
    %c0_7 = arith.constant 0 : index
    %7 = vector.load %arg2[%c0_5, %c0_6, %c0_7] : memref<9x128x256xbf16, #tpu.memory_space<vmem>>, vector<1x128x256xbf16>
    %8 = vector.shape_cast %7 : vector<1x128x256xbf16> to vector<128x256xbf16>
    %cst = arith.constant dense<0.000000e+00> : vector<16x256xf32>
    %9 = tpu.matmul %6, %8, %cst {dimension_numbers = #tpu.dot_dimension_numbers<[1], [0], [0], [1], [0, 0, 1, 1], [], []>} : vector<16x128xbf16>, vector<128x256xbf16>, vector<16x256xf32> -> vector<16x256xf32>
    %10 = arith.addf %2, %9 : vector<16x256xf32>
    %c0_8 = arith.constant 0 : index
    %c0_9 = arith.constant 0 : index
    %c1 = arith.constant 1 : index
    %c0_10 = arith.constant 0 : index
    %11 = vector.load %arg1[%c0_8, %c0_9, %c1, %c0_10] : memref<1x6x6x128xf32, #tpu.memory_space<vmem>>, vector<1x4x4x128xf32>
    %12 = vector.shape_cast %11 : vector<1x4x4x128xf32> to vector<4x4x128xf32>
    %13 = vector.shape_cast %12 : vector<4x4x128xf32> to vector<16x128xf32>
    %14 = arith.truncf %13 : vector<16x128xf32> to vector<16x128xbf16>
    %c1_11 = arith.constant 1 : index
    %c0_12 = arith.constant 0 : index
    %c0_13 = arith.constant 0 : index
    %15 = vector.load %arg2[%c1_11, %c0_12, %c0_13] : memref<9x128x256xbf16, #tpu.memory_space<vmem>>, vector<1x128x256xbf16>
    %16 = vector.shape_cast %15 : vector<1x128x256xbf16> to vector<128x256xbf16>
    %cst_14 = arith.constant dense<0.000000e+00> : vector<16x256xf32>
    %17 = tpu.matmul %14, %16, %cst_14 {dimension_numbers = #tpu.dot_dimension_numbers<[1], [0], [0], [1], [0, 0, 1, 1], [], []>} : vector<16x128xbf16>, vector<128x256xbf16>, vector<16x256xf32> -> vector<16x256xf32>
    %18 = arith.addf %10, %17 : vector<16x256xf32>
    %c0_15 = arith.constant 0 : index
    %c0_16 = arith.constant 0 : index
    %c2 = arith.constant 2 : index
    %c0_17 = arith.constant 0 : index
    %19 = vector.load %arg1[%c0_15, %c0_16, %c2, %c0_17] : memref<1x6x6x128xf32, #tpu.memory_space<vmem>>, vector<1x4x4x128xf32>
    %20 = vector.shape_cast %19 : vector<1x4x4x128xf32> to vector<4x4x128xf32>
    %21 = vector.shape_cast %20 : vector<4x4x128xf32> to vector<16x128xf32>
    %22 = arith.truncf %21 : vector<16x128xf32> to vector<16x128xbf16>
    %c2_18 = arith.constant 2 : index
    %c0_19 = arith.constant 0 : index
    %c0_20 = arith.constant 0 : index
    %23 = vector.load %arg2[%c2_18, %c0_19, %c0_20] : memref<9x128x256xbf16, #tpu.memory_space<vmem>>, vector<1x128x256xbf16>
    %24 = vector.shape_cast %23 : vector<1x128x256xbf16> to vector<128x256xbf16>
    %cst_21 = arith.constant dense<0.000000e+00> : vector<16x256xf32>
    %25 = tpu.matmul %22, %24, %cst_21 {dimension_numbers = #tpu.dot_dimension_numbers<[1], [0], [0], [1], [0, 0, 1, 1], [], []>} : vector<16x128xbf16>, vector<128x256xbf16>, vector<16x256xf32> -> vector<16x256xf32>
    %26 = arith.addf %18, %25 : vector<16x256xf32>
    %c0_22 = arith.constant 0 : index
    %c1_23 = arith.constant 1 : index
    %c0_24 = arith.constant 0 : index
    %c0_25 = arith.constant 0 : index
    %27 = vector.load %arg1[%c0_22, %c1_23, %c0_24, %c0_25] : memref<1x6x6x128xf32, #tpu.memory_space<vmem>>, vector<1x4x4x128xf32>
    %28 = vector.shape_cast %27 : vector<1x4x4x128xf32> to vector<4x4x128xf32>
    %29 = vector.shape_cast %28 : vector<4x4x128xf32> to vector<16x128xf32>
    %30 = arith.truncf %29 : vector<16x128xf32> to vector<16x128xbf16>
    %c3 = arith.constant 3 : index
    %c0_26 = arith.constant 0 : index
    %c0_27 = arith.constant 0 : index
    %31 = vector.load %arg2[%c3, %c0_26, %c0_27] : memref<9x128x256xbf16, #tpu.memory_space<vmem>>, vector<1x128x256xbf16>
    %32 = vector.shape_cast %31 : vector<1x128x256xbf16> to vector<128x256xbf16>
    %cst_28 = arith.constant dense<0.000000e+00> : vector<16x256xf32>
    %33 = tpu.matmul %30, %32, %cst_28 {dimension_numbers = #tpu.dot_dimension_numbers<[1], [0], [0], [1], [0, 0, 1, 1], [], []>} : vector<16x128xbf16>, vector<128x256xbf16>, vector<16x256xf32> -> vector<16x256xf32>
    %34 = arith.addf %26, %33 : vector<16x256xf32>
    %c0_29 = arith.constant 0 : index
    %c1_30 = arith.constant 1 : index
    %c1_31 = arith.constant 1 : index
    %c0_32 = arith.constant 0 : index
    %35 = vector.load %arg1[%c0_29, %c1_30, %c1_31, %c0_32] : memref<1x6x6x128xf32, #tpu.memory_space<vmem>>, vector<1x4x4x128xf32>
    %36 = vector.shape_cast %35 : vector<1x4x4x128xf32> to vector<4x4x128xf32>
    %37 = vector.shape_cast %36 : vector<4x4x128xf32> to vector<16x128xf32>
    %38 = arith.truncf %37 : vector<16x128xf32> to vector<16x128xbf16>
    %c4 = arith.constant 4 : index
    %c0_33 = arith.constant 0 : index
    %c0_34 = arith.constant 0 : index
    %39 = vector.load %arg2[%c4, %c0_33, %c0_34] : memref<9x128x256xbf16, #tpu.memory_space<vmem>>, vector<1x128x256xbf16>
    %40 = vector.shape_cast %39 : vector<1x128x256xbf16> to vector<128x256xbf16>
    %cst_35 = arith.constant dense<0.000000e+00> : vector<16x256xf32>
    %41 = tpu.matmul %38, %40, %cst_35 {dimension_numbers = #tpu.dot_dimension_numbers<[1], [0], [0], [1], [0, 0, 1, 1], [], []>} : vector<16x128xbf16>, vector<128x256xbf16>, vector<16x256xf32> -> vector<16x256xf32>
    %42 = arith.addf %34, %41 : vector<16x256xf32>
    %c0_36 = arith.constant 0 : index
    %c1_37 = arith.constant 1 : index
    %c2_38 = arith.constant 2 : index
    %c0_39 = arith.constant 0 : index
    %43 = vector.load %arg1[%c0_36, %c1_37, %c2_38, %c0_39] : memref<1x6x6x128xf32, #tpu.memory_space<vmem>>, vector<1x4x4x128xf32>
    %44 = vector.shape_cast %43 : vector<1x4x4x128xf32> to vector<4x4x128xf32>
    %45 = vector.shape_cast %44 : vector<4x4x128xf32> to vector<16x128xf32>
    %46 = arith.truncf %45 : vector<16x128xf32> to vector<16x128xbf16>
    %c5 = arith.constant 5 : index
    %c0_40 = arith.constant 0 : index
    %c0_41 = arith.constant 0 : index
    %47 = vector.load %arg2[%c5, %c0_40, %c0_41] : memref<9x128x256xbf16, #tpu.memory_space<vmem>>, vector<1x128x256xbf16>
    %48 = vector.shape_cast %47 : vector<1x128x256xbf16> to vector<128x256xbf16>
    %cst_42 = arith.constant dense<0.000000e+00> : vector<16x256xf32>
    %49 = tpu.matmul %46, %48, %cst_42 {dimension_numbers = #tpu.dot_dimension_numbers<[1], [0], [0], [1], [0, 0, 1, 1], [], []>} : vector<16x128xbf16>, vector<128x256xbf16>, vector<16x256xf32> -> vector<16x256xf32>
    %50 = arith.addf %42, %49 : vector<16x256xf32>
    %c0_43 = arith.constant 0 : index
    %c2_44 = arith.constant 2 : index
    %c0_45 = arith.constant 0 : index
    %c0_46 = arith.constant 0 : index
    %51 = vector.load %arg1[%c0_43, %c2_44, %c0_45, %c0_46] : memref<1x6x6x128xf32, #tpu.memory_space<vmem>>, vector<1x4x4x128xf32>
    %52 = vector.shape_cast %51 : vector<1x4x4x128xf32> to vector<4x4x128xf32>
    %53 = vector.shape_cast %52 : vector<4x4x128xf32> to vector<16x128xf32>
    %54 = arith.truncf %53 : vector<16x128xf32> to vector<16x128xbf16>
    %c6 = arith.constant 6 : index
    %c0_47 = arith.constant 0 : index
    %c0_48 = arith.constant 0 : index
    %55 = vector.load %arg2[%c6, %c0_47, %c0_48] : memref<9x128x256xbf16, #tpu.memory_space<vmem>>, vector<1x128x256xbf16>
    %56 = vector.shape_cast %55 : vector<1x128x256xbf16> to vector<128x256xbf16>
    %cst_49 = arith.constant dense<0.000000e+00> : vector<16x256xf32>
    %57 = tpu.matmul %54, %56, %cst_49 {dimension_numbers = #tpu.dot_dimension_numbers<[1], [0], [0], [1], [0, 0, 1, 1], [], []>} : vector<16x128xbf16>, vector<128x256xbf16>, vector<16x256xf32> -> vector<16x256xf32>
    %58 = arith.addf %50, %57 : vector<16x256xf32>
    %c0_50 = arith.constant 0 : index
    %c2_51 = arith.constant 2 : index
    %c1_52 = arith.constant 1 : index
    %c0_53 = arith.constant 0 : index
    %59 = vector.load %arg1[%c0_50, %c2_51, %c1_52, %c0_53] : memref<1x6x6x128xf32, #tpu.memory_space<vmem>>, vector<1x4x4x128xf32>
    %60 = vector.shape_cast %59 : vector<1x4x4x128xf32> to vector<4x4x128xf32>
    %61 = vector.shape_cast %60 : vector<4x4x128xf32> to vector<16x128xf32>
    %62 = arith.truncf %61 : vector<16x128xf32> to vector<16x128xbf16>
    %c7 = arith.constant 7 : index
    %c0_54 = arith.constant 0 : index
    %c0_55 = arith.constant 0 : index
    %63 = vector.load %arg2[%c7, %c0_54, %c0_55] : memref<9x128x256xbf16, #tpu.memory_space<vmem>>, vector<1x128x256xbf16>
    %64 = vector.shape_cast %63 : vector<1x128x256xbf16> to vector<128x256xbf16>
    %cst_56 = arith.constant dense<0.000000e+00> : vector<16x256xf32>
    %65 = tpu.matmul %62, %64, %cst_56 {dimension_numbers = #tpu.dot_dimension_numbers<[1], [0], [0], [1], [0, 0, 1, 1], [], []>} : vector<16x128xbf16>, vector<128x256xbf16>, vector<16x256xf32> -> vector<16x256xf32>
    %66 = arith.addf %58, %65 : vector<16x256xf32>
    %c0_57 = arith.constant 0 : index
    %c2_58 = arith.constant 2 : index
    %c2_59 = arith.constant 2 : index
    %c0_60 = arith.constant 0 : index
    %67 = vector.load %arg1[%c0_57, %c2_58, %c2_59, %c0_60] : memref<1x6x6x128xf32, #tpu.memory_space<vmem>>, vector<1x4x4x128xf32>
    %68 = vector.shape_cast %67 : vector<1x4x4x128xf32> to vector<4x4x128xf32>
    %69 = vector.shape_cast %68 : vector<4x4x128xf32> to vector<16x128xf32>
    %70 = arith.truncf %69 : vector<16x128xf32> to vector<16x128xbf16>
    %c8 = arith.constant 8 : index
    %c0_61 = arith.constant 0 : index
    %c0_62 = arith.constant 0 : index
    %71 = vector.load %arg2[%c8, %c0_61, %c0_62] : memref<9x128x256xbf16, #tpu.memory_space<vmem>>, vector<1x128x256xbf16>
    %72 = vector.shape_cast %71 : vector<1x128x256xbf16> to vector<128x256xbf16>
    %cst_63 = arith.constant dense<0.000000e+00> : vector<16x256xf32>
    %73 = tpu.matmul %70, %72, %cst_63 {dimension_numbers = #tpu.dot_dimension_numbers<[1], [0], [0], [1], [0, 0, 1, 1], [], []>} : vector<16x128xbf16>, vector<128x256xbf16>, vector<16x256xf32> -> vector<16x256xf32>
    %74 = arith.addf %66, %73 : vector<16x256xf32>
    %cst_64 = arith.constant 0.000000e+00 : f32
    %75 = vector.broadcast %cst_64 : f32 to vector<16x256xf32>
    %76 = arith.maximumf %74, %75 : vector<16x256xf32>
    %77 = vector.shape_cast %76 : vector<16x256xf32> to vector<4x4x256xf32>
    %c0_65 = arith.constant 0 : index
    %c0_66 = arith.constant 0 : index
    %c0_67 = arith.constant 0 : index
    %c0_68 = arith.constant 0 : index
    %78 = vector.load %arg4[%c0_65, %c0_66, %c0_67, %c0_68] : memref<1x4x4x256xf32, #tpu.memory_space<vmem>>, vector<1x4x4x256xf32>
    %79 = vector.shape_cast %78 : vector<1x4x4x256xf32> to vector<4x4x256xf32>
    %80 = vector.shape_cast %77 : vector<4x4x256xf32> to vector<1x4x4x256xf32>
    tpu.vector_store %arg4[%c0_65, %c0_66, %c0_67, %c0_68], %80 {strides = array<i32>} : memref<1x4x4x256xf32, #tpu.memory_space<vmem>>, vector<1x4x4x256xf32>,
    return
  }
  func.func @transform_0(%arg0: i32) -> (i32, i32, i32, i32) {
    %c0_i32 = arith.constant 0 : i32
    %c0_i32_0 = arith.constant 0 : i32
    %c0_i32_1 = arith.constant 0 : i32
    %c0_i32_2 = arith.constant 0 : i32
    return %arg0, %c0_i32, %c0_i32_0, %c0_i32_1 : i32, i32, i32, i32
  }
  func.func @transform_1(%arg0: i32) -> (i32, i32, i32) {
    %c0_i32 = arith.constant 0 : i32
    %c0_i32_0 = arith.constant 0 : i32
    %c0_i32_1 = arith.constant 0 : i32
    %c0_i32_2 = arith.constant 0 : i32
    return %c0_i32, %c0_i32_0, %c0_i32_1 : i32, i32, i32
  }
  func.func @transform_2(%arg0: i32) -> (i32, i32) {
    %c0_i32 = arith.constant 0 : i32
    %c0_i32_0 = arith.constant 0 : i32
    %c0_i32_1 = arith.constant 0 : i32
    return %c0_i32, %c0_i32_0 : i32, i32
  }
  func.func @transform_3(%arg0: i32) -> (i32, i32, i32, i32) {
    %c0_i32 = arith.constant 0 : i32
    %c0_i32_0 = arith.constant 0 : i32
    %c0_i32_1 = arith.constant 0 : i32
    %c0_i32_2 = arith.constant 0 : i32
    return %arg0, %c0_i32, %c0_i32_0, %c0_i32_1 : i32, i32, i32, i32
  }
}

</mosaic_0001>

<llo_original>
// kernel: feature_extractor_pallas.9
$region0: #{feature_extractor_pallas.9}
  #allocation0 [shape = 'u32[]', space=smem, size = 0x4, offset = 0x4, fixed_abs, tag = 'smem constant byte address 0x4 - core index']
  #allocation1 [shape = 'u32[72,128]{1,0:T(1,128)}', space=vmem, size = 0x9000, scoped, tag = 'internal scratch']
  %s0 = inlined_call_operand.vmem [shape: f32[2,16,8,128], index: 0, kind: input, shape index: {}]
  %s1 = inlined_call_operand.vmem [shape: f32[2,8,8,64], index: 1, kind: output, shape index: {}]
  %s2 = sld [smem:[#allocation0]]
  $region37: #{feature_extractor_pallas.9} parent=0
    _
  %s4 = ssub.s32 1, %s2
  %s5 = scalar_select 0, %s4, %s2
  loop: start=0, step=1, limit=4
  $region2: #{feature_extractor_pallas.9} parent=0 // loop_pre_header
    _
  $region3: #{feature_extractor_pallas.9} parent=0 // loop_header
    %s7 = sphi 0, %s11
    %p8 = scmp.ge.s32.totalorder %s7, 4
    %s17 = sphi 0, %s19
    %s20 = sphi 0, %s17
    %s21 = sphi 0, %s20
    %s37 = sphi 0, %s21
    %s43 = sphi 0, %s45
    %s46 = sphi 0, %s43
    %s47 = sphi 0, %s46
    %s63 = sphi 0, %s47
  $region4: #{feature_extractor_pallas.9} parent=0 // loop_header_branch
    %10 = sbr.rel (%p8) target = $region8
  $region5: #{feature_extractor_pallas.9} parent=0 // loop_body
    %s12 = ssub.s32 %s7, 1
    %s13 = ssub.s32 %s7, 2
    %s14 = sadd.s32 %s7, 1
    %s15 = ssub.s32 %s7, %s14
    %p16 = scmp.eq.s32.totalorder %s15, 0
    %s18 = sadd.s32 %s17, 1
    %s19 = scalar_select %p16, %s17, %s18
    %p22 = pneg %p16
    %p23 = scmp.eq.s32.totalorder %s7, 1
    %p24 = por %p22, %p23
    %p25 = scmp.ne.s32.totalorder %s17, %s20
    %p26 = scmp.eq.s32.totalorder %s7, 0
    %p27 = por %p25, %p26
    %p28 = scmp.ne.s32.totalorder %s17, %s20
    %p29 = scmp.eq.s32.totalorder %s12, 1
    %p30 = por %p28, %p29
    %p31 = scmp.ne.s32.totalorder %s20, %s21
    %p32 = scmp.eq.s32.totalorder %s12, 0
    %p33 = por %p31, %p32
    %p34 = scmp.ne.s32.totalorder %s20, %s21
    %p35 = scmp.eq.s32.totalorder %s13, 1
    %p36 = por %p34, %p35
    %p38 = scmp.ne.s32.totalorder %s21, %s37
    %p39 = scmp.eq.s32.totalorder %s13, 0
    %p40 = por %p38, %p39
    %s41 = ssub.s32 %s7, %s14
    %p42 = scmp.eq.s32.totalorder %s41, 0
    %s44 = sadd.s32 %s43, 1
    %s45 = scalar_select %p42, %s43, %s44
    %p48 = pneg %p42
    %p49 = scmp.eq.s32.totalorder %s7, 1
    %p50 = por %p48, %p49
    %p51 = scmp.ne.s32.totalorder %s43, %s46
    %p52 = scmp.eq.s32.totalorder %s7, 0
    %p53 = por %p51, %p52
    %p54 = scmp.ne.s32.totalorder %s43, %s46
    %p55 = scmp.eq.s32.totalorder %s12, 1
    %p56 = por %p54, %p55
    %p57 = scmp.ne.s32.totalorder %s46, %s47
    %p58 = scmp.eq.s32.totalorder %s12, 0
    %p59 = por %p57, %p58
    %p60 = scmp.ne.s32.totalorder %s46, %s47
    %p61 = scmp.eq.s32.totalorder %s13, 1
    %p62 = por %p60, %p61
    %p64 = scmp.ne.s32.totalorder %s47, %s63
    %p65 = scmp.eq.s32.totalorder %s13, 0
    %p66 = por %p64, %p65
    %p67 = scmp.le.s32.totalorder 1, %s7
    %p68 = scmp.lt.s32.totalorder %s7, 3
    %p69 = pnand %p67, %p68
    %p70 = pneg %p69
    // Predicated region
    $region9: #{feature_extractor_pallas.9} parent=5 // pred_check
      _
    $region10: #{feature_extractor_pallas.9} parent=5 // pred_check_branch
      %72 = sbr.rel (%p69) target = $region12
    $region11: #{feature_extractor_pallas.9} parent=5 // pred_region
      %s73 = ssub.s32 %s7, 1
    $region12: #{feature_extractor_pallas.9} parent=5 // pred_fallthru
      _
    %p74 = scmp.lt.s32.totalorder %s7, 2
    // Predicated region
    $region13: #{feature_extractor_pallas.9} parent=5 // pred_check
      %p75 = pneg %p74
    $region14: #{feature_extractor_pallas.9} parent=5 // pred_check_branch
      %77 = sbr.rel (%p75) target = $region16
    $region15: #{feature_extractor_pallas.9} parent=5 // pred_region
      // Predicated region
      $region17: #{feature_extractor_pallas.9} parent=15 // pred_check
        %p78 = pneg %p27
      $region18: #{feature_extractor_pallas.9} parent=15 // pred_check_branch
        %80 = sbr.rel (%p78) target = $region20
      $region19: #{feature_extractor_pallas.9} parent=15 // pred_region
        %p81 = scmp.lt.s32.totalorder %s7, 1
        %s82 = scalar_select %p81, %s7, 1
        %s83 = smul.addr %s82, 16
        %s84 = smul.addr %s83, 8
        %s85 = scalar_lea.vmem %s0, %s84
      $region20: #{feature_extractor_pallas.9} parent=15 // pred_fallthru
        _
    $region16: #{feature_extractor_pallas.9} parent=5 // pred_fallthru
      _
    %p86 = scmp.le.s32.totalorder 1, %s7
    %p87 = scmp.lt.s32.totalorder %s7, 3
    %p88 = pnand %p86, %p87
    %p89 = pneg %p88
    // Predicated region
    $region21: #{feature_extractor_pallas.9} parent=5 // pred_check
      _
    $region22: #{feature_extractor_pallas.9} parent=5 // pred_check_branch
      %91 = sbr.rel (%p88) target = $region24
    $region23: #{feature_extractor_pallas.9} parent=5 // pred_region
      %s92 = ssub.s32 %s7, 1
      %p93 = scmp.lt.s32.totalorder %s12, 1
      %s94 = scalar_select %p93, %s12, 1
      %s95 = smul.addr %s94, 16
      %s96 = smul.addr %s95, 8
      %s97 = scalar_lea.vmem %s0, %s96
      %p98 = pneg %p33
      %p99 = pneg %p30
      %p100 = pneg %p59
      %p101 = pneg %p56
      %p102 = scmp.lt.s32.totalorder %s12, 1
      %s103 = scalar_select %p102, %s12, 1
      %s104 = smul.addr %s103, 8
      %s105 = smul.addr %s104, 8
      %s106 = scalar_lea.vmem %s1, %s105
      %p107 = scmp.lt.s32.totalorder %s12, 1
      %s108 = scalar_select %p107, %s12, 1
      %s109 = smul.addr %s108, 16
      %s110 = smul.addr %s109, 8
      %s111 = scalar_lea.vmem %s0, %s110
      %p112 = scmp.lt.s32.totalorder %s12, 1
      %s113 = scalar_select %p112, %s12, 1
      %s114 = smul.addr %s113, 8
      %s115 = smul.addr %s114, 8
      %s116 = scalar_lea.vmem %s1, %s115
      %v117 = vld [vmem:[%s111] sm:$0xff]
      %s118 = scalar_lea.vmem %s111, 8
      %v119 = vld [vmem:[%s118] sm:$0xff]
      %v120 = vmax.f32 %v117, %v119
      %122 = vrot.lane.b32.xlu0 %v120, 64
      %v123 = vpop.permute.xlu0 %122
      %v125 = vmax.f32 %v120, %v123
      %vm126 = vcmask 523264
      %127 = vst.msk [vmem:[%s116] sm:$0xff] %vm126, %v125
      %s128 = scalar_lea.vmem %s111, 16
      %v129 = vld [vmem:[%s128] sm:$0xff]
      %s130 = scalar_lea.vmem %s111, 24
      %v131 = vld [vmem:[%s130] sm:$0xff]
      %v132 = vmax.f32 %v129, %v131
      %134 = vrot.lane.b32.xlu0 %v132, 64
      %v135 = vpop.permute.xlu0 %134
      %v137 = vmax.f32 %v132, %v135
      %s138 = scalar_lea.vmem %s116, 8
      %139 = vst.msk [vmem:[%s138] sm:$0xff] %vm126, %v137
      %s140 = scalar_lea.vmem %s111, 32
      %v141 = vld [vmem:[%s140] sm:$0xff]
      %s142 = scalar_lea.vmem %s111, 40
      %v143 = vld [vmem:[%s142] sm:$0xff]
      %v144 = vmax.f32 %v141, %v143
      %146 = vrot.lane.b32.xlu0 %v144, 64
      %v147 = vpop.permute.xlu0 %146
      %v149 = vmax.f32 %v144, %v147
      %s150 = scalar_lea.vmem %s116, 16
      %151 = vst.msk [vmem:[%s150] sm:$0xff] %vm126, %v149
      %s152 = scalar_lea.vmem %s111, 48
      %v153 = vld [vmem:[%s152] sm:$0xff]
      %s154 = scalar_lea.vmem %s111, 56
      %v155 = vld [vmem:[%s154] sm:$0xff]
      %v156 = vmax.f32 %v153, %v155
      %158 = vrot.lane.b32.xlu0 %v156, 64
      %v159 = vpop.permute.xlu0 %158
      %v161 = vmax.f32 %v156, %v159
      %s162 = scalar_lea.vmem %s116, 24
      %163 = vst.msk [vmem:[%s162] sm:$0xff] %vm126, %v161
      %s164 = scalar_lea.vmem %s111, 64
      %v165 = vld [vmem:[%s164] sm:$0xff]
      %s166 = scalar_lea.vmem %s111, 72
      %v167 = vld [vmem:[%s166] sm:$0xff]
      %v168 = vmax.f32 %v165, %v167
      %170 = vrot.lane.b32.xlu0 %v168, 64
      %v171 = vpop.permute.xlu0 %170
      %v173 = vmax.f32 %v168, %v171
      %s174 = scalar_lea.vmem %s116, 32
      %175 = vst.msk [vmem:[%s174] sm:$0xff] %vm126, %v173
      %s176 = scalar_lea.vmem %s111, 80
      %v177 = vld [vmem:[%s176] sm:$0xff]
      %s178 = scalar_lea.vmem %s111, 88
      %v179 = vld [vmem:[%s178] sm:$0xff]
      %v180 = vmax.f32 %v177, %v179
      %182 = vrot.lane.b32.xlu0 %v180, 64
      %v183 = vpop.permute.xlu0 %182
      %v185 = vmax.f32 %v180, %v183
      %s186 = scalar_lea.vmem %s116, 40
      %187 = vst.msk [vmem:[%s186] sm:$0xff] %vm126, %v185
      %s188 = scalar_lea.vmem %s111, 96
      %v189 = vld [vmem:[%s188] sm:$0xff]
      %s190 = scalar_lea.vmem %s111, 104
      %v191 = vld [vmem:[%s190] sm:$0xff]
      %v192 = vmax.f32 %v189, %v191
      %194 = vrot.lane.b32.xlu0 %v192, 64
      %v195 = vpop.permute.xlu0 %194
      %v197 = vmax.f32 %v192, %v195
      %s198 = scalar_lea.vmem %s116, 48
      %199 = vst.msk [vmem:[%s198] sm:$0xff] %vm126, %v197
      %s200 = scalar_lea.vmem %s111, 112
      %v201 = vld [vmem:[%s200] sm:$0xff]
      %s202 = scalar_lea.vmem %s111, 120
      %v203 = vld [vmem:[%s202] sm:$0xff]
      %v204 = vmax.f32 %v201, %v203
      %206 = vrot.lane.b32.xlu0 %v204, 64
      %v207 = vpop.permute.xlu0 %206
      %v209 = vmax.f32 %v204, %v207
      %s210 = scalar_lea.vmem %s116, 56
      %211 = vst.msk [vmem:[%s210] sm:$0xff] %vm126, %v209
      %p212 = scmp.lt.s32.totalorder %s12, 1
      %s213 = scalar_select %p212, %s12, 1
      %s214 = smul.addr %s213, 8
      %s215 = smul.addr %s214, 8
      %s216 = scalar_lea.vmem %s1, %s215
      // Predicated region
      $region25: #{feature_extractor_pallas.9} parent=23 // pred_check
        %p217 = pneg %p56
      $region26: #{feature_extractor_pallas.9} parent=23 // pred_check_branch
        %219 = sbr.rel (%p217) target = $region28
      $region27: #{feature_extractor_pallas.9} parent=23 // pred_region
        _
      $region28: #{feature_extractor_pallas.9} parent=23 // pred_fallthru
        _
    $region24: #{feature_extractor_pallas.9} parent=5 // pred_fallthru
      _
    %p220 = scmp.le.s32.totalorder 2, %s7
    // Predicated region
    $region29: #{feature_extractor_pallas.9} parent=5 // pred_check
      %p221 = pneg %p220
    $region30: #{feature_extractor_pallas.9} parent=5 // pred_check_branch
      %223 = sbr.rel (%p221) target = $region32
    $region31: #{feature_extractor_pallas.9} parent=5 // pred_region
      %s224 = ssub.s32 %s7, 2
      // Predicated region
      $region33: #{feature_extractor_pallas.9} parent=31 // pred_check
        %p225 = pneg %p62
      $region34: #{feature_extractor_pallas.9} parent=31 // pred_check_branch
        %227 = sbr.rel (%p225) target = $region36
      $region35: #{feature_extractor_pallas.9} parent=31 // pred_region
        %p228 = scmp.lt.s32.totalorder %s13, 1
        %s229 = scalar_select %p228, %s13, 1
        %s230 = smul.addr %s229, 8
        %s231 = smul.addr %s230, 8
        %s232 = scalar_lea.vmem %s1, %s231
      $region36: #{feature_extractor_pallas.9} parent=31 // pred_fallthru
        _
    $region32: #{feature_extractor_pallas.9} parent=5 // pred_fallthru
      _
  $region6: #{feature_extractor_pallas.9} parent=0 // loop_footer
    %s11 = sadd.s32 1, %s7
  $region7: #{feature_extractor_pallas.9} parent=0 // loop_footer_branch
    %6 = sbr.rel target = $region3
  $region8: #{feature_extractor_pallas.9} parent=0 // loop_exit
    _

// kernel: feature_extractor_pallas.7
$region0: #{feature_extractor_pallas.7}
  #allocation0 [shape = 'u32[]', space=smem, size = 0x4, offset = 0x4, fixed_abs, tag = 'smem constant byte address 0x4 - core index']
  #allocation1 [shape = 'u32[72,128]{1,0:T(1,128)}', space=vmem, size = 0x9000, scoped, tag = 'internal scratch']
  %s0 = inlined_call_operand.vmem [shape: f32[2,18,18,8], index: 0, kind: input, shape index: {}]
  %s1 = inlined_call_operand.vmem [shape: bf16[9,8,64], index: 1, kind: input, shape index: {}]
  %s2 = inlined_call_operand.vmem [shape: f32[1,64], index: 2, kind: input, shape index: {}]
  %s3 = inlined_call_operand.vmem [shape: f32[2,16,16,64], index: 3, kind: output, shape index: {}]
  %s4 = sld [smem:[#allocation0]]
  $region45: #{feature_extractor_pallas.7} parent=0
    _
  %s6 = ssub.s32 1, %s4
  %s7 = scalar_select 0, %s6, %s4
  loop: start=0, step=1, limit=4
  $region2: #{feature_extractor_pallas.7} parent=0 // loop_pre_header
    _
  $region3: #{feature_extractor_pallas.7} parent=0 // loop_header
    %s9 = sphi 0, %s13
    %p10 = scmp.ge.s32.totalorder %s9, 4
    %s19 = sphi 0, %s21
    %s22 = sphi 0, %s19
    %s23 = sphi 0, %s22
    %s39 = sphi 0, %s23
    %s43 = sphi 0, %s43
    %s45 = sphi 0, %s43
    %s46 = sphi 0, %s45
    %s60 = sphi 0, %s46
    %s64 = sphi 0, %s64
    %s66 = sphi 0, %s64
    %s67 = sphi 0, %s66
    %s81 = sphi 0, %s67
    %s87 = sphi 0, %s89
    %s90 = sphi 0, %s87
    %s91 = sphi 0, %s90
    %s107 = sphi 0, %s91
  $region4: #{feature_extractor_pallas.7} parent=0 // loop_header_branch
    %12 = sbr.rel (%p10) target = $region8
  $region5: #{feature_extractor_pallas.7} parent=0 // loop_body
    %s14 = ssub.s32 %s9, 1
    %s15 = ssub.s32 %s9, 2
    %s16 = sadd.s32 %s9, 1
    %s17 = ssub.s32 %s9, %s16
    %p18 = scmp.eq.s32.totalorder %s17, 0
    %s20 = sadd.s32 %s19, 1
    %s21 = scalar_select %p18, %s19, %s20
    %p24 = pneg %p18
    %p25 = scmp.eq.s32.totalorder %s9, 1
    %p26 = por %p24, %p25
    %p27 = scmp.ne.s32.totalorder %s19, %s22
    %p28 = scmp.eq.s32.totalorder %s9, 0
    %p29 = por %p27, %p28
    %p30 = scmp.ne.s32.totalorder %s19, %s22
    %p31 = scmp.eq.s32.totalorder %s14, 1
    %p32 = por %p30, %p31
    %p33 = scmp.ne.s32.totalorder %s22, %s23
    %p34 = scmp.eq.s32.totalorder %s14, 0
    %p35 = por %p33, %p34
    %p36 = scmp.ne.s32.totalorder %s22, %s23
    %p37 = scmp.eq.s32.totalorder %s15, 1
    %p38 = por %p36, %p37
    %p40 = scmp.ne.s32.totalorder %s23, %s39
    %p41 = scmp.eq.s32.totalorder %s15, 0
    %p42 = por %p40, %p41
    %s44 = sadd.s32 %s43, 1
    %p47 = scmp.eq.s32.totalorder %s9, 1
    %p48 = scmp.ne.s32.totalorder %s43, %s45
    %p49 = scmp.eq.s32.totalorder %s9, 0
    %p50 = por %p48, %p49
    %p51 = scmp.ne.s32.totalorder %s43, %s45
    %p52 = scmp.eq.s32.totalorder %s14, 1
    %p53 = por %p51, %p52
    %p54 = scmp.ne.s32.totalorder %s45, %s46
    %p55 = scmp.eq.s32.totalorder %s14, 0
    %p56 = por %p54, %p55
    %p57 = scmp.ne.s32.totalorder %s45, %s46
    %p58 = scmp.eq.s32.totalorder %s15, 1
    %p59 = por %p57, %p58
    %p61 = scmp.ne.s32.totalorder %s46, %s60
    %p62 = scmp.eq.s32.totalorder %s15, 0
    %p63 = por %p61, %p62
    %s65 = sadd.s32 %s64, 1
    %p68 = scmp.eq.s32.totalorder %s9, 1
    %p69 = scmp.ne.s32.totalorder %s64, %s66
    %p70 = scmp.eq.s32.totalorder %s9, 0
    %p71 = por %p69, %p70
    %p72 = scmp.ne.s32.totalorder %s64, %s66
    %p73 = scmp.eq.s32.totalorder %s14, 1
    %p74 = por %p72, %p73
    %p75 = scmp.ne.s32.totalorder %s66, %s67
    %p76 = scmp.eq.s32.totalorder %s14, 0
    %p77 = por %p75, %p76
    %p78 = scmp.ne.s32.totalorder %s66, %s67
    %p79 = scmp.eq.s32.totalorder %s15, 1
    %p80 = por %p78, %p79
    %p82 = scmp.ne.s32.totalorder %s67, %s81
    %p83 = scmp.eq.s32.totalorder %s15, 0
    %p84 = por %p82, %p83
    %s85 = ssub.s32 %s9, %s16
    %p86 = scmp.eq.s32.totalorder %s85, 0
    %s88 = sadd.s32 %s87, 1
    %s89 = scalar_select %p86, %s87, %s88
    %p92 = pneg %p86
    %p93 = scmp.eq.s32.totalorder %s9, 1
    %p94 = por %p92, %p93
    %p95 = scmp.ne.s32.totalorder %s87, %s90
    %p96 = scmp.eq.s32.totalorder %s9, 0
    %p97 = por %p95, %p96
    %p98 = scmp.ne.s32.totalorder %s87, %s90
    %p99 = scmp.eq.s32.totalorder %s14, 1
    %p100 = por %p98, %p99
    %p101 = scmp.ne.s32.totalorder %s90, %s91
    %p102 = scmp.eq.s32.totalorder %s14, 0
    %p103 = por %p101, %p102
    %p104 = scmp.ne.s32.totalorder %s90, %s91
    %p105 = scmp.eq.s32.totalorder %s15, 1
    %p106 = por %p104, %p105
    %p108 = scmp.ne.s32.totalorder %s91, %s107
    %p109 = scmp.eq.s32.totalorder %s15, 0
    %p110 = por %p108, %p109
    %p111 = scmp.le.s32.totalorder 1, %s9
    %p112 = scmp.lt.s32.totalorder %s9, 3
    %p113 = pnand %p111, %p112
    %p114 = pneg %p113
    // Predicated region
    $region9: #{feature_extractor_pallas.7} parent=5 // pred_check
      _
    $region10: #{feature_extractor_pallas.7} parent=5 // pred_check_branch
      %116 = sbr.rel (%p113) target = $region12
    $region11: #{feature_extractor_pallas.7} parent=5 // pred_region
      %s117 = ssub.s32 %s9, 1
      // Predicated region
      $region13: #{feature_extractor_pallas.7} parent=11 // pred_check
        %p118 = pneg %p56
      $region14: #{feature_extractor_pallas.7} parent=11 // pred_check_branch
        %120 = sbr.rel (%p118) target = $region16
      $region15: #{feature_extractor_pallas.7} parent=11 // pred_region
        _
      $region16: #{feature_extractor_pallas.7} parent=11 // pred_fallthru
        _
      // Predicated region
      $region17: #{feature_extractor_pallas.7} parent=11 // pred_check
        %p121 = pneg %p77
      $region18: #{feature_extractor_pallas.7} parent=11 // pred_check_branch
        %123 = sbr.rel (%p121) target = $region20
      $region19: #{feature_extractor_pallas.7} parent=11 // pred_region
        _
      $region20: #{feature_extractor_pallas.7} parent=11 // pred_fallthru
        _
    $region12: #{feature_extractor_pallas.7} parent=5 // pred_fallthru
      _
    %p124 = scmp.lt.s32.totalorder %s9, 2
    // Predicated region
    $region21: #{feature_extractor_pallas.7} parent=5 // pred_check
      %p125 = pneg %p124
    $region22: #{feature_extractor_pallas.7} parent=5 // pred_check_branch
      %127 = sbr.rel (%p125) target = $region24
    $region23: #{feature_extractor_pallas.7} parent=5 // pred_region
      // Predicated region
      $region25: #{feature_extractor_pallas.7} parent=23 // pred_check
        %p128 = pneg %p29
      $region26: #{feature_extractor_pallas.7} parent=23 // pred_check_branch
        %130 = sbr.rel (%p128) target = $region28
      $region27: #{feature_extractor_pallas.7} parent=23 // pred_region
        %p131 = scmp.lt.s32.totalorder %s9, 1
        %s132 = scalar_select %p131, %s9, 1
        %s133 = smul.addr %s132, 54
        %s134 = smul.addr %s133, 8
        %s135 = scalar_lea.vmem %s0, %s134
      $region28: #{feature_extractor_pallas.7} parent=23 // pred_fallthru
        _
    $region24: #{feature_extractor_pallas.7} parent=5 // pred_fallthru
      _
    %p136 = scmp.le.s32.totalorder 1, %s9
    %p137 = scmp.lt.s32.totalorder %s9, 3
    %p138 = pnand %p136, %p137
    %p139 = pneg %p138
    // Predicated region
    $region29: #{feature_extractor_pallas.7} parent=5 // pred_check
      _
    $region30: #{feature_extractor_pallas.7} parent=5 // pred_check_branch
      %141 = sbr.rel (%p138) target = $region32
    $region31: #{feature_extractor_pallas.7} parent=5 // pred_region
      %s142 = ssub.s32 %s9, 1
      %p143 = scmp.lt.s32.totalorder %s14, 1
      %s144 = scalar_select %p143, %s14, 1
      %s145 = smul.addr %s144, 54
      %s146 = smul.addr %s145, 8
      %s147 = scalar_lea.vmem %s0, %s146
      %p148 = pneg %p35
      %p149 = pneg %p32
      %p150 = pneg %p56
      %p151 = pneg %p53
      %p152 = pneg %p77
      %p153 = pneg %p74
      %p154 = pneg %p103
      %p155 = pneg %p100
      %p156 = scmp.lt.s32.totalorder %s14, 1
      %s157 = scalar_select %p156, %s14, 1
      %s158 = smul.addr %s157, 32
      %s159 = smul.addr %s158, 8
      %s160 = scalar_lea.vmem %s3, %s159
      %p161 = scmp.lt.s32.totalorder %s14, 1
      %s162 = scalar_select %p161, %s14, 1
      %s163 = smul.addr %s162, 54
      %s164 = smul.addr %s163, 8
      %s165 = scalar_lea.vmem %s0, %s164
      %p166 = scmp.lt.s32.totalorder %s14, 1
      %s167 = scalar_select %p166, %s14, 1
      %s168 = smul.addr %s167, 32
      %s169 = smul.addr %s168, 8
      %s170 = scalar_lea.vmem %s3, %s169
      %v172 = vld [vmem:[%s2] sm:$0x1]
      %v174 = vperm.slane %v172, 0
      %v176 = vld [vmem:[%s165] sm:$0xff]
      %v177 = vld [vmem:[%s165 + $0x8] sm:$0xff]
      %v178 = vld [vmem:[%s165 + $0x18] sm:$0xff]
      %v179 = vld [vmem:[%s165 + $0x20] sm:$0xff]
      %v180 = vld [vmem:[%s165 + $0x30] sm:$0xff]
      %v181 = vld [vmem:[%s165 + $0x38] sm:$0xff]
      %v182 = vld [vmem:[%s165 + $0x48] sm:$0xff]
      %v183 = vld [vmem:[%s165 + $0x50] sm:$0xff]
      %v184 = vld [vmem:[%s165 + $0x60] sm:$0xff]
      %v185 = vld [vmem:[%s165 + $0x68] sm:$0xff]
      %v186 = vld [vmem:[%s165 + $0x78] sm:$0xff]
      %v187 = vld [vmem:[%s165 + $0x80] sm:$0xff]
      %v188 = vld [vmem:[%s165 + $0x90] sm:$0xff]
      %v189 = vld [vmem:[%s165 + $0x98] sm:$0xff]
      %v190 = vld [vmem:[%s165 + $0xa8] sm:$0xff]
      %v191 = vld [vmem:[%s165 + $0xb0] sm:$0xff]
      %v192 = vld [vmem:[%s165 + $0xc0] sm:$0xff]
      %v193 = vld [vmem:[%s165 + $0xc8] sm:$0xff]
      %v194 = vld [vmem:[%s165 + $0xd8] sm:$0xff]
      %v195 = vld [vmem:[%s165 + $0xe0] sm:$0xff]
      %v196 = vld [vmem:[%s165 + $0xf0] sm:$0xff]
      %v197 = vld [vmem:[%s165 + $0xf8] sm:$0xff]
      %v198 = vld [vmem:[%s165 + $0x108] sm:$0xff]
      %v199 = vld [vmem:[%s165 + $0x110] sm:$0xff]
      %v200 = vld [vmem:[%s165 + $0x120] sm:$0xff]
      %v201 = vld [vmem:[%s165 + $0x128] sm:$0xff]
      %v202 = vld [vmem:[%s165 + $0x138] sm:$0xff]
      %v203 = vld [vmem:[%s165 + $0x140] sm:$0xff]
      %v204 = vld [vmem:[%s165 + $0x150] sm:$0xff]
      %v205 = vld [vmem:[%s165 + $0x158] sm:$0xff]
      %v206 = vld [vmem:[%s165 + $0x168] sm:$0xff]
      %v207 = vld [vmem:[%s165 + $0x170] sm:$0xff]
      %v208 = vpack.c.bf16 %v177, %v176
      %v209 = vpack.c.bf16 %v179, %v178
      %v210 = vpack.c.bf16 %v181, %v180
      %v211 = vpack.c.bf16 %v183, %v182
      %v212 = vpack.c.bf16 %v185, %v184
      %v213 = vpack.c.bf16 %v187, %v186
      %v214 = vpack.c.bf16 %v189, %v188
      %v215 = vpack.c.bf16 %v191, %v190
      %v216 = vpack.c.bf16 %v193, %v192
      %v217 = vpack.c.bf16 %v195, %v194
      %v218 = vpack.c.bf16 %v197, %v196
      %v219 = vpack.c.bf16 %v199, %v198
      %v220 = vpack.c.bf16 %v201, %v200
      %v221 = vpack.c.bf16 %v203, %v202
      %v222 = vpack.c.bf16 %v205, %v204
      %v223 = vpack.c.bf16 %v207, %v206
      %v224 = vld [vmem:[%s1] sm:$0xf]
      %vm225 = vcmask 64512
      %v227 = vsel %vm225, %v208, 0
      %v230 = vsel %vm225, %v209, 0
      %v233 = vsel %vm225, %v210, 0
      %v236 = vsel %vm225, %v211, 0
      %v239 = vsel %vm225, %v212, 0
      %v242 = vsel %vm225, %v213, 0
      %v245 = vsel %vm225, %v214, 0
      %v248 = vsel %vm225, %v215, 0
      %v251 = vsel %vm225, %v216, 0
      %v254 = vsel %vm225, %v217, 0
      %v257 = vsel %vm225, %v218, 0
      %v260 = vsel %vm225, %v219, 0
      %v263 = vsel %vm225, %v220, 0
      %v266 = vsel %vm225, %v221, 0
      %v269 = vsel %vm225, %v222, 0
      %v272 = vsel %vm225, %v223, 0
      %vm274 = vcmask 1043456
      %v276 = vsel %vm274, %v224, 0
      %278 = vmatpush.bf16.msra.mxu0 0
      %279 = vmatpush.bf16.msra.mxu0 0
      %280 = vmatpush.bf16.msra.mxu0 0
      %281 = vmatpush.bf16.msra.mxu0 0
      %282 = vmatpush.bf16.msra.mxu0 0
      %283 = vmatpush.bf16.msra.mxu0 0
      %284 = vmatpush.bf16.msra.mxu0 0
      %285 = vmatpush.bf16.msra.mxu0 %v276
      %286 = vmatmul.bf16.gmra.mxu0 %v227
      %v287 = vpop.f32.mrf.mxu0
      %v288 = vadd.f32 0.0, %v287
      %v289 = vpop.f32.mrf.mxu0
      %v290 = vadd.f32 0.0, %v289
      %291 = vmatmul.bf16.gmra.mxu0 %v230
      %v292 = vpop.f32.mrf.mxu0
      %v293 = vadd.f32 0.0, %v292
      %v294 = vpop.f32.mrf.mxu0
      %v295 = vadd.f32 0.0, %v294
      %296 = vmatmul.bf16.gmra.mxu0 %v233
      %v297 = vpop.f32.mrf.mxu0
      %v298 = vadd.f32 0.0, %v297
      %v299 = vpop.f32.mrf.mxu0
      %v300 = vadd.f32 0.0, %v299
      %301 = vmatmul.bf16.gmra.mxu0 %v236
      %v302 = vpop.f32.mrf.mxu0
      %v303 = vadd.f32 0.0, %v302
      %v304 = vpop.f32.mrf.mxu0
      %v305 = vadd.f32 0.0, %v304
      %306 = vmatmul.bf16.gmra.mxu0 %v239
      %v307 = vpop.f32.mrf.mxu0
      %v308 = vadd.f32 0.0, %v307
      %v309 = vpop.f32.mrf.mxu0
      %v310 = vadd.f32 0.0, %v309
      %311 = vmatmul.bf16.gmra.mxu0 %v242
      %v312 = vpop.f32.mrf.mxu0
      %v313 = vadd.f32 0.0, %v312
      %v314 = vpop.f32.mrf.mxu0
      %v315 = vadd.f32 0.0, %v314
      %316 = vmatmul.bf16.gmra.mxu0 %v245
      %v317 = vpop.f32.mrf.mxu0
      %v318 = vadd.f32 0.0, %v317
      %v319 = vpop.f32.mrf.mxu0
      %v320 = vadd.f32 0.0, %v319
      %321 = vmatmul.bf16.gmra.mxu0 %v248
      %v322 = vpop.f32.mrf.mxu0
      %v323 = vadd.f32 0.0, %v322
      %v324 = vpop.f32.mrf.mxu0
      %v325 = vadd.f32 0.0, %v324
      %326 = vmatmul.bf16.gmra.mxu0 %v251
      %v327 = vpop.f32.mrf.mxu0
      %v328 = vadd.f32 0.0, %v327
      %v329 = vpop.f32.mrf.mxu0
      %v330 = vadd.f32 0.0, %v329
      %331 = vmatmul.bf16.gmra.mxu0 %v254
      %v332 = vpop.f32.mrf.mxu0
      %v333 = vadd.f32 0.0, %v332
      %v334 = vpop.f32.mrf.mxu0
      %v335 = vadd.f32 0.0, %v334
      %336 = vmatmul.bf16.gmra.mxu0 %v257
      %v337 = vpop.f32.mrf.mxu0
      %v338 = vadd.f32 0.0, %v337
      %v339 = vpop.f32.mrf.mxu0
      %v340 = vadd.f32 0.0, %v339
      %341 = vmatmul.bf16.gmra.mxu0 %v260
      %v342 = vpop.f32.mrf.mxu0
      %v343 = vadd.f32 0.0, %v342
      %v344 = vpop.f32.mrf.mxu0
      %v345 = vadd.f32 0.0, %v344
      %346 = vmatmul.bf16.gmra.mxu0 %v263
      %v347 = vpop.f32.mrf.mxu0
      %v348 = vadd.f32 0.0, %v347
      %v349 = vpop.f32.mrf.mxu0
      %v350 = vadd.f32 0.0, %v349
      %351 = vmatmul.bf16.gmra.mxu0 %v266
      %v352 = vpop.f32.mrf.mxu0
      %v353 = vadd.f32 0.0, %v352
      %v354 = vpop.f32.mrf.mxu0
      %v355 = vadd.f32 0.0, %v354
      %356 = vmatmul.bf16.gmra.mxu0 %v269
      %v357 = vpop.f32.mrf.mxu0
      %v358 = vadd.f32 0.0, %v357
      %v359 = vpop.f32.mrf.mxu0
      %v360 = vadd.f32 0.0, %v359
      %361 = vmatmul.bf16.gmra.mxu0 %v272
      %v362 = vpop.f32.mrf.mxu0
      %v363 = vadd.f32 0.0, %v362
      %v364 = vpop.f32.mrf.mxu0
      %v365 = vadd.f32 0.0, %v364
      %366 = vdwg.mxu0
      %v367 = vadd.f32 %v174, %v288
      %v368 = vadd.f32 %v174, %v290
      %v369 = vadd.f32 %v174, %v293
      %v370 = vadd.f32 %v174, %v295
      %v371 = vadd.f32 %v174, %v298
      %v372 = vadd.f32 %v174, %v300
      %v373 = vadd.f32 %v174, %v303
      %v374 = vadd.f32 %v174, %v305
      %v375 = vadd.f32 %v174, %v308
      %v376 = vadd.f32 %v174, %v310
      %v377 = vadd.f32 %v174, %v313
      %v378 = vadd.f32 %v174, %v315
      %v379 = vadd.f32 %v174, %v318
      %v380 = vadd.f32 %v174, %v320
      %v381 = vadd.f32 %v174, %v323
      %v382 = vadd.f32 %v174, %v325
      %v383 = vadd.f32 %v174, %v328
      %v384 = vadd.f32 %v174, %v330
      %v385 = vadd.f32 %v174, %v333
      %v386 = vadd.f32 %v174, %v335
      %v387 = vadd.f32 %v174, %v338
      %v388 = vadd.f32 %v174, %v340
      %v389 = vadd.f32 %v174, %v343
      %v390 = vadd.f32 %v174, %v345
      %v391 = vadd.f32 %v174, %v348
      %v392 = vadd.f32 %v174, %v350
      %v393 = vadd.f32 %v174, %v353
      %v394 = vadd.f32 %v174, %v355
      %v395 = vadd.f32 %v174, %v358
      %v396 = vadd.f32 %v174, %v360
      %v397 = vadd.f32 %v174, %v363
      %v398 = vadd.f32 %v174, %v365
      %v399 = vld [vmem:[%s165 + $0x1] sm:$0xff]
      %v400 = vld [vmem:[%s165 + $0x9] sm:$0xff]
      %v401 = vld [vmem:[%s165 + $0x19] sm:$0xff]
      %v402 = vld [vmem:[%s165 + $0x21] sm:$0xff]
      %v403 = vld [vmem:[%s165 + $0x31] sm:$0xff]
      %v404 = vld [vmem:[%s165 + $0x39] sm:$0xff]
      %v405 = vld [vmem:[%s165 + $0x49] sm:$0xff]
      %v406 = vld [vmem:[%s165 + $0x51] sm:$0xff]
      %v407 = vld [vmem:[%s165 + $0x61] sm:$0xff]
      %v408 = vld [vmem:[%s165 + $0x69] sm:$0xff]
      %v409 = vld [vmem:[%s165 + $0x79] sm:$0xff]
      %v410 = vld [vmem:[%s165 + $0x81] sm:$0xff]
      %v411 = vld [vmem:[%s165 + $0x91] sm:$0xff]
      %v412 = vld [vmem:[%s165 + $0x99] sm:$0xff]
      %v413 = vld [vmem:[%s165 + $0xa9] sm:$0xff]
      %v414 = vld [vmem:[%s165 + $0xb1] sm:$0xff]
      %v415 = vld [vmem:[%s165 + $0xc1] sm:$0xff]
      %v416 = vld [vmem:[%s165 + $0xc9] sm:$0xff]
      %v417 = vld [vmem:[%s165 + $0xd9] sm:$0xff]
      %v418 = vld [vmem:[%s165 + $0xe1] sm:$0xff]
      %v419 = vld [vmem:[%s165 + $0xf1] sm:$0xff]
      %v420 = vld [vmem:[%s165 + $0xf9] sm:$0xff]
      %v421 = vld [vmem:[%s165 + $0x109] sm:$0xff]
      %v422 = vld [vmem:[%s165 + $0x111] sm:$0xff]
      %v423 = vld [vmem:[%s165 + $0x121] sm:$0xff]
      %v424 = vld [vmem:[%s165 + $0x129] sm:$0xff]
      %v425 = vld [vmem:[%s165 + $0x139] sm:$0xff]
      %v426 = vld [vmem:[%s165 + $0x141] sm:$0xff]
      %v427 = vld [vmem:[%s165 + $0x151] sm:$0xff]
      %v428 = vld [vmem:[%s165 + $0x159] sm:$0xff]
      %v429 = vld [vmem:[%s165 + $0x169] sm:$0xff]
      %v430 = vld [vmem:[%s165 + $0x171] sm:$0xff]
      %v431 = vpack.c.bf16 %v400, %v399
      %v432 = vpack.c.bf16 %v402, %v401
      %v433 = vpack.c.bf16 %v404, %v403
      %v434 = vpack.c.bf16 %v406, %v405
      %v435 = vpack.c.bf16 %v408, %v407
      %v436 = vpack.c.bf16 %v410, %v409
      %v437 = vpack.c.bf16 %v412, %v411
      %v438 = vpack.c.bf16 %v414, %v413
      %v439 = vpack.c.bf16 %v416, %v415
      %v440 = vpack.c.bf16 %v418, %v417
      %v441 = vpack.c.bf16 %v420, %v419
      %v442 = vpack.c.bf16 %v422, %v421
      %v443 = vpack.c.bf16 %v424, %v423
      %v444 = vpack.c.bf16 %v426, %v425
      %v445 = vpack.c.bf16 %v428, %v427
      %v446 = vpack.c.bf16 %v430, %v429
      %s447 = scalar_lea.vmem %s1, 4
      %v448 = vld [vmem:[%s447] sm:$0xf]
      %v450 = vsel %vm225, %v431, 0
      %v453 = vsel %vm225, %v432, 0
      %v456 = vsel %vm225, %v433, 0
      %v459 = vsel %vm225, %v434, 0
      %v462 = vsel %vm225, %v435, 0
      %v465 = vsel %vm225, %v436, 0
      %v468 = vsel %vm225, %v437, 0
      %v471 = vsel %vm225, %v438, 0
      %v474 = vsel %vm225, %v439, 0
      %v477 = vsel %vm225, %v440, 0
      %v480 = vsel %vm225, %v441, 0
      %v483 = vsel %vm225, %v442, 0
      %v486 = vsel %vm225, %v443, 0
      %v489 = vsel %vm225, %v444, 0
      %v492 = vsel %vm225, %v445, 0
      %v495 = vsel %vm225, %v446, 0
      %v498 = vsel %vm274, %v448, 0
      %500 = vmatpush.bf16.msra.mxu0 0
      %501 = vmatpush.bf16.msra.mxu0 0
      %502 = vmatpush.bf16.msra.mxu0 0
      %503 = vmatpush.bf16.msra.mxu0 0
      %504 = vmatpush.bf16.msra.mxu0 0
      %505 = vmatpush.bf16.msra.mxu0 0
      %506 = vmatpush.bf16.msra.mxu0 0
      %507 = vmatpush.bf16.msra.mxu0 %v498
      %508 = vmatmul.bf16.gmra.mxu0 %v450
      %v509 = vpop.f32.mrf.mxu0
      %v510 = vadd.f32 0.0, %v509
      %v511 = vpop.f32.mrf.mxu0
      %v512 = vadd.f32 0.0, %v511
      %513 = vmatmul.bf16.gmra.mxu0 %v453
      %v514 = vpop.f32.mrf.mxu0
      %v515 = vadd.f32 0.0, %v514
      %v516 = vpop.f32.mrf.mxu0
      %v517 = vadd.f32 0.0, %v516
      %518 = vmatmul.bf16.gmra.mxu0 %v456
      %v519 = vpop.f32.mrf.mxu0
      %v520 = vadd.f32 0.0, %v519
      %v521 = vpop.f32.mrf.mxu0
      %v522 = vadd.f32 0.0, %v521
      %523 = vmatmul.bf16.gmra.mxu0 %v459
      %v524 = vpop.f32.mrf.mxu0
      %v525 = vadd.f32 0.0, %v524
      %v526 = vpop.f32.mrf.mxu0
      %v527 = vadd.f32 0.0, %v526
      %528 = vmatmul.bf16.gmra.mxu0 %v462
      %v529 = vpop.f32.mrf.mxu0
      %v530 = vadd.f32 0.0, %v529
      %v531 = vpop.f32.mrf.mxu0
      %v532 = vadd.f32 0.0, %v531
      %533 = vmatmul.bf16.gmra.mxu0 %v465
      %v534 = vpop.f32.mrf.mxu0
      %v535 = vadd.f32 0.0, %v534
      %v536 = vpop.f32.mrf.mxu0
      %v537 = vadd.f32 0.0, %v536
      %538 = vmatmul.bf16.gmra.mxu0 %v468
      %v539 = vpop.f32.mrf.mxu0
      %v540 = vadd.f32 0.0, %v539
      %v541 = vpop.f32.mrf.mxu0
      %v542 = vadd.f32 0.0, %v541
      %543 = vmatmul.bf16.gmra.mxu0 %v471
      %v544 = vpop.f32.mrf.mxu0
      %v545 = vadd.f32 0.0, %v544
      %v546 = vpop.f32.mrf.mxu0
      %v547 = vadd.f32 0.0, %v546
      %548 = vmatmul.bf16.gmra.mxu0 %v474
      %v549 = vpop.f32.mrf.mxu0
      %v550 = vadd.f32 0.0, %v549
      %v551 = vpop.f32.mrf.mxu0
      %v552 = vadd.f32 0.0, %v551
      %553 = vmatmul.bf16.gmra.mxu0 %v477
      %v554 = vpop.f32.mrf.mxu0
      %v555 = vadd.f32 0.0, %v554
      %v556 = vpop.f32.mrf.mxu0
      %v557 = vadd.f32 0.0, %v556
      %558 = vmatmul.bf16.gmra.mxu0 %v480
      %v559 = vpop.f32.mrf.mxu0
      %v560 = vadd.f32 0.0, %v559
      %v561 = vpop.f32.mrf.mxu0
      %v562 = vadd.f32 0.0, %v561
      %563 = vmatmul.bf16.gmra.mxu0 %v483
      %v564 = vpop.f32.mrf.mxu0
      %v565 = vadd.f32 0.0, %v564
      %v566 = vpop.f32.mrf.mxu0
      %v567 = vadd.f32 0.0, %v566
      %568 = vmatmul.bf16.gmra.mxu0 %v486
      %v569 = vpop.f32.mrf.mxu0
      %v570 = vadd.f32 0.0, %v569
      %v571 = vpop.f32.mrf.mxu0
      %v572 = vadd.f32 0.0, %v571
      %573 = vmatmul.bf16.gmra.mxu0 %v489
      %v574 = vpop.f32.mrf.mxu0
      %v575 = vadd.f32 0.0, %v574
      %v576 = vpop.f32.mrf.mxu0
      %v577 = vadd.f32 0.0, %v576
      %578 = vmatmul.bf16.gmra.mxu0 %v492
      %v579 = vpop.f32.mrf.mxu0
      %v580 = vadd.f32 0.0, %v579
      %v581 = vpop.f32.mrf.mxu0
      %v582 = vadd.f32 0.0, %v581
      %583 = vmatmul.bf16.gmra.mxu0 %v495
      %v584 = vpop.f32.mrf.mxu0
      %v585 = vadd.f32 0.0, %v584
      %v586 = vpop.f32.mrf.mxu0
      %v587 = vadd.f32 0.0, %v586
      %588 = vdwg.mxu0
      %v589 = vadd.f32 %v367, %v510
      %v590 = vadd.f32 %v368, %v512
      %v591 = vadd.f32 %v369, %v515
      %v592 = vadd.f32 %v370, %v517
      %v593 = vadd.f32 %v371, %v520
      %v594 = vadd.f32 %v372, %v522
      %v595 = vadd.f32 %v373, %v525
      %v596 = vadd.f32 %v374, %v527
      %v597 = vadd.f32 %v375, %v530
      %v598 = vadd.f32 %v376, %v532
      %v599 = vadd.f32 %v377, %v535
      %v600 = vadd.f32 %v378, %v537
      %v601 = vadd.f32 %v379, %v540
      %v602 = vadd.f32 %v380, %v542
      %v603 = vadd.f32 %v381, %v545
      %v604 = vadd.f32 %v382, %v547
      %v605 = vadd.f32 %v383, %v550
      %v606 = vadd.f32 %v384, %v552
      %v607 = vadd.f32 %v385, %v555
      %v608 = vadd.f32 %v386, %v557
      %v609 = vadd.f32 %v387, %v560
      %v610 = vadd.f32 %v388, %v562
      %v611 = vadd.f32 %v389, %v565
      %v612 = vadd.f32 %v390, %v567
      %v613 = vadd.f32 %v391, %v570
      %v614 = vadd.f32 %v392, %v572
      %v615 = vadd.f32 %v393, %v575
      %v616 = vadd.f32 %v394, %v577
      %v617 = vadd.f32 %v395, %v580
      %v618 = vadd.f32 %v396, %v582
      %v619 = vadd.f32 %v397, %v585
      %v620 = vadd.f32 %v398, %v587
      %v621 = vld [vmem:[%s165 + $0x2] sm:$0xff]
      %v622 = vld [vmem:[%s165 + $0xa] sm:$0xff]
      %v623 = vld [vmem:[%s165 + $0x1a] sm:$0xff]
      %v624 = vld [vmem:[%s165 + $0x22] sm:$0xff]
      %v625 = vld [vmem:[%s165 + $0x32] sm:$0xff]
      %v626 = vld [vmem:[%s165 + $0x3a] sm:$0xff]
      %v627 = vld [vmem:[%s165 + $0x4a] sm:$0xff]
      %v628 = vld [vmem:[%s165 + $0x52] sm:$0xff]
      %v629 = vld [vmem:[%s165 + $0x62] sm:$0xff]
      %v630 = vld [vmem:[%s165 + $0x6a] sm:$0xff]
      %v631 = vld [vmem:[%s165 + $0x7a] sm:$0xff]
      %v632 = vld [vmem:[%s165 + $0x82] sm:$0xff]
      %v633 = vld [vmem:[%s165 + $0x92] sm:$0xff]
      %v634 = vld [vmem:[%s165 + $0x9a] sm:$0xff]
      %v635 = vld [vmem:[%s165 + $0xaa] sm:$0xff]
      %v636 = vld [vmem:[%s165 + $0xb2] sm:$0xff]
      %v637 = vld [vmem:[%s165 + $0xc2] sm:$0xff]
      %v638 = vld [vmem:[%s165 + $0xca] sm:$0xff]
      %v639 = vld [vmem:[%s165 + $0xda] sm:$0xff]
      %v640 = vld [vmem:[%s165 + $0xe2] sm:$0xff]
      %v641 = vld [vmem:[%s165 + $0xf2] sm:$0xff]
      %v642 = vld [vmem:[%s165 + $0xfa] sm:$0xff]
      %v643 = vld [vmem:[%s165 + $0x10a] sm:$0xff]
      %v644 = vld [vmem:[%s165 + $0x112] sm:$0xff]
      %v645 = vld [vmem:[%s165 + $0x122] sm:$0xff]
      %v646 = vld [vmem:[%s165 + $0x12a] sm:$0xff]
      %v647 = vld [vmem:[%s165 + $0x13a] sm:$0xff]
      %v648 = vld [vmem:[%s165 + $0x142] sm:$0xff]
      %v649 = vld [vmem:[%s165 + $0x152] sm:$0xff]
      %v650 = vld [vmem:[%s165 + $0x15a] sm:$0xff]
      %v651 = vld [vmem:[%s165 + $0x16a] sm:$0xff]
      %v652 = vld [vmem:[%s165 + $0x172] sm:$0xff]
      %v653 = vpack.c.bf16 %v622, %v621
      %v654 = vpack.c.bf16 %v624, %v623
      %v655 = vpack.c.bf16 %v626, %v625
      %v656 = vpack.c.bf16 %v628, %v627
      %v657 = vpack.c.bf16 %v630, %v629
      %v658 = vpack.c.bf16 %v632, %v631
      %v659 = vpack.c.bf16 %v634, %v633
      %v660 = vpack.c.bf16 %v636, %v635
      %v661 = vpack.c.bf16 %v638, %v637
      %v662 = vpack.c.bf16 %v640, %v639
      %v663 = vpack.c.bf16 %v642, %v641
      %v664 = vpack.c.bf16 %v644, %v643
      %v665 = vpack.c.bf16 %v646, %v645
      %v666 = vpack.c.bf16 %v648, %v647
      %v667 = vpack.c.bf16 %v650, %v649
      %v668 = vpack.c.bf16 %v652, %v651
      %s669 = scalar_lea.vmem %s1, 8
      %v670 = vld [vmem:[%s669] sm:$0xf]
      %v672 = vsel %vm225, %v653, 0
      %v675 = vsel %vm225, %v654, 0
      %v678 = vsel %vm225, %v655, 0
      %v681 = vsel %vm225, %v656, 0
      %v684 = vsel %vm225, %v657, 0
      %v687 = vsel %vm225, %v658, 0
      %v690 = vsel %vm225, %v659, 0
      %v693 = vsel %vm225, %v660, 0
      %v696 = vsel %vm225, %v661, 0
      %v699 = vsel %vm225, %v662, 0
      %v702 = vsel %vm225, %v663, 0
      %v705 = vsel %vm225, %v664, 0
      %v708 = vsel %vm225, %v665, 0
      %v711 = vsel %vm225, %v666, 0
      %v714 = vsel %vm225, %v667, 0
      %v717 = vsel %vm225, %v668, 0
      %v720 = vsel %vm274, %v670, 0
      %722 = vmatpush.bf16.msra.mxu0 0
      %723 = vmatpush.bf16.msra.mxu0 0
      %724 = vmatpush.bf16.msra.mxu0 0
      %725 = vmatpush.bf16.msra.mxu0 0
      %726 = vmatpush.bf16.msra.mxu0 0
      %727 = vmatpush.bf16.msra.mxu0 0
      %728 = vmatpush.bf16.msra.mxu0 0
      %729 = vmatpush.bf16.msra.mxu0 %v720
      %730 = vmatmul.bf16.gmra.mxu0 %v672
      %v731 = vpop.f32.mrf.mxu0
      %v732 = vadd.f32 0.0, %v731
      %v733 = vpop.f32.mrf.mxu0
      %v734 = vadd.f32 0.0, %v733
      %735 = vmatmul.bf16.gmra.mxu0 %v675
      %v736 = vpop.f32.mrf.mxu0
      %v737 = vadd.f32 0.0, %v736
      %v738 = vpop.f32.mrf.mxu0
      %v739 = vadd.f32 0.0, %v738
      %740 = vmatmul.bf16.gmra.mxu0 %v678
      %v741 = vpop.f32.mrf.mxu0
      %v742 = vadd.f32 0.0, %v741
      %v743 = vpop.f32.mrf.mxu0
      %v744 = vadd.f32 0.0, %v743
      %745 = vmatmul.bf16.gmra.mxu0 %v681
      %v746 = vpop.f32.mrf.mxu0
      %v747 = vadd.f32 0.0, %v746
      %v748 = vpop.f32.mrf.mxu0
      %v749 = vadd.f32 0.0, %v748
      %750 = vmatmul.bf16.gmra.mxu0 %v684
      %v751 = vpop.f32.mrf.mxu0
      %v752 = vadd.f32 0.0, %v751
      %v753 = vpop.f32.mrf.mxu0
      %v754 = vadd.f32 0.0, %v753
      %755 = vmatmul.bf16.gmra.mxu0 %v687
      %v756 = vpop.f32.mrf.mxu0
      %v757 = vadd.f32 0.0, %v756
      %v758 = vpop.f32.mrf.mxu0
      %v759 = vadd.f32 0.0, %v758
      %760 = vmatmul.bf16.gmra.mxu0 %v690
      %v761 = vpop.f32.mrf.mxu0
      %v762 = vadd.f32 0.0, %v761
      %v763 = vpop.f32.mrf.mxu0
      %v764 = vadd.f32 0.0, %v763
      %765 = vmatmul.bf16.gmra.mxu0 %v693
      %v766 = vpop.f32.mrf.mxu0
      %v767 = vadd.f32 0.0, %v766
      %v768 = vpop.f32.mrf.mxu0
      %v769 = vadd.f32 0.0, %v768
      %770 = vmatmul.bf16.gmra.mxu0 %v696
      %v771 = vpop.f32.mrf.mxu0
      %v772 = vadd.f32 0.0, %v771
      %v773 = vpop.f32.mrf.mxu0
      %v774 = vadd.f32 0.0, %v773
      %775 = vmatmul.bf16.gmra.mxu0 %v699
      %v776 = vpop.f32.mrf.mxu0
      %v777 = vadd.f32 0.0, %v776
      %v778 = vpop.f32.mrf.mxu0
      %v779 = vadd.f32 0.0, %v778
      %780 = vmatmul.bf16.gmra.mxu0 %v702
      %v781 = vpop.f32.mrf.mxu0
      %v782 = vadd.f32 0.0, %v781
      %v783 = vpop.f32.mrf.mxu0
      %v784 = vadd.f32 0.0, %v783
      %785 = vmatmul.bf16.gmra.mxu0 %v705
      %v786 = vpop.f32.mrf.mxu0
      %v787 = vadd.f32 0.0, %v786
      %v788 = vpop.f32.mrf.mxu0
      %v789 = vadd.f32 0.0, %v788
      %790 = vmatmul.bf16.gmra.mxu0 %v708
      %v791 = vpop.f32.mrf.mxu0
      %v792 = vadd.f32 0.0, %v791
      %v793 = vpop.f32.mrf.mxu0
      %v794 = vadd.f32 0.0, %v793
      %795 = vmatmul.bf16.gmra.mxu0 %v711
      %v796 = vpop.f32.mrf.mxu0
      %v797 = vadd.f32 0.0, %v796
      %v798 = vpop.f32.mrf.mxu0
      %v799 = vadd.f32 0.0, %v798
      %800 = vmatmul.bf16.gmra.mxu0 %v714
      %v801 = vpop.f32.mrf.mxu0
      %v802 = vadd.f32 0.0, %v801
      %v803 = vpop.f32.mrf.mxu0
      %v804 = vadd.f32 0.0, %v803
      %805 = vmatmul.bf16.gmra.mxu0 %v717
      %v806 = vpop.f32.mrf.mxu0
      %v807 = vadd.f32 0.0, %v806
      %v808 = vpop.f32.mrf.mxu0
      %v809 = vadd.f32 0.0, %v808
      %810 = vdwg.mxu0
      %v811 = vadd.f32 %v589, %v732
      %v812 = vadd.f32 %v590, %v734
      %v813 = vadd.f32 %v591, %v737
      %v814 = vadd.f32 %v592, %v739
      %v815 = vadd.f32 %v593, %v742
      %v816 = vadd.f32 %v594, %v744
      %v817 = vadd.f32 %v595, %v747
      %v818 = vadd.f32 %v596, %v749
      %v819 = vadd.f32 %v597, %v752
      %v820 = vadd.f32 %v598, %v754
      %v821 = vadd.f32 %v599, %v757
      %v822 = vadd.f32 %v600, %v759
      %v823 = vadd.f32 %v601, %v762
      %v824 = vadd.f32 %v602, %v764
      %v825 = vadd.f32 %v603, %v767
      %v826 = vadd.f32 %v604, %v769
      %v827 = vadd.f32 %v605, %v772
      %v828 = vadd.f32 %v606, %v774
      %v829 = vadd.f32 %v607, %v777
      %v830 = vadd.f32 %v608, %v779
      %v831 = vadd.f32 %v609, %v782
      %v832 = vadd.f32 %v610, %v784
      %v833 = vadd.f32 %v611, %v787
      %v834 = vadd.f32 %v612, %v789
      %v835 = vadd.f32 %v613, %v792
      %v836 = vadd.f32 %v614, %v794
      %v837 = vadd.f32 %v615, %v797
      %v838 = vadd.f32 %v616, %v799
      %v839 = vadd.f32 %v617, %v802
      %v840 = vadd.f32 %v618, %v804
      %v841 = vadd.f32 %v619, %v807
      %v842 = vadd.f32 %v620, %v809
      %s843 = scalar_lea.vmem %s165, 24
      %v844 = vld [vmem:[%s843] sm:$0xff]
      %v845 = vld [vmem:[%s843 + $0x8] sm:$0xff]
      %v846 = vld [vmem:[%s843 + $0x18] sm:$0xff]
      %v847 = vld [vmem:[%s843 + $0x20] sm:$0xff]
      %v848 = vld [vmem:[%s843 + $0x30] sm:$0xff]
      %v849 = vld [vmem:[%s843 + $0x38] sm:$0xff]
      %v850 = vld [vmem:[%s843 + $0x48] sm:$0xff]
      %v851 = vld [vmem:[%s843 + $0x50] sm:$0xff]
      %v852 = vld [vmem:[%s843 + $0x60] sm:$0xff]
      %v853 = vld [vmem:[%s843 + $0x68] sm:$0xff]
      %v854 = vld [vmem:[%s843 + $0x78] sm:$0xff]
      %v855 = vld [vmem:[%s843 + $0x80] sm:$0xff]
      %v856 = vld [vmem:[%s843 + $0x90] sm:$0xff]
      %v857 = vld [vmem:[%s843 + $0x98] sm:$0xff]
      %v858 = vld [vmem:[%s843 + $0xa8] sm:$0xff]
      %v859 = vld [vmem:[%s843 + $0xb0] sm:$0xff]
      %v860 = vld [vmem:[%s843 + $0xc0] sm:$0xff]
      %v861 = vld [vmem:[%s843 + $0xc8] sm:$0xff]
      %v862 = vld [vmem:[%s843 + $0xd8] sm:$0xff]
      %v863 = vld [vmem:[%s843 + $0xe0] sm:$0xff]
      %v864 = vld [vmem:[%s843 + $0xf0] sm:$0xff]
      %v865 = vld [vmem:[%s843 + $0xf8] sm:$0xff]
      %v866 = vld [vmem:[%s843 + $0x108] sm:$0xff]
      %v867 = vld [vmem:[%s843 + $0x110] sm:$0xff]
      %v868 = vld [vmem:[%s843 + $0x120] sm:$0xff]
      %v869 = vld [vmem:[%s843 + $0x128] sm:$0xff]
      %v870 = vld [vmem:[%s843 + $0x138] sm:$0xff]
      %v871 = vld [vmem:[%s843 + $0x140] sm:$0xff]
      %v872 = vld [vmem:[%s843 + $0x150] sm:$0xff]
      %v873 = vld [vmem:[%s843 + $0x158] sm:$0xff]
      %v874 = vld [vmem:[%s843 + $0x168] sm:$0xff]
      %v875 = vld [vmem:[%s843 + $0x170] sm:$0xff]
      %v876 = vpack.c.bf16 %v845, %v844
      %v877 = vpack.c.bf16 %v847, %v846
      %v878 = vpack.c.bf16 %v849, %v848
      %v879 = vpack.c.bf16 %v851, %v850
      %v880 = vpack.c.bf16 %v853, %v852
      %v881 = vpack.c.bf16 %v855, %v854
      %v882 = vpack.c.bf16 %v857, %v856
      %v883 = vpack.c.bf16 %v859, %v858
      %v884 = vpack.c.bf16 %v861, %v860
      %v885 = vpack.c.bf16 %v863, %v862
      %v886 = vpack.c.bf16 %v865, %v864
      %v887 = vpack.c.bf16 %v867, %v866
      %v888 = vpack.c.bf16 %v869, %v868
      %v889 = vpack.c.bf16 %v871, %v870
      %v890 = vpack.c.bf16 %v873, %v872
      %v891 = vpack.c.bf16 %v875, %v874
      %s892 = scalar_lea.vmem %s1, 12
      %v893 = vld [vmem:[%s892] sm:$0xf]
      %v895 = vsel %vm225, %v876, 0
      %v898 = vsel %vm225, %v877, 0
      %v901 = vsel %vm225, %v878, 0
      %v904 = vsel %vm225, %v879, 0
      %v907 = vsel %vm225, %v880, 0
      %v910 = vsel %vm225, %v881, 0
      %v913 = vsel %vm225, %v882, 0
      %v916 = vsel %vm225, %v883, 0
      %v919 = vsel %vm225, %v884, 0
      %v922 = vsel %vm225, %v885, 0
      %v925 = vsel %vm225, %v886, 0
      %v928 = vsel %vm225, %v887, 0
      %v931 = vsel %vm225, %v888, 0
      %v934 = vsel %vm225, %v889, 0
      %v937 = vsel %vm225, %v890, 0
      %v940 = vsel %vm225, %v891, 0
      %v943 = vsel %vm274, %v893, 0
      %945 = vmatpush.bf16.msra.mxu0 0
      %946 = vmatpush.bf16.msra.mxu0 0
      %947 = vmatpush.bf16.msra.mxu0 0
      %948 = vmatpush.bf16.msra.mxu0 0
      %949 = vmatpush.bf16.msra.mxu0 0
      %950 = vmatpush.bf16.msra.mxu0 0
      %951 = vmatpush.bf16.msra.mxu0 0
      %952 = vmatpush.bf16.msra.mxu0 %v943
      %953 = vmatmul.bf16.gmra.mxu0 %v895
      %v954 = vpop.f32.mrf.mxu0
      %v955 = vadd.f32 0.0, %v954
      %v956 = vpop.f32.mrf.mxu0
      %v957 = vadd.f32 0.0, %v956
      %958 = vmatmul.bf16.gmra.mxu0 %v898
      %v959 = vpop.f32.mrf.mxu0
      %v960 = vadd.f32 0.0, %v959
      %v961 = vpop.f32.mrf.mxu0
      %v962 = vadd.f32 0.0, %v961
      %963 = vmatmul.bf16.gmra.mxu0 %v901
      %v964 = vpop.f32.mrf.mxu0
      %v965 = vadd.f32 0.0, %v964
      %v966 = vpop.f32.mrf.mxu0
      %v967 = vadd.f32 0.0, %v966
      %968 = vmatmul.bf16.gmra.mxu0 %v904
      %v969 = vpop.f32.mrf.mxu0
      %v970 = vadd.f32 0.0, %v969
      %v971 = vpop.f32.mrf.mxu0
      %v972 = vadd.f32 0.0, %v971
      %973 = vmatmul.bf16.gmra.mxu0 %v907
      %v974 = vpop.f32.mrf.mxu0
      %v975 = vadd.f32 0.0, %v974
      %v976 = vpop.f32.mrf.mxu0
      %v977 = vadd.f32 0.0, %v976
      %978 = vmatmul.bf16.gmra.mxu0 %v910
      %v979 = vpop.f32.mrf.mxu0
      %v980 = vadd.f32 0.0, %v979
      %v981 = vpop.f32.mrf.mxu0
      %v982 = vadd.f32 0.0, %v981
      %983 = vmatmul.bf16.gmra.mxu0 %v913
      %v984 = vpop.f32.mrf.mxu0
      %v985 = vadd.f32 0.0, %v984
      %v986 = vpop.f32.mrf.mxu0
      %v987 = vadd.f32 0.0, %v986
      %988 = vmatmul.bf16.gmra.mxu0 %v916
      %v989 = vpop.f32.mrf.mxu0
      %v990 = vadd.f32 0.0, %v989
      %v991 = vpop.f32.mrf.mxu0
      %v992 = vadd.f32 0.0, %v991
      %993 = vmatmul.bf16.gmra.mxu0 %v919
      %v994 = vpop.f32.mrf.mxu0
      %v995 = vadd.f32 0.0, %v994
      %v996 = vpop.f32.mrf.mxu0
      %v997 = vadd.f32 0.0, %v996
      %998 = vmatmul.bf16.gmra.mxu0 %v922
      %v999 = vpop.f32.mrf.mxu0
      %v1000 = vadd.f32 0.0, %v999
      %v1001 = vpop.f32.mrf.mxu0
      %v1002 = vadd.f32 0.0, %v1001
      %1003 = vmatmul.bf16.gmra.mxu0 %v925
      %v1004 = vpop.f32.mrf.mxu0
      %v1005 = vadd.f32 0.0, %v1004
      %v1006 = vpop.f32.mrf.mxu0
      %v1007 = vadd.f32 0.0, %v1006
      %1008 = vmatmul.bf16.gmra.mxu0 %v928
      %v1009 = vpop.f32.mrf.mxu0
      %v1010 = vadd.f32 0.0, %v1009
      %v1011 = vpop.f32.mrf.mxu0
      %v1012 = vadd.f32 0.0, %v1011
      %1013 = vmatmul.bf16.gmra.mxu0 %v931
      %v1014 = vpop.f32.mrf.mxu0
      %v1015 = vadd.f32 0.0, %v1014
      %v1016 = vpop.f32.mrf.mxu0
      %v1017 = vadd.f32 0.0, %v1016
      %1018 = vmatmul.bf16.gmra.mxu0 %v934
      %v1019 = vpop.f32.mrf.mxu0
      %v1020 = vadd.f32 0.0, %v1019
      %v1021 = vpop.f32.mrf.mxu0
      %v1022 = vadd.f32 0.0, %v1021
      %1023 = vmatmul.bf16.gmra.mxu0 %v937
      %v1024 = vpop.f32.mrf.mxu0
      %v1025 = vadd.f32 0.0, %v1024
      %v1026 = vpop.f32.mrf.mxu0
      %v1027 = vadd.f32 0.0, %v1026
      %1028 = vmatmul.bf16.gmra.mxu0 %v940
      %v1029 = vpop.f32.mrf.mxu0
      %v1030 = vadd.f32 0.0, %v1029
      %v1031 = vpop.f32.mrf.mxu0
      %v1032 = vadd.f32 0.0, %v1031
      %1033 = vdwg.mxu0
      %v1034 = vadd.f32 %v811, %v955
      %v1035 = vadd.f32 %v812, %v957
      %v1036 = vadd.f32 %v813, %v960
      %v1037 = vadd.f32 %v814, %v962
      %v1038 = vadd.f32 %v815, %v965
      %v1039 = vadd.f32 %v816, %v967
      %v1040 = vadd.f32 %v817, %v970
      %v1041 = vadd.f32 %v818, %v972
      %v1042 = vadd.f32 %v819, %v975
      %v1043 = vadd.f32 %v820, %v977
      %v1044 = vadd.f32 %v821, %v980
      %v1045 = vadd.f32 %v822, %v982
      %v1046 = vadd.f32 %v823, %v985
      %v1047 = vadd.f32 %v824, %v987
      %v1048 = vadd.f32 %v825, %v990
      %v1049 = vadd.f32 %v826, %v992
      %v1050 = vadd.f32 %v827, %v995
      %v1051 = vadd.f32 %v828, %v997
      %v1052 = vadd.f32 %v829, %v1000
      %v1053 = vadd.f32 %v830, %v1002
      %v1054 = vadd.f32 %v831, %v1005
      %v1055 = vadd.f32 %v832, %v1007
      %v1056 = vadd.f32 %v833, %v1010
      %v1057 = vadd.f32 %v834, %v1012
      %v1058 = vadd.f32 %v835, %v1015
      %v1059 = vadd.f32 %v836, %v1017
      %v1060 = vadd.f32 %v837, %v1020
      %v1061 = vadd.f32 %v838, %v1022
      %v1062 = vadd.f32 %v839, %v1025
      %v1063 = vadd.f32 %v840, %v1027
      %v1064 = vadd.f32 %v841, %v1030
      %v1065 = vadd.f32 %v842, %v1032
      %v1066 = vld [vmem:[%s843 + $0x1] sm:$0xff]
      %v1067 = vld [vmem:[%s843 + $0x9] sm:$0xff]
      %v1068 = vld [vmem:[%s843 + $0x19] sm:$0xff]
      %v1069 = vld [vmem:[%s843 + $0x21] sm:$0xff]
      %v1070 = vld [vmem:[%s843 + $0x31] sm:$0xff]
      %v1071 = vld [vmem:[%s843 + $0x39] sm:$0xff]
      %v1072 = vld [vmem:[%s843 + $0x49] sm:$0xff]
      %v1073 = vld [vmem:[%s843 + $0x51] sm:$0xff]
      %v1074 = vld [vmem:[%s843 + $0x61] sm:$0xff]
      %v1075 = vld [vmem:[%s843 + $0x69] sm:$0xff]
      %v1076 = vld [vmem:[%s843 + $0x79] sm:$0xff]
      %v1077 = vld [vmem:[%s843 + $0x81] sm:$0xff]
      %v1078 = vld [vmem:[%s843 + $0x91] sm:$0xff]
      %v1079 = vld [vmem:[%s843 + $0x99] sm:$0xff]
      %v1080 = vld [vmem:[%s843 + $0xa9] sm:$0xff]
      %v1081 = vld [vmem:[%s843 + $0xb1] sm:$0xff]
      %v1082 = vld [vmem:[%s843 + $0xc1] sm:$0xff]
      %v1083 = vld [vmem:[%s843 + $0xc9] sm:$0xff]
      %v1084 = vld [vmem:[%s843 + $0xd9] sm:$0xff]
      %v1085 = vld [vmem:[%s843 + $0xe1] sm:$0xff]
      %v1086 = vld [vmem:[%s843 + $0xf1] sm:$0xff]
      %v1087 = vld [vmem:[%s843 + $0xf9] sm:$0xff]
      %v1088 = vld [vmem:[%s843 + $0x109] sm:$0xff]
      %v1089 = vld [vmem:[%s843 + $0x111] sm:$0xff]
      %v1090 = vld [vmem:[%s843 + $0x121] sm:$0xff]
      %v1091 = vld [vmem:[%s843 + $0x129] sm:$0xff]
      %v1092 = vld [vmem:[%s843 + $0x139] sm:$0xff]
      %v1093 = vld [vmem:[%s843 + $0x141] sm:$0xff]
      %v1094 = vld [vmem:[%s843 + $0x151] sm:$0xff]
      %v1095 = vld [vmem:[%s843 + $0x159] sm:$0xff]
      %v1096 = vld [vmem:[%s843 + $0x169] sm:$0xff]
      %v1097 = vld [vmem:[%s843 + $0x171] sm:$0xff]
      %v1098 = vpack.c.bf16 %v1067, %v1066
      %v1099 = vpack.c.bf16 %v1069, %v1068
      %v1100 = vpack.c.bf16 %v1071, %v1070
      %v1101 = vpack.c.bf16 %v1073, %v1072
      %v1102 = vpack.c.bf16 %v1075, %v1074
      %v1103 = vpack.c.bf16 %v1077, %v1076
      %v1104 = vpack.c.bf16 %v1079, %v1078
      %v1105 = vpack.c.bf16 %v1081, %v1080
      %v1106 = vpack.c.bf16 %v1083, %v1082
      %v1107 = vpack.c.bf16 %v1085, %v1084
      %v1108 = vpack.c.bf16 %v1087, %v1086
      %v1109 = vpack.c.bf16 %v1089, %v1088
      %v1110 = vpack.c.bf16 %v1091, %v1090
      %v1111 = vpack.c.bf16 %v1093, %v1092
      %v1112 = vpack.c.bf16 %v1095, %v1094
      %v1113 = vpack.c.bf16 %v1097, %v1096
      %s1114 = scalar_lea.vmem %s1, 16
      %v1115 = vld [vmem:[%s1114] sm:$0xf]
      %v1117 = vsel %vm225, %v1098, 0
      %v1120 = vsel %vm225, %v1099, 0
      %v1123 = vsel %vm225, %v1100, 0
      %v1126 = vsel %vm225, %v1101, 0
      %v1129 = vsel %vm225, %v1102, 0
      %v1132 = vsel %vm225, %v1103, 0
      %v1135 = vsel %vm225, %v1104, 0
      %v1138 = vsel %vm225, %v1105, 0
      %v1141 = vsel %vm225, %v1106, 0
      %v1144 = vsel %vm225, %v1107, 0
      %v1147 = vsel %vm225, %v1108, 0
      %v1150 = vsel %vm225, %v1109, 0
      %v1153 = vsel %vm225, %v1110, 0
      %v1156 = vsel %vm225, %v1111, 0
      %v1159 = vsel %vm225, %v1112, 0
      %v1162 = vsel %vm225, %v1113, 0
      %v1165 = vsel %vm274, %v1115, 0
      %1167 = vmatpush.bf16.msra.mxu0 0
      %1168 = vmatpush.bf16.msra.mxu0 0
      %1169 = vmatpush.bf16.msra.mxu0 0
      %1170 = vmatpush.bf16.msra.mxu0 0
      %1171 = vmatpush.bf16.msra.mxu0 0
      %1172 = vmatpush.bf16.msra.mxu0 0
      %1173 = vmatpush.bf16.msra.mxu0 0
      %1174 = vmatpush.bf16.msra.mxu0 %v1165
      %1175 = vmatmul.bf16.gmra.mxu0 %v1117
      %v1176 = vpop.f32.mrf.mxu0
      %v1177 = vadd.f32 0.0, %v1176
      %v1178 = vpop.f32.mrf.mxu0
      %v1179 = vadd.f32 0.0, %v1178
      %1180 = vmatmul.bf16.gmra.mxu0 %v1120
      %v1181 = vpop.f32.mrf.mxu0
      %v1182 = vadd.f32 0.0, %v1181
      %v1183 = vpop.f32.mrf.mxu0
      %v1184 = vadd.f32 0.0, %v1183
      %1185 = vmatmul.bf16.gmra.mxu0 %v1123
      %v1186 = vpop.f32.mrf.mxu0
      %v1187 = vadd.f32 0.0, %v1186
      %v1188 = vpop.f32.mrf.mxu0
      %v1189 = vadd.f32 0.0, %v1188
      %1190 = vmatmul.bf16.gmra.mxu0 %v1126
      %v1191 = vpop.f32.mrf.mxu0
      %v1192 = vadd.f32 0.0, %v1191
      %v1193 = vpop.f32.mrf.mxu0
      %v1194 = vadd.f32 0.0, %v1193
      %1195 = vmatmul.bf16.gmra.mxu0 %v1129
      %v1196 = vpop.f32.mrf.mxu0
      %v1197 = vadd.f32 0.0, %v1196
      %v1198 = vpop.f32.mrf.mxu0
      %v1199 = vadd.f32 0.0, %v1198
      %1200 = vmatmul.bf16.gmra.mxu0 %v1132
      %v1201 = vpop.f32.mrf.mxu0
      %v1202 = vadd.f32 0.0, %v1201
      %v1203 = vpop.f32.mrf.mxu0
      %v1204 = vadd.f32 0.0, %v1203
      %1205 = vmatmul.bf16.gmra.mxu0 %v1135
      %v1206 = vpop.f32.mrf.mxu0
      %v1207 = vadd.f32 0.0, %v1206
      %v1208 = vpop.f32.mrf.mxu0
      %v1209 = vadd.f32 0.0, %v1208
      %1210 = vmatmul.bf16.gmra.mxu0 %v1138
      %v1211 = vpop.f32.mrf.mxu0
      %v1212 = vadd.f32 0.0, %v1211
      %v1213 = vpop.f32.mrf.mxu0
      %v1214 = vadd.f32 0.0, %v1213
      %1215 = vmatmul.bf16.gmra.mxu0 %v1141
      %v1216 = vpop.f32.mrf.mxu0
      %v1217 = vadd.f32 0.0, %v1216
      %v1218 = vpop.f32.mrf.mxu0
      %v1219 = vadd.f32 0.0, %v1218
      %1220 = vmatmul.bf16.gmra.mxu0 %v1144
      %v1221 = vpop.f32.mrf.mxu0
      %v1222 = vadd.f32 0.0, %v1221
      %v1223 = vpop.f32.mrf.mxu0
      %v1224 = vadd.f32 0.0, %v1223
      %1225 = vmatmul.bf16.gmra.mxu0 %v1147
      %v1226 = vpop.f32.mrf.mxu0
      %v1227 = vadd.f32 0.0, %v1226
      %v1228 = vpop.f32.mrf.mxu0
      %v1229 = vadd.f32 0.0, %v1228
      %1230 = vmatmul.bf16.gmra.mxu0 %v1150
      %v1231 = vpop.f32.mrf.mxu0
      %v1232 = vadd.f32 0.0, %v1231
      %v1233 = vpop.f32.mrf.mxu0
      %v1234 = vadd.f32 0.0, %v1233
      %1235 = vmatmul.bf16.gmra.mxu0 %v1153
      %v1236 = vpop.f32.mrf.mxu0
      %v1237 = vadd.f32 0.0, %v1236
      %v1238 = vpop.f32.mrf.mxu0
      %v1239 = vadd.f32 0.0, %v1238
      %1240 = vmatmul.bf16.gmra.mxu0 %v1156
      %v1241 = vpop.f32.mrf.mxu0
      %v1242 = vadd.f32 0.0, %v1241
      %v1243 = vpop.f32.mrf.mxu0
      %v1244 = vadd.f32 0.0, %v1243
      %1245 = vmatmul.bf16.gmra.mxu0 %v1159
      %v1246 = vpop.f32.mrf.mxu0
      %v1247 = vadd.f32 0.0, %v1246
      %v1248 = vpop.f32.mrf.mxu0
      %v1249 = vadd.f32 0.0, %v1248
      %1250 = vmatmul.bf16.gmra.mxu0 %v1162
      %v1251 = vpop.f32.mrf.mxu0
      %v1252 = vadd.f32 0.0, %v1251
      %v1253 = vpop.f32.mrf.mxu0
      %v1254 = vadd.f32 0.0, %v1253
      %1255 = vdwg.mxu0
      %v1256 = vadd.f32 %v1034, %v1177
      %v1257 = vadd.f32 %v1035, %v1179
      %v1258 = vadd.f32 %v1036, %v1182
      %v1259 = vadd.f32 %v1037, %v1184
      %v1260 = vadd.f32 %v1038, %v1187
      %v1261 = vadd.f32 %v1039, %v1189
      %v1262 = vadd.f32 %v1040, %v1192
      %v1263 = vadd.f32 %v1041, %v1194
      %v1264 = vadd.f32 %v1042, %v1197
      %v1265 = vadd.f32 %v1043, %v1199
      %v1266 = vadd.f32 %v1044, %v1202
      %v1267 = vadd.f32 %v1045, %v1204
      %v1268 = vadd.f32 %v1046, %v1207
      %v1269 = vadd.f32 %v1047, %v1209
      %v1270 = vadd.f32 %v1048, %v1212
      %v1271 = vadd.f32 %v1049, %v1214
      %v1272 = vadd.f32 %v1050, %v1217
      %v1273 = vadd.f32 %v1051, %v1219
      %v1274 = vadd.f32 %v1052, %v1222
      %v1275 = vadd.f32 %v1053, %v1224
      %v1276 = vadd.f32 %v1054, %v1227
      %v1277 = vadd.f32 %v1055, %v1229
      %v1278 = vadd.f32 %v1056, %v1232
      %v1279 = vadd.f32 %v1057, %v1234
      %v1280 = vadd.f32 %v1058, %v1237
      %v1281 = vadd.f32 %v1059, %v1239
      %v1282 = vadd.f32 %v1060, %v1242
      %v1283 = vadd.f32 %v1061, %v1244
      %v1284 = vadd.f32 %v1062, %v1247
      %v1285 = vadd.f32 %v1063, %v1249
      %v1286 = vadd.f32 %v1064, %v1252
      %v1287 = vadd.f32 %v1065, %v1254
      %v1288 = vld [vmem:[%s843 + $0x2] sm:$0xff]
      %v1289 = vld [vmem:[%s843 + $0xa] sm:$0xff]
      %v1290 = vld [vmem:[%s843 + $0x1a] sm:$0xff]
      %v1291 = vld [vmem:[%s843 + $0x22] sm:$0xff]
      %v1292 = vld [vmem:[%s843 + $0x32] sm:$0xff]
      %v1293 = vld [vmem:[%s843 + $0x3a] sm:$0xff]
      %v1294 = vld [vmem:[%s843 + $0x4a] sm:$0xff]
      %v1295 = vld [vmem:[%s843 + $0x52] sm:$0xff]
      %v1296 = vld [vmem:[%s843 + $0x62] sm:$0xff]
      %v1297 = vld [vmem:[%s843 + $0x6a] sm:$0xff]
      %v1298 = vld [vmem:[%s843 + $0x7a] sm:$0xff]
      %v1299 = vld [vmem:[%s843 + $0x82] sm:$0xff]
      %v1300 = vld [vmem:[%s843 + $0x92] sm:$0xff]
      %v1301 = vld [vmem:[%s843 + $0x9a] sm:$0xff]
      %v1302 = vld [vmem:[%s843 + $0xaa] sm:$0xff]
      %v1303 = vld [vmem:[%s843 + $0xb2] sm:$0xff]
      %v1304 = vld [vmem:[%s843 + $0xc2] sm:$0xff]
      %v1305 = vld [vmem:[%s843 + $0xca] sm:$0xff]
      %v1306 = vld [vmem:[%s843 + $0xda] sm:$0xff]
      %v1307 = vld [vmem:[%s843 + $0xe2] sm:$0xff]
      %v1308 = vld [vmem:[%s843 + $0xf2] sm:$0xff]
      %v1309 = vld [vmem:[%s843 + $0xfa] sm:$0xff]
      %v1310 = vld [vmem:[%s843 + $0x10a] sm:$0xff]
      %v1311 = vld [vmem:[%s843 + $0x112] sm:$0xff]
      %v1312 = vld [vmem:[%s843 + $0x122] sm:$0xff]
      %v1313 = vld [vmem:[%s843 + $0x12a] sm:$0xff]
      %v1314 = vld [vmem:[%s843 + $0x13a] sm:$0xff]
      %v1315 = vld [vmem:[%s843 + $0x142] sm:$0xff]
      %v1316 = vld [vmem:[%s843 + $0x152] sm:$0xff]
      %v1317 = vld [vmem:[%s843 + $0x15a] sm:$0xff]
      %v1318 = vld [vmem:[%s843 + $0x16a] sm:$0xff]
      %v1319 = vld [vmem:[%s843 + $0x172] sm:$0xff]
      %v1320 = vpack.c.bf16 %v1289, %v1288
      %v1321 = vpack.c.bf16 %v1291, %v1290
      %v1322 = vpack.c.bf16 %v1293, %v1292
      %v1323 = vpack.c.bf16 %v1295, %v1294
      %v1324 = vpack.c.bf16 %v1297, %v1296
      %v1325 = vpack.c.bf16 %v1299, %v1298
      %v1326 = vpack.c.bf16 %v1301, %v1300
      %v1327 = vpack.c.bf16 %v1303, %v1302
      %v1328 = vpack.c.bf16 %v1305, %v1304
      %v1329 = vpack.c.bf16 %v1307, %v1306
      %v1330 = vpack.c.bf16 %v1309, %v1308
      %v1331 = vpack.c.bf16 %v1311, %v1310
      %v1332 = vpack.c.bf16 %v1313, %v1312
      %v1333 = vpack.c.bf16 %v1315, %v1314
      %v1334 = vpack.c.bf16 %v1317, %v1316
      %v1335 = vpack.c.bf16 %v1319, %v1318
      %s1336 = scalar_lea.vmem %s1, 20
      %v1337 = vld [vmem:[%s1336] sm:$0xf]
      %v1339 = vsel %vm225, %v1320, 0
      %v1342 = vsel %vm225, %v1321, 0
      %v1345 = vsel %vm225, %v1322, 0
      %v1348 = vsel %vm225, %v1323, 0
      %v1351 = vsel %vm225, %v1324, 0
      %v1354 = vsel %vm225, %v1325, 0
      %v1357 = vsel %vm225, %v1326, 0
      %v1360 = vsel %vm225, %v1327, 0
      %v1363 = vsel %vm225, %v1328, 0
      %v1366 = vsel %vm225, %v1329, 0
      %v1369 = vsel %vm225, %v1330, 0
      %v1372 = vsel %vm225, %v1331, 0
      %v1375 = vsel %vm225, %v1332, 0
      %v1378 = vsel %vm225, %v1333, 0
      %v1381 = vsel %vm225, %v1334, 0
      %v1384 = vsel %vm225, %v1335, 0
      %v1387 = vsel %vm274, %v1337, 0
      %1389 = vmatpush.bf16.msra.mxu0 0
      %1390 = vmatpush.bf16.msra.mxu0 0
      %1391 = vmatpush.bf16.msra.mxu0 0
      %1392 = vmatpush.bf16.msra.mxu0 0
      %1393 = vmatpush.bf16.msra.mxu0 0
      %1394 = vmatpush.bf16.msra.mxu0 0
      %1395 = vmatpush.bf16.msra.mxu0 0
      %1396 = vmatpush.bf16.msra.mxu0 %v1387
      %1397 = vmatmul.bf16.gmra.mxu0 %v1339
      %v1398 = vpop.f32.mrf.mxu0
      %v1399 = vadd.f32 0.0, %v1398
      %v1400 = vpop.f32.mrf.mxu0
      %v1401 = vadd.f32 0.0, %v1400
      %1402 = vmatmul.bf16.gmra.mxu0 %v1342
      %v1403 = vpop.f32.mrf.mxu0
      %v1404 = vadd.f32 0.0, %v1403
      %v1405 = vpop.f32.mrf.mxu0
      %v1406 = vadd.f32 0.0, %v1405
      %1407 = vmatmul.bf16.gmra.mxu0 %v1345
      %v1408 = vpop.f32.mrf.mxu0
      %v1409 = vadd.f32 0.0, %v1408
      %v1410 = vpop.f32.mrf.mxu0
      %v1411 = vadd.f32 0.0, %v1410
      %1412 = vmatmul.bf16.gmra.mxu0 %v1348
      %v1413 = vpop.f32.mrf.mxu0
      %v1414 = vadd.f32 0.0, %v1413
      %v1415 = vpop.f32.mrf.mxu0
      %v1416 = vadd.f32 0.0, %v1415
      %1417 = vmatmul.bf16.gmra.mxu0 %v1351
      %v1418 = vpop.f32.mrf.mxu0
      %v1419 = vadd.f32 0.0, %v1418
      %v1420 = vpop.f32.mrf.mxu0
      %v1421 = vadd.f32 0.0, %v1420
      %1422 = vmatmul.bf16.gmra.mxu0 %v1354
      %v1423 = vpop.f32.mrf.mxu0
      %v1424 = vadd.f32 0.0, %v1423
      %v1425 = vpop.f32.mrf.mxu0
      %v1426 = vadd.f32 0.0, %v1425
      %1427 = vmatmul.bf16.gmra.mxu0 %v1357
      %v1428 = vpop.f32.mrf.mxu0
      %v1429 = vadd.f32 0.0, %v1428
      %v1430 = vpop.f32.mrf.mxu0
      %v1431 = vadd.f32 0.0, %v1430
      %1432 = vmatmul.bf16.gmra.mxu0 %v1360
      %v1433 = vpop.f32.mrf.mxu0
      %v1434 = vadd.f32 0.0, %v1433
      %v1435 = vpop.f32.mrf.mxu0
      %v1436 = vadd.f32 0.0, %v1435
      %1437 = vmatmul.bf16.gmra.mxu0 %v1363
      %v1438 = vpop.f32.mrf.mxu0
      %v1439 = vadd.f32 0.0, %v1438
      %v1440 = vpop.f32.mrf.mxu0
      %v1441 = vadd.f32 0.0, %v1440
      %1442 = vmatmul.bf16.gmra.mxu0 %v1366
      %v1443 = vpop.f32.mrf.mxu0
      %v1444 = vadd.f32 0.0, %v1443
      %v1445 = vpop.f32.mrf.mxu0
      %v1446 = vadd.f32 0.0, %v1445
      %1447 = vmatmul.bf16.gmra.mxu0 %v1369
      %v1448 = vpop.f32.mrf.mxu0
      %v1449 = vadd.f32 0.0, %v1448
      %v1450 = vpop.f32.mrf.mxu0
      %v1451 = vadd.f32 0.0, %v1450
      %1452 = vmatmul.bf16.gmra.mxu0 %v1372
      %v1453 = vpop.f32.mrf.mxu0
      %v1454 = vadd.f32 0.0, %v1453
      %v1455 = vpop.f32.mrf.mxu0
      %v1456 = vadd.f32 0.0, %v1455
      %1457 = vmatmul.bf16.gmra.mxu0 %v1375
      %v1458 = vpop.f32.mrf.mxu0
      %v1459 = vadd.f32 0.0, %v1458
      %v1460 = vpop.f32.mrf.mxu0
      %v1461 = vadd.f32 0.0, %v1460
      %1462 = vmatmul.bf16.gmra.mxu0 %v1378
      %v1463 = vpop.f32.mrf.mxu0
      %v1464 = vadd.f32 0.0, %v1463
      %v1465 = vpop.f32.mrf.mxu0
      %v1466 = vadd.f32 0.0, %v1465
      %1467 = vmatmul.bf16.gmra.mxu0 %v1381
      %v1468 = vpop.f32.mrf.mxu0
      %v1469 = vadd.f32 0.0, %v1468
      %v1470 = vpop.f32.mrf.mxu0
      %v1471 = vadd.f32 0.0, %v1470
      %1472 = vmatmul.bf16.gmra.mxu0 %v1384
      %v1473 = vpop.f32.mrf.mxu0
      %v1474 = vadd.f32 0.0, %v1473
      %v1475 = vpop.f32.mrf.mxu0
      %v1476 = vadd.f32 0.0, %v1475
      %1477 = vdwg.mxu0
      %v1478 = vadd.f32 %v1256, %v1399
      %v1479 = vadd.f32 %v1257, %v1401
      %v1480 = vadd.f32 %v1258, %v1404
      %v1481 = vadd.f32 %v1259, %v1406
      %v1482 = vadd.f32 %v1260, %v1409
      %v1483 = vadd.f32 %v1261, %v1411
      %v1484 = vadd.f32 %v1262, %v1414
      %v1485 = vadd.f32 %v1263, %v1416
      %v1486 = vadd.f32 %v1264, %v1419
      %v1487 = vadd.f32 %v1265, %v1421
      %v1488 = vadd.f32 %v1266, %v1424
      %v1489 = vadd.f32 %v1267, %v1426
      %v1490 = vadd.f32 %v1268, %v1429
      %v1491 = vadd.f32 %v1269, %v1431
      %v1492 = vadd.f32 %v1270, %v1434
      %v1493 = vadd.f32 %v1271, %v1436
      %v1494 = vadd.f32 %v1272, %v1439
      %v1495 = vadd.f32 %v1273, %v1441
      %v1496 = vadd.f32 %v1274, %v1444
      %v1497 = vadd.f32 %v1275, %v1446
      %v1498 = vadd.f32 %v1276, %v1449
      %v1499 = vadd.f32 %v1277, %v1451
      %v1500 = vadd.f32 %v1278, %v1454
      %v1501 = vadd.f32 %v1279, %v1456
      %v1502 = vadd.f32 %v1280, %v1459
      %v1503 = vadd.f32 %v1281, %v1461
      %v1504 = vadd.f32 %v1282, %v1464
      %v1505 = vadd.f32 %v1283, %v1466
      %v1506 = vadd.f32 %v1284, %v1469
      %v1507 = vadd.f32 %v1285, %v1471
      %v1508 = vadd.f32 %v1286, %v1474
      %v1509 = vadd.f32 %v1287, %v1476
      %s1510 = scalar_lea.vmem %s165, 48
      %v1511 = vld [vmem:[%s1510] sm:$0xff]
      %v1512 = vld [vmem:[%s1510 + $0x8] sm:$0xff]
      %v1513 = vld [vmem:[%s1510 + $0x18] sm:$0xff]
      %v1514 = vld [vmem:[%s1510 + $0x20] sm:$0xff]
      %v1515 = vld [vmem:[%s1510 + $0x30] sm:$0xff]
      %v1516 = vld [vmem:[%s1510 + $0x38] sm:$0xff]
      %v1517 = vld [vmem:[%s1510 + $0x48] sm:$0xff]
      %v1518 = vld [vmem:[%s1510 + $0x50] sm:$0xff]
      %v1519 = vld [vmem:[%s1510 + $0x60] sm:$0xff]
      %v1520 = vld [vmem:[%s1510 + $0x68] sm:$0xff]
      %v1521 = vld [vmem:[%s1510 + $0x78] sm:$0xff]
      %v1522 = vld [vmem:[%s1510 + $0x80] sm:$0xff]
      %v1523 = vld [vmem:[%s1510 + $0x90] sm:$0xff]
      %v1524 = vld [vmem:[%s1510 + $0x98] sm:$0xff]
      %v1525 = vld [vmem:[%s1510 + $0xa8] sm:$0xff]
      %v1526 = vld [vmem:[%s1510 + $0xb0] sm:$0xff]
      %v1527 = vld [vmem:[%s1510 + $0xc0] sm:$0xff]
      %v1528 = vld [vmem:[%s1510 + $0xc8] sm:$0xff]
      %v1529 = vld [vmem:[%s1510 + $0xd8] sm:$0xff]
      %v1530 = vld [vmem:[%s1510 + $0xe0] sm:$0xff]
      %v1531 = vld [vmem:[%s1510 + $0xf0] sm:$0xff]
      %v1532 = vld [vmem:[%s1510 + $0xf8] sm:$0xff]
      %v1533 = vld [vmem:[%s1510 + $0x108] sm:$0xff]
      %v1534 = vld [vmem:[%s1510 + $0x110] sm:$0xff]
      %v1535 = vld [vmem:[%s1510 + $0x120] sm:$0xff]
      %v1536 = vld [vmem:[%s1510 + $0x128] sm:$0xff]
      %v1537 = vld [vmem:[%s1510 + $0x138] sm:$0xff]
      %v1538 = vld [vmem:[%s1510 + $0x140] sm:$0xff]
      %v1539 = vld [vmem:[%s1510 + $0x150] sm:$0xff]
      %v1540 = vld [vmem:[%s1510 + $0x158] sm:$0xff]
      %v1541 = vld [vmem:[%s1510 + $0x168] sm:$0xff]
      %v1542 = vld [vmem:[%s1510 + $0x170] sm:$0xff]
      %v1543 = vpack.c.bf16 %v1512, %v1511
      %v1544 = vpack.c.bf16 %v1514, %v1513
      %v1545 = vpack.c.bf16 %v1516, %v1515
      %v1546 = vpack.c.bf16 %v1518, %v1517
      %v1547 = vpack.c.bf16 %v1520, %v1519
      %v1548 = vpack.c.bf16 %v1522, %v1521
      %v1549 = vpack.c.bf16 %v1524, %v1523
      %v1550 = vpack.c.bf16 %v1526, %v1525
      %v1551 = vpack.c.bf16 %v1528, %v1527
      %v1552 = vpack.c.bf16 %v1530, %v1529
      %v1553 = vpack.c.bf16 %v1532, %v1531
      %v1554 = vpack.c.bf16 %v1534, %v1533
      %v1555 = vpack.c.bf16 %v1536, %v1535
      %v1556 = vpack.c.bf16 %v1538, %v1537
      %v1557 = vpack.c.bf16 %v1540, %v1539
      %v1558 = vpack.c.bf16 %v1542, %v1541
      %s1559 = scalar_lea.vmem %s1, 24
      %v1560 = vld [vmem:[%s1559] sm:$0xf]
      %v1562 = vsel %vm225, %v1543, 0
      %v1565 = vsel %vm225, %v1544, 0
      %v1568 = vsel %vm225, %v1545, 0
      %v1571 = vsel %vm225, %v1546, 0
      %v1574 = vsel %vm225, %v1547, 0
      %v1577 = vsel %vm225, %v1548, 0
      %v1580 = vsel %vm225, %v1549, 0
      %v1583 = vsel %vm225, %v1550, 0
      %v1586 = vsel %vm225, %v1551, 0
      %v1589 = vsel %vm225, %v1552, 0
      %v1592 = vsel %vm225, %v1553, 0
      %v1595 = vsel %vm225, %v1554, 0
      %v1598 = vsel %vm225, %v1555, 0
      %v1601 = vsel %vm225, %v1556, 0
      %v1604 = vsel %vm225, %v1557, 0
      %v1607 = vsel %vm225, %v1558, 0
      %v1610 = vsel %vm274, %v1560, 0
      %1612 = vmatpush.bf16.msra.mxu0 0
      %1613 = vmatpush.bf16.msra.mxu0 0
      %1614 = vmatpush.bf16.msra.mxu0 0
      %1615 = vmatpush.bf16.msra.mxu0 0
      %1616 = vmatpush.bf16.msra.mxu0 0
      %1617 = vmatpush.bf16.msra.mxu0 0
      %1618 = vmatpush.bf16.msra.mxu0 0
      %1619 = vmatpush.bf16.msra.mxu0 %v1610
      %1620 = vmatmul.bf16.gmra.mxu0 %v1562
      %v1621 = vpop.f32.mrf.mxu0
      %v1622 = vadd.f32 0.0, %v1621
      %v1623 = vpop.f32.mrf.mxu0
      %v1624 = vadd.f32 0.0, %v1623
      %1625 = vmatmul.bf16.gmra.mxu0 %v1565
      %v1626 = vpop.f32.mrf.mxu0
      %v1627 = vadd.f32 0.0, %v1626
      %v1628 = vpop.f32.mrf.mxu0
      %v1629 = vadd.f32 0.0, %v1628
      %1630 = vmatmul.bf16.gmra.mxu0 %v1568
      %v1631 = vpop.f32.mrf.mxu0
      %v1632 = vadd.f32 0.0, %v1631
      %v1633 = vpop.f32.mrf.mxu0
      %v1634 = vadd.f32 0.0, %v1633
      %1635 = vmatmul.bf16.gmra.mxu0 %v1571
      %v1636 = vpop.f32.mrf.mxu0
      %v1637 = vadd.f32 0.0, %v1636
      %v1638 = vpop.f32.mrf.mxu0
      %v1639 = vadd.f32 0.0, %v1638
      %1640 = vmatmul.bf16.gmra.mxu0 %v1574
      %v1641 = vpop.f32.mrf.mxu0
      %v1642 = vadd.f32 0.0, %v1641
      %v1643 = vpop.f32.mrf.mxu0
      %v1644 = vadd.f32 0.0, %v1643
      %1645 = vmatmul.bf16.gmra.mxu0 %v1577
      %v1646 = vpop.f32.mrf.mxu0
      %v1647 = vadd.f32 0.0, %v1646
      %v1648 = vpop.f32.mrf.mxu0
      %v1649 = vadd.f32 0.0, %v1648
      %1650 = vmatmul.bf16.gmra.mxu0 %v1580
      %v1651 = vpop.f32.mrf.mxu0
      %v1652 = vadd.f32 0.0, %v1651
      %v1653 = vpop.f32.mrf.mxu0
      %v1654 = vadd.f32 0.0, %v1653
      %1655 = vmatmul.bf16.gmra.mxu0 %v1583
      %v1656 = vpop.f32.mrf.mxu0
      %v1657 = vadd.f32 0.0, %v1656
      %v1658 = vpop.f32.mrf.mxu0
      %v1659 = vadd.f32 0.0, %v1658
      %1660 = vmatmul.bf16.gmra.mxu0 %v1586
      %v1661 = vpop.f32.mrf.mxu0
      %v1662 = vadd.f32 0.0, %v1661
      %v1663 = vpop.f32.mrf.mxu0
      %v1664 = vadd.f32 0.0, %v1663
      %1665 = vmatmul.bf16.gmra.mxu0 %v1589
      %v1666 = vpop.f32.mrf.mxu0
      %v1667 = vadd.f32 0.0, %v1666
      %v1668 = vpop.f32.mrf.mxu0
      %v1669 = vadd.f32 0.0, %v1668
      %1670 = vmatmul.bf16.gmra.mxu0 %v1592
      %v1671 = vpop.f32.mrf.mxu0
      %v1672 = vadd.f32 0.0, %v1671
      %v1673 = vpop.f32.mrf.mxu0
      %v1674 = vadd.f32 0.0, %v1673
      %1675 = vmatmul.bf16.gmra.mxu0 %v1595
      %v1676 = vpop.f32.mrf.mxu0
      %v1677 = vadd.f32 0.0, %v1676
      %v1678 = vpop.f32.mrf.mxu0
      %v1679 = vadd.f32 0.0, %v1678
      %1680 = vmatmul.bf16.gmra.mxu0 %v1598
      %v1681 = vpop.f32.mrf.mxu0
      %v1682 = vadd.f32 0.0, %v1681
      %v1683 = vpop.f32.mrf.mxu0
      %v1684 = vadd.f32 0.0, %v1683
      %1685 = vmatmul.bf16.gmra.mxu0 %v1601
      %v1686 = vpop.f32.mrf.mxu0
      %v1687 = vadd.f32 0.0, %v1686
      %v1688 = vpop.f32.mrf.mxu0
      %v1689 = vadd.f32 0.0, %v1688
      %1690 = vmatmul.bf16.gmra.mxu0 %v1604
      %v1691 = vpop.f32.mrf.mxu0
      %v1692 = vadd.f32 0.0, %v1691
      %v1693 = vpop.f32.mrf.mxu0
      %v1694 = vadd.f32 0.0, %v1693
      %1695 = vmatmul.bf16.gmra.mxu0 %v1607
      %v1696 = vpop.f32.mrf.mxu0
      %v1697 = vadd.f32 0.0, %v1696
      %v1698 = vpop.f32.mrf.mxu0
      %v1699 = vadd.f32 0.0, %v1698
      %1700 = vdwg.mxu0
      %v1701 = vadd.f32 %v1478, %v1622
      %v1702 = vadd.f32 %v1479, %v1624
      %v1703 = vadd.f32 %v1480, %v1627
      %v1704 = vadd.f32 %v1481, %v1629
      %v1705 = vadd.f32 %v1482, %v1632
      %v1706 = vadd.f32 %v1483, %v1634
      %v1707 = vadd.f32 %v1484, %v1637
      %v1708 = vadd.f32 %v1485, %v1639
      %v1709 = vadd.f32 %v1486, %v1642
      %v1710 = vadd.f32 %v1487, %v1644
      %v1711 = vadd.f32 %v1488, %v1647
      %v1712 = vadd.f32 %v1489, %v1649
      %v1713 = vadd.f32 %v1490, %v1652
      %v1714 = vadd.f32 %v1491, %v1654
      %v1715 = vadd.f32 %v1492, %v1657
      %v1716 = vadd.f32 %v1493, %v1659
      %v1717 = vadd.f32 %v1494, %v1662
      %v1718 = vadd.f32 %v1495, %v1664
      %v1719 = vadd.f32 %v1496, %v1667
      %v1720 = vadd.f32 %v1497, %v1669
      %v1721 = vadd.f32 %v1498, %v1672
      %v1722 = vadd.f32 %v1499, %v1674
      %v1723 = vadd.f32 %v1500, %v1677
      %v1724 = vadd.f32 %v1501, %v1679
      %v1725 = vadd.f32 %v1502, %v1682
      %v1726 = vadd.f32 %v1503, %v1684
      %v1727 = vadd.f32 %v1504, %v1687
      %v1728 = vadd.f32 %v1505, %v1689
      %v1729 = vadd.f32 %v1506, %v1692
      %v1730 = vadd.f32 %v1507, %v1694
      %v1731 = vadd.f32 %v1508, %v1697
      %v1732 = vadd.f32 %v1509, %v1699
      %v1733 = vld [vmem:[%s1510 + $0x1] sm:$0xff]
      %v1734 = vld [vmem:[%s1510 + $0x9] sm:$0xff]
      %v1735 = vld [vmem:[%s1510 + $0x19] sm:$0xff]
      %v1736 = vld [vmem:[%s1510 + $0x21] sm:$0xff]
      %v1737 = vld [vmem:[%s1510 + $0x31] sm:$0xff]
      %v1738 = vld [vmem:[%s1510 + $0x39] sm:$0xff]
      %v1739 = vld [vmem:[%s1510 + $0x49] sm:$0xff]
      %v1740 = vld [vmem:[%s1510 + $0x51] sm:$0xff]
      %v1741 = vld [vmem:[%s1510 + $0x61] sm:$0xff]
      %v1742 = vld [vmem:[%s1510 + $0x69] sm:$0xff]
      %v1743 = vld [vmem:[%s1510 + $0x79] sm:$0xff]
      %v1744 = vld [vmem:[%s1510 + $0x81] sm:$0xff]
      %v1745 = vld [vmem:[%s1510 + $0x91] sm:$0xff]
      %v1746 = vld [vmem:[%s1510 + $0x99] sm:$0xff]
      %v1747 = vld [vmem:[%s1510 + $0xa9] sm:$0xff]
      %v1748 = vld [vmem:[%s1510 + $0xb1] sm:$0xff]
      %v1749 = vld [vmem:[%s1510 + $0xc1] sm:$0xff]
      %v1750 = vld [vmem:[%s1510 + $0xc9] sm:$0xff]
      %v1751 = vld [vmem:[%s1510 + $0xd9] sm:$0xff]
      %v1752 = vld [vmem:[%s1510 + $0xe1] sm:$0xff]
      %v1753 = vld [vmem:[%s1510 + $0xf1] sm:$0xff]
      %v1754 = vld [vmem:[%s1510 + $0xf9] sm:$0xff]
      %v1755 = vld [vmem:[%s1510 + $0x109] sm:$0xff]
      %v1756 = vld [vmem:[%s1510 + $0x111] sm:$0xff]
      %v1757 = vld [vmem:[%s1510 + $0x121] sm:$0xff]
      %v1758 = vld [vmem:[%s1510 + $0x129] sm:$0xff]
      %v1759 = vld [vmem:[%s1510 + $0x139] sm:$0xff]
      %v1760 = vld [vmem:[%s1510 + $0x141] sm:$0xff]
      %v1761 = vld [vmem:[%s1510 + $0x151] sm:$0xff]
      %v1762 = vld [vmem:[%s1510 + $0x159] sm:$0xff]
      %v1763 = vld [vmem:[%s1510 + $0x169] sm:$0xff]
      %v1764 = vld [vmem:[%s1510 + $0x171] sm:$0xff]
      %v1765 = vpack.c.bf16 %v1734, %v1733
      %v1766 = vpack.c.bf16 %v1736, %v1735
      %v1767 = vpack.c.bf16 %v1738, %v1737
      %v1768 = vpack.c.bf16 %v1740, %v1739
      %v1769 = vpack.c.bf16 %v1742, %v1741
      %v1770 = vpack.c.bf16 %v1744, %v1743
      %v1771 = vpack.c.bf16 %v1746, %v1745
      %v1772 = vpack.c.bf16 %v1748, %v1747
      %v1773 = vpack.c.bf16 %v1750, %v1749
      %v1774 = vpack.c.bf16 %v1752, %v1751
      %v1775 = vpack.c.bf16 %v1754, %v1753
      %v1776 = vpack.c.bf16 %v1756, %v1755
      %v1777 = vpack.c.bf16 %v1758, %v1757
      %v1778 = vpack.c.bf16 %v1760, %v1759
      %v1779 = vpack.c.bf16 %v1762, %v1761
      %v1780 = vpack.c.bf16 %v1764, %v1763
      %s1781 = scalar_lea.vmem %s1, 28
      %v1782 = vld [vmem:[%s1781] sm:$0xf]
      %v1784 = vsel %vm225, %v1765, 0
      %v1787 = vsel %vm225, %v1766, 0
      %v1790 = vsel %vm225, %v1767, 0
      %v1793 = vsel %vm225, %v1768, 0
      %v1796 = vsel %vm225, %v1769, 0
      %v1799 = vsel %vm225, %v1770, 0
      %v1802 = vsel %vm225, %v1771, 0
      %v1805 = vsel %vm225, %v1772, 0
      %v1808 = vsel %vm225, %v1773, 0
      %v1811 = vsel %vm225, %v1774, 0
      %v1814 = vsel %vm225, %v1775, 0
      %v1817 = vsel %vm225, %v1776, 0
      %v1820 = vsel %vm225, %v1777, 0
      %v1823 = vsel %vm225, %v1778, 0
      %v1826 = vsel %vm225, %v1779, 0
      %v1829 = vsel %vm225, %v1780, 0
      %v1832 = vsel %vm274, %v1782, 0
      %1834 = vmatpush.bf16.msra.mxu0 0
      %1835 = vmatpush.bf16.msra.mxu0 0
      %1836 = vmatpush.bf16.msra.mxu0 0
      %1837 = vmatpush.bf16.msra.mxu0 0
      %1838 = vmatpush.bf16.msra.mxu0 0
      %1839 = vmatpush.bf16.msra.mxu0 0
      %1840 = vmatpush.bf16.msra.mxu0 0
      %1841 = vmatpush.bf16.msra.mxu0 %v1832
      %1842 = vmatmul.bf16.gmra.mxu0 %v1784
      %v1843 = vpop.f32.mrf.mxu0
      %v1844 = vadd.f32 0.0, %v1843
      %v1845 = vpop.f32.mrf.mxu0
      %v1846 = vadd.f32 0.0, %v1845
      %1847 = vmatmul.bf16.gmra.mxu0 %v1787
      %v1848 = vpop.f32.mrf.mxu0
      %v1849 = vadd.f32 0.0, %v1848
      %v1850 = vpop.f32.mrf.mxu0
      %v1851 = vadd.f32 0.0, %v1850
      %1852 = vmatmul.bf16.gmra.mxu0 %v1790
      %v1853 = vpop.f32.mrf.mxu0
      %v1854 = vadd.f32 0.0, %v1853
      %v1855 = vpop.f32.mrf.mxu0
      %v1856 = vadd.f32 0.0, %v1855
      %1857 = vmatmul.bf16.gmra.mxu0 %v1793
      %v1858 = vpop.f32.mrf.mxu0
      %v1859 = vadd.f32 0.0, %v1858
      %v1860 = vpop.f32.mrf.mxu0
      %v1861 = vadd.f32 0.0, %v1860
      %1862 = vmatmul.bf16.gmra.mxu0 %v1796
      %v1863 = vpop.f32.mrf.mxu0
      %v1864 = vadd.f32 0.0, %v1863
      %v1865 = vpop.f32.mrf.mxu0
      %v1866 = vadd.f32 0.0, %v1865
      %1867 = vmatmul.bf16.gmra.mxu0 %v1799
      %v1868 = vpop.f32.mrf.mxu0
      %v1869 = vadd.f32 0.0, %v1868
      %v1870 = vpop.f32.mrf.mxu0
      %v1871 = vadd.f32 0.0, %v1870
      %1872 = vmatmul.bf16.gmra.mxu0 %v1802
      %v1873 = vpop.f32.mrf.mxu0
      %v1874 = vadd.f32 0.0, %v1873
      %v1875 = vpop.f32.mrf.mxu0
      %v1876 = vadd.f32 0.0, %v1875
      %1877 = vmatmul.bf16.gmra.mxu0 %v1805
      %v1878 = vpop.f32.mrf.mxu0
      %v1879 = vadd.f32 0.0, %v1878
      %v1880 = vpop.f32.mrf.mxu0
      %v1881 = vadd.f32 0.0, %v1880
      %1882 = vmatmul.bf16.gmra.mxu0 %v1808
      %v1883 = vpop.f32.mrf.mxu0
      %v1884 = vadd.f32 0.0, %v1883
      %v1885 = vpop.f32.mrf.mxu0
      %v1886 = vadd.f32 0.0, %v1885
      %1887 = vmatmul.bf16.gmra.mxu0 %v1811
      %v1888 = vpop.f32.mrf.mxu0
      %v1889 = vadd.f32 0.0, %v1888
      %v1890 = vpop.f32.mrf.mxu0
      %v1891 = vadd.f32 0.0, %v1890
      %1892 = vmatmul.bf16.gmra.mxu0 %v1814
      %v1893 = vpop.f32.mrf.mxu0
      %v1894 = vadd.f32 0.0, %v1893
      %v1895 = vpop.f32.mrf.mxu0
      %v1896 = vadd.f32 0.0, %v1895
      %1897 = vmatmul.bf16.gmra.mxu0 %v1817
      %v1898 = vpop.f32.mrf.mxu0
      %v1899 = vadd.f32 0.0, %v1898
      %v1900 = vpop.f32.mrf.mxu0
      %v1901 = vadd.f32 0.0, %v1900
      %1902 = vmatmul.bf16.gmra.mxu0 %v1820
      %v1903 = vpop.f32.mrf.mxu0
      %v1904 = vadd.f32 0.0, %v1903
      %v1905 = vpop.f32.mrf.mxu0
      %v1906 = vadd.f32 0.0, %v1905
      %1907 = vmatmul.bf16.gmra.mxu0 %v1823
      %v1908 = vpop.f32.mrf.mxu0
      %v1909 = vadd.f32 0.0, %v1908
      %v1910 = vpop.f32.mrf.mxu0
      %v1911 = vadd.f32 0.0, %v1910
      %1912 = vmatmul.bf16.gmra.mxu0 %v1826
      %v1913 = vpop.f32.mrf.mxu0
      %v1914 = vadd.f32 0.0, %v1913
      %v1915 = vpop.f32.mrf.mxu0
      %v1916 = vadd.f32 0.0, %v1915
      %1917 = vmatmul.bf16.gmra.mxu0 %v1829
      %v1918 = vpop.f32.mrf.mxu0
      %v1919 = vadd.f32 0.0, %v1918
      %v1920 = vpop.f32.mrf.mxu0
      %v1921 = vadd.f32 0.0, %v1920
      %1922 = vdwg.mxu0
      %v1923 = vadd.f32 %v1701, %v1844
      %v1924 = vadd.f32 %v1702, %v1846
      %v1925 = vadd.f32 %v1703, %v1849
      %v1926 = vadd.f32 %v1704, %v1851
      %v1927 = vadd.f32 %v1705, %v1854
      %v1928 = vadd.f32 %v1706, %v1856
      %v1929 = vadd.f32 %v1707, %v1859
      %v1930 = vadd.f32 %v1708, %v1861
      %v1931 = vadd.f32 %v1709, %v1864
      %v1932 = vadd.f32 %v1710, %v1866
      %v1933 = vadd.f32 %v1711, %v1869
      %v1934 = vadd.f32 %v1712, %v1871
      %v1935 = vadd.f32 %v1713, %v1874
      %v1936 = vadd.f32 %v1714, %v1876
      %v1937 = vadd.f32 %v1715, %v1879
      %v1938 = vadd.f32 %v1716, %v1881
      %v1939 = vadd.f32 %v1717, %v1884
      %v1940 = vadd.f32 %v1718, %v1886
      %v1941 = vadd.f32 %v1719, %v1889
      %v1942 = vadd.f32 %v1720, %v1891
      %v1943 = vadd.f32 %v1721, %v1894
      %v1944 = vadd.f32 %v1722, %v1896
      %v1945 = vadd.f32 %v1723, %v1899
      %v1946 = vadd.f32 %v1724, %v1901
      %v1947 = vadd.f32 %v1725, %v1904
      %v1948 = vadd.f32 %v1726, %v1906
      %v1949 = vadd.f32 %v1727, %v1909
      %v1950 = vadd.f32 %v1728, %v1911
      %v1951 = vadd.f32 %v1729, %v1914
      %v1952 = vadd.f32 %v1730, %v1916
      %v1953 = vadd.f32 %v1731, %v1919
      %v1954 = vadd.f32 %v1732, %v1921
      %v1955 = vld [vmem:[%s1510 + $0x2] sm:$0xff]
      %v1956 = vld [vmem:[%s1510 + $0xa] sm:$0xff]
      %v1957 = vld [vmem:[%s1510 + $0x1a] sm:$0xff]
      %v1958 = vld [vmem:[%s1510 + $0x22] sm:$0xff]
      %v1959 = vld [vmem:[%s1510 + $0x32] sm:$0xff]
      %v1960 = vld [vmem:[%s1510 + $0x3a] sm:$0xff]
      %v1961 = vld [vmem:[%s1510 + $0x4a] sm:$0xff]
      %v1962 = vld [vmem:[%s1510 + $0x52] sm:$0xff]
      %v1963 = vld [vmem:[%s1510 + $0x62] sm:$0xff]
      %v1964 = vld [vmem:[%s1510 + $0x6a] sm:$0xff]
      %v1965 = vld [vmem:[%s1510 + $0x7a] sm:$0xff]
      %v1966 = vld [vmem:[%s1510 + $0x82] sm:$0xff]
      %v1967 = vld [vmem:[%s1510 + $0x92] sm:$0xff]
      %v1968 = vld [vmem:[%s1510 + $0x9a] sm:$0xff]
      %v1969 = vld [vmem:[%s1510 + $0xaa] sm:$0xff]
      %v1970 = vld [vmem:[%s1510 + $0xb2] sm:$0xff]
      %v1971 = vld [vmem:[%s1510 + $0xc2] sm:$0xff]
      %v1972 = vld [vmem:[%s1510 + $0xca] sm:$0xff]
      %v1973 = vld [vmem:[%s1510 + $0xda] sm:$0xff]
      %v1974 = vld [vmem:[%s1510 + $0xe2] sm:$0xff]
      %v1975 = vld [vmem:[%s1510 + $0xf2] sm:$0xff]
      %v1976 = vld [vmem:[%s1510 + $0xfa] sm:$0xff]
      %v1977 = vld [vmem:[%s1510 + $0x10a] sm:$0xff]
      %v1978 = vld [vmem:[%s1510 + $0x112] sm:$0xff]
      %v1979 = vld [vmem:[%s1510 + $0x122] sm:$0xff]
      %v1980 = vld [vmem:[%s1510 + $0x12a] sm:$0xff]
      %v1981 = vld [vmem:[%s1510 + $0x13a] sm:$0xff]
      %v1982 = vld [vmem:[%s1510 + $0x142] sm:$0xff]
      %v1983 = vld [vmem:[%s1510 + $0x152] sm:$0xff]
      %v1984 = vld [vmem:[%s1510 + $0x15a] sm:$0xff]
      %v1985 = vld [vmem:[%s1510 + $0x16a] sm:$0xff]
      %v1986 = vld [vmem:[%s1510 + $0x172] sm:$0xff]
      %v1987 = vpack.c.bf16 %v1956, %v1955
      %v1988 = vpack.c.bf16 %v1958, %v1957
      %v1989 = vpack.c.bf16 %v1960, %v1959
      %v1990 = vpack.c.bf16 %v1962, %v1961
      %v1991 = vpack.c.bf16 %v1964, %v1963
      %v1992 = vpack.c.bf16 %v1966, %v1965
      %v1993 = vpack.c.bf16 %v1968, %v1967
      %v1994 = vpack.c.bf16 %v1970, %v1969
      %v1995 = vpack.c.bf16 %v1972, %v1971
      %v1996 = vpack.c.bf16 %v1974, %v1973
      %v1997 = vpack.c.bf16 %v1976, %v1975
      %v1998 = vpack.c.bf16 %v1978, %v1977
      %v1999 = vpack.c.bf16 %v1980, %v1979
      %v2000 = vpack.c.bf16 %v1982, %v1981
      %v2001 = vpack.c.bf16 %v1984, %v1983
      %v2002 = vpack.c.bf16 %v1986, %v1985
      %s2003 = scalar_lea.vmem %s1, 32
      %v2004 = vld [vmem:[%s2003] sm:$0xf]
      %v2006 = vsel %vm225, %v1987, 0
      %v2009 = vsel %vm225, %v1988, 0
      %v2012 = vsel %vm225, %v1989, 0
      %v2015 = vsel %vm225, %v1990, 0
      %v2018 = vsel %vm225, %v1991, 0
      %v2021 = vsel %vm225, %v1992, 0
      %v2024 = vsel %vm225, %v1993, 0
      %v2027 = vsel %vm225, %v1994, 0
      %v2030 = vsel %vm225, %v1995, 0
      %v2033 = vsel %vm225, %v1996, 0
      %v2036 = vsel %vm225, %v1997, 0
      %v2039 = vsel %vm225, %v1998, 0
      %v2042 = vsel %vm225, %v1999, 0
      %v2045 = vsel %vm225, %v2000, 0
      %v2048 = vsel %vm225, %v2001, 0
      %v2051 = vsel %vm225, %v2002, 0
      %v2054 = vsel %vm274, %v2004, 0
      %2056 = vmatpush.bf16.msra.mxu0 0
      %2057 = vmatpush.bf16.msra.mxu0 0
      %2058 = vmatpush.bf16.msra.mxu0 0
      %2059 = vmatpush.bf16.msra.mxu0 0
      %2060 = vmatpush.bf16.msra.mxu0 0
      %2061 = vmatpush.bf16.msra.mxu0 0
      %2062 = vmatpush.bf16.msra.mxu0 0
      %2063 = vmatpush.bf16.msra.mxu0 %v2054
      %2064 = vmatmul.bf16.gmra.mxu0 %v2006
      %v2065 = vpop.f32.mrf.mxu0
      %v2066 = vadd.f32 0.0, %v2065
      %v2067 = vpop.f32.mrf.mxu0
      %v2068 = vadd.f32 0.0, %v2067
      %2069 = vmatmul.bf16.gmra.mxu0 %v2009
      %v2070 = vpop.f32.mrf.mxu0
      %v2071 = vadd.f32 0.0, %v2070
      %v2072 = vpop.f32.mrf.mxu0
      %v2073 = vadd.f32 0.0, %v2072
      %2074 = vmatmul.bf16.gmra.mxu0 %v2012
      %v2075 = vpop.f32.mrf.mxu0
      %v2076 = vadd.f32 0.0, %v2075
      %v2077 = vpop.f32.mrf.mxu0
      %v2078 = vadd.f32 0.0, %v2077
      %2079 = vmatmul.bf16.gmra.mxu0 %v2015
      %v2080 = vpop.f32.mrf.mxu0
      %v2081 = vadd.f32 0.0, %v2080
      %v2082 = vpop.f32.mrf.mxu0
      %v2083 = vadd.f32 0.0, %v2082
      %2084 = vmatmul.bf16.gmra.mxu0 %v2018
      %v2085 = vpop.f32.mrf.mxu0
      %v2086 = vadd.f32 0.0, %v2085
      %v2087 = vpop.f32.mrf.mxu0
      %v2088 = vadd.f32 0.0, %v2087
      %2089 = vmatmul.bf16.gmra.mxu0 %v2021
      %v2090 = vpop.f32.mrf.mxu0
      %v2091 = vadd.f32 0.0, %v2090
      %v2092 = vpop.f32.mrf.mxu0
      %v2093 = vadd.f32 0.0, %v2092
      %2094 = vmatmul.bf16.gmra.mxu0 %v2024
      %v2095 = vpop.f32.mrf.mxu0
      %v2096 = vadd.f32 0.0, %v2095
      %v2097 = vpop.f32.mrf.mxu0
      %v2098 = vadd.f32 0.0, %v2097
      %2099 = vmatmul.bf16.gmra.mxu0 %v2027
      %v2100 = vpop.f32.mrf.mxu0
      %v2101 = vadd.f32 0.0, %v2100
      %v2102 = vpop.f32.mrf.mxu0
      %v2103 = vadd.f32 0.0, %v2102
      %2104 = vmatmul.bf16.gmra.mxu0 %v2030
      %v2105 = vpop.f32.mrf.mxu0
      %v2106 = vadd.f32 0.0, %v2105
      %v2107 = vpop.f32.mrf.mxu0
      %v2108 = vadd.f32 0.0, %v2107
      %2109 = vmatmul.bf16.gmra.mxu0 %v2033
      %v2110 = vpop.f32.mrf.mxu0
      %v2111 = vadd.f32 0.0, %v2110
      %v2112 = vpop.f32.mrf.mxu0
      %v2113 = vadd.f32 0.0, %v2112
      %2114 = vmatmul.bf16.gmra.mxu0 %v2036
      %v2115 = vpop.f32.mrf.mxu0
      %v2116 = vadd.f32 0.0, %v2115
      %v2117 = vpop.f32.mrf.mxu0
      %v2118 = vadd.f32 0.0, %v2117
      %2119 = vmatmul.bf16.gmra.mxu0 %v2039
      %v2120 = vpop.f32.mrf.mxu0
      %v2121 = vadd.f32 0.0, %v2120
      %v2122 = vpop.f32.mrf.mxu0
      %v2123 = vadd.f32 0.0, %v2122
      %2124 = vmatmul.bf16.gmra.mxu0 %v2042
      %v2125 = vpop.f32.mrf.mxu0
      %v2126 = vadd.f32 0.0, %v2125
      %v2127 = vpop.f32.mrf.mxu0
      %v2128 = vadd.f32 0.0, %v2127
      %2129 = vmatmul.bf16.gmra.mxu0 %v2045
      %v2130 = vpop.f32.mrf.mxu0
      %v2131 = vadd.f32 0.0, %v2130
      %v2132 = vpop.f32.mrf.mxu0
      %v2133 = vadd.f32 0.0, %v2132
      %2134 = vmatmul.bf16.gmra.mxu0 %v2048
      %v2135 = vpop.f32.mrf.mxu0
      %v2136 = vadd.f32 0.0, %v2135
      %v2137 = vpop.f32.mrf.mxu0
      %v2138 = vadd.f32 0.0, %v2137
      %2139 = vmatmul.bf16.gmra.mxu0 %v2051
      %v2140 = vpop.f32.mrf.mxu0
      %v2141 = vadd.f32 0.0, %v2140
      %v2142 = vpop.f32.mrf.mxu0
      %v2143 = vadd.f32 0.0, %v2142
      %2144 = vdwg.mxu0
      %v2145 = vadd.f32 %v1923, %v2066
      %v2146 = vadd.f32 %v1924, %v2068
      %v2147 = vadd.f32 %v1925, %v2071
      %v2148 = vadd.f32 %v1926, %v2073
      %v2149 = vadd.f32 %v1927, %v2076
      %v2150 = vadd.f32 %v1928, %v2078
      %v2151 = vadd.f32 %v1929, %v2081
      %v2152 = vadd.f32 %v1930, %v2083
      %v2153 = vadd.f32 %v1931, %v2086
      %v2154 = vadd.f32 %v1932, %v2088
      %v2155 = vadd.f32 %v1933, %v2091
      %v2156 = vadd.f32 %v1934, %v2093
      %v2157 = vadd.f32 %v1935, %v2096
      %v2158 = vadd.f32 %v1936, %v2098
      %v2159 = vadd.f32 %v1937, %v2101
      %v2160 = vadd.f32 %v1938, %v2103
      %v2161 = vadd.f32 %v1939, %v2106
      %v2162 = vadd.f32 %v1940, %v2108
      %v2163 = vadd.f32 %v1941, %v2111
      %v2164 = vadd.f32 %v1942, %v2113
      %v2165 = vadd.f32 %v1943, %v2116
      %v2166 = vadd.f32 %v1944, %v2118
      %v2167 = vadd.f32 %v1945, %v2121
      %v2168 = vadd.f32 %v1946, %v2123
      %v2169 = vadd.f32 %v1947, %v2126
      %v2170 = vadd.f32 %v1948, %v2128
      %v2171 = vadd.f32 %v1949, %v2131
      %v2172 = vadd.f32 %v1950, %v2133
      %v2173 = vadd.f32 %v1951, %v2136
      %v2174 = vadd.f32 %v1952, %v2138
      %v2175 = vadd.f32 %v1953, %v2141
      %v2176 = vadd.f32 %v1954, %v2143
      %v2177 = vmax.f32 %v2145, 0.0
      %v2178 = vmax.f32 %v2146, 0.0
      %v2179 = vmax.f32 %v2147, 0.0
      %v2180 = vmax.f32 %v2148, 0.0
      %v2181 = vmax.f32 %v2149, 0.0
      %v2182 = vmax.f32 %v2150, 0.0
      %v2183 = vmax.f32 %v2151, 0.0
      %v2184 = vmax.f32 %v2152, 0.0
      %v2185 = vmax.f32 %v2153, 0.0
      %v2186 = vmax.f32 %v2154, 0.0
      %v2187 = vmax.f32 %v2155, 0.0
      %v2188 = vmax.f32 %v2156, 0.0
      %v2189 = vmax.f32 %v2157, 0.0
      %v2190 = vmax.f32 %v2158, 0.0
      %v2191 = vmax.f32 %v2159, 0.0
      %v2192 = vmax.f32 %v2160, 0.0
      %v2193 = vmax.f32 %v2161, 0.0
      %v2194 = vmax.f32 %v2162, 0.0
      %v2195 = vmax.f32 %v2163, 0.0
      %v2196 = vmax.f32 %v2164, 0.0
      %v2197 = vmax.f32 %v2165, 0.0
      %v2198 = vmax.f32 %v2166, 0.0
      %v2199 = vmax.f32 %v2167, 0.0
      %v2200 = vmax.f32 %v2168, 0.0
      %v2201 = vmax.f32 %v2169, 0.0
      %v2202 = vmax.f32 %v2170, 0.0
      %v2203 = vmax.f32 %v2171, 0.0
      %v2204 = vmax.f32 %v2172, 0.0
      %v2205 = vmax.f32 %v2173, 0.0
      %v2206 = vmax.f32 %v2174, 0.0
      %v2207 = vmax.f32 %v2175, 0.0
      %v2208 = vmax.f32 %v2176, 0.0
      %vm2209 = vcmask 523264
      %2210 = vst.msk [vmem:[%s170] sm:$0xff] %vm2209, %v2177
      %2211 = vst.msk [vmem:[%s170 + $0x8] sm:$0xff] %vm2209, %v2178
      %2212 = vst.msk [vmem:[%s170 + $0x10] sm:$0xff] %vm2209, %v2179
      %2213 = vst.msk [vmem:[%s170 + $0x18] sm:$0xff] %vm2209, %v2180
      %2214 = vst.msk [vmem:[%s170 + $0x20] sm:$0xff] %vm2209, %v2181
      %2215 = vst.msk [vmem:[%s170 + $0x28] sm:$0xff] %vm2209, %v2182
      %2216 = vst.msk [vmem:[%s170 + $0x30] sm:$0xff] %vm2209, %v2183
      %2217 = vst.msk [vmem:[%s170 + $0x38] sm:$0xff] %vm2209, %v2184
      %2218 = vst.msk [vmem:[%s170 + $0x40] sm:$0xff] %vm2209, %v2185
      %2219 = vst.msk [vmem:[%s170 + $0x48] sm:$0xff] %vm2209, %v2186
      %2220 = vst.msk [vmem:[%s170 + $0x50] sm:$0xff] %vm2209, %v2187
      %2221 = vst.msk [vmem:[%s170 + $0x58] sm:$0xff] %vm2209, %v2188
      %2222 = vst.msk [vmem:[%s170 + $0x60] sm:$0xff] %vm2209, %v2189
      %2223 = vst.msk [vmem:[%s170 + $0x68] sm:$0xff] %vm2209, %v2190
      %2224 = vst.msk [vmem:[%s170 + $0x70] sm:$0xff] %vm2209, %v2191
      %2225 = vst.msk [vmem:[%s170 + $0x78] sm:$0xff] %vm2209, %v2192
      %2226 = vst.msk [vmem:[%s170 + $0x80] sm:$0xff] %vm2209, %v2193
      %2227 = vst.msk [vmem:[%s170 + $0x88] sm:$0xff] %vm2209, %v2194
      %2228 = vst.msk [vmem:[%s170 + $0x90] sm:$0xff] %vm2209, %v2195
      %2229 = vst.msk [vmem:[%s170 + $0x98] sm:$0xff] %vm2209, %v2196
      %2230 = vst.msk [vmem:[%s170 + $0xa0] sm:$0xff] %vm2209, %v2197
      %2231 = vst.msk [vmem:[%s170 + $0xa8] sm:$0xff] %vm2209, %v2198
      %2232 = vst.msk [vmem:[%s170 + $0xb0] sm:$0xff] %vm2209, %v2199
      %2233 = vst.msk [vmem:[%s170 + $0xb8] sm:$0xff] %vm2209, %v2200
      %2234 = vst.msk [vmem:[%s170 + $0xc0] sm:$0xff] %vm2209, %v2201
      %2235 = vst.msk [vmem:[%s170 + $0xc8] sm:$0xff] %vm2209, %v2202
      %2236 = vst.msk [vmem:[%s170 + $0xd0] sm:$0xff] %vm2209, %v2203
      %2237 = vst.msk [vmem:[%s170 + $0xd8] sm:$0xff] %vm2209, %v2204
      %2238 = vst.msk [vmem:[%s170 + $0xe0] sm:$0xff] %vm2209, %v2205
      %2239 = vst.msk [vmem:[%s170 + $0xe8] sm:$0xff] %vm2209, %v2206
      %2240 = vst.msk [vmem:[%s170 + $0xf0] sm:$0xff] %vm2209, %v2207
      %2241 = vst.msk [vmem:[%s170 + $0xf8] sm:$0xff] %vm2209, %v2208
      %p2242 = scmp.lt.s32.totalorder %s14, 1
      %s2243 = scalar_select %p2242, %s14, 1
      %s2244 = smul.addr %s2243, 32
      %s2245 = smul.addr %s2244, 8
      %s2246 = scalar_lea.vmem %s3, %s2245
      // Predicated region
      $region33: #{feature_extractor_pallas.7} parent=31 // pred_check
        %p2247 = pneg %p100
      $region34: #{feature_extractor_pallas.7} parent=31 // pred_check_branch
        %2249 = sbr.rel (%p2247) target = $region36
      $region35: #{feature_extractor_pallas.7} parent=31 // pred_region
        _
      $region36: #{feature_extractor_pallas.7} parent=31 // pred_fallthru
        _
    $region32: #{feature_extractor_pallas.7} parent=5 // pred_fallthru
      _
    %p2250 = scmp.le.s32.totalorder 2, %s9
    // Predicated region
    $region37: #{feature_extractor_pallas.7} parent=5 // pred_check
      %p2251 = pneg %p2250
    $region38: #{feature_extractor_pallas.7} parent=5 // pred_check_branch
      %2253 = sbr.rel (%p2251) target = $region40
    $region39: #{feature_extractor_pallas.7} parent=5 // pred_region
      %s2254 = ssub.s32 %s9, 2
      // Predicated region
      $region41: #{feature_extractor_pallas.7} parent=39 // pred_check
        %p2255 = pneg %p106
      $region42: #{feature_extractor_pallas.7} parent=39 // pred_check_branch
        %2257 = sbr.rel (%p2255) target = $region44
      $region43: #{feature_extractor_pallas.7} parent=39 // pred_region
        %p2258 = scmp.lt.s32.totalorder %s15, 1
        %s2259 = scalar_select %p2258, %s15, 1
        %s2260 = smul.addr %s2259, 32
        %s2261 = smul.addr %s2260, 8
        %s2262 = scalar_lea.vmem %s3, %s2261
      $region44: #{feature_extractor_pallas.7} parent=39 // pred_fallthru
        _
    $region40: #{feature_extractor_pallas.7} parent=5 // pred_fallthru
      _
  $region6: #{feature_extractor_pallas.7} parent=0 // loop_footer
    %s13 = sadd.s32 1, %s9
  $region7: #{feature_extractor_pallas.7} parent=0 // loop_footer_branch
    %8 = sbr.rel target = $region3
  $region8: #{feature_extractor_pallas.7} parent=0 // loop_exit
    _

// kernel: feature_extractor_pallas.10
$region0: #{feature_extractor_pallas.10}
  #allocation0 [shape = 'u32[]', space=smem, size = 0x4, offset = 0x4, fixed_abs, tag = 'smem constant byte address 0x4 - core index']
  #allocation1 [shape = 'u32[72,128]{1,0:T(1,128)}', space=vmem, size = 0x9000, scoped, tag = 'internal scratch']
  %s0 = inlined_call_operand.vmem [shape: f32[2,10,10,64], index: 0, kind: input, shape index: {}]
  %s1 = inlined_call_operand.vmem [shape: bf16[9,64,128], index: 1, kind: input, shape index: {}]
  %s2 = inlined_call_operand.vmem [shape: f32[1,128], index: 2, kind: input, shape index: {}]
  %s3 = inlined_call_operand.vmem [shape: f32[2,8,8,128], index: 3, kind: output, shape index: {}]
  %s4 = sld [smem:[#allocation0]]
  $region45: #{feature_extractor_pallas.10} parent=0
    _
  %s6 = ssub.s32 1, %s4
  %s7 = scalar_select 0, %s6, %s4
  loop: start=0, step=1, limit=4
  $region2: #{feature_extractor_pallas.10} parent=0 // loop_pre_header
    _
  $region3: #{feature_extractor_pallas.10} parent=0 // loop_header
    %s9 = sphi 0, %s13
    %p10 = scmp.ge.s32.totalorder %s9, 4
    %s19 = sphi 0, %s21
    %s22 = sphi 0, %s19
    %s23 = sphi 0, %s22
    %s39 = sphi 0, %s23
    %s43 = sphi 0, %s43
    %s45 = sphi 0, %s43
    %s46 = sphi 0, %s45
    %s60 = sphi 0, %s46
    %s64 = sphi 0, %s64
    %s66 = sphi 0, %s64
    %s67 = sphi 0, %s66
    %s81 = sphi 0, %s67
    %s87 = sphi 0, %s89
    %s90 = sphi 0, %s87
    %s91 = sphi 0, %s90
    %s107 = sphi 0, %s91
  $region4: #{feature_extractor_pallas.10} parent=0 // loop_header_branch
    %12 = sbr.rel (%p10) target = $region8
  $region5: #{feature_extractor_pallas.10} parent=0 // loop_body
    %s14 = ssub.s32 %s9, 1
    %s15 = ssub.s32 %s9, 2
    %s16 = sadd.s32 %s9, 1
    %s17 = ssub.s32 %s9, %s16
    %p18 = scmp.eq.s32.totalorder %s17, 0
    %s20 = sadd.s32 %s19, 1
    %s21 = scalar_select %p18, %s19, %s20
    %p24 = pneg %p18
    %p25 = scmp.eq.s32.totalorder %s9, 1
    %p26 = por %p24, %p25
    %p27 = scmp.ne.s32.totalorder %s19, %s22
    %p28 = scmp.eq.s32.totalorder %s9, 0
    %p29 = por %p27, %p28
    %p30 = scmp.ne.s32.totalorder %s19, %s22
    %p31 = scmp.eq.s32.totalorder %s14, 1
    %p32 = por %p30, %p31
    %p33 = scmp.ne.s32.totalorder %s22, %s23
    %p34 = scmp.eq.s32.totalorder %s14, 0
    %p35 = por %p33, %p34
    %p36 = scmp.ne.s32.totalorder %s22, %s23
    %p37 = scmp.eq.s32.totalorder %s15, 1
    %p38 = por %p36, %p37
    %p40 = scmp.ne.s32.totalorder %s23, %s39
    %p41 = scmp.eq.s32.totalorder %s15, 0
    %p42 = por %p40, %p41
    %s44 = sadd.s32 %s43, 1
    %p47 = scmp.eq.s32.totalorder %s9, 1
    %p48 = scmp.ne.s32.totalorder %s43, %s45
    %p49 = scmp.eq.s32.totalorder %s9, 0
    %p50 = por %p48, %p49
    %p51 = scmp.ne.s32.totalorder %s43, %s45
    %p52 = scmp.eq.s32.totalorder %s14, 1
    %p53 = por %p51, %p52
    %p54 = scmp.ne.s32.totalorder %s45, %s46
    %p55 = scmp.eq.s32.totalorder %s14, 0
    %p56 = por %p54, %p55
    %p57 = scmp.ne.s32.totalorder %s45, %s46
    %p58 = scmp.eq.s32.totalorder %s15, 1
    %p59 = por %p57, %p58
    %p61 = scmp.ne.s32.totalorder %s46, %s60
    %p62 = scmp.eq.s32.totalorder %s15, 0
    %p63 = por %p61, %p62
    %s65 = sadd.s32 %s64, 1
    %p68 = scmp.eq.s32.totalorder %s9, 1
    %p69 = scmp.ne.s32.totalorder %s64, %s66
    %p70 = scmp.eq.s32.totalorder %s9, 0
    %p71 = por %p69, %p70
    %p72 = scmp.ne.s32.totalorder %s64, %s66
    %p73 = scmp.eq.s32.totalorder %s14, 1
    %p74 = por %p72, %p73
    %p75 = scmp.ne.s32.totalorder %s66, %s67
    %p76 = scmp.eq.s32.totalorder %s14, 0
    %p77 = por %p75, %p76
    %p78 = scmp.ne.s32.totalorder %s66, %s67
    %p79 = scmp.eq.s32.totalorder %s15, 1
    %p80 = por %p78, %p79
    %p82 = scmp.ne.s32.totalorder %s67, %s81
    %p83 = scmp.eq.s32.totalorder %s15, 0
    %p84 = por %p82, %p83
    %s85 = ssub.s32 %s9, %s16
    %p86 = scmp.eq.s32.totalorder %s85, 0
    %s88 = sadd.s32 %s87, 1
    %s89 = scalar_select %p86, %s87, %s88
    %p92 = pneg %p86
    %p93 = scmp.eq.s32.totalorder %s9, 1
    %p94 = por %p92, %p93
    %p95 = scmp.ne.s32.totalorder %s87, %s90
    %p96 = scmp.eq.s32.totalorder %s9, 0
    %p97 = por %p95, %p96
    %p98 = scmp.ne.s32.totalorder %s87, %s90
    %p99 = scmp.eq.s32.totalorder %s14, 1
    %p100 = por %p98, %p99
    %p101 = scmp.ne.s32.totalorder %s90, %s91
    %p102 = scmp.eq.s32.totalorder %s14, 0
    %p103 = por %p101, %p102
    %p104 = scmp.ne.s32.totalorder %s90, %s91
    %p105 = scmp.eq.s32.totalorder %s15, 1
    %p106 = por %p104, %p105
    %p108 = scmp.ne.s32.totalorder %s91, %s107
    %p109 = scmp.eq.s32.totalorder %s15, 0
    %p110 = por %p108, %p109
    %p111 = scmp.le.s32.totalorder 1, %s9
    %p112 = scmp.lt.s32.totalorder %s9, 3
    %p113 = pnand %p111, %p112
    %p114 = pneg %p113
    // Predicated region
    $region9: #{feature_extractor_pallas.10} parent=5 // pred_check
      _
    $region10: #{feature_extractor_pallas.10} parent=5 // pred_check_branch
      %116 = sbr.rel (%p113) target = $region12
    $region11: #{feature_extractor_pallas.10} parent=5 // pred_region
      %s117 = ssub.s32 %s9, 1
      // Predicated region
      $region13: #{feature_extractor_pallas.10} parent=11 // pred_check
        %p118 = pneg %p56
      $region14: #{feature_extractor_pallas.10} parent=11 // pred_check_branch
        %120 = sbr.rel (%p118) target = $region16
      $region15: #{feature_extractor_pallas.10} parent=11 // pred_region
        _
      $region16: #{feature_extractor_pallas.10} parent=11 // pred_fallthru
        _
      // Predicated region
      $region17: #{feature_extractor_pallas.10} parent=11 // pred_check
        %p121 = pneg %p77
      $region18: #{feature_extractor_pallas.10} parent=11 // pred_check_branch
        %123 = sbr.rel (%p121) target = $region20
      $region19: #{feature_extractor_pallas.10} parent=11 // pred_region
        _
      $region20: #{feature_extractor_pallas.10} parent=11 // pred_fallthru
        _
    $region12: #{feature_extractor_pallas.10} parent=5 // pred_fallthru
      _
    %p124 = scmp.lt.s32.totalorder %s9, 2
    // Predicated region
    $region21: #{feature_extractor_pallas.10} parent=5 // pred_check
      %p125 = pneg %p124
    $region22: #{feature_extractor_pallas.10} parent=5 // pred_check_branch
      %127 = sbr.rel (%p125) target = $region24
    $region23: #{feature_extractor_pallas.10} parent=5 // pred_region
      // Predicated region
      $region25: #{feature_extractor_pallas.10} parent=23 // pred_check
        %p128 = pneg %p29
      $region26: #{feature_extractor_pallas.10} parent=23 // pred_check_branch
        %130 = sbr.rel (%p128) target = $region28
      $region27: #{feature_extractor_pallas.10} parent=23 // pred_region
        %p131 = scmp.lt.s32.totalorder %s9, 1
        %s132 = scalar_select %p131, %s9, 1
        %s133 = smul.addr %s132, 20
        %s134 = smul.addr %s133, 8
        %s135 = scalar_lea.vmem %s0, %s134
      $region28: #{feature_extractor_pallas.10} parent=23 // pred_fallthru
        _
    $region24: #{feature_extractor_pallas.10} parent=5 // pred_fallthru
      _
    %p136 = scmp.le.s32.totalorder 1, %s9
    %p137 = scmp.lt.s32.totalorder %s9, 3
    %p138 = pnand %p136, %p137
    %p139 = pneg %p138
    // Predicated region
    $region29: #{feature_extractor_pallas.10} parent=5 // pred_check
      _
    $region30: #{feature_extractor_pallas.10} parent=5 // pred_check_branch
      %141 = sbr.rel (%p138) target = $region32
    $region31: #{feature_extractor_pallas.10} parent=5 // pred_region
      %s142 = ssub.s32 %s9, 1
      %p143 = scmp.lt.s32.totalorder %s14, 1
      %s144 = scalar_select %p143, %s14, 1
      %s145 = smul.addr %s144, 20
      %s146 = smul.addr %s145, 8
      %s147 = scalar_lea.vmem %s0, %s146
      %p148 = pneg %p35
      %p149 = pneg %p32
      %p150 = pneg %p56
      %p151 = pneg %p53
      %p152 = pneg %p77
      %p153 = pneg %p74
      %p154 = pneg %p103
      %p155 = pneg %p100
      %p156 = scmp.lt.s32.totalorder %s14, 1
      %s157 = scalar_select %p156, %s14, 1
      %s158 = smul.addr %s157, 8
      %s159 = smul.addr %s158, 8
      %s160 = scalar_lea.vmem %s3, %s159
      %p161 = scmp.lt.s32.totalorder %s14, 1
      %s162 = scalar_select %p161, %s14, 1
      %s163 = smul.addr %s162, 20
      %s164 = smul.addr %s163, 8
      %s165 = scalar_lea.vmem %s0, %s164
      %p166 = scmp.lt.s32.totalorder %s14, 1
      %s167 = scalar_select %p166, %s14, 1
      %s168 = smul.addr %s167, 8
      %s169 = smul.addr %s168, 8
      %s170 = scalar_lea.vmem %s3, %s169
      %v172 = vld [vmem:[%s2] sm:$0x1]
      %v174 = vperm.slane %v172, 0
      %v176 = vld [vmem:[%s165] sm:$0xff]
      %v177 = vld [vmem:[%s165 + $0x10] sm:$0xff]
      %v178 = vld [vmem:[%s165 + $0x20] sm:$0xff]
      %v179 = vld [vmem:[%s165 + $0x30] sm:$0xff]
      %v180 = vld [vmem:[%s165 + $0x40] sm:$0xff]
      %v181 = vld [vmem:[%s165 + $0x50] sm:$0xff]
      %v182 = vld [vmem:[%s165 + $0x60] sm:$0xff]
      %v183 = vld [vmem:[%s165 + $0x70] sm:$0xff]
      %v184 = vpack.c.bf16 %v177, %v176
      %v185 = vpack.c.bf16 %v179, %v178
      %v186 = vpack.c.bf16 %v181, %v180
      %v187 = vpack.c.bf16 %v183, %v182
      %v188 = vld [vmem:[%s1] sm:$0xf]
      %v189 = vld [vmem:[%s1 + $0x4] sm:$0xf]
      %v190 = vld [vmem:[%s1 + $0x8] sm:$0xf]
      %v191 = vld [vmem:[%s1 + $0xc] sm:$0xf]
      %v192 = vld [vmem:[%s1 + $0x10] sm:$0xf]
      %v193 = vld [vmem:[%s1 + $0x14] sm:$0xf]
      %v194 = vld [vmem:[%s1 + $0x18] sm:$0xf]
      %v195 = vld [vmem:[%s1 + $0x1c] sm:$0xf]
      %v204 = vunpack.c.l.b16 %v188
      %v205 = vunpack.c.l.b16 %v189
      %v206 = vunpack.c.l.b16 %v190
      %v207 = vunpack.c.l.b16 %v191
      %v208 = vunpack.c.l.b16 %v192
      %v209 = vunpack.c.l.b16 %v193
      %v210 = vunpack.c.l.b16 %v194
      %v211 = vunpack.c.l.b16 %v195
      %v212 = vpack.c.b16 %v205, %v204
      %v213 = vpack.c.b16 %v207, %v206
      %v214 = vpack.c.b16 %v209, %v208
      %v215 = vpack.c.b16 %v211, %v210
      %vm220 = vcmask 523264
      %v222 = vsel %vm220, %v184, 0
      %v225 = vsel %vm220, %v185, 0
      %v228 = vsel %vm220, %v186, 0
      %v231 = vsel %vm220, %v187, 0
      %233 = vmatpush.bf16.msra.mxu0 0
      %234 = vmatpush.bf16.msra.mxu0 0
      %235 = vmatpush.bf16.msra.mxu0 0
      %236 = vmatpush.bf16.msra.mxu0 0
      %237 = vmatpush.bf16.msra.mxu0 %v215
      %238 = vmatpush.bf16.msra.mxu0 %v214
      %239 = vmatpush.bf16.msra.mxu0 %v213
      %240 = vmatpush.bf16.msra.mxu0 %v212
      %241 = vmatmul.bf16.gmra.mxu0 %v222
      %v242 = vpop.f32.mrf.mxu0
      %v243 = vadd.f32 0.0, %v242
      %v244 = vpop.f32.mrf.mxu0
      %v245 = vadd.f32 0.0, %v244
      %246 = vmatmul.bf16.gmra.mxu0 %v225
      %v247 = vpop.f32.mrf.mxu0
      %v248 = vadd.f32 0.0, %v247
      %v249 = vpop.f32.mrf.mxu0
      %v250 = vadd.f32 0.0, %v249
      %251 = vmatmul.bf16.gmra.mxu0 %v228
      %v252 = vpop.f32.mrf.mxu0
      %v253 = vadd.f32 0.0, %v252
      %v254 = vpop.f32.mrf.mxu0
      %v255 = vadd.f32 0.0, %v254
      %256 = vmatmul.bf16.gmra.mxu0 %v231
      %v257 = vpop.f32.mrf.mxu0
      %v258 = vadd.f32 0.0, %v257
      %v259 = vpop.f32.mrf.mxu0
      %v260 = vadd.f32 0.0, %v259
      %261 = vdwg.mxu0
      %v262 = vadd.f32 %v174, %v243
      %v263 = vadd.f32 %v174, %v245
      %v264 = vadd.f32 %v174, %v248
      %v265 = vadd.f32 %v174, %v250
      %v266 = vadd.f32 %v174, %v253
      %v267 = vadd.f32 %v174, %v255
      %v268 = vadd.f32 %v174, %v258
      %v269 = vadd.f32 %v174, %v260
      %v270 = vld [vmem:[%s165 + $0x1] sm:$0xff]
      %v271 = vld [vmem:[%s165 + $0x11] sm:$0xff]
      %v272 = vld [vmem:[%s165 + $0x21] sm:$0xff]
      %v273 = vld [vmem:[%s165 + $0x31] sm:$0xff]
      %v274 = vld [vmem:[%s165 + $0x41] sm:$0xff]
      %v275 = vld [vmem:[%s165 + $0x51] sm:$0xff]
      %v276 = vld [vmem:[%s165 + $0x61] sm:$0xff]
      %v277 = vld [vmem:[%s165 + $0x71] sm:$0xff]
      %v278 = vpack.c.bf16 %v271, %v270
      %v279 = vpack.c.bf16 %v273, %v272
      %v280 = vpack.c.bf16 %v275, %v274
      %v281 = vpack.c.bf16 %v277, %v276
      %s282 = scalar_lea.vmem %s1, 32
      %v283 = vld [vmem:[%s282] sm:$0xf]
      %v284 = vld [vmem:[%s282 + $0x4] sm:$0xf]
      %v285 = vld [vmem:[%s282 + $0x8] sm:$0xf]
      %v286 = vld [vmem:[%s282 + $0xc] sm:$0xf]
      %v287 = vld [vmem:[%s282 + $0x10] sm:$0xf]
      %v288 = vld [vmem:[%s282 + $0x14] sm:$0xf]
      %v289 = vld [vmem:[%s282 + $0x18] sm:$0xf]
      %v290 = vld [vmem:[%s282 + $0x1c] sm:$0xf]
      %v299 = vunpack.c.l.b16 %v283
      %v300 = vunpack.c.l.b16 %v284
      %v301 = vunpack.c.l.b16 %v285
      %v302 = vunpack.c.l.b16 %v286
      %v303 = vunpack.c.l.b16 %v287
      %v304 = vunpack.c.l.b16 %v288
      %v305 = vunpack.c.l.b16 %v289
      %v306 = vunpack.c.l.b16 %v290
      %v307 = vpack.c.b16 %v300, %v299
      %v308 = vpack.c.b16 %v302, %v301
      %v309 = vpack.c.b16 %v304, %v303
      %v310 = vpack.c.b16 %v306, %v305
      %v316 = vsel %vm220, %v278, 0
      %v319 = vsel %vm220, %v279, 0
      %v322 = vsel %vm220, %v280, 0
      %v325 = vsel %vm220, %v281, 0
      %327 = vmatpush.bf16.msra.mxu0 0
      %328 = vmatpush.bf16.msra.mxu0 0
      %329 = vmatpush.bf16.msra.mxu0 0
      %330 = vmatpush.bf16.msra.mxu0 0
      %331 = vmatpush.bf16.msra.mxu0 %v310
      %332 = vmatpush.bf16.msra.mxu0 %v309
      %333 = vmatpush.bf16.msra.mxu0 %v308
      %334 = vmatpush.bf16.msra.mxu0 %v307
      %335 = vmatmul.bf16.gmra.mxu0 %v316
      %v336 = vpop.f32.mrf.mxu0
      %v337 = vadd.f32 0.0, %v336
      %v338 = vpop.f32.mrf.mxu0
      %v339 = vadd.f32 0.0, %v338
      %340 = vmatmul.bf16.gmra.mxu0 %v319
      %v341 = vpop.f32.mrf.mxu0
      %v342 = vadd.f32 0.0, %v341
      %v343 = vpop.f32.mrf.mxu0
      %v344 = vadd.f32 0.0, %v343
      %345 = vmatmul.bf16.gmra.mxu0 %v322
      %v346 = vpop.f32.mrf.mxu0
      %v347 = vadd.f32 0.0, %v346
      %v348 = vpop.f32.mrf.mxu0
      %v349 = vadd.f32 0.0, %v348
      %350 = vmatmul.bf16.gmra.mxu0 %v325
      %v351 = vpop.f32.mrf.mxu0
      %v352 = vadd.f32 0.0, %v351
      %v353 = vpop.f32.mrf.mxu0
      %v354 = vadd.f32 0.0, %v353
      %355 = vdwg.mxu0
      %v356 = vadd.f32 %v262, %v337
      %v357 = vadd.f32 %v263, %v339
      %v358 = vadd.f32 %v264, %v342
      %v359 = vadd.f32 %v265, %v344
      %v360 = vadd.f32 %v266, %v347
      %v361 = vadd.f32 %v267, %v349
      %v362 = vadd.f32 %v268, %v352
      %v363 = vadd.f32 %v269, %v354
      %v364 = vld [vmem:[%s165 + $0x2] sm:$0xff]
      %v365 = vld [vmem:[%s165 + $0x12] sm:$0xff]
      %v366 = vld [vmem:[%s165 + $0x22] sm:$0xff]
      %v367 = vld [vmem:[%s165 + $0x32] sm:$0xff]
      %v368 = vld [vmem:[%s165 + $0x42] sm:$0xff]
      %v369 = vld [vmem:[%s165 + $0x52] sm:$0xff]
      %v370 = vld [vmem:[%s165 + $0x62] sm:$0xff]
      %v371 = vld [vmem:[%s165 + $0x72] sm:$0xff]
      %v372 = vpack.c.bf16 %v365, %v364
      %v373 = vpack.c.bf16 %v367, %v366
      %v374 = vpack.c.bf16 %v369, %v368
      %v375 = vpack.c.bf16 %v371, %v370
      %s376 = scalar_lea.vmem %s1, 64
      %v377 = vld [vmem:[%s376] sm:$0xf]
      %v378 = vld [vmem:[%s376 + $0x4] sm:$0xf]
      %v379 = vld [vmem:[%s376 + $0x8] sm:$0xf]
      %v380 = vld [vmem:[%s376 + $0xc] sm:$0xf]
      %v381 = vld [vmem:[%s376 + $0x10] sm:$0xf]
      %v382 = vld [vmem:[%s376 + $0x14] sm:$0xf]
      %v383 = vld [vmem:[%s376 + $0x18] sm:$0xf]
      %v384 = vld [vmem:[%s376 + $0x1c] sm:$0xf]
      %v393 = vunpack.c.l.b16 %v377
      %v394 = vunpack.c.l.b16 %v378
      %v395 = vunpack.c.l.b16 %v379
      %v396 = vunpack.c.l.b16 %v380
      %v397 = vunpack.c.l.b16 %v381
      %v398 = vunpack.c.l.b16 %v382
      %v399 = vunpack.c.l.b16 %v383
      %v400 = vunpack.c.l.b16 %v384
      %v401 = vpack.c.b16 %v394, %v393
      %v402 = vpack.c.b16 %v396, %v395
      %v403 = vpack.c.b16 %v398, %v397
      %v404 = vpack.c.b16 %v400, %v399
      %v410 = vsel %vm220, %v372, 0
      %v413 = vsel %vm220, %v373, 0
      %v416 = vsel %vm220, %v374, 0
      %v419 = vsel %vm220, %v375, 0
      %421 = vmatpush.bf16.msra.mxu0 0
      %422 = vmatpush.bf16.msra.mxu0 0
      %423 = vmatpush.bf16.msra.mxu0 0
      %424 = vmatpush.bf16.msra.mxu0 0
      %425 = vmatpush.bf16.msra.mxu0 %v404
      %426 = vmatpush.bf16.msra.mxu0 %v403
      %427 = vmatpush.bf16.msra.mxu0 %v402
      %428 = vmatpush.bf16.msra.mxu0 %v401
      %429 = vmatmul.bf16.gmra.mxu0 %v410
      %v430 = vpop.f32.mrf.mxu0
      %v431 = vadd.f32 0.0, %v430
      %v432 = vpop.f32.mrf.mxu0
      %v433 = vadd.f32 0.0, %v432
      %434 = vmatmul.bf16.gmra.mxu0 %v413
      %v435 = vpop.f32.mrf.mxu0
      %v436 = vadd.f32 0.0, %v435
      %v437 = vpop.f32.mrf.mxu0
      %v438 = vadd.f32 0.0, %v437
      %439 = vmatmul.bf16.gmra.mxu0 %v416
      %v440 = vpop.f32.mrf.mxu0
      %v441 = vadd.f32 0.0, %v440
      %v442 = vpop.f32.mrf.mxu0
      %v443 = vadd.f32 0.0, %v442
      %444 = vmatmul.bf16.gmra.mxu0 %v419
      %v445 = vpop.f32.mrf.mxu0
      %v446 = vadd.f32 0.0, %v445
      %v447 = vpop.f32.mrf.mxu0
      %v448 = vadd.f32 0.0, %v447
      %449 = vdwg.mxu0
      %v450 = vadd.f32 %v356, %v431
      %v451 = vadd.f32 %v357, %v433
      %v452 = vadd.f32 %v358, %v436
      %v453 = vadd.f32 %v359, %v438
      %v454 = vadd.f32 %v360, %v441
      %v455 = vadd.f32 %v361, %v443
      %v456 = vadd.f32 %v362, %v446
      %v457 = vadd.f32 %v363, %v448
      %s458 = scalar_lea.vmem %s165, 16
      %v459 = vld [vmem:[%s458] sm:$0xff]
      %v460 = vld [vmem:[%s458 + $0x10] sm:$0xff]
      %v461 = vld [vmem:[%s458 + $0x20] sm:$0xff]
      %v462 = vld [vmem:[%s458 + $0x30] sm:$0xff]
      %v463 = vld [vmem:[%s458 + $0x40] sm:$0xff]
      %v464 = vld [vmem:[%s458 + $0x50] sm:$0xff]
      %v465 = vld [vmem:[%s458 + $0x60] sm:$0xff]
      %v466 = vld [vmem:[%s458 + $0x70] sm:$0xff]
      %v467 = vpack.c.bf16 %v460, %v459
      %v468 = vpack.c.bf16 %v462, %v461
      %v469 = vpack.c.bf16 %v464, %v463
      %v470 = vpack.c.bf16 %v466, %v465
      %s471 = scalar_lea.vmem %s1, 96
      %v472 = vld [vmem:[%s471] sm:$0xf]
      %v473 = vld [vmem:[%s471 + $0x4] sm:$0xf]
      %v474 = vld [vmem:[%s471 + $0x8] sm:$0xf]
      %v475 = vld [vmem:[%s471 + $0xc] sm:$0xf]
      %v476 = vld [vmem:[%s471 + $0x10] sm:$0xf]
      %v477 = vld [vmem:[%s471 + $0x14] sm:$0xf]
      %v478 = vld [vmem:[%s471 + $0x18] sm:$0xf]
      %v479 = vld [vmem:[%s471 + $0x1c] sm:$0xf]
      %v488 = vunpack.c.l.b16 %v472
      %v489 = vunpack.c.l.b16 %v473
      %v490 = vunpack.c.l.b16 %v474
      %v491 = vunpack.c.l.b16 %v475
      %v492 = vunpack.c.l.b16 %v476
      %v493 = vunpack.c.l.b16 %v477
      %v494 = vunpack.c.l.b16 %v478
      %v495 = vunpack.c.l.b16 %v479
      %v496 = vpack.c.b16 %v489, %v488
      %v497 = vpack.c.b16 %v491, %v490
      %v498 = vpack.c.b16 %v493, %v492
      %v499 = vpack.c.b16 %v495, %v494
      %v505 = vsel %vm220, %v467, 0
      %v508 = vsel %vm220, %v468, 0
      %v511 = vsel %vm220, %v469, 0
      %v514 = vsel %vm220, %v470, 0
      %516 = vmatpush.bf16.msra.mxu0 0
      %517 = vmatpush.bf16.msra.mxu0 0
      %518 = vmatpush.bf16.msra.mxu0 0
      %519 = vmatpush.bf16.msra.mxu0 0
      %520 = vmatpush.bf16.msra.mxu0 %v499
      %521 = vmatpush.bf16.msra.mxu0 %v498
      %522 = vmatpush.bf16.msra.mxu0 %v497
      %523 = vmatpush.bf16.msra.mxu0 %v496
      %524 = vmatmul.bf16.gmra.mxu0 %v505
      %v525 = vpop.f32.mrf.mxu0
      %v526 = vadd.f32 0.0, %v525
      %v527 = vpop.f32.mrf.mxu0
      %v528 = vadd.f32 0.0, %v527
      %529 = vmatmul.bf16.gmra.mxu0 %v508
      %v530 = vpop.f32.mrf.mxu0
      %v531 = vadd.f32 0.0, %v530
      %v532 = vpop.f32.mrf.mxu0
      %v533 = vadd.f32 0.0, %v532
      %534 = vmatmul.bf16.gmra.mxu0 %v511
      %v535 = vpop.f32.mrf.mxu0
      %v536 = vadd.f32 0.0, %v535
      %v537 = vpop.f32.mrf.mxu0
      %v538 = vadd.f32 0.0, %v537
      %539 = vmatmul.bf16.gmra.mxu0 %v514
      %v540 = vpop.f32.mrf.mxu0
      %v541 = vadd.f32 0.0, %v540
      %v542 = vpop.f32.mrf.mxu0
      %v543 = vadd.f32 0.0, %v542
      %544 = vdwg.mxu0
      %v545 = vadd.f32 %v450, %v526
      %v546 = vadd.f32 %v451, %v528
      %v547 = vadd.f32 %v452, %v531
      %v548 = vadd.f32 %v453, %v533
      %v549 = vadd.f32 %v454, %v536
      %v550 = vadd.f32 %v455, %v538
      %v551 = vadd.f32 %v456, %v541
      %v552 = vadd.f32 %v457, %v543
      %v553 = vld [vmem:[%s458 + $0x1] sm:$0xff]
      %v554 = vld [vmem:[%s458 + $0x11] sm:$0xff]
      %v555 = vld [vmem:[%s458 + $0x21] sm:$0xff]
      %v556 = vld [vmem:[%s458 + $0x31] sm:$0xff]
      %v557 = vld [vmem:[%s458 + $0x41] sm:$0xff]
      %v558 = vld [vmem:[%s458 + $0x51] sm:$0xff]
      %v559 = vld [vmem:[%s458 + $0x61] sm:$0xff]
      %v560 = vld [vmem:[%s458 + $0x71] sm:$0xff]
      %v561 = vpack.c.bf16 %v554, %v553
      %v562 = vpack.c.bf16 %v556, %v555
      %v563 = vpack.c.bf16 %v558, %v557
      %v564 = vpack.c.bf16 %v560, %v559
      %s565 = scalar_lea.vmem %s1, 128
      %v566 = vld [vmem:[%s565] sm:$0xf]
      %v567 = vld [vmem:[%s565 + $0x4] sm:$0xf]
      %v568 = vld [vmem:[%s565 + $0x8] sm:$0xf]
      %v569 = vld [vmem:[%s565 + $0xc] sm:$0xf]
      %v570 = vld [vmem:[%s565 + $0x10] sm:$0xf]
      %v571 = vld [vmem:[%s565 + $0x14] sm:$0xf]
      %v572 = vld [vmem:[%s565 + $0x18] sm:$0xf]
      %v573 = vld [vmem:[%s565 + $0x1c] sm:$0xf]
      %v582 = vunpack.c.l.b16 %v566
      %v583 = vunpack.c.l.b16 %v567
      %v584 = vunpack.c.l.b16 %v568
      %v585 = vunpack.c.l.b16 %v569
      %v586 = vunpack.c.l.b16 %v570
      %v587 = vunpack.c.l.b16 %v571
      %v588 = vunpack.c.l.b16 %v572
      %v589 = vunpack.c.l.b16 %v573
      %v590 = vpack.c.b16 %v583, %v582
      %v591 = vpack.c.b16 %v585, %v584
      %v592 = vpack.c.b16 %v587, %v586
      %v593 = vpack.c.b16 %v589, %v588
      %v599 = vsel %vm220, %v561, 0
      %v602 = vsel %vm220, %v562, 0
      %v605 = vsel %vm220, %v563, 0
      %v608 = vsel %vm220, %v564, 0
      %610 = vmatpush.bf16.msra.mxu0 0
      %611 = vmatpush.bf16.msra.mxu0 0
      %612 = vmatpush.bf16.msra.mxu0 0
      %613 = vmatpush.bf16.msra.mxu0 0
      %614 = vmatpush.bf16.msra.mxu0 %v593
      %615 = vmatpush.bf16.msra.mxu0 %v592
      %616 = vmatpush.bf16.msra.mxu0 %v591
      %617 = vmatpush.bf16.msra.mxu0 %v590
      %618 = vmatmul.bf16.gmra.mxu0 %v599
      %v619 = vpop.f32.mrf.mxu0
      %v620 = vadd.f32 0.0, %v619
      %v621 = vpop.f32.mrf.mxu0
      %v622 = vadd.f32 0.0, %v621
      %623 = vmatmul.bf16.gmra.mxu0 %v602
      %v624 = vpop.f32.mrf.mxu0
      %v625 = vadd.f32 0.0, %v624
      %v626 = vpop.f32.mrf.mxu0
      %v627 = vadd.f32 0.0, %v626
      %628 = vmatmul.bf16.gmra.mxu0 %v605
      %v629 = vpop.f32.mrf.mxu0
      %v630 = vadd.f32 0.0, %v629
      %v631 = vpop.f32.mrf.mxu0
      %v632 = vadd.f32 0.0, %v631
      %633 = vmatmul.bf16.gmra.mxu0 %v608
      %v634 = vpop.f32.mrf.mxu0
      %v635 = vadd.f32 0.0, %v634
      %v636 = vpop.f32.mrf.mxu0
      %v637 = vadd.f32 0.0, %v636
      %638 = vdwg.mxu0
      %v639 = vadd.f32 %v545, %v620
      %v640 = vadd.f32 %v546, %v622
      %v641 = vadd.f32 %v547, %v625
      %v642 = vadd.f32 %v548, %v627
      %v643 = vadd.f32 %v549, %v630
      %v644 = vadd.f32 %v550, %v632
      %v645 = vadd.f32 %v551, %v635
      %v646 = vadd.f32 %v552, %v637
      %v647 = vld [vmem:[%s458 + $0x2] sm:$0xff]
      %v648 = vld [vmem:[%s458 + $0x12] sm:$0xff]
      %v649 = vld [vmem:[%s458 + $0x22] sm:$0xff]
      %v650 = vld [vmem:[%s458 + $0x32] sm:$0xff]
      %v651 = vld [vmem:[%s458 + $0x42] sm:$0xff]
      %v652 = vld [vmem:[%s458 + $0x52] sm:$0xff]
      %v653 = vld [vmem:[%s458 + $0x62] sm:$0xff]
      %v654 = vld [vmem:[%s458 + $0x72] sm:$0xff]
      %v655 = vpack.c.bf16 %v648, %v647
      %v656 = vpack.c.bf16 %v650, %v649
      %v657 = vpack.c.bf16 %v652, %v651
      %v658 = vpack.c.bf16 %v654, %v653
      %s659 = scalar_lea.vmem %s1, 160
      %v660 = vld [vmem:[%s659] sm:$0xf]
      %v661 = vld [vmem:[%s659 + $0x4] sm:$0xf]
      %v662 = vld [vmem:[%s659 + $0x8] sm:$0xf]
      %v663 = vld [vmem:[%s659 + $0xc] sm:$0xf]
      %v664 = vld [vmem:[%s659 + $0x10] sm:$0xf]
      %v665 = vld [vmem:[%s659 + $0x14] sm:$0xf]
      %v666 = vld [vmem:[%s659 + $0x18] sm:$0xf]
      %v667 = vld [vmem:[%s659 + $0x1c] sm:$0xf]
      %v676 = vunpack.c.l.b16 %v660
      %v677 = vunpack.c.l.b16 %v661
      %v678 = vunpack.c.l.b16 %v662
      %v679 = vunpack.c.l.b16 %v663
      %v680 = vunpack.c.l.b16 %v664
      %v681 = vunpack.c.l.b16 %v665
      %v682 = vunpack.c.l.b16 %v666
      %v683 = vunpack.c.l.b16 %v667
      %v684 = vpack.c.b16 %v677, %v676
      %v685 = vpack.c.b16 %v679, %v678
      %v686 = vpack.c.b16 %v681, %v680
      %v687 = vpack.c.b16 %v683, %v682
      %v693 = vsel %vm220, %v655, 0
      %v696 = vsel %vm220, %v656, 0
      %v699 = vsel %vm220, %v657, 0
      %v702 = vsel %vm220, %v658, 0
      %704 = vmatpush.bf16.msra.mxu0 0
      %705 = vmatpush.bf16.msra.mxu0 0
      %706 = vmatpush.bf16.msra.mxu0 0
      %707 = vmatpush.bf16.msra.mxu0 0
      %708 = vmatpush.bf16.msra.mxu0 %v687
      %709 = vmatpush.bf16.msra.mxu0 %v686
      %710 = vmatpush.bf16.msra.mxu0 %v685
      %711 = vmatpush.bf16.msra.mxu0 %v684
      %712 = vmatmul.bf16.gmra.mxu0 %v693
      %v713 = vpop.f32.mrf.mxu0
      %v714 = vadd.f32 0.0, %v713
      %v715 = vpop.f32.mrf.mxu0
      %v716 = vadd.f32 0.0, %v715
      %717 = vmatmul.bf16.gmra.mxu0 %v696
      %v718 = vpop.f32.mrf.mxu0
      %v719 = vadd.f32 0.0, %v718
      %v720 = vpop.f32.mrf.mxu0
      %v721 = vadd.f32 0.0, %v720
      %722 = vmatmul.bf16.gmra.mxu0 %v699
      %v723 = vpop.f32.mrf.mxu0
      %v724 = vadd.f32 0.0, %v723
      %v725 = vpop.f32.mrf.mxu0
      %v726 = vadd.f32 0.0, %v725
      %727 = vmatmul.bf16.gmra.mxu0 %v702
      %v728 = vpop.f32.mrf.mxu0
      %v729 = vadd.f32 0.0, %v728
      %v730 = vpop.f32.mrf.mxu0
      %v731 = vadd.f32 0.0, %v730
      %732 = vdwg.mxu0
      %v733 = vadd.f32 %v639, %v714
      %v734 = vadd.f32 %v640, %v716
      %v735 = vadd.f32 %v641, %v719
      %v736 = vadd.f32 %v642, %v721
      %v737 = vadd.f32 %v643, %v724
      %v738 = vadd.f32 %v644, %v726
      %v739 = vadd.f32 %v645, %v729
      %v740 = vadd.f32 %v646, %v731
      %s741 = scalar_lea.vmem %s165, 32
      %v742 = vld [vmem:[%s741] sm:$0xff]
      %v743 = vld [vmem:[%s741 + $0x10] sm:$0xff]
      %v744 = vld [vmem:[%s741 + $0x20] sm:$0xff]
      %v745 = vld [vmem:[%s741 + $0x30] sm:$0xff]
      %v746 = vld [vmem:[%s741 + $0x40] sm:$0xff]
      %v747 = vld [vmem:[%s741 + $0x50] sm:$0xff]
      %v748 = vld [vmem:[%s741 + $0x60] sm:$0xff]
      %v749 = vld [vmem:[%s741 + $0x70] sm:$0xff]
      %v750 = vpack.c.bf16 %v743, %v742
      %v751 = vpack.c.bf16 %v745, %v744
      %v752 = vpack.c.bf16 %v747, %v746
      %v753 = vpack.c.bf16 %v749, %v748
      %s754 = scalar_lea.vmem %s1, 192
      %v755 = vld [vmem:[%s754] sm:$0xf]
      %v756 = vld [vmem:[%s754 + $0x4] sm:$0xf]
      %v757 = vld [vmem:[%s754 + $0x8] sm:$0xf]
      %v758 = vld [vmem:[%s754 + $0xc] sm:$0xf]
      %v759 = vld [vmem:[%s754 + $0x10] sm:$0xf]
      %v760 = vld [vmem:[%s754 + $0x14] sm:$0xf]
      %v761 = vld [vmem:[%s754 + $0x18] sm:$0xf]
      %v762 = vld [vmem:[%s754 + $0x1c] sm:$0xf]
      %v771 = vunpack.c.l.b16 %v755
      %v772 = vunpack.c.l.b16 %v756
      %v773 = vunpack.c.l.b16 %v757
      %v774 = vunpack.c.l.b16 %v758
      %v775 = vunpack.c.l.b16 %v759
      %v776 = vunpack.c.l.b16 %v760
      %v777 = vunpack.c.l.b16 %v761
      %v778 = vunpack.c.l.b16 %v762
      %v779 = vpack.c.b16 %v772, %v771
      %v780 = vpack.c.b16 %v774, %v773
      %v781 = vpack.c.b16 %v776, %v775
      %v782 = vpack.c.b16 %v778, %v777
      %v788 = vsel %vm220, %v750, 0
      %v791 = vsel %vm220, %v751, 0
      %v794 = vsel %vm220, %v752, 0
      %v797 = vsel %vm220, %v753, 0
      %799 = vmatpush.bf16.msra.mxu0 0
      %800 = vmatpush.bf16.msra.mxu0 0
      %801 = vmatpush.bf16.msra.mxu0 0
      %802 = vmatpush.bf16.msra.mxu0 0
      %803 = vmatpush.bf16.msra.mxu0 %v782
      %804 = vmatpush.bf16.msra.mxu0 %v781
      %805 = vmatpush.bf16.msra.mxu0 %v780
      %806 = vmatpush.bf16.msra.mxu0 %v779
      %807 = vmatmul.bf16.gmra.mxu0 %v788
      %v808 = vpop.f32.mrf.mxu0
      %v809 = vadd.f32 0.0, %v808
      %v810 = vpop.f32.mrf.mxu0
      %v811 = vadd.f32 0.0, %v810
      %812 = vmatmul.bf16.gmra.mxu0 %v791
      %v813 = vpop.f32.mrf.mxu0
      %v814 = vadd.f32 0.0, %v813
      %v815 = vpop.f32.mrf.mxu0
      %v816 = vadd.f32 0.0, %v815
      %817 = vmatmul.bf16.gmra.mxu0 %v794
      %v818 = vpop.f32.mrf.mxu0
      %v819 = vadd.f32 0.0, %v818
      %v820 = vpop.f32.mrf.mxu0
      %v821 = vadd.f32 0.0, %v820
      %822 = vmatmul.bf16.gmra.mxu0 %v797
      %v823 = vpop.f32.mrf.mxu0
      %v824 = vadd.f32 0.0, %v823
      %v825 = vpop.f32.mrf.mxu0
      %v826 = vadd.f32 0.0, %v825
      %827 = vdwg.mxu0
      %v828 = vadd.f32 %v733, %v809
      %v829 = vadd.f32 %v734, %v811
      %v830 = vadd.f32 %v735, %v814
      %v831 = vadd.f32 %v736, %v816
      %v832 = vadd.f32 %v737, %v819
      %v833 = vadd.f32 %v738, %v821
      %v834 = vadd.f32 %v739, %v824
      %v835 = vadd.f32 %v740, %v826
      %v836 = vld [vmem:[%s741 + $0x1] sm:$0xff]
      %v837 = vld [vmem:[%s741 + $0x11] sm:$0xff]
      %v838 = vld [vmem:[%s741 + $0x21] sm:$0xff]
      %v839 = vld [vmem:[%s741 + $0x31] sm:$0xff]
      %v840 = vld [vmem:[%s741 + $0x41] sm:$0xff]
      %v841 = vld [vmem:[%s741 + $0x51] sm:$0xff]
      %v842 = vld [vmem:[%s741 + $0x61] sm:$0xff]
      %v843 = vld [vmem:[%s741 + $0x71] sm:$0xff]
      %v844 = vpack.c.bf16 %v837, %v836
      %v845 = vpack.c.bf16 %v839, %v838
      %v846 = vpack.c.bf16 %v841, %v840
      %v847 = vpack.c.bf16 %v843, %v842
      %s848 = scalar_lea.vmem %s1, 224
      %v849 = vld [vmem:[%s848] sm:$0xf]
      %v850 = vld [vmem:[%s848 + $0x4] sm:$0xf]
      %v851 = vld [vmem:[%s848 + $0x8] sm:$0xf]
      %v852 = vld [vmem:[%s848 + $0xc] sm:$0xf]
      %v853 = vld [vmem:[%s848 + $0x10] sm:$0xf]
      %v854 = vld [vmem:[%s848 + $0x14] sm:$0xf]
      %v855 = vld [vmem:[%s848 + $0x18] sm:$0xf]
      %v856 = vld [vmem:[%s848 + $0x1c] sm:$0xf]
      %v865 = vunpack.c.l.b16 %v849
      %v866 = vunpack.c.l.b16 %v850
      %v867 = vunpack.c.l.b16 %v851
      %v868 = vunpack.c.l.b16 %v852
      %v869 = vunpack.c.l.b16 %v853
      %v870 = vunpack.c.l.b16 %v854
      %v871 = vunpack.c.l.b16 %v855
      %v872 = vunpack.c.l.b16 %v856
      %v873 = vpack.c.b16 %v866, %v865
      %v874 = vpack.c.b16 %v868, %v867
      %v875 = vpack.c.b16 %v870, %v869
      %v876 = vpack.c.b16 %v872, %v871
      %v882 = vsel %vm220, %v844, 0
      %v885 = vsel %vm220, %v845, 0
      %v888 = vsel %vm220, %v846, 0
      %v891 = vsel %vm220, %v847, 0
      %893 = vmatpush.bf16.msra.mxu0 0
      %894 = vmatpush.bf16.msra.mxu0 0
      %895 = vmatpush.bf16.msra.mxu0 0
      %896 = vmatpush.bf16.msra.mxu0 0
      %897 = vmatpush.bf16.msra.mxu0 %v876
      %898 = vmatpush.bf16.msra.mxu0 %v875
      %899 = vmatpush.bf16.msra.mxu0 %v874
      %900 = vmatpush.bf16.msra.mxu0 %v873
      %901 = vmatmul.bf16.gmra.mxu0 %v882
      %v902 = vpop.f32.mrf.mxu0
      %v903 = vadd.f32 0.0, %v902
      %v904 = vpop.f32.mrf.mxu0
      %v905 = vadd.f32 0.0, %v904
      %906 = vmatmul.bf16.gmra.mxu0 %v885
      %v907 = vpop.f32.mrf.mxu0
      %v908 = vadd.f32 0.0, %v907
      %v909 = vpop.f32.mrf.mxu0
      %v910 = vadd.f32 0.0, %v909
      %911 = vmatmul.bf16.gmra.mxu0 %v888
      %v912 = vpop.f32.mrf.mxu0
      %v913 = vadd.f32 0.0, %v912
      %v914 = vpop.f32.mrf.mxu0
      %v915 = vadd.f32 0.0, %v914
      %916 = vmatmul.bf16.gmra.mxu0 %v891
      %v917 = vpop.f32.mrf.mxu0
      %v918 = vadd.f32 0.0, %v917
      %v919 = vpop.f32.mrf.mxu0
      %v920 = vadd.f32 0.0, %v919
      %921 = vdwg.mxu0
      %v922 = vadd.f32 %v828, %v903
      %v923 = vadd.f32 %v829, %v905
      %v924 = vadd.f32 %v830, %v908
      %v925 = vadd.f32 %v831, %v910
      %v926 = vadd.f32 %v832, %v913
      %v927 = vadd.f32 %v833, %v915
      %v928 = vadd.f32 %v834, %v918
      %v929 = vadd.f32 %v835, %v920
      %v930 = vld [vmem:[%s741 + $0x2] sm:$0xff]
      %v931 = vld [vmem:[%s741 + $0x12] sm:$0xff]
      %v932 = vld [vmem:[%s741 + $0x22] sm:$0xff]
      %v933 = vld [vmem:[%s741 + $0x32] sm:$0xff]
      %v934 = vld [vmem:[%s741 + $0x42] sm:$0xff]
      %v935 = vld [vmem:[%s741 + $0x52] sm:$0xff]
      %v936 = vld [vmem:[%s741 + $0x62] sm:$0xff]
      %v937 = vld [vmem:[%s741 + $0x72] sm:$0xff]
      %v938 = vpack.c.bf16 %v931, %v930
      %v939 = vpack.c.bf16 %v933, %v932
      %v940 = vpack.c.bf16 %v935, %v934
      %v941 = vpack.c.bf16 %v937, %v936
      %s942 = scalar_lea.vmem %s1, 256
      %v943 = vld [vmem:[%s942] sm:$0xf]
      %v944 = vld [vmem:[%s942 + $0x4] sm:$0xf]
      %v945 = vld [vmem:[%s942 + $0x8] sm:$0xf]
      %v946 = vld [vmem:[%s942 + $0xc] sm:$0xf]
      %v947 = vld [vmem:[%s942 + $0x10] sm:$0xf]
      %v948 = vld [vmem:[%s942 + $0x14] sm:$0xf]
      %v949 = vld [vmem:[%s942 + $0x18] sm:$0xf]
      %v950 = vld [vmem:[%s942 + $0x1c] sm:$0xf]
      %v959 = vunpack.c.l.b16 %v943
      %v960 = vunpack.c.l.b16 %v944
      %v961 = vunpack.c.l.b16 %v945
      %v962 = vunpack.c.l.b16 %v946
      %v963 = vunpack.c.l.b16 %v947
      %v964 = vunpack.c.l.b16 %v948
      %v965 = vunpack.c.l.b16 %v949
      %v966 = vunpack.c.l.b16 %v950
      %v967 = vpack.c.b16 %v960, %v959
      %v968 = vpack.c.b16 %v962, %v961
      %v969 = vpack.c.b16 %v964, %v963
      %v970 = vpack.c.b16 %v966, %v965
      %v976 = vsel %vm220, %v938, 0
      %v979 = vsel %vm220, %v939, 0
      %v982 = vsel %vm220, %v940, 0
      %v985 = vsel %vm220, %v941, 0
      %987 = vmatpush.bf16.msra.mxu0 0
      %988 = vmatpush.bf16.msra.mxu0 0
      %989 = vmatpush.bf16.msra.mxu0 0
      %990 = vmatpush.bf16.msra.mxu0 0
      %991 = vmatpush.bf16.msra.mxu0 %v970
      %992 = vmatpush.bf16.msra.mxu0 %v969
      %993 = vmatpush.bf16.msra.mxu0 %v968
      %994 = vmatpush.bf16.msra.mxu0 %v967
      %995 = vmatmul.bf16.gmra.mxu0 %v976
      %v996 = vpop.f32.mrf.mxu0
      %v997 = vadd.f32 0.0, %v996
      %v998 = vpop.f32.mrf.mxu0
      %v999 = vadd.f32 0.0, %v998
      %1000 = vmatmul.bf16.gmra.mxu0 %v979
      %v1001 = vpop.f32.mrf.mxu0
      %v1002 = vadd.f32 0.0, %v1001
      %v1003 = vpop.f32.mrf.mxu0
      %v1004 = vadd.f32 0.0, %v1003
      %1005 = vmatmul.bf16.gmra.mxu0 %v982
      %v1006 = vpop.f32.mrf.mxu0
      %v1007 = vadd.f32 0.0, %v1006
      %v1008 = vpop.f32.mrf.mxu0
      %v1009 = vadd.f32 0.0, %v1008
      %1010 = vmatmul.bf16.gmra.mxu0 %v985
      %v1011 = vpop.f32.mrf.mxu0
      %v1012 = vadd.f32 0.0, %v1011
      %v1013 = vpop.f32.mrf.mxu0
      %v1014 = vadd.f32 0.0, %v1013
      %1015 = vdwg.mxu0
      %v1016 = vadd.f32 %v922, %v997
      %v1017 = vadd.f32 %v923, %v999
      %v1018 = vadd.f32 %v924, %v1002
      %v1019 = vadd.f32 %v925, %v1004
      %v1020 = vadd.f32 %v926, %v1007
      %v1021 = vadd.f32 %v927, %v1009
      %v1022 = vadd.f32 %v928, %v1012
      %v1023 = vadd.f32 %v929, %v1014
      %v1024 = vmax.f32 %v1016, 0.0
      %v1025 = vmax.f32 %v1017, 0.0
      %v1026 = vmax.f32 %v1018, 0.0
      %v1027 = vmax.f32 %v1019, 0.0
      %v1028 = vmax.f32 %v1020, 0.0
      %v1029 = vmax.f32 %v1021, 0.0
      %v1030 = vmax.f32 %v1022, 0.0
      %v1031 = vmax.f32 %v1023, 0.0
      %1032 = vst [vmem:[%s170] sm:$0xff] %v1024
      %1033 = vst [vmem:[%s170 + $0x8] sm:$0xff] %v1025
      %1034 = vst [vmem:[%s170 + $0x10] sm:$0xff] %v1026
      %1035 = vst [vmem:[%s170 + $0x18] sm:$0xff] %v1027
      %1036 = vst [vmem:[%s170 + $0x20] sm:$0xff] %v1028
      %1037 = vst [vmem:[%s170 + $0x28] sm:$0xff] %v1029
      %1038 = vst [vmem:[%s170 + $0x30] sm:$0xff] %v1030
      %1039 = vst [vmem:[%s170 + $0x38] sm:$0xff] %v1031
      %p1040 = scmp.lt.s32.totalorder %s14, 1
      %s1041 = scalar_select %p1040, %s14, 1
      %s1042 = smul.addr %s1041, 8
      %s1043 = smul.addr %s1042, 8
      %s1044 = scalar_lea.vmem %s3, %s1043
      // Predicated region
      $region33: #{feature_extractor_pallas.10} parent=31 // pred_check
        %p1045 = pneg %p100
      $region34: #{feature_extractor_pallas.10} parent=31 // pred_check_branch
        %1047 = sbr.rel (%p1045) target = $region36
      $region35: #{feature_extractor_pallas.10} parent=31 // pred_region
        _
      $region36: #{feature_extractor_pallas.10} parent=31 // pred_fallthru
        _
    $region32: #{feature_extractor_pallas.10} parent=5 // pred_fallthru
      _
    %p1048 = scmp.le.s32.totalorder 2, %s9
    // Predicated region
    $region37: #{feature_extractor_pallas.10} parent=5 // pred_check
      %p1049 = pneg %p1048
    $region38: #{feature_extractor_pallas.10} parent=5 // pred_check_branch
      %1051 = sbr.rel (%p1049) target = $region40
    $region39: #{feature_extractor_pallas.10} parent=5 // pred_region
      %s1052 = ssub.s32 %s9, 2
      // Predicated region
      $region41: #{feature_extractor_pallas.10} parent=39 // pred_check
        %p1053 = pneg %p106
      $region42: #{feature_extractor_pallas.10} parent=39 // pred_check_branch
        %1055 = sbr.rel (%p1053) target = $region44
      $region43: #{feature_extractor_pallas.10} parent=39 // pred_region
        %p1056 = scmp.lt.s32.totalorder %s15, 1
        %s1057 = scalar_select %p1056, %s15, 1
        %s1058 = smul.addr %s1057, 8
        %s1059 = smul.addr %s1058, 8
        %s1060 = scalar_lea.vmem %s3, %s1059
      $region44: #{feature_extractor_pallas.10} parent=39 // pred_fallthru
        _
    $region40: #{feature_extractor_pallas.10} parent=5 // pred_fallthru
      _
  $region6: #{feature_extractor_pallas.10} parent=0 // loop_footer
    %s13 = sadd.s32 1, %s9
  $region7: #{feature_extractor_pallas.10} parent=0 // loop_footer_branch
    %8 = sbr.rel target = $region3
  $region8: #{feature_extractor_pallas.10} parent=0 // loop_exit
    _

// kernel: feature_extractor_pallas.8
$region0: #{feature_extractor_pallas.8}
  #allocation0 [shape = 'u32[]', space=smem, size = 0x4, offset = 0x4, fixed_abs, tag = 'smem constant byte address 0x4 - core index']
  #allocation1 [shape = 'u32[72,128]{1,0:T(1,128)}', space=vmem, size = 0x9000, scoped, tag = 'internal scratch']
  %s0 = inlined_call_operand.vmem [shape: f32[2,18,18,64], index: 0, kind: input, shape index: {}]
  %s1 = inlined_call_operand.vmem [shape: bf16[9,64,64], index: 1, kind: input, shape index: {}]
  %s2 = inlined_call_operand.vmem [shape: f32[1,64], index: 2, kind: input, shape index: {}]
  %s3 = inlined_call_operand.vmem [shape: f32[2,16,16,64], index: 3, kind: output, shape index: {}]
  %s4 = sld [smem:[#allocation0]]
  $region45: #{feature_extractor_pallas.8} parent=0
    _
  %s6 = ssub.s32 1, %s4
  %s7 = scalar_select 0, %s6, %s4
  loop: start=0, step=1, limit=4
  $region2: #{feature_extractor_pallas.8} parent=0 // loop_pre_header
    _
  $region3: #{feature_extractor_pallas.8} parent=0 // loop_header
    %s9 = sphi 0, %s13
    %p10 = scmp.ge.s32.totalorder %s9, 4
    %s19 = sphi 0, %s21
    %s22 = sphi 0, %s19
    %s23 = sphi 0, %s22
    %s39 = sphi 0, %s23
    %s43 = sphi 0, %s43
    %s45 = sphi 0, %s43
    %s46 = sphi 0, %s45
    %s60 = sphi 0, %s46
    %s64 = sphi 0, %s64
    %s66 = sphi 0, %s64
    %s67 = sphi 0, %s66
    %s81 = sphi 0, %s67
    %s87 = sphi 0, %s89
    %s90 = sphi 0, %s87
    %s91 = sphi 0, %s90
    %s107 = sphi 0, %s91
  $region4: #{feature_extractor_pallas.8} parent=0 // loop_header_branch
    %12 = sbr.rel (%p10) target = $region8
  $region5: #{feature_extractor_pallas.8} parent=0 // loop_body
    %s14 = ssub.s32 %s9, 1
    %s15 = ssub.s32 %s9, 2
    %s16 = sadd.s32 %s9, 1
    %s17 = ssub.s32 %s9, %s16
    %p18 = scmp.eq.s32.totalorder %s17, 0
    %s20 = sadd.s32 %s19, 1
    %s21 = scalar_select %p18, %s19, %s20
    %p24 = pneg %p18
    %p25 = scmp.eq.s32.totalorder %s9, 1
    %p26 = por %p24, %p25
    %p27 = scmp.ne.s32.totalorder %s19, %s22
    %p28 = scmp.eq.s32.totalorder %s9, 0
    %p29 = por %p27, %p28
    %p30 = scmp.ne.s32.totalorder %s19, %s22
    %p31 = scmp.eq.s32.totalorder %s14, 1
    %p32 = por %p30, %p31
    %p33 = scmp.ne.s32.totalorder %s22, %s23
    %p34 = scmp.eq.s32.totalorder %s14, 0
    %p35 = por %p33, %p34
    %p36 = scmp.ne.s32.totalorder %s22, %s23
    %p37 = scmp.eq.s32.totalorder %s15, 1
    %p38 = por %p36, %p37
    %p40 = scmp.ne.s32.totalorder %s23, %s39
    %p41 = scmp.eq.s32.totalorder %s15, 0
    %p42 = por %p40, %p41
    %s44 = sadd.s32 %s43, 1
    %p47 = scmp.eq.s32.totalorder %s9, 1
    %p48 = scmp.ne.s32.totalorder %s43, %s45
    %p49 = scmp.eq.s32.totalorder %s9, 0
    %p50 = por %p48, %p49
    %p51 = scmp.ne.s32.totalorder %s43, %s45
    %p52 = scmp.eq.s32.totalorder %s14, 1
    %p53 = por %p51, %p52
    %p54 = scmp.ne.s32.totalorder %s45, %s46
    %p55 = scmp.eq.s32.totalorder %s14, 0
    %p56 = por %p54, %p55
    %p57 = scmp.ne.s32.totalorder %s45, %s46
    %p58 = scmp.eq.s32.totalorder %s15, 1
    %p59 = por %p57, %p58
    %p61 = scmp.ne.s32.totalorder %s46, %s60
    %p62 = scmp.eq.s32.totalorder %s15, 0
    %p63 = por %p61, %p62
    %s65 = sadd.s32 %s64, 1
    %p68 = scmp.eq.s32.totalorder %s9, 1
    %p69 = scmp.ne.s32.totalorder %s64, %s66
    %p70 = scmp.eq.s32.totalorder %s9, 0
    %p71 = por %p69, %p70
    %p72 = scmp.ne.s32.totalorder %s64, %s66
    %p73 = scmp.eq.s32.totalorder %s14, 1
    %p74 = por %p72, %p73
    %p75 = scmp.ne.s32.totalorder %s66, %s67
    %p76 = scmp.eq.s32.totalorder %s14, 0
    %p77 = por %p75, %p76
    %p78 = scmp.ne.s32.totalorder %s66, %s67
    %p79 = scmp.eq.s32.totalorder %s15, 1
    %p80 = por %p78, %p79
    %p82 = scmp.ne.s32.totalorder %s67, %s81
    %p83 = scmp.eq.s32.totalorder %s15, 0
    %p84 = por %p82, %p83
    %s85 = ssub.s32 %s9, %s16
    %p86 = scmp.eq.s32.totalorder %s85, 0
    %s88 = sadd.s32 %s87, 1
    %s89 = scalar_select %p86, %s87, %s88
    %p92 = pneg %p86
    %p93 = scmp.eq.s32.totalorder %s9, 1
    %p94 = por %p92, %p93
    %p95 = scmp.ne.s32.totalorder %s87, %s90
    %p96 = scmp.eq.s32.totalorder %s9, 0
    %p97 = por %p95, %p96
    %p98 = scmp.ne.s32.totalorder %s87, %s90
    %p99 = scmp.eq.s32.totalorder %s14, 1
    %p100 = por %p98, %p99
    %p101 = scmp.ne.s32.totalorder %s90, %s91
    %p102 = scmp.eq.s32.totalorder %s14, 0
    %p103 = por %p101, %p102
    %p104 = scmp.ne.s32.totalorder %s90, %s91
    %p105 = scmp.eq.s32.totalorder %s15, 1
    %p106 = por %p104, %p105
    %p108 = scmp.ne.s32.totalorder %s91, %s107
    %p109 = scmp.eq.s32.totalorder %s15, 0
    %p110 = por %p108, %p109
    %p111 = scmp.le.s32.totalorder 1, %s9
    %p112 = scmp.lt.s32.totalorder %s9, 3
    %p113 = pnand %p111, %p112
    %p114 = pneg %p113
    // Predicated region
    $region9: #{feature_extractor_pallas.8} parent=5 // pred_check
      _
    $region10: #{feature_extractor_pallas.8} parent=5 // pred_check_branch
      %116 = sbr.rel (%p113) target = $region12
    $region11: #{feature_extractor_pallas.8} parent=5 // pred_region
      %s117 = ssub.s32 %s9, 1
      // Predicated region
      $region13: #{feature_extractor_pallas.8} parent=11 // pred_check
        %p118 = pneg %p56
      $region14: #{feature_extractor_pallas.8} parent=11 // pred_check_branch
        %120 = sbr.rel (%p118) target = $region16
      $region15: #{feature_extractor_pallas.8} parent=11 // pred_region
        _
      $region16: #{feature_extractor_pallas.8} parent=11 // pred_fallthru
        _
      // Predicated region
      $region17: #{feature_extractor_pallas.8} parent=11 // pred_check
        %p121 = pneg %p77
      $region18: #{feature_extractor_pallas.8} parent=11 // pred_check_branch
        %123 = sbr.rel (%p121) target = $region20
      $region19: #{feature_extractor_pallas.8} parent=11 // pred_region
        _
      $region20: #{feature_extractor_pallas.8} parent=11 // pred_fallthru
        _
    $region12: #{feature_extractor_pallas.8} parent=5 // pred_fallthru
      _
    %p124 = scmp.lt.s32.totalorder %s9, 2
    // Predicated region
    $region21: #{feature_extractor_pallas.8} parent=5 // pred_check
      %p125 = pneg %p124
    $region22: #{feature_extractor_pallas.8} parent=5 // pred_check_branch
      %127 = sbr.rel (%p125) target = $region24
    $region23: #{feature_extractor_pallas.8} parent=5 // pred_region
      // Predicated region
      $region25: #{feature_extractor_pallas.8} parent=23 // pred_check
        %p128 = pneg %p29
      $region26: #{feature_extractor_pallas.8} parent=23 // pred_check_branch
        %130 = sbr.rel (%p128) target = $region28
      $region27: #{feature_extractor_pallas.8} parent=23 // pred_region
        %p131 = scmp.lt.s32.totalorder %s9, 1
        %s132 = scalar_select %p131, %s9, 1
        %s133 = smul.addr %s132, 54
        %s134 = smul.addr %s133, 8
        %s135 = scalar_lea.vmem %s0, %s134
      $region28: #{feature_extractor_pallas.8} parent=23 // pred_fallthru
        _
    $region24: #{feature_extractor_pallas.8} parent=5 // pred_fallthru
      _
    %p136 = scmp.le.s32.totalorder 1, %s9
    %p137 = scmp.lt.s32.totalorder %s9, 3
    %p138 = pnand %p136, %p137
    %p139 = pneg %p138
    // Predicated region
    $region29: #{feature_extractor_pallas.8} parent=5 // pred_check
      _
    $region30: #{feature_extractor_pallas.8} parent=5 // pred_check_branch
      %141 = sbr.rel (%p138) target = $region32
    $region31: #{feature_extractor_pallas.8} parent=5 // pred_region
      %s142 = ssub.s32 %s9, 1
      %p143 = scmp.lt.s32.totalorder %s14, 1
      %s144 = scalar_select %p143, %s14, 1
      %s145 = smul.addr %s144, 54
      %s146 = smul.addr %s145, 8
      %s147 = scalar_lea.vmem %s0, %s146
      %p148 = pneg %p35
      %p149 = pneg %p32
      %p150 = pneg %p56
      %p151 = pneg %p53
      %p152 = pneg %p77
      %p153 = pneg %p74
      %p154 = pneg %p103
      %p155 = pneg %p100
      %p156 = scmp.lt.s32.totalorder %s14, 1
      %s157 = scalar_select %p156, %s14, 1
      %s158 = smul.addr %s157, 32
      %s159 = smul.addr %s158, 8
      %s160 = scalar_lea.vmem %s3, %s159
      %p161 = scmp.lt.s32.totalorder %s14, 1
      %s162 = scalar_select %p161, %s14, 1
      %s163 = smul.addr %s162, 54
      %s164 = smul.addr %s163, 8
      %s165 = scalar_lea.vmem %s0, %s164
      %p166 = scmp.lt.s32.totalorder %s14, 1
      %s167 = scalar_select %p166, %s14, 1
      %s168 = smul.addr %s167, 32
      %s169 = smul.addr %s168, 8
      %s170 = scalar_lea.vmem %s3, %s169
      %v172 = vld [vmem:[%s2] sm:$0x1]
      %v174 = vperm.slane %v172, 0
      %v176 = vld [vmem:[%s165] sm:$0xff]
      %v177 = vld [vmem:[%s165 + $0x8] sm:$0xff]
      %v178 = vld [vmem:[%s165 + $0x18] sm:$0xff]
      %v179 = vld [vmem:[%s165 + $0x20] sm:$0xff]
      %v180 = vld [vmem:[%s165 + $0x30] sm:$0xff]
      %v181 = vld [vmem:[%s165 + $0x38] sm:$0xff]
      %v182 = vld [vmem:[%s165 + $0x48] sm:$0xff]
      %v183 = vld [vmem:[%s165 + $0x50] sm:$0xff]
      %v184 = vld [vmem:[%s165 + $0x60] sm:$0xff]
      %v185 = vld [vmem:[%s165 + $0x68] sm:$0xff]
      %v186 = vld [vmem:[%s165 + $0x78] sm:$0xff]
      %v187 = vld [vmem:[%s165 + $0x80] sm:$0xff]
      %v188 = vld [vmem:[%s165 + $0x90] sm:$0xff]
      %v189 = vld [vmem:[%s165 + $0x98] sm:$0xff]
      %v190 = vld [vmem:[%s165 + $0xa8] sm:$0xff]
      %v191 = vld [vmem:[%s165 + $0xb0] sm:$0xff]
      %v192 = vld [vmem:[%s165 + $0xc0] sm:$0xff]
      %v193 = vld [vmem:[%s165 + $0xc8] sm:$0xff]
      %v194 = vld [vmem:[%s165 + $0xd8] sm:$0xff]
      %v195 = vld [vmem:[%s165 + $0xe0] sm:$0xff]
      %v196 = vld [vmem:[%s165 + $0xf0] sm:$0xff]
      %v197 = vld [vmem:[%s165 + $0xf8] sm:$0xff]
      %v198 = vld [vmem:[%s165 + $0x108] sm:$0xff]
      %v199 = vld [vmem:[%s165 + $0x110] sm:$0xff]
      %v200 = vld [vmem:[%s165 + $0x120] sm:$0xff]
      %v201 = vld [vmem:[%s165 + $0x128] sm:$0xff]
      %v202 = vld [vmem:[%s165 + $0x138] sm:$0xff]
      %v203 = vld [vmem:[%s165 + $0x140] sm:$0xff]
      %v204 = vld [vmem:[%s165 + $0x150] sm:$0xff]
      %v205 = vld [vmem:[%s165 + $0x158] sm:$0xff]
      %v206 = vld [vmem:[%s165 + $0x168] sm:$0xff]
      %v207 = vld [vmem:[%s165 + $0x170] sm:$0xff]
      %v208 = vpack.c.bf16 %v177, %v176
      %v209 = vpack.c.bf16 %v179, %v178
      %v210 = vpack.c.bf16 %v181, %v180
      %v211 = vpack.c.bf16 %v183, %v182
      %v212 = vpack.c.bf16 %v185, %v184
      %v213 = vpack.c.bf16 %v187, %v186
      %v214 = vpack.c.bf16 %v189, %v188
      %v215 = vpack.c.bf16 %v191, %v190
      %v216 = vpack.c.bf16 %v193, %v192
      %v217 = vpack.c.bf16 %v195, %v194
      %v218 = vpack.c.bf16 %v197, %v196
      %v219 = vpack.c.bf16 %v199, %v198
      %v220 = vpack.c.bf16 %v201, %v200
      %v221 = vpack.c.bf16 %v203, %v202
      %v222 = vpack.c.bf16 %v205, %v204
      %v223 = vpack.c.bf16 %v207, %v206
      %v224 = vld [vmem:[%s1] sm:$0xf]
      %v225 = vld [vmem:[%s1 + $0x4] sm:$0xf]
      %v226 = vld [vmem:[%s1 + $0x8] sm:$0xf]
      %v227 = vld [vmem:[%s1 + $0xc] sm:$0xf]
      %v228 = vld [vmem:[%s1 + $0x10] sm:$0xf]
      %v229 = vld [vmem:[%s1 + $0x14] sm:$0xf]
      %v230 = vld [vmem:[%s1 + $0x18] sm:$0xf]
      %v231 = vld [vmem:[%s1 + $0x1c] sm:$0xf]
      %v240 = vunpack.c.l.b16 %v224
      %v241 = vunpack.c.l.b16 %v225
      %v242 = vunpack.c.l.b16 %v226
      %v243 = vunpack.c.l.b16 %v227
      %v244 = vunpack.c.l.b16 %v228
      %v245 = vunpack.c.l.b16 %v229
      %v246 = vunpack.c.l.b16 %v230
      %v247 = vunpack.c.l.b16 %v231
      %v248 = vpack.c.b16 %v241, %v240
      %v249 = vpack.c.b16 %v243, %v242
      %v250 = vpack.c.b16 %v245, %v244
      %v251 = vpack.c.b16 %v247, %v246
      %vm256 = vcmask 523264
      %v258 = vsel %vm256, %v208, 0
      %v261 = vsel %vm256, %v209, 0
      %v264 = vsel %vm256, %v210, 0
      %v267 = vsel %vm256, %v211, 0
      %v270 = vsel %vm256, %v212, 0
      %v273 = vsel %vm256, %v213, 0
      %v276 = vsel %vm256, %v214, 0
      %v279 = vsel %vm256, %v215, 0
      %v282 = vsel %vm256, %v216, 0
      %v285 = vsel %vm256, %v217, 0
      %v288 = vsel %vm256, %v218, 0
      %v291 = vsel %vm256, %v219, 0
      %v294 = vsel %vm256, %v220, 0
      %v297 = vsel %vm256, %v221, 0
      %v300 = vsel %vm256, %v222, 0
      %v303 = vsel %vm256, %v223, 0
      %305 = vmatpush.bf16.msra.mxu0 0
      %306 = vmatpush.bf16.msra.mxu0 0
      %307 = vmatpush.bf16.msra.mxu0 0
      %308 = vmatpush.bf16.msra.mxu0 0
      %309 = vmatpush.bf16.msra.mxu0 %v251
      %310 = vmatpush.bf16.msra.mxu0 %v250
      %311 = vmatpush.bf16.msra.mxu0 %v249
      %312 = vmatpush.bf16.msra.mxu0 %v248
      %313 = vmatmul.bf16.gmra.mxu0 %v258
      %v314 = vpop.f32.mrf.mxu0
      %v315 = vadd.f32 0.0, %v314
      %v316 = vpop.f32.mrf.mxu0
      %v317 = vadd.f32 0.0, %v316
      %318 = vmatmul.bf16.gmra.mxu0 %v261
      %v319 = vpop.f32.mrf.mxu0
      %v320 = vadd.f32 0.0, %v319
      %v321 = vpop.f32.mrf.mxu0
      %v322 = vadd.f32 0.0, %v321
      %323 = vmatmul.bf16.gmra.mxu0 %v264
      %v324 = vpop.f32.mrf.mxu0
      %v325 = vadd.f32 0.0, %v324
      %v326 = vpop.f32.mrf.mxu0
      %v327 = vadd.f32 0.0, %v326
      %328 = vmatmul.bf16.gmra.mxu0 %v267
      %v329 = vpop.f32.mrf.mxu0
      %v330 = vadd.f32 0.0, %v329
      %v331 = vpop.f32.mrf.mxu0
      %v332 = vadd.f32 0.0, %v331
      %333 = vmatmul.bf16.gmra.mxu0 %v270
      %v334 = vpop.f32.mrf.mxu0
      %v335 = vadd.f32 0.0, %v334
      %v336 = vpop.f32.mrf.mxu0
      %v337 = vadd.f32 0.0, %v336
      %338 = vmatmul.bf16.gmra.mxu0 %v273
      %v339 = vpop.f32.mrf.mxu0
      %v340 = vadd.f32 0.0, %v339
      %v341 = vpop.f32.mrf.mxu0
      %v342 = vadd.f32 0.0, %v341
      %343 = vmatmul.bf16.gmra.mxu0 %v276
      %v344 = vpop.f32.mrf.mxu0
      %v345 = vadd.f32 0.0, %v344
      %v346 = vpop.f32.mrf.mxu0
      %v347 = vadd.f32 0.0, %v346
      %348 = vmatmul.bf16.gmra.mxu0 %v279
      %v349 = vpop.f32.mrf.mxu0
      %v350 = vadd.f32 0.0, %v349
      %v351 = vpop.f32.mrf.mxu0
      %v352 = vadd.f32 0.0, %v351
      %353 = vmatmul.bf16.gmra.mxu0 %v282
      %v354 = vpop.f32.mrf.mxu0
      %v355 = vadd.f32 0.0, %v354
      %v356 = vpop.f32.mrf.mxu0
      %v357 = vadd.f32 0.0, %v356
      %358 = vmatmul.bf16.gmra.mxu0 %v285
      %v359 = vpop.f32.mrf.mxu0
      %v360 = vadd.f32 0.0, %v359
      %v361 = vpop.f32.mrf.mxu0
      %v362 = vadd.f32 0.0, %v361
      %363 = vmatmul.bf16.gmra.mxu0 %v288
      %v364 = vpop.f32.mrf.mxu0
      %v365 = vadd.f32 0.0, %v364
      %v366 = vpop.f32.mrf.mxu0
      %v367 = vadd.f32 0.0, %v366
      %368 = vmatmul.bf16.gmra.mxu0 %v291
      %v369 = vpop.f32.mrf.mxu0
      %v370 = vadd.f32 0.0, %v369
      %v371 = vpop.f32.mrf.mxu0
      %v372 = vadd.f32 0.0, %v371
      %373 = vmatmul.bf16.gmra.mxu0 %v294
      %v374 = vpop.f32.mrf.mxu0
      %v375 = vadd.f32 0.0, %v374
      %v376 = vpop.f32.mrf.mxu0
      %v377 = vadd.f32 0.0, %v376
      %378 = vmatmul.bf16.gmra.mxu0 %v297
      %v379 = vpop.f32.mrf.mxu0
      %v380 = vadd.f32 0.0, %v379
      %v381 = vpop.f32.mrf.mxu0
      %v382 = vadd.f32 0.0, %v381
      %383 = vmatmul.bf16.gmra.mxu0 %v300
      %v384 = vpop.f32.mrf.mxu0
      %v385 = vadd.f32 0.0, %v384
      %v386 = vpop.f32.mrf.mxu0
      %v387 = vadd.f32 0.0, %v386
      %388 = vmatmul.bf16.gmra.mxu0 %v303
      %v389 = vpop.f32.mrf.mxu0
      %v390 = vadd.f32 0.0, %v389
      %v391 = vpop.f32.mrf.mxu0
      %v392 = vadd.f32 0.0, %v391
      %393 = vdwg.mxu0
      %v394 = vadd.f32 %v174, %v315
      %v395 = vadd.f32 %v174, %v317
      %v396 = vadd.f32 %v174, %v320
      %v397 = vadd.f32 %v174, %v322
      %v398 = vadd.f32 %v174, %v325
      %v399 = vadd.f32 %v174, %v327
      %v400 = vadd.f32 %v174, %v330
      %v401 = vadd.f32 %v174, %v332
      %v402 = vadd.f32 %v174, %v335
      %v403 = vadd.f32 %v174, %v337
      %v404 = vadd.f32 %v174, %v340
      %v405 = vadd.f32 %v174, %v342
      %v406 = vadd.f32 %v174, %v345
      %v407 = vadd.f32 %v174, %v347
      %v408 = vadd.f32 %v174, %v350
      %v409 = vadd.f32 %v174, %v352
      %v410 = vadd.f32 %v174, %v355
      %v411 = vadd.f32 %v174, %v357
      %v412 = vadd.f32 %v174, %v360
      %v413 = vadd.f32 %v174, %v362
      %v414 = vadd.f32 %v174, %v365
      %v415 = vadd.f32 %v174, %v367
      %v416 = vadd.f32 %v174, %v370
      %v417 = vadd.f32 %v174, %v372
      %v418 = vadd.f32 %v174, %v375
      %v419 = vadd.f32 %v174, %v377
      %v420 = vadd.f32 %v174, %v380
      %v421 = vadd.f32 %v174, %v382
      %v422 = vadd.f32 %v174, %v385
      %v423 = vadd.f32 %v174, %v387
      %v424 = vadd.f32 %v174, %v390
      %v425 = vadd.f32 %v174, %v392
      %v426 = vld [vmem:[%s165 + $0x1] sm:$0xff]
      %v427 = vld [vmem:[%s165 + $0x9] sm:$0xff]
      %v428 = vld [vmem:[%s165 + $0x19] sm:$0xff]
      %v429 = vld [vmem:[%s165 + $0x21] sm:$0xff]
      %v430 = vld [vmem:[%s165 + $0x31] sm:$0xff]
      %v431 = vld [vmem:[%s165 + $0x39] sm:$0xff]
      %v432 = vld [vmem:[%s165 + $0x49] sm:$0xff]
      %v433 = vld [vmem:[%s165 + $0x51] sm:$0xff]
      %v434 = vld [vmem:[%s165 + $0x61] sm:$0xff]
      %v435 = vld [vmem:[%s165 + $0x69] sm:$0xff]
      %v436 = vld [vmem:[%s165 + $0x79] sm:$0xff]
      %v437 = vld [vmem:[%s165 + $0x81] sm:$0xff]
      %v438 = vld [vmem:[%s165 + $0x91] sm:$0xff]
      %v439 = vld [vmem:[%s165 + $0x99] sm:$0xff]
      %v440 = vld [vmem:[%s165 + $0xa9] sm:$0xff]
      %v441 = vld [vmem:[%s165 + $0xb1] sm:$0xff]
      %v442 = vld [vmem:[%s165 + $0xc1] sm:$0xff]
      %v443 = vld [vmem:[%s165 + $0xc9] sm:$0xff]
      %v444 = vld [vmem:[%s165 + $0xd9] sm:$0xff]
      %v445 = vld [vmem:[%s165 + $0xe1] sm:$0xff]
      %v446 = vld [vmem:[%s165 + $0xf1] sm:$0xff]
      %v447 = vld [vmem:[%s165 + $0xf9] sm:$0xff]
      %v448 = vld [vmem:[%s165 + $0x109] sm:$0xff]
      %v449 = vld [vmem:[%s165 + $0x111] sm:$0xff]
      %v450 = vld [vmem:[%s165 + $0x121] sm:$0xff]
      %v451 = vld [vmem:[%s165 + $0x129] sm:$0xff]
      %v452 = vld [vmem:[%s165 + $0x139] sm:$0xff]
      %v453 = vld [vmem:[%s165 + $0x141] sm:$0xff]
      %v454 = vld [vmem:[%s165 + $0x151] sm:$0xff]
      %v455 = vld [vmem:[%s165 + $0x159] sm:$0xff]
      %v456 = vld [vmem:[%s165 + $0x169] sm:$0xff]
      %v457 = vld [vmem:[%s165 + $0x171] sm:$0xff]
      %v458 = vpack.c.bf16 %v427, %v426
      %v459 = vpack.c.bf16 %v429, %v428
      %v460 = vpack.c.bf16 %v431, %v430
      %v461 = vpack.c.bf16 %v433, %v432
      %v462 = vpack.c.bf16 %v435, %v434
      %v463 = vpack.c.bf16 %v437, %v436
      %v464 = vpack.c.bf16 %v439, %v438
      %v465 = vpack.c.bf16 %v441, %v440
      %v466 = vpack.c.bf16 %v443, %v442
      %v467 = vpack.c.bf16 %v445, %v444
      %v468 = vpack.c.bf16 %v447, %v446
      %v469 = vpack.c.bf16 %v449, %v448
      %v470 = vpack.c.bf16 %v451, %v450
      %v471 = vpack.c.bf16 %v453, %v452
      %v472 = vpack.c.bf16 %v455, %v454
      %v473 = vpack.c.bf16 %v457, %v456
      %s474 = scalar_lea.vmem %s1, 32
      %v475 = vld [vmem:[%s474] sm:$0xf]
      %v476 = vld [vmem:[%s474 + $0x4] sm:$0xf]
      %v477 = vld [vmem:[%s474 + $0x8] sm:$0xf]
      %v478 = vld [vmem:[%s474 + $0xc] sm:$0xf]
      %v479 = vld [vmem:[%s474 + $0x10] sm:$0xf]
      %v480 = vld [vmem:[%s474 + $0x14] sm:$0xf]
      %v481 = vld [vmem:[%s474 + $0x18] sm:$0xf]
      %v482 = vld [vmem:[%s474 + $0x1c] sm:$0xf]
      %v491 = vunpack.c.l.b16 %v475
      %v492 = vunpack.c.l.b16 %v476
      %v493 = vunpack.c.l.b16 %v477
      %v494 = vunpack.c.l.b16 %v478
      %v495 = vunpack.c.l.b16 %v479
      %v496 = vunpack.c.l.b16 %v480
      %v497 = vunpack.c.l.b16 %v481
      %v498 = vunpack.c.l.b16 %v482
      %v499 = vpack.c.b16 %v492, %v491
      %v500 = vpack.c.b16 %v494, %v493
      %v501 = vpack.c.b16 %v496, %v495
      %v502 = vpack.c.b16 %v498, %v497
      %v508 = vsel %vm256, %v458, 0
      %v511 = vsel %vm256, %v459, 0
      %v514 = vsel %vm256, %v460, 0
      %v517 = vsel %vm256, %v461, 0
      %v520 = vsel %vm256, %v462, 0
      %v523 = vsel %vm256, %v463, 0
      %v526 = vsel %vm256, %v464, 0
      %v529 = vsel %vm256, %v465, 0
      %v532 = vsel %vm256, %v466, 0
      %v535 = vsel %vm256, %v467, 0
      %v538 = vsel %vm256, %v468, 0
      %v541 = vsel %vm256, %v469, 0
      %v544 = vsel %vm256, %v470, 0
      %v547 = vsel %vm256, %v471, 0
      %v550 = vsel %vm256, %v472, 0
      %v553 = vsel %vm256, %v473, 0
      %555 = vmatpush.bf16.msra.mxu0 0
      %556 = vmatpush.bf16.msra.mxu0 0
      %557 = vmatpush.bf16.msra.mxu0 0
      %558 = vmatpush.bf16.msra.mxu0 0
      %559 = vmatpush.bf16.msra.mxu0 %v502
      %560 = vmatpush.bf16.msra.mxu0 %v501
      %561 = vmatpush.bf16.msra.mxu0 %v500
      %562 = vmatpush.bf16.msra.mxu0 %v499
      %563 = vmatmul.bf16.gmra.mxu0 %v508
      %v564 = vpop.f32.mrf.mxu0
      %v565 = vadd.f32 0.0, %v564
      %v566 = vpop.f32.mrf.mxu0
      %v567 = vadd.f32 0.0, %v566
      %568 = vmatmul.bf16.gmra.mxu0 %v511
      %v569 = vpop.f32.mrf.mxu0
      %v570 = vadd.f32 0.0, %v569
      %v571 = vpop.f32.mrf.mxu0
      %v572 = vadd.f32 0.0, %v571
      %573 = vmatmul.bf16.gmra.mxu0 %v514
      %v574 = vpop.f32.mrf.mxu0
      %v575 = vadd.f32 0.0, %v574
      %v576 = vpop.f32.mrf.mxu0
      %v577 = vadd.f32 0.0, %v576
      %578 = vmatmul.bf16.gmra.mxu0 %v517
      %v579 = vpop.f32.mrf.mxu0
      %v580 = vadd.f32 0.0, %v579
      %v581 = vpop.f32.mrf.mxu0
      %v582 = vadd.f32 0.0, %v581
      %583 = vmatmul.bf16.gmra.mxu0 %v520
      %v584 = vpop.f32.mrf.mxu0
      %v585 = vadd.f32 0.0, %v584
      %v586 = vpop.f32.mrf.mxu0
      %v587 = vadd.f32 0.0, %v586
      %588 = vmatmul.bf16.gmra.mxu0 %v523
      %v589 = vpop.f32.mrf.mxu0
      %v590 = vadd.f32 0.0, %v589
      %v591 = vpop.f32.mrf.mxu0
      %v592 = vadd.f32 0.0, %v591
      %593 = vmatmul.bf16.gmra.mxu0 %v526
      %v594 = vpop.f32.mrf.mxu0
      %v595 = vadd.f32 0.0, %v594
      %v596 = vpop.f32.mrf.mxu0
      %v597 = vadd.f32 0.0, %v596
      %598 = vmatmul.bf16.gmra.mxu0 %v529
      %v599 = vpop.f32.mrf.mxu0
      %v600 = vadd.f32 0.0, %v599
      %v601 = vpop.f32.mrf.mxu0
      %v602 = vadd.f32 0.0, %v601
      %603 = vmatmul.bf16.gmra.mxu0 %v532
      %v604 = vpop.f32.mrf.mxu0
      %v605 = vadd.f32 0.0, %v604
      %v606 = vpop.f32.mrf.mxu0
      %v607 = vadd.f32 0.0, %v606
      %608 = vmatmul.bf16.gmra.mxu0 %v535
      %v609 = vpop.f32.mrf.mxu0
      %v610 = vadd.f32 0.0, %v609
      %v611 = vpop.f32.mrf.mxu0
      %v612 = vadd.f32 0.0, %v611
      %613 = vmatmul.bf16.gmra.mxu0 %v538
      %v614 = vpop.f32.mrf.mxu0
      %v615 = vadd.f32 0.0, %v614
      %v616 = vpop.f32.mrf.mxu0
      %v617 = vadd.f32 0.0, %v616
      %618 = vmatmul.bf16.gmra.mxu0 %v541
      %v619 = vpop.f32.mrf.mxu0
      %v620 = vadd.f32 0.0, %v619
      %v621 = vpop.f32.mrf.mxu0
      %v622 = vadd.f32 0.0, %v621
      %623 = vmatmul.bf16.gmra.mxu0 %v544
      %v624 = vpop.f32.mrf.mxu0
      %v625 = vadd.f32 0.0, %v624
      %v626 = vpop.f32.mrf.mxu0
      %v627 = vadd.f32 0.0, %v626
      %628 = vmatmul.bf16.gmra.mxu0 %v547
      %v629 = vpop.f32.mrf.mxu0
      %v630 = vadd.f32 0.0, %v629
      %v631 = vpop.f32.mrf.mxu0
      %v632 = vadd.f32 0.0, %v631
      %633 = vmatmul.bf16.gmra.mxu0 %v550
      %v634 = vpop.f32.mrf.mxu0
      %v635 = vadd.f32 0.0, %v634
      %v636 = vpop.f32.mrf.mxu0
      %v637 = vadd.f32 0.0, %v636
      %638 = vmatmul.bf16.gmra.mxu0 %v553
      %v639 = vpop.f32.mrf.mxu0
      %v640 = vadd.f32 0.0, %v639
      %v641 = vpop.f32.mrf.mxu0
      %v642 = vadd.f32 0.0, %v641
      %643 = vdwg.mxu0
      %v644 = vadd.f32 %v394, %v565
      %v645 = vadd.f32 %v395, %v567
      %v646 = vadd.f32 %v396, %v570
      %v647 = vadd.f32 %v397, %v572
      %v648 = vadd.f32 %v398, %v575
      %v649 = vadd.f32 %v399, %v577
      %v650 = vadd.f32 %v400, %v580
      %v651 = vadd.f32 %v401, %v582
      %v652 = vadd.f32 %v402, %v585
      %v653 = vadd.f32 %v403, %v587
      %v654 = vadd.f32 %v404, %v590
      %v655 = vadd.f32 %v405, %v592
      %v656 = vadd.f32 %v406, %v595
      %v657 = vadd.f32 %v407, %v597
      %v658 = vadd.f32 %v408, %v600
      %v659 = vadd.f32 %v409, %v602
      %v660 = vadd.f32 %v410, %v605
      %v661 = vadd.f32 %v411, %v607
      %v662 = vadd.f32 %v412, %v610
      %v663 = vadd.f32 %v413, %v612
      %v664 = vadd.f32 %v414, %v615
      %v665 = vadd.f32 %v415, %v617
      %v666 = vadd.f32 %v416, %v620
      %v667 = vadd.f32 %v417, %v622
      %v668 = vadd.f32 %v418, %v625
      %v669 = vadd.f32 %v419, %v627
      %v670 = vadd.f32 %v420, %v630
      %v671 = vadd.f32 %v421, %v632
      %v672 = vadd.f32 %v422, %v635
      %v673 = vadd.f32 %v423, %v637
      %v674 = vadd.f32 %v424, %v640
      %v675 = vadd.f32 %v425, %v642
      %v676 = vld [vmem:[%s165 + $0x2] sm:$0xff]
      %v677 = vld [vmem:[%s165 + $0xa] sm:$0xff]
      %v678 = vld [vmem:[%s165 + $0x1a] sm:$0xff]
      %v679 = vld [vmem:[%s165 + $0x22] sm:$0xff]
      %v680 = vld [vmem:[%s165 + $0x32] sm:$0xff]
      %v681 = vld [vmem:[%s165 + $0x3a] sm:$0xff]
      %v682 = vld [vmem:[%s165 + $0x4a] sm:$0xff]
      %v683 = vld [vmem:[%s165 + $0x52] sm:$0xff]
      %v684 = vld [vmem:[%s165 + $0x62] sm:$0xff]
      %v685 = vld [vmem:[%s165 + $0x6a] sm:$0xff]
      %v686 = vld [vmem:[%s165 + $0x7a] sm:$0xff]
      %v687 = vld [vmem:[%s165 + $0x82] sm:$0xff]
      %v688 = vld [vmem:[%s165 + $0x92] sm:$0xff]
      %v689 = vld [vmem:[%s165 + $0x9a] sm:$0xff]
      %v690 = vld [vmem:[%s165 + $0xaa] sm:$0xff]
      %v691 = vld [vmem:[%s165 + $0xb2] sm:$0xff]
      %v692 = vld [vmem:[%s165 + $0xc2] sm:$0xff]
      %v693 = vld [vmem:[%s165 + $0xca] sm:$0xff]
      %v694 = vld [vmem:[%s165 + $0xda] sm:$0xff]
      %v695 = vld [vmem:[%s165 + $0xe2] sm:$0xff]
      %v696 = vld [vmem:[%s165 + $0xf2] sm:$0xff]
      %v697 = vld [vmem:[%s165 + $0xfa] sm:$0xff]
      %v698 = vld [vmem:[%s165 + $0x10a] sm:$0xff]
      %v699 = vld [vmem:[%s165 + $0x112] sm:$0xff]
      %v700 = vld [vmem:[%s165 + $0x122] sm:$0xff]
      %v701 = vld [vmem:[%s165 + $0x12a] sm:$0xff]
      %v702 = vld [vmem:[%s165 + $0x13a] sm:$0xff]
      %v703 = vld [vmem:[%s165 + $0x142] sm:$0xff]
      %v704 = vld [vmem:[%s165 + $0x152] sm:$0xff]
      %v705 = vld [vmem:[%s165 + $0x15a] sm:$0xff]
      %v706 = vld [vmem:[%s165 + $0x16a] sm:$0xff]
      %v707 = vld [vmem:[%s165 + $0x172] sm:$0xff]
      %v708 = vpack.c.bf16 %v677, %v676
      %v709 = vpack.c.bf16 %v679, %v678
      %v710 = vpack.c.bf16 %v681, %v680
      %v711 = vpack.c.bf16 %v683, %v682
      %v712 = vpack.c.bf16 %v685, %v684
      %v713 = vpack.c.bf16 %v687, %v686
      %v714 = vpack.c.bf16 %v689, %v688
      %v715 = vpack.c.bf16 %v691, %v690
      %v716 = vpack.c.bf16 %v693, %v692
      %v717 = vpack.c.bf16 %v695, %v694
      %v718 = vpack.c.bf16 %v697, %v696
      %v719 = vpack.c.bf16 %v699, %v698
      %v720 = vpack.c.bf16 %v701, %v700
      %v721 = vpack.c.bf16 %v703, %v702
      %v722 = vpack.c.bf16 %v705, %v704
      %v723 = vpack.c.bf16 %v707, %v706
      %s724 = scalar_lea.vmem %s1, 64
      %v725 = vld [vmem:[%s724] sm:$0xf]
      %v726 = vld [vmem:[%s724 + $0x4] sm:$0xf]
      %v727 = vld [vmem:[%s724 + $0x8] sm:$0xf]
      %v728 = vld [vmem:[%s724 + $0xc] sm:$0xf]
      %v729 = vld [vmem:[%s724 + $0x10] sm:$0xf]
      %v730 = vld [vmem:[%s724 + $0x14] sm:$0xf]
      %v731 = vld [vmem:[%s724 + $0x18] sm:$0xf]
      %v732 = vld [vmem:[%s724 + $0x1c] sm:$0xf]
      %v741 = vunpack.c.l.b16 %v725
      %v742 = vunpack.c.l.b16 %v726
      %v743 = vunpack.c.l.b16 %v727
      %v744 = vunpack.c.l.b16 %v728
      %v745 = vunpack.c.l.b16 %v729
      %v746 = vunpack.c.l.b16 %v730
      %v747 = vunpack.c.l.b16 %v731
      %v748 = vunpack.c.l.b16 %v732
      %v749 = vpack.c.b16 %v742, %v741
      %v750 = vpack.c.b16 %v744, %v743
      %v751 = vpack.c.b16 %v746, %v745
      %v752 = vpack.c.b16 %v748, %v747
      %v758 = vsel %vm256, %v708, 0
      %v761 = vsel %vm256, %v709, 0
      %v764 = vsel %vm256, %v710, 0
      %v767 = vsel %vm256, %v711, 0
      %v770 = vsel %vm256, %v712, 0
      %v773 = vsel %vm256, %v713, 0
      %v776 = vsel %vm256, %v714, 0
      %v779 = vsel %vm256, %v715, 0
      %v782 = vsel %vm256, %v716, 0
      %v785 = vsel %vm256, %v717, 0
      %v788 = vsel %vm256, %v718, 0
      %v791 = vsel %vm256, %v719, 0
      %v794 = vsel %vm256, %v720, 0
      %v797 = vsel %vm256, %v721, 0
      %v800 = vsel %vm256, %v722, 0
      %v803 = vsel %vm256, %v723, 0
      %805 = vmatpush.bf16.msra.mxu0 0
      %806 = vmatpush.bf16.msra.mxu0 0
      %807 = vmatpush.bf16.msra.mxu0 0
      %808 = vmatpush.bf16.msra.mxu0 0
      %809 = vmatpush.bf16.msra.mxu0 %v752
      %810 = vmatpush.bf16.msra.mxu0 %v751
      %811 = vmatpush.bf16.msra.mxu0 %v750
      %812 = vmatpush.bf16.msra.mxu0 %v749
      %813 = vmatmul.bf16.gmra.mxu0 %v758
      %v814 = vpop.f32.mrf.mxu0
      %v815 = vadd.f32 0.0, %v814
      %v816 = vpop.f32.mrf.mxu0
      %v817 = vadd.f32 0.0, %v816
      %818 = vmatmul.bf16.gmra.mxu0 %v761
      %v819 = vpop.f32.mrf.mxu0
      %v820 = vadd.f32 0.0, %v819
      %v821 = vpop.f32.mrf.mxu0
      %v822 = vadd.f32 0.0, %v821
      %823 = vmatmul.bf16.gmra.mxu0 %v764
      %v824 = vpop.f32.mrf.mxu0
      %v825 = vadd.f32 0.0, %v824
      %v826 = vpop.f32.mrf.mxu0
      %v827 = vadd.f32 0.0, %v826
      %828 = vmatmul.bf16.gmra.mxu0 %v767
      %v829 = vpop.f32.mrf.mxu0
      %v830 = vadd.f32 0.0, %v829
      %v831 = vpop.f32.mrf.mxu0
      %v832 = vadd.f32 0.0, %v831
      %833 = vmatmul.bf16.gmra.mxu0 %v770
      %v834 = vpop.f32.mrf.mxu0
      %v835 = vadd.f32 0.0, %v834
      %v836 = vpop.f32.mrf.mxu0
      %v837 = vadd.f32 0.0, %v836
      %838 = vmatmul.bf16.gmra.mxu0 %v773
      %v839 = vpop.f32.mrf.mxu0
      %v840 = vadd.f32 0.0, %v839
      %v841 = vpop.f32.mrf.mxu0
      %v842 = vadd.f32 0.0, %v841
      %843 = vmatmul.bf16.gmra.mxu0 %v776
      %v844 = vpop.f32.mrf.mxu0
      %v845 = vadd.f32 0.0, %v844
      %v846 = vpop.f32.mrf.mxu0
      %v847 = vadd.f32 0.0, %v846
      %848 = vmatmul.bf16.gmra.mxu0 %v779
      %v849 = vpop.f32.mrf.mxu0
      %v850 = vadd.f32 0.0, %v849
      %v851 = vpop.f32.mrf.mxu0
      %v852 = vadd.f32 0.0, %v851
      %853 = vmatmul.bf16.gmra.mxu0 %v782
      %v854 = vpop.f32.mrf.mxu0
      %v855 = vadd.f32 0.0, %v854
      %v856 = vpop.f32.mrf.mxu0
      %v857 = vadd.f32 0.0, %v856
      %858 = vmatmul.bf16.gmra.mxu0 %v785
      %v859 = vpop.f32.mrf.mxu0
      %v860 = vadd.f32 0.0, %v859
      %v861 = vpop.f32.mrf.mxu0
      %v862 = vadd.f32 0.0, %v861
      %863 = vmatmul.bf16.gmra.mxu0 %v788
      %v864 = vpop.f32.mrf.mxu0
      %v865 = vadd.f32 0.0, %v864
      %v866 = vpop.f32.mrf.mxu0
      %v867 = vadd.f32 0.0, %v866
      %868 = vmatmul.bf16.gmra.mxu0 %v791
      %v869 = vpop.f32.mrf.mxu0
      %v870 = vadd.f32 0.0, %v869
      %v871 = vpop.f32.mrf.mxu0
      %v872 = vadd.f32 0.0, %v871
      %873 = vmatmul.bf16.gmra.mxu0 %v794
      %v874 = vpop.f32.mrf.mxu0
      %v875 = vadd.f32 0.0, %v874
      %v876 = vpop.f32.mrf.mxu0
      %v877 = vadd.f32 0.0, %v876
      %878 = vmatmul.bf16.gmra.mxu0 %v797
      %v879 = vpop.f32.mrf.mxu0
      %v880 = vadd.f32 0.0, %v879
      %v881 = vpop.f32.mrf.mxu0
      %v882 = vadd.f32 0.0, %v881
      %883 = vmatmul.bf16.gmra.mxu0 %v800
      %v884 = vpop.f32.mrf.mxu0
      %v885 = vadd.f32 0.0, %v884
      %v886 = vpop.f32.mrf.mxu0
      %v887 = vadd.f32 0.0, %v886
      %888 = vmatmul.bf16.gmra.mxu0 %v803
      %v889 = vpop.f32.mrf.mxu0
      %v890 = vadd.f32 0.0, %v889
      %v891 = vpop.f32.mrf.mxu0
      %v892 = vadd.f32 0.0, %v891
      %893 = vdwg.mxu0
      %v894 = vadd.f32 %v644, %v815
      %v895 = vadd.f32 %v645, %v817
      %v896 = vadd.f32 %v646, %v820
      %v897 = vadd.f32 %v647, %v822
      %v898 = vadd.f32 %v648, %v825
      %v899 = vadd.f32 %v649, %v827
      %v900 = vadd.f32 %v650, %v830
      %v901 = vadd.f32 %v651, %v832
      %v902 = vadd.f32 %v652, %v835
      %v903 = vadd.f32 %v653, %v837
      %v904 = vadd.f32 %v654, %v840
      %v905 = vadd.f32 %v655, %v842
      %v906 = vadd.f32 %v656, %v845
      %v907 = vadd.f32 %v657, %v847
      %v908 = vadd.f32 %v658, %v850
      %v909 = vadd.f32 %v659, %v852
      %v910 = vadd.f32 %v660, %v855
      %v911 = vadd.f32 %v661, %v857
      %v912 = vadd.f32 %v662, %v860
      %v913 = vadd.f32 %v663, %v862
      %v914 = vadd.f32 %v664, %v865
      %v915 = vadd.f32 %v665, %v867
      %v916 = vadd.f32 %v666, %v870
      %v917 = vadd.f32 %v667, %v872
      %v918 = vadd.f32 %v668, %v875
      %v919 = vadd.f32 %v669, %v877
      %v920 = vadd.f32 %v670, %v880
      %v921 = vadd.f32 %v671, %v882
      %v922 = vadd.f32 %v672, %v885
      %v923 = vadd.f32 %v673, %v887
      %v924 = vadd.f32 %v674, %v890
      %v925 = vadd.f32 %v675, %v892
      %s926 = scalar_lea.vmem %s165, 24
      %v927 = vld [vmem:[%s926] sm:$0xff]
      %v928 = vld [vmem:[%s926 + $0x8] sm:$0xff]
      %v929 = vld [vmem:[%s926 + $0x18] sm:$0xff]
      %v930 = vld [vmem:[%s926 + $0x20] sm:$0xff]
      %v931 = vld [vmem:[%s926 + $0x30] sm:$0xff]
      %v932 = vld [vmem:[%s926 + $0x38] sm:$0xff]
      %v933 = vld [vmem:[%s926 + $0x48] sm:$0xff]
      %v934 = vld [vmem:[%s926 + $0x50] sm:$0xff]
      %v935 = vld [vmem:[%s926 + $0x60] sm:$0xff]
      %v936 = vld [vmem:[%s926 + $0x68] sm:$0xff]
      %v937 = vld [vmem:[%s926 + $0x78] sm:$0xff]
      %v938 = vld [vmem:[%s926 + $0x80] sm:$0xff]
      %v939 = vld [vmem:[%s926 + $0x90] sm:$0xff]
      %v940 = vld [vmem:[%s926 + $0x98] sm:$0xff]
      %v941 = vld [vmem:[%s926 + $0xa8] sm:$0xff]
      %v942 = vld [vmem:[%s926 + $0xb0] sm:$0xff]
      %v943 = vld [vmem:[%s926 + $0xc0] sm:$0xff]
      %v944 = vld [vmem:[%s926 + $0xc8] sm:$0xff]
      %v945 = vld [vmem:[%s926 + $0xd8] sm:$0xff]
      %v946 = vld [vmem:[%s926 + $0xe0] sm:$0xff]
      %v947 = vld [vmem:[%s926 + $0xf0] sm:$0xff]
      %v948 = vld [vmem:[%s926 + $0xf8] sm:$0xff]
      %v949 = vld [vmem:[%s926 + $0x108] sm:$0xff]
      %v950 = vld [vmem:[%s926 + $0x110] sm:$0xff]
      %v951 = vld [vmem:[%s926 + $0x120] sm:$0xff]
      %v952 = vld [vmem:[%s926 + $0x128] sm:$0xff]
      %v953 = vld [vmem:[%s926 + $0x138] sm:$0xff]
      %v954 = vld [vmem:[%s926 + $0x140] sm:$0xff]
      %v955 = vld [vmem:[%s926 + $0x150] sm:$0xff]
      %v956 = vld [vmem:[%s926 + $0x158] sm:$0xff]
      %v957 = vld [vmem:[%s926 + $0x168] sm:$0xff]
      %v958 = vld [vmem:[%s926 + $0x170] sm:$0xff]
      %v959 = vpack.c.bf16 %v928, %v927
      %v960 = vpack.c.bf16 %v930, %v929
      %v961 = vpack.c.bf16 %v932, %v931
      %v962 = vpack.c.bf16 %v934, %v933
      %v963 = vpack.c.bf16 %v936, %v935
      %v964 = vpack.c.bf16 %v938, %v937
      %v965 = vpack.c.bf16 %v940, %v939
      %v966 = vpack.c.bf16 %v942, %v941
      %v967 = vpack.c.bf16 %v944, %v943
      %v968 = vpack.c.bf16 %v946, %v945
      %v969 = vpack.c.bf16 %v948, %v947
      %v970 = vpack.c.bf16 %v950, %v949
      %v971 = vpack.c.bf16 %v952, %v951
      %v972 = vpack.c.bf16 %v954, %v953
      %v973 = vpack.c.bf16 %v956, %v955
      %v974 = vpack.c.bf16 %v958, %v957
      %s975 = scalar_lea.vmem %s1, 96
      %v976 = vld [vmem:[%s975] sm:$0xf]
      %v977 = vld [vmem:[%s975 + $0x4] sm:$0xf]
      %v978 = vld [vmem:[%s975 + $0x8] sm:$0xf]
      %v979 = vld [vmem:[%s975 + $0xc] sm:$0xf]
      %v980 = vld [vmem:[%s975 + $0x10] sm:$0xf]
      %v981 = vld [vmem:[%s975 + $0x14] sm:$0xf]
      %v982 = vld [vmem:[%s975 + $0x18] sm:$0xf]
      %v983 = vld [vmem:[%s975 + $0x1c] sm:$0xf]
      %v992 = vunpack.c.l.b16 %v976
      %v993 = vunpack.c.l.b16 %v977
      %v994 = vunpack.c.l.b16 %v978
      %v995 = vunpack.c.l.b16 %v979
      %v996 = vunpack.c.l.b16 %v980
      %v997 = vunpack.c.l.b16 %v981
      %v998 = vunpack.c.l.b16 %v982
      %v999 = vunpack.c.l.b16 %v983
      %v1000 = vpack.c.b16 %v993, %v992
      %v1001 = vpack.c.b16 %v995, %v994
      %v1002 = vpack.c.b16 %v997, %v996
      %v1003 = vpack.c.b16 %v999, %v998
      %v1009 = vsel %vm256, %v959, 0
      %v1012 = vsel %vm256, %v960, 0
      %v1015 = vsel %vm256, %v961, 0
      %v1018 = vsel %vm256, %v962, 0
      %v1021 = vsel %vm256, %v963, 0
      %v1024 = vsel %vm256, %v964, 0
      %v1027 = vsel %vm256, %v965, 0
      %v1030 = vsel %vm256, %v966, 0
      %v1033 = vsel %vm256, %v967, 0
      %v1036 = vsel %vm256, %v968, 0
      %v1039 = vsel %vm256, %v969, 0
      %v1042 = vsel %vm256, %v970, 0
      %v1045 = vsel %vm256, %v971, 0
      %v1048 = vsel %vm256, %v972, 0
      %v1051 = vsel %vm256, %v973, 0
      %v1054 = vsel %vm256, %v974, 0
      %1056 = vmatpush.bf16.msra.mxu0 0
      %1057 = vmatpush.bf16.msra.mxu0 0
      %1058 = vmatpush.bf16.msra.mxu0 0
      %1059 = vmatpush.bf16.msra.mxu0 0
      %1060 = vmatpush.bf16.msra.mxu0 %v1003
      %1061 = vmatpush.bf16.msra.mxu0 %v1002
      %1062 = vmatpush.bf16.msra.mxu0 %v1001
      %1063 = vmatpush.bf16.msra.mxu0 %v1000
      %1064 = vmatmul.bf16.gmra.mxu0 %v1009
      %v1065 = vpop.f32.mrf.mxu0
      %v1066 = vadd.f32 0.0, %v1065
      %v1067 = vpop.f32.mrf.mxu0
      %v1068 = vadd.f32 0.0, %v1067
      %1069 = vmatmul.bf16.gmra.mxu0 %v1012
      %v1070 = vpop.f32.mrf.mxu0
      %v1071 = vadd.f32 0.0, %v1070
      %v1072 = vpop.f32.mrf.mxu0
      %v1073 = vadd.f32 0.0, %v1072
      %1074 = vmatmul.bf16.gmra.mxu0 %v1015
      %v1075 = vpop.f32.mrf.mxu0
      %v1076 = vadd.f32 0.0, %v1075
      %v1077 = vpop.f32.mrf.mxu0
      %v1078 = vadd.f32 0.0, %v1077
      %1079 = vmatmul.bf16.gmra.mxu0 %v1018
      %v1080 = vpop.f32.mrf.mxu0
      %v1081 = vadd.f32 0.0, %v1080
      %v1082 = vpop.f32.mrf.mxu0
      %v1083 = vadd.f32 0.0, %v1082
      %1084 = vmatmul.bf16.gmra.mxu0 %v1021
      %v1085 = vpop.f32.mrf.mxu0
      %v1086 = vadd.f32 0.0, %v1085
      %v1087 = vpop.f32.mrf.mxu0
      %v1088 = vadd.f32 0.0, %v1087
      %1089 = vmatmul.bf16.gmra.mxu0 %v1024
      %v1090 = vpop.f32.mrf.mxu0
      %v1091 = vadd.f32 0.0, %v1090
      %v1092 = vpop.f32.mrf.mxu0
      %v1093 = vadd.f32 0.0, %v1092
      %1094 = vmatmul.bf16.gmra.mxu0 %v1027
      %v1095 = vpop.f32.mrf.mxu0
      %v1096 = vadd.f32 0.0, %v1095
      %v1097 = vpop.f32.mrf.mxu0
      %v1098 = vadd.f32 0.0, %v1097
      %1099 = vmatmul.bf16.gmra.mxu0 %v1030
      %v1100 = vpop.f32.mrf.mxu0
      %v1101 = vadd.f32 0.0, %v1100
      %v1102 = vpop.f32.mrf.mxu0
      %v1103 = vadd.f32 0.0, %v1102
      %1104 = vmatmul.bf16.gmra.mxu0 %v1033
      %v1105 = vpop.f32.mrf.mxu0
      %v1106 = vadd.f32 0.0, %v1105
      %v1107 = vpop.f32.mrf.mxu0
      %v1108 = vadd.f32 0.0, %v1107
      %1109 = vmatmul.bf16.gmra.mxu0 %v1036
      %v1110 = vpop.f32.mrf.mxu0
      %v1111 = vadd.f32 0.0, %v1110
      %v1112 = vpop.f32.mrf.mxu0
      %v1113 = vadd.f32 0.0, %v1112
      %1114 = vmatmul.bf16.gmra.mxu0 %v1039
      %v1115 = vpop.f32.mrf.mxu0
      %v1116 = vadd.f32 0.0, %v1115
      %v1117 = vpop.f32.mrf.mxu0
      %v1118 = vadd.f32 0.0, %v1117
      %1119 = vmatmul.bf16.gmra.mxu0 %v1042
      %v1120 = vpop.f32.mrf.mxu0
      %v1121 = vadd.f32 0.0, %v1120
      %v1122 = vpop.f32.mrf.mxu0
      %v1123 = vadd.f32 0.0, %v1122
      %1124 = vmatmul.bf16.gmra.mxu0 %v1045
      %v1125 = vpop.f32.mrf.mxu0
      %v1126 = vadd.f32 0.0, %v1125
      %v1127 = vpop.f32.mrf.mxu0
      %v1128 = vadd.f32 0.0, %v1127
      %1129 = vmatmul.bf16.gmra.mxu0 %v1048
      %v1130 = vpop.f32.mrf.mxu0
      %v1131 = vadd.f32 0.0, %v1130
      %v1132 = vpop.f32.mrf.mxu0
      %v1133 = vadd.f32 0.0, %v1132
      %1134 = vmatmul.bf16.gmra.mxu0 %v1051
      %v1135 = vpop.f32.mrf.mxu0
      %v1136 = vadd.f32 0.0, %v1135
      %v1137 = vpop.f32.mrf.mxu0
      %v1138 = vadd.f32 0.0, %v1137
      %1139 = vmatmul.bf16.gmra.mxu0 %v1054
      %v1140 = vpop.f32.mrf.mxu0
      %v1141 = vadd.f32 0.0, %v1140
      %v1142 = vpop.f32.mrf.mxu0
      %v1143 = vadd.f32 0.0, %v1142
      %1144 = vdwg.mxu0
      %v1145 = vadd.f32 %v894, %v1066
      %v1146 = vadd.f32 %v895, %v1068
      %v1147 = vadd.f32 %v896, %v1071
      %v1148 = vadd.f32 %v897, %v1073
      %v1149 = vadd.f32 %v898, %v1076
      %v1150 = vadd.f32 %v899, %v1078
      %v1151 = vadd.f32 %v900, %v1081
      %v1152 = vadd.f32 %v901, %v1083
      %v1153 = vadd.f32 %v902, %v1086
      %v1154 = vadd.f32 %v903, %v1088
      %v1155 = vadd.f32 %v904, %v1091
      %v1156 = vadd.f32 %v905, %v1093
      %v1157 = vadd.f32 %v906, %v1096
      %v1158 = vadd.f32 %v907, %v1098
      %v1159 = vadd.f32 %v908, %v1101
      %v1160 = vadd.f32 %v909, %v1103
      %v1161 = vadd.f32 %v910, %v1106
      %v1162 = vadd.f32 %v911, %v1108
      %v1163 = vadd.f32 %v912, %v1111
      %v1164 = vadd.f32 %v913, %v1113
      %v1165 = vadd.f32 %v914, %v1116
      %v1166 = vadd.f32 %v915, %v1118
      %v1167 = vadd.f32 %v916, %v1121
      %v1168 = vadd.f32 %v917, %v1123
      %v1169 = vadd.f32 %v918, %v1126
      %v1170 = vadd.f32 %v919, %v1128
      %v1171 = vadd.f32 %v920, %v1131
      %v1172 = vadd.f32 %v921, %v1133
      %v1173 = vadd.f32 %v922, %v1136
      %v1174 = vadd.f32 %v923, %v1138
      %v1175 = vadd.f32 %v924, %v1141
      %v1176 = vadd.f32 %v925, %v1143
      %v1177 = vld [vmem:[%s926 + $0x1] sm:$0xff]
      %v1178 = vld [vmem:[%s926 + $0x9] sm:$0xff]
      %v1179 = vld [vmem:[%s926 + $0x19] sm:$0xff]
      %v1180 = vld [vmem:[%s926 + $0x21] sm:$0xff]
      %v1181 = vld [vmem:[%s926 + $0x31] sm:$0xff]
      %v1182 = vld [vmem:[%s926 + $0x39] sm:$0xff]
      %v1183 = vld [vmem:[%s926 + $0x49] sm:$0xff]
      %v1184 = vld [vmem:[%s926 + $0x51] sm:$0xff]
      %v1185 = vld [vmem:[%s926 + $0x61] sm:$0xff]
      %v1186 = vld [vmem:[%s926 + $0x69] sm:$0xff]
      %v1187 = vld [vmem:[%s926 + $0x79] sm:$0xff]
      %v1188 = vld [vmem:[%s926 + $0x81] sm:$0xff]
      %v1189 = vld [vmem:[%s926 + $0x91] sm:$0xff]
      %v1190 = vld [vmem:[%s926 + $0x99] sm:$0xff]
      %v1191 = vld [vmem:[%s926 + $0xa9] sm:$0xff]
      %v1192 = vld [vmem:[%s926 + $0xb1] sm:$0xff]
      %v1193 = vld [vmem:[%s926 + $0xc1] sm:$0xff]
      %v1194 = vld [vmem:[%s926 + $0xc9] sm:$0xff]
      %v1195 = vld [vmem:[%s926 + $0xd9] sm:$0xff]
      %v1196 = vld [vmem:[%s926 + $0xe1] sm:$0xff]
      %v1197 = vld [vmem:[%s926 + $0xf1] sm:$0xff]
      %v1198 = vld [vmem:[%s926 + $0xf9] sm:$0xff]
      %v1199 = vld [vmem:[%s926 + $0x109] sm:$0xff]
      %v1200 = vld [vmem:[%s926 + $0x111] sm:$0xff]
      %v1201 = vld [vmem:[%s926 + $0x121] sm:$0xff]
      %v1202 = vld [vmem:[%s926 + $0x129] sm:$0xff]
      %v1203 = vld [vmem:[%s926 + $0x139] sm:$0xff]
      %v1204 = vld [vmem:[%s926 + $0x141] sm:$0xff]
      %v1205 = vld [vmem:[%s926 + $0x151] sm:$0xff]
      %v1206 = vld [vmem:[%s926 + $0x159] sm:$0xff]
      %v1207 = vld [vmem:[%s926 + $0x169] sm:$0xff]
      %v1208 = vld [vmem:[%s926 + $0x171] sm:$0xff]
      %v1209 = vpack.c.bf16 %v1178, %v1177
      %v1210 = vpack.c.bf16 %v1180, %v1179
      %v1211 = vpack.c.bf16 %v1182, %v1181
      %v1212 = vpack.c.bf16 %v1184, %v1183
      %v1213 = vpack.c.bf16 %v1186, %v1185
      %v1214 = vpack.c.bf16 %v1188, %v1187
      %v1215 = vpack.c.bf16 %v1190, %v1189
      %v1216 = vpack.c.bf16 %v1192, %v1191
      %v1217 = vpack.c.bf16 %v1194, %v1193
      %v1218 = vpack.c.bf16 %v1196, %v1195
      %v1219 = vpack.c.bf16 %v1198, %v1197
      %v1220 = vpack.c.bf16 %v1200, %v1199
      %v1221 = vpack.c.bf16 %v1202, %v1201
      %v1222 = vpack.c.bf16 %v1204, %v1203
      %v1223 = vpack.c.bf16 %v1206, %v1205
      %v1224 = vpack.c.bf16 %v1208, %v1207
      %s1225 = scalar_lea.vmem %s1, 128
      %v1226 = vld [vmem:[%s1225] sm:$0xf]
      %v1227 = vld [vmem:[%s1225 + $0x4] sm:$0xf]
      %v1228 = vld [vmem:[%s1225 + $0x8] sm:$0xf]
      %v1229 = vld [vmem:[%s1225 + $0xc] sm:$0xf]
      %v1230 = vld [vmem:[%s1225 + $0x10] sm:$0xf]
      %v1231 = vld [vmem:[%s1225 + $0x14] sm:$0xf]
      %v1232 = vld [vmem:[%s1225 + $0x18] sm:$0xf]
      %v1233 = vld [vmem:[%s1225 + $0x1c] sm:$0xf]
      %v1242 = vunpack.c.l.b16 %v1226
      %v1243 = vunpack.c.l.b16 %v1227
      %v1244 = vunpack.c.l.b16 %v1228
      %v1245 = vunpack.c.l.b16 %v1229
      %v1246 = vunpack.c.l.b16 %v1230
      %v1247 = vunpack.c.l.b16 %v1231
      %v1248 = vunpack.c.l.b16 %v1232
      %v1249 = vunpack.c.l.b16 %v1233
      %v1250 = vpack.c.b16 %v1243, %v1242
      %v1251 = vpack.c.b16 %v1245, %v1244
      %v1252 = vpack.c.b16 %v1247, %v1246
      %v1253 = vpack.c.b16 %v1249, %v1248
      %v1259 = vsel %vm256, %v1209, 0
      %v1262 = vsel %vm256, %v1210, 0
      %v1265 = vsel %vm256, %v1211, 0
      %v1268 = vsel %vm256, %v1212, 0
      %v1271 = vsel %vm256, %v1213, 0
      %v1274 = vsel %vm256, %v1214, 0
      %v1277 = vsel %vm256, %v1215, 0
      %v1280 = vsel %vm256, %v1216, 0
      %v1283 = vsel %vm256, %v1217, 0
      %v1286 = vsel %vm256, %v1218, 0
      %v1289 = vsel %vm256, %v1219, 0
      %v1292 = vsel %vm256, %v1220, 0
      %v1295 = vsel %vm256, %v1221, 0
      %v1298 = vsel %vm256, %v1222, 0
      %v1301 = vsel %vm256, %v1223, 0
      %v1304 = vsel %vm256, %v1224, 0
      %1306 = vmatpush.bf16.msra.mxu0 0
      %1307 = vmatpush.bf16.msra.mxu0 0
      %1308 = vmatpush.bf16.msra.mxu0 0
      %1309 = vmatpush.bf16.msra.mxu0 0
      %1310 = vmatpush.bf16.msra.mxu0 %v1253
      %1311 = vmatpush.bf16.msra.mxu0 %v1252
      %1312 = vmatpush.bf16.msra.mxu0 %v1251
      %1313 = vmatpush.bf16.msra.mxu0 %v1250
      %1314 = vmatmul.bf16.gmra.mxu0 %v1259
      %v1315 = vpop.f32.mrf.mxu0
      %v1316 = vadd.f32 0.0, %v1315
      %v1317 = vpop.f32.mrf.mxu0
      %v1318 = vadd.f32 0.0, %v1317
      %1319 = vmatmul.bf16.gmra.mxu0 %v1262
      %v1320 = vpop.f32.mrf.mxu0
      %v1321 = vadd.f32 0.0, %v1320
      %v1322 = vpop.f32.mrf.mxu0
      %v1323 = vadd.f32 0.0, %v1322
      %1324 = vmatmul.bf16.gmra.mxu0 %v1265
      %v1325 = vpop.f32.mrf.mxu0
      %v1326 = vadd.f32 0.0, %v1325
      %v1327 = vpop.f32.mrf.mxu0
      %v1328 = vadd.f32 0.0, %v1327
      %1329 = vmatmul.bf16.gmra.mxu0 %v1268
      %v1330 = vpop.f32.mrf.mxu0
      %v1331 = vadd.f32 0.0, %v1330
      %v1332 = vpop.f32.mrf.mxu0
      %v1333 = vadd.f32 0.0, %v1332
      %1334 = vmatmul.bf16.gmra.mxu0 %v1271
      %v1335 = vpop.f32.mrf.mxu0
      %v1336 = vadd.f32 0.0, %v1335
      %v1337 = vpop.f32.mrf.mxu0
      %v1338 = vadd.f32 0.0, %v1337
      %1339 = vmatmul.bf16.gmra.mxu0 %v1274
      %v1340 = vpop.f32.mrf.mxu0
      %v1341 = vadd.f32 0.0, %v1340
      %v1342 = vpop.f32.mrf.mxu0
      %v1343 = vadd.f32 0.0, %v1342
      %1344 = vmatmul.bf16.gmra.mxu0 %v1277
      %v1345 = vpop.f32.mrf.mxu0
      %v1346 = vadd.f32 0.0, %v1345
      %v1347 = vpop.f32.mrf.mxu0
      %v1348 = vadd.f32 0.0, %v1347
      %1349 = vmatmul.bf16.gmra.mxu0 %v1280
      %v1350 = vpop.f32.mrf.mxu0
      %v1351 = vadd.f32 0.0, %v1350
      %v1352 = vpop.f32.mrf.mxu0
      %v1353 = vadd.f32 0.0, %v1352
      %1354 = vmatmul.bf16.gmra.mxu0 %v1283
      %v1355 = vpop.f32.mrf.mxu0
      %v1356 = vadd.f32 0.0, %v1355
      %v1357 = vpop.f32.mrf.mxu0
      %v1358 = vadd.f32 0.0, %v1357
      %1359 = vmatmul.bf16.gmra.mxu0 %v1286
      %v1360 = vpop.f32.mrf.mxu0
      %v1361 = vadd.f32 0.0, %v1360
      %v1362 = vpop.f32.mrf.mxu0
      %v1363 = vadd.f32 0.0, %v1362
      %1364 = vmatmul.bf16.gmra.mxu0 %v1289
      %v1365 = vpop.f32.mrf.mxu0
      %v1366 = vadd.f32 0.0, %v1365
      %v1367 = vpop.f32.mrf.mxu0
      %v1368 = vadd.f32 0.0, %v1367
      %1369 = vmatmul.bf16.gmra.mxu0 %v1292
      %v1370 = vpop.f32.mrf.mxu0
      %v1371 = vadd.f32 0.0, %v1370
      %v1372 = vpop.f32.mrf.mxu0
      %v1373 = vadd.f32 0.0, %v1372
      %1374 = vmatmul.bf16.gmra.mxu0 %v1295
      %v1375 = vpop.f32.mrf.mxu0
      %v1376 = vadd.f32 0.0, %v1375
      %v1377 = vpop.f32.mrf.mxu0
      %v1378 = vadd.f32 0.0, %v1377
      %1379 = vmatmul.bf16.gmra.mxu0 %v1298
      %v1380 = vpop.f32.mrf.mxu0
      %v1381 = vadd.f32 0.0, %v1380
      %v1382 = vpop.f32.mrf.mxu0
      %v1383 = vadd.f32 0.0, %v1382
      %1384 = vmatmul.bf16.gmra.mxu0 %v1301
      %v1385 = vpop.f32.mrf.mxu0
      %v1386 = vadd.f32 0.0, %v1385
      %v1387 = vpop.f32.mrf.mxu0
      %v1388 = vadd.f32 0.0, %v1387
      %1389 = vmatmul.bf16.gmra.mxu0 %v1304
      %v1390 = vpop.f32.mrf.mxu0
      %v1391 = vadd.f32 0.0, %v1390
      %v1392 = vpop.f32.mrf.mxu0
      %v1393 = vadd.f32 0.0, %v1392
      %1394 = vdwg.mxu0
      %v1395 = vadd.f32 %v1145, %v1316
      %v1396 = vadd.f32 %v1146, %v1318
      %v1397 = vadd.f32 %v1147, %v1321
      %v1398 = vadd.f32 %v1148, %v1323
      %v1399 = vadd.f32 %v1149, %v1326
      %v1400 = vadd.f32 %v1150, %v1328
      %v1401 = vadd.f32 %v1151, %v1331
      %v1402 = vadd.f32 %v1152, %v1333
      %v1403 = vadd.f32 %v1153, %v1336
      %v1404 = vadd.f32 %v1154, %v1338
      %v1405 = vadd.f32 %v1155, %v1341
      %v1406 = vadd.f32 %v1156, %v1343
      %v1407 = vadd.f32 %v1157, %v1346
      %v1408 = vadd.f32 %v1158, %v1348
      %v1409 = vadd.f32 %v1159, %v1351
      %v1410 = vadd.f32 %v1160, %v1353
      %v1411 = vadd.f32 %v1161, %v1356
      %v1412 = vadd.f32 %v1162, %v1358
      %v1413 = vadd.f32 %v1163, %v1361
      %v1414 = vadd.f32 %v1164, %v1363
      %v1415 = vadd.f32 %v1165, %v1366
      %v1416 = vadd.f32 %v1166, %v1368
      %v1417 = vadd.f32 %v1167, %v1371
      %v1418 = vadd.f32 %v1168, %v1373
      %v1419 = vadd.f32 %v1169, %v1376
      %v1420 = vadd.f32 %v1170, %v1378
      %v1421 = vadd.f32 %v1171, %v1381
      %v1422 = vadd.f32 %v1172, %v1383
      %v1423 = vadd.f32 %v1173, %v1386
      %v1424 = vadd.f32 %v1174, %v1388
      %v1425 = vadd.f32 %v1175, %v1391
      %v1426 = vadd.f32 %v1176, %v1393
      %v1427 = vld [vmem:[%s926 + $0x2] sm:$0xff]
      %v1428 = vld [vmem:[%s926 + $0xa] sm:$0xff]
      %v1429 = vld [vmem:[%s926 + $0x1a] sm:$0xff]
      %v1430 = vld [vmem:[%s926 + $0x22] sm:$0xff]
      %v1431 = vld [vmem:[%s926 + $0x32] sm:$0xff]
      %v1432 = vld [vmem:[%s926 + $0x3a] sm:$0xff]
      %v1433 = vld [vmem:[%s926 + $0x4a] sm:$0xff]
      %v1434 = vld [vmem:[%s926 + $0x52] sm:$0xff]
      %v1435 = vld [vmem:[%s926 + $0x62] sm:$0xff]
      %v1436 = vld [vmem:[%s926 + $0x6a] sm:$0xff]
      %v1437 = vld [vmem:[%s926 + $0x7a] sm:$0xff]
      %v1438 = vld [vmem:[%s926 + $0x82] sm:$0xff]
      %v1439 = vld [vmem:[%s926 + $0x92] sm:$0xff]
      %v1440 = vld [vmem:[%s926 + $0x9a] sm:$0xff]
      %v1441 = vld [vmem:[%s926 + $0xaa] sm:$0xff]
      %v1442 = vld [vmem:[%s926 + $0xb2] sm:$0xff]
      %v1443 = vld [vmem:[%s926 + $0xc2] sm:$0xff]
      %v1444 = vld [vmem:[%s926 + $0xca] sm:$0xff]
      %v1445 = vld [vmem:[%s926 + $0xda] sm:$0xff]
      %v1446 = vld [vmem:[%s926 + $0xe2] sm:$0xff]
      %v1447 = vld [vmem:[%s926 + $0xf2] sm:$0xff]
      %v1448 = vld [vmem:[%s926 + $0xfa] sm:$0xff]
      %v1449 = vld [vmem:[%s926 + $0x10a] sm:$0xff]
      %v1450 = vld [vmem:[%s926 + $0x112] sm:$0xff]
      %v1451 = vld [vmem:[%s926 + $0x122] sm:$0xff]
      %v1452 = vld [vmem:[%s926 + $0x12a] sm:$0xff]
      %v1453 = vld [vmem:[%s926 + $0x13a] sm:$0xff]
      %v1454 = vld [vmem:[%s926 + $0x142] sm:$0xff]
      %v1455 = vld [vmem:[%s926 + $0x152] sm:$0xff]
      %v1456 = vld [vmem:[%s926 + $0x15a] sm:$0xff]
      %v1457 = vld [vmem:[%s926 + $0x16a] sm:$0xff]
      %v1458 = vld [vmem:[%s926 + $0x172] sm:$0xff]
      %v1459 = vpack.c.bf16 %v1428, %v1427
      %v1460 = vpack.c.bf16 %v1430, %v1429
      %v1461 = vpack.c.bf16 %v1432, %v1431
      %v1462 = vpack.c.bf16 %v1434, %v1433
      %v1463 = vpack.c.bf16 %v1436, %v1435
      %v1464 = vpack.c.bf16 %v1438, %v1437
      %v1465 = vpack.c.bf16 %v1440, %v1439
      %v1466 = vpack.c.bf16 %v1442, %v1441
      %v1467 = vpack.c.bf16 %v1444, %v1443
      %v1468 = vpack.c.bf16 %v1446, %v1445
      %v1469 = vpack.c.bf16 %v1448, %v1447
      %v1470 = vpack.c.bf16 %v1450, %v1449
      %v1471 = vpack.c.bf16 %v1452, %v1451
      %v1472 = vpack.c.bf16 %v1454, %v1453
      %v1473 = vpack.c.bf16 %v1456, %v1455
      %v1474 = vpack.c.bf16 %v1458, %v1457
      %s1475 = scalar_lea.vmem %s1, 160
      %v1476 = vld [vmem:[%s1475] sm:$0xf]
      %v1477 = vld [vmem:[%s1475 + $0x4] sm:$0xf]
      %v1478 = vld [vmem:[%s1475 + $0x8] sm:$0xf]
      %v1479 = vld [vmem:[%s1475 + $0xc] sm:$0xf]
      %v1480 = vld [vmem:[%s1475 + $0x10] sm:$0xf]
      %v1481 = vld [vmem:[%s1475 + $0x14] sm:$0xf]
      %v1482 = vld [vmem:[%s1475 + $0x18] sm:$0xf]
      %v1483 = vld [vmem:[%s1475 + $0x1c] sm:$0xf]
      %v1492 = vunpack.c.l.b16 %v1476
      %v1493 = vunpack.c.l.b16 %v1477
      %v1494 = vunpack.c.l.b16 %v1478
      %v1495 = vunpack.c.l.b16 %v1479
      %v1496 = vunpack.c.l.b16 %v1480
      %v1497 = vunpack.c.l.b16 %v1481
      %v1498 = vunpack.c.l.b16 %v1482
      %v1499 = vunpack.c.l.b16 %v1483
      %v1500 = vpack.c.b16 %v1493, %v1492
      %v1501 = vpack.c.b16 %v1495, %v1494
      %v1502 = vpack.c.b16 %v1497, %v1496
      %v1503 = vpack.c.b16 %v1499, %v1498
      %v1509 = vsel %vm256, %v1459, 0
      %v1512 = vsel %vm256, %v1460, 0
      %v1515 = vsel %vm256, %v1461, 0
      %v1518 = vsel %vm256, %v1462, 0
      %v1521 = vsel %vm256, %v1463, 0
      %v1524 = vsel %vm256, %v1464, 0
      %v1527 = vsel %vm256, %v1465, 0
      %v1530 = vsel %vm256, %v1466, 0
      %v1533 = vsel %vm256, %v1467, 0
      %v1536 = vsel %vm256, %v1468, 0
      %v1539 = vsel %vm256, %v1469, 0
      %v1542 = vsel %vm256, %v1470, 0
      %v1545 = vsel %vm256, %v1471, 0
      %v1548 = vsel %vm256, %v1472, 0
      %v1551 = vsel %vm256, %v1473, 0
      %v1554 = vsel %vm256, %v1474, 0
      %1556 = vmatpush.bf16.msra.mxu0 0
      %1557 = vmatpush.bf16.msra.mxu0 0
      %1558 = vmatpush.bf16.msra.mxu0 0
      %1559 = vmatpush.bf16.msra.mxu0 0
      %1560 = vmatpush.bf16.msra.mxu0 %v1503
      %1561 = vmatpush.bf16.msra.mxu0 %v1502
      %1562 = vmatpush.bf16.msra.mxu0 %v1501
      %1563 = vmatpush.bf16.msra.mxu0 %v1500
      %1564 = vmatmul.bf16.gmra.mxu0 %v1509
      %v1565 = vpop.f32.mrf.mxu0
      %v1566 = vadd.f32 0.0, %v1565
      %v1567 = vpop.f32.mrf.mxu0
      %v1568 = vadd.f32 0.0, %v1567
      %1569 = vmatmul.bf16.gmra.mxu0 %v1512
      %v1570 = vpop.f32.mrf.mxu0
      %v1571 = vadd.f32 0.0, %v1570
      %v1572 = vpop.f32.mrf.mxu0
      %v1573 = vadd.f32 0.0, %v1572
      %1574 = vmatmul.bf16.gmra.mxu0 %v1515
      %v1575 = vpop.f32.mrf.mxu0
      %v1576 = vadd.f32 0.0, %v1575
      %v1577 = vpop.f32.mrf.mxu0
      %v1578 = vadd.f32 0.0, %v1577
      %1579 = vmatmul.bf16.gmra.mxu0 %v1518
      %v1580 = vpop.f32.mrf.mxu0
      %v1581 = vadd.f32 0.0, %v1580
      %v1582 = vpop.f32.mrf.mxu0
      %v1583 = vadd.f32 0.0, %v1582
      %1584 = vmatmul.bf16.gmra.mxu0 %v1521
      %v1585 = vpop.f32.mrf.mxu0
      %v1586 = vadd.f32 0.0, %v1585
      %v1587 = vpop.f32.mrf.mxu0
      %v1588 = vadd.f32 0.0, %v1587
      %1589 = vmatmul.bf16.gmra.mxu0 %v1524
      %v1590 = vpop.f32.mrf.mxu0
      %v1591 = vadd.f32 0.0, %v1590
      %v1592 = vpop.f32.mrf.mxu0
      %v1593 = vadd.f32 0.0, %v1592
      %1594 = vmatmul.bf16.gmra.mxu0 %v1527
      %v1595 = vpop.f32.mrf.mxu0
      %v1596 = vadd.f32 0.0, %v1595
      %v1597 = vpop.f32.mrf.mxu0
      %v1598 = vadd.f32 0.0, %v1597
      %1599 = vmatmul.bf16.gmra.mxu0 %v1530
      %v1600 = vpop.f32.mrf.mxu0
      %v1601 = vadd.f32 0.0, %v1600
      %v1602 = vpop.f32.mrf.mxu0
      %v1603 = vadd.f32 0.0, %v1602
      %1604 = vmatmul.bf16.gmra.mxu0 %v1533
      %v1605 = vpop.f32.mrf.mxu0
      %v1606 = vadd.f32 0.0, %v1605
      %v1607 = vpop.f32.mrf.mxu0
      %v1608 = vadd.f32 0.0, %v1607
      %1609 = vmatmul.bf16.gmra.mxu0 %v1536
      %v1610 = vpop.f32.mrf.mxu0
      %v1611 = vadd.f32 0.0, %v1610
      %v1612 = vpop.f32.mrf.mxu0
      %v1613 = vadd.f32 0.0, %v1612
      %1614 = vmatmul.bf16.gmra.mxu0 %v1539
      %v1615 = vpop.f32.mrf.mxu0
      %v1616 = vadd.f32 0.0, %v1615
      %v1617 = vpop.f32.mrf.mxu0
      %v1618 = vadd.f32 0.0, %v1617
      %1619 = vmatmul.bf16.gmra.mxu0 %v1542
      %v1620 = vpop.f32.mrf.mxu0
      %v1621 = vadd.f32 0.0, %v1620
      %v1622 = vpop.f32.mrf.mxu0
      %v1623 = vadd.f32 0.0, %v1622
      %1624 = vmatmul.bf16.gmra.mxu0 %v1545
      %v1625 = vpop.f32.mrf.mxu0
      %v1626 = vadd.f32 0.0, %v1625
      %v1627 = vpop.f32.mrf.mxu0
      %v1628 = vadd.f32 0.0, %v1627
      %1629 = vmatmul.bf16.gmra.mxu0 %v1548
      %v1630 = vpop.f32.mrf.mxu0
      %v1631 = vadd.f32 0.0, %v1630
      %v1632 = vpop.f32.mrf.mxu0
      %v1633 = vadd.f32 0.0, %v1632
      %1634 = vmatmul.bf16.gmra.mxu0 %v1551
      %v1635 = vpop.f32.mrf.mxu0
      %v1636 = vadd.f32 0.0, %v1635
      %v1637 = vpop.f32.mrf.mxu0
      %v1638 = vadd.f32 0.0, %v1637
      %1639 = vmatmul.bf16.gmra.mxu0 %v1554
      %v1640 = vpop.f32.mrf.mxu0
      %v1641 = vadd.f32 0.0, %v1640
      %v1642 = vpop.f32.mrf.mxu0
      %v1643 = vadd.f32 0.0, %v1642
      %1644 = vdwg.mxu0
      %v1645 = vadd.f32 %v1395, %v1566
      %v1646 = vadd.f32 %v1396, %v1568
      %v1647 = vadd.f32 %v1397, %v1571
      %v1648 = vadd.f32 %v1398, %v1573
      %v1649 = vadd.f32 %v1399, %v1576
      %v1650 = vadd.f32 %v1400, %v1578
      %v1651 = vadd.f32 %v1401, %v1581
      %v1652 = vadd.f32 %v1402, %v1583
      %v1653 = vadd.f32 %v1403, %v1586
      %v1654 = vadd.f32 %v1404, %v1588
      %v1655 = vadd.f32 %v1405, %v1591
      %v1656 = vadd.f32 %v1406, %v1593
      %v1657 = vadd.f32 %v1407, %v1596
      %v1658 = vadd.f32 %v1408, %v1598
      %v1659 = vadd.f32 %v1409, %v1601
      %v1660 = vadd.f32 %v1410, %v1603
      %v1661 = vadd.f32 %v1411, %v1606
      %v1662 = vadd.f32 %v1412, %v1608
      %v1663 = vadd.f32 %v1413, %v1611
      %v1664 = vadd.f32 %v1414, %v1613
      %v1665 = vadd.f32 %v1415, %v1616
      %v1666 = vadd.f32 %v1416, %v1618
      %v1667 = vadd.f32 %v1417, %v1621
      %v1668 = vadd.f32 %v1418, %v1623
      %v1669 = vadd.f32 %v1419, %v1626
      %v1670 = vadd.f32 %v1420, %v1628
      %v1671 = vadd.f32 %v1421, %v1631
      %v1672 = vadd.f32 %v1422, %v1633
      %v1673 = vadd.f32 %v1423, %v1636
      %v1674 = vadd.f32 %v1424, %v1638
      %v1675 = vadd.f32 %v1425, %v1641
      %v1676 = vadd.f32 %v1426, %v1643
      %s1677 = scalar_lea.vmem %s165, 48
      %v1678 = vld [vmem:[%s1677] sm:$0xff]
      %v1679 = vld [vmem:[%s1677 + $0x8] sm:$0xff]
      %v1680 = vld [vmem:[%s1677 + $0x18] sm:$0xff]
      %v1681 = vld [vmem:[%s1677 + $0x20] sm:$0xff]
      %v1682 = vld [vmem:[%s1677 + $0x30] sm:$0xff]
      %v1683 = vld [vmem:[%s1677 + $0x38] sm:$0xff]
      %v1684 = vld [vmem:[%s1677 + $0x48] sm:$0xff]
      %v1685 = vld [vmem:[%s1677 + $0x50] sm:$0xff]
      %v1686 = vld [vmem:[%s1677 + $0x60] sm:$0xff]
      %v1687 = vld [vmem:[%s1677 + $0x68] sm:$0xff]
      %v1688 = vld [vmem:[%s1677 + $0x78] sm:$0xff]
      %v1689 = vld [vmem:[%s1677 + $0x80] sm:$0xff]
      %v1690 = vld [vmem:[%s1677 + $0x90] sm:$0xff]
      %v1691 = vld [vmem:[%s1677 + $0x98] sm:$0xff]
      %v1692 = vld [vmem:[%s1677 + $0xa8] sm:$0xff]
      %v1693 = vld [vmem:[%s1677 + $0xb0] sm:$0xff]
      %v1694 = vld [vmem:[%s1677 + $0xc0] sm:$0xff]
      %v1695 = vld [vmem:[%s1677 + $0xc8] sm:$0xff]
      %v1696 = vld [vmem:[%s1677 + $0xd8] sm:$0xff]
      %v1697 = vld [vmem:[%s1677 + $0xe0] sm:$0xff]
      %v1698 = vld [vmem:[%s1677 + $0xf0] sm:$0xff]
      %v1699 = vld [vmem:[%s1677 + $0xf8] sm:$0xff]
      %v1700 = vld [vmem:[%s1677 + $0x108] sm:$0xff]
      %v1701 = vld [vmem:[%s1677 + $0x110] sm:$0xff]
      %v1702 = vld [vmem:[%s1677 + $0x120] sm:$0xff]
      %v1703 = vld [vmem:[%s1677 + $0x128] sm:$0xff]
      %v1704 = vld [vmem:[%s1677 + $0x138] sm:$0xff]
      %v1705 = vld [vmem:[%s1677 + $0x140] sm:$0xff]
      %v1706 = vld [vmem:[%s1677 + $0x150] sm:$0xff]
      %v1707 = vld [vmem:[%s1677 + $0x158] sm:$0xff]
      %v1708 = vld [vmem:[%s1677 + $0x168] sm:$0xff]
      %v1709 = vld [vmem:[%s1677 + $0x170] sm:$0xff]
      %v1710 = vpack.c.bf16 %v1679, %v1678
      %v1711 = vpack.c.bf16 %v1681, %v1680
      %v1712 = vpack.c.bf16 %v1683, %v1682
      %v1713 = vpack.c.bf16 %v1685, %v1684
      %v1714 = vpack.c.bf16 %v1687, %v1686
      %v1715 = vpack.c.bf16 %v1689, %v1688
      %v1716 = vpack.c.bf16 %v1691, %v1690
      %v1717 = vpack.c.bf16 %v1693, %v1692
      %v1718 = vpack.c.bf16 %v1695, %v1694
      %v1719 = vpack.c.bf16 %v1697, %v1696
      %v1720 = vpack.c.bf16 %v1699, %v1698
      %v1721 = vpack.c.bf16 %v1701, %v1700
      %v1722 = vpack.c.bf16 %v1703, %v1702
      %v1723 = vpack.c.bf16 %v1705, %v1704
      %v1724 = vpack.c.bf16 %v1707, %v1706
      %v1725 = vpack.c.bf16 %v1709, %v1708
      %s1726 = scalar_lea.vmem %s1, 192
      %v1727 = vld [vmem:[%s1726] sm:$0xf]
      %v1728 = vld [vmem:[%s1726 + $0x4] sm:$0xf]
      %v1729 = vld [vmem:[%s1726 + $0x8] sm:$0xf]
      %v1730 = vld [vmem:[%s1726 + $0xc] sm:$0xf]
      %v1731 = vld [vmem:[%s1726 + $0x10] sm:$0xf]
      %v1732 = vld [vmem:[%s1726 + $0x14] sm:$0xf]
      %v1733 = vld [vmem:[%s1726 + $0x18] sm:$0xf]
      %v1734 = vld [vmem:[%s1726 + $0x1c] sm:$0xf]
      %v1743 = vunpack.c.l.b16 %v1727
      %v1744 = vunpack.c.l.b16 %v1728
      %v1745 = vunpack.c.l.b16 %v1729
      %v1746 = vunpack.c.l.b16 %v1730
      %v1747 = vunpack.c.l.b16 %v1731
      %v1748 = vunpack.c.l.b16 %v1732
      %v1749 = vunpack.c.l.b16 %v1733
      %v1750 = vunpack.c.l.b16 %v1734
      %v1751 = vpack.c.b16 %v1744, %v1743
      %v1752 = vpack.c.b16 %v1746, %v1745
      %v1753 = vpack.c.b16 %v1748, %v1747
      %v1754 = vpack.c.b16 %v1750, %v1749
      %v1760 = vsel %vm256, %v1710, 0
      %v1763 = vsel %vm256, %v1711, 0
      %v1766 = vsel %vm256, %v1712, 0
      %v1769 = vsel %vm256, %v1713, 0
      %v1772 = vsel %vm256, %v1714, 0
      %v1775 = vsel %vm256, %v1715, 0
      %v1778 = vsel %vm256, %v1716, 0
      %v1781 = vsel %vm256, %v1717, 0
      %v1784 = vsel %vm256, %v1718, 0
      %v1787 = vsel %vm256, %v1719, 0
      %v1790 = vsel %vm256, %v1720, 0
      %v1793 = vsel %vm256, %v1721, 0
      %v1796 = vsel %vm256, %v1722, 0
      %v1799 = vsel %vm256, %v1723, 0
      %v1802 = vsel %vm256, %v1724, 0
      %v1805 = vsel %vm256, %v1725, 0
      %1807 = vmatpush.bf16.msra.mxu0 0
      %1808 = vmatpush.bf16.msra.mxu0 0
      %1809 = vmatpush.bf16.msra.mxu0 0
      %1810 = vmatpush.bf16.msra.mxu0 0
      %1811 = vmatpush.bf16.msra.mxu0 %v1754
      %1812 = vmatpush.bf16.msra.mxu0 %v1753
      %1813 = vmatpush.bf16.msra.mxu0 %v1752
      %1814 = vmatpush.bf16.msra.mxu0 %v1751
      %1815 = vmatmul.bf16.gmra.mxu0 %v1760
      %v1816 = vpop.f32.mrf.mxu0
      %v1817 = vadd.f32 0.0, %v1816
      %v1818 = vpop.f32.mrf.mxu0
      %v1819 = vadd.f32 0.0, %v1818
      %1820 = vmatmul.bf16.gmra.mxu0 %v1763
      %v1821 = vpop.f32.mrf.mxu0
      %v1822 = vadd.f32 0.0, %v1821
      %v1823 = vpop.f32.mrf.mxu0
      %v1824 = vadd.f32 0.0, %v1823
      %1825 = vmatmul.bf16.gmra.mxu0 %v1766
      %v1826 = vpop.f32.mrf.mxu0
      %v1827 = vadd.f32 0.0, %v1826
      %v1828 = vpop.f32.mrf.mxu0
      %v1829 = vadd.f32 0.0, %v1828
      %1830 = vmatmul.bf16.gmra.mxu0 %v1769
      %v1831 = vpop.f32.mrf.mxu0
      %v1832 = vadd.f32 0.0, %v1831
      %v1833 = vpop.f32.mrf.mxu0
      %v1834 = vadd.f32 0.0, %v1833
      %1835 = vmatmul.bf16.gmra.mxu0 %v1772
      %v1836 = vpop.f32.mrf.mxu0
      %v1837 = vadd.f32 0.0, %v1836
      %v1838 = vpop.f32.mrf.mxu0
      %v1839 = vadd.f32 0.0, %v1838
      %1840 = vmatmul.bf16.gmra.mxu0 %v1775
      %v1841 = vpop.f32.mrf.mxu0
      %v1842 = vadd.f32 0.0, %v1841
      %v1843 = vpop.f32.mrf.mxu0
      %v1844 = vadd.f32 0.0, %v1843
      %1845 = vmatmul.bf16.gmra.mxu0 %v1778
      %v1846 = vpop.f32.mrf.mxu0
      %v1847 = vadd.f32 0.0, %v1846
      %v1848 = vpop.f32.mrf.mxu0
      %v1849 = vadd.f32 0.0, %v1848
      %1850 = vmatmul.bf16.gmra.mxu0 %v1781
      %v1851 = vpop.f32.mrf.mxu0
      %v1852 = vadd.f32 0.0, %v1851
      %v1853 = vpop.f32.mrf.mxu0
      %v1854 = vadd.f32 0.0, %v1853
      %1855 = vmatmul.bf16.gmra.mxu0 %v1784
      %v1856 = vpop.f32.mrf.mxu0
      %v1857 = vadd.f32 0.0, %v1856
      %v1858 = vpop.f32.mrf.mxu0
      %v1859 = vadd.f32 0.0, %v1858
      %1860 = vmatmul.bf16.gmra.mxu0 %v1787
      %v1861 = vpop.f32.mrf.mxu0
      %v1862 = vadd.f32 0.0, %v1861
      %v1863 = vpop.f32.mrf.mxu0
      %v1864 = vadd.f32 0.0, %v1863
      %1865 = vmatmul.bf16.gmra.mxu0 %v1790
      %v1866 = vpop.f32.mrf.mxu0
      %v1867 = vadd.f32 0.0, %v1866
      %v1868 = vpop.f32.mrf.mxu0
      %v1869 = vadd.f32 0.0, %v1868
      %1870 = vmatmul.bf16.gmra.mxu0 %v1793
      %v1871 = vpop.f32.mrf.mxu0
      %v1872 = vadd.f32 0.0, %v1871
      %v1873 = vpop.f32.mrf.mxu0
      %v1874 = vadd.f32 0.0, %v1873
      %1875 = vmatmul.bf16.gmra.mxu0 %v1796
      %v1876 = vpop.f32.mrf.mxu0
      %v1877 = vadd.f32 0.0, %v1876
      %v1878 = vpop.f32.mrf.mxu0
      %v1879 = vadd.f32 0.0, %v1878
      %1880 = vmatmul.bf16.gmra.mxu0 %v1799
      %v1881 = vpop.f32.mrf.mxu0
      %v1882 = vadd.f32 0.0, %v1881
      %v1883 = vpop.f32.mrf.mxu0
      %v1884 = vadd.f32 0.0, %v1883
      %1885 = vmatmul.bf16.gmra.mxu0 %v1802
      %v1886 = vpop.f32.mrf.mxu0
      %v1887 = vadd.f32 0.0, %v1886
      %v1888 = vpop.f32.mrf.mxu0
      %v1889 = vadd.f32 0.0, %v1888
      %1890 = vmatmul.bf16.gmra.mxu0 %v1805
      %v1891 = vpop.f32.mrf.mxu0
      %v1892 = vadd.f32 0.0, %v1891
      %v1893 = vpop.f32.mrf.mxu0
      %v1894 = vadd.f32 0.0, %v1893
      %1895 = vdwg.mxu0
      %v1896 = vadd.f32 %v1645, %v1817
      %v1897 = vadd.f32 %v1646, %v1819
      %v1898 = vadd.f32 %v1647, %v1822
      %v1899 = vadd.f32 %v1648, %v1824
      %v1900 = vadd.f32 %v1649, %v1827
      %v1901 = vadd.f32 %v1650, %v1829
      %v1902 = vadd.f32 %v1651, %v1832
      %v1903 = vadd.f32 %v1652, %v1834
      %v1904 = vadd.f32 %v1653, %v1837
      %v1905 = vadd.f32 %v1654, %v1839
      %v1906 = vadd.f32 %v1655, %v1842
      %v1907 = vadd.f32 %v1656, %v1844
      %v1908 = vadd.f32 %v1657, %v1847
      %v1909 = vadd.f32 %v1658, %v1849
      %v1910 = vadd.f32 %v1659, %v1852
      %v1911 = vadd.f32 %v1660, %v1854
      %v1912 = vadd.f32 %v1661, %v1857
      %v1913 = vadd.f32 %v1662, %v1859
      %v1914 = vadd.f32 %v1663, %v1862
      %v1915 = vadd.f32 %v1664, %v1864
      %v1916 = vadd.f32 %v1665, %v1867
      %v1917 = vadd.f32 %v1666, %v1869
      %v1918 = vadd.f32 %v1667, %v1872
      %v1919 = vadd.f32 %v1668, %v1874
      %v1920 = vadd.f32 %v1669, %v1877
      %v1921 = vadd.f32 %v1670, %v1879
      %v1922 = vadd.f32 %v1671, %v1882
      %v1923 = vadd.f32 %v1672, %v1884
      %v1924 = vadd.f32 %v1673, %v1887
      %v1925 = vadd.f32 %v1674, %v1889
      %v1926 = vadd.f32 %v1675, %v1892
      %v1927 = vadd.f32 %v1676, %v1894
      %v1928 = vld [vmem:[%s1677 + $0x1] sm:$0xff]
      %v1929 = vld [vmem:[%s1677 + $0x9] sm:$0xff]
      %v1930 = vld [vmem:[%s1677 + $0x19] sm:$0xff]
      %v1931 = vld [vmem:[%s1677 + $0x21] sm:$0xff]
      %v1932 = vld [vmem:[%s1677 + $0x31] sm:$0xff]
      %v1933 = vld [vmem:[%s1677 + $0x39] sm:$0xff]
      %v1934 = vld [vmem:[%s1677 + $0x49] sm:$0xff]
      %v1935 = vld [vmem:[%s1677 + $0x51] sm:$0xff]
      %v1936 = vld [vmem:[%s1677 + $0x61] sm:$0xff]
      %v1937 = vld [vmem:[%s1677 + $0x69] sm:$0xff]
      %v1938 = vld [vmem:[%s1677 + $0x79] sm:$0xff]
      %v1939 = vld [vmem:[%s1677 + $0x81] sm:$0xff]
      %v1940 = vld [vmem:[%s1677 + $0x91] sm:$0xff]
      %v1941 = vld [vmem:[%s1677 + $0x99] sm:$0xff]
      %v1942 = vld [vmem:[%s1677 + $0xa9] sm:$0xff]
      %v1943 = vld [vmem:[%s1677 + $0xb1] sm:$0xff]
      %v1944 = vld [vmem:[%s1677 + $0xc1] sm:$0xff]
      %v1945 = vld [vmem:[%s1677 + $0xc9] sm:$0xff]
      %v1946 = vld [vmem:[%s1677 + $0xd9] sm:$0xff]
      %v1947 = vld [vmem:[%s1677 + $0xe1] sm:$0xff]
      %v1948 = vld [vmem:[%s1677 + $0xf1] sm:$0xff]
      %v1949 = vld [vmem:[%s1677 + $0xf9] sm:$0xff]
      %v1950 = vld [vmem:[%s1677 + $0x109] sm:$0xff]
      %v1951 = vld [vmem:[%s1677 + $0x111] sm:$0xff]
      %v1952 = vld [vmem:[%s1677 + $0x121] sm:$0xff]
      %v1953 = vld [vmem:[%s1677 + $0x129] sm:$0xff]
      %v1954 = vld [vmem:[%s1677 + $0x139] sm:$0xff]
      %v1955 = vld [vmem:[%s1677 + $0x141] sm:$0xff]
      %v1956 = vld [vmem:[%s1677 + $0x151] sm:$0xff]
      %v1957 = vld [vmem:[%s1677 + $0x159] sm:$0xff]
      %v1958 = vld [vmem:[%s1677 + $0x169] sm:$0xff]
      %v1959 = vld [vmem:[%s1677 + $0x171] sm:$0xff]
      %v1960 = vpack.c.bf16 %v1929, %v1928
      %v1961 = vpack.c.bf16 %v1931, %v1930
      %v1962 = vpack.c.bf16 %v1933, %v1932
      %v1963 = vpack.c.bf16 %v1935, %v1934
      %v1964 = vpack.c.bf16 %v1937, %v1936
      %v1965 = vpack.c.bf16 %v1939, %v1938
      %v1966 = vpack.c.bf16 %v1941, %v1940
      %v1967 = vpack.c.bf16 %v1943, %v1942
      %v1968 = vpack.c.bf16 %v1945, %v1944
      %v1969 = vpack.c.bf16 %v1947, %v1946
      %v1970 = vpack.c.bf16 %v1949, %v1948
      %v1971 = vpack.c.bf16 %v1951, %v1950
      %v1972 = vpack.c.bf16 %v1953, %v1952
      %v1973 = vpack.c.bf16 %v1955, %v1954
      %v1974 = vpack.c.bf16 %v1957, %v1956
      %v1975 = vpack.c.bf16 %v1959, %v1958
      %s1976 = scalar_lea.vmem %s1, 224
      %v1977 = vld [vmem:[%s1976] sm:$0xf]
      %v1978 = vld [vmem:[%s1976 + $0x4] sm:$0xf]
      %v1979 = vld [vmem:[%s1976 + $0x8] sm:$0xf]
      %v1980 = vld [vmem:[%s1976 + $0xc] sm:$0xf]
      %v1981 = vld [vmem:[%s1976 + $0x10] sm:$0xf]
      %v1982 = vld [vmem:[%s1976 + $0x14] sm:$0xf]
      %v1983 = vld [vmem:[%s1976 + $0x18] sm:$0xf]
      %v1984 = vld [vmem:[%s1976 + $0x1c] sm:$0xf]
      %v1993 = vunpack.c.l.b16 %v1977
      %v1994 = vunpack.c.l.b16 %v1978
      %v1995 = vunpack.c.l.b16 %v1979
      %v1996 = vunpack.c.l.b16 %v1980
      %v1997 = vunpack.c.l.b16 %v1981
      %v1998 = vunpack.c.l.b16 %v1982
      %v1999 = vunpack.c.l.b16 %v1983
      %v2000 = vunpack.c.l.b16 %v1984
      %v2001 = vpack.c.b16 %v1994, %v1993
      %v2002 = vpack.c.b16 %v1996, %v1995
      %v2003 = vpack.c.b16 %v1998, %v1997
      %v2004 = vpack.c.b16 %v2000, %v1999
      %v2010 = vsel %vm256, %v1960, 0
      %v2013 = vsel %vm256, %v1961, 0
      %v2016 = vsel %vm256, %v1962, 0
      %v2019 = vsel %vm256, %v1963, 0
      %v2022 = vsel %vm256, %v1964, 0
      %v2025 = vsel %vm256, %v1965, 0
      %v2028 = vsel %vm256, %v1966, 0
      %v2031 = vsel %vm256, %v1967, 0
      %v2034 = vsel %vm256, %v1968, 0
      %v2037 = vsel %vm256, %v1969, 0
      %v2040 = vsel %vm256, %v1970, 0
      %v2043 = vsel %vm256, %v1971, 0
      %v2046 = vsel %vm256, %v1972, 0
      %v2049 = vsel %vm256, %v1973, 0
      %v2052 = vsel %vm256, %v1974, 0
      %v2055 = vsel %vm256, %v1975, 0
      %2057 = vmatpush.bf16.msra.mxu0 0
      %2058 = vmatpush.bf16.msra.mxu0 0
      %2059 = vmatpush.bf16.msra.mxu0 0
      %2060 = vmatpush.bf16.msra.mxu0 0
      %2061 = vmatpush.bf16.msra.mxu0 %v2004
      %2062 = vmatpush.bf16.msra.mxu0 %v2003
      %2063 = vmatpush.bf16.msra.mxu0 %v2002
      %2064 = vmatpush.bf16.msra.mxu0 %v2001
      %2065 = vmatmul.bf16.gmra.mxu0 %v2010
      %v2066 = vpop.f32.mrf.mxu0
      %v2067 = vadd.f32 0.0, %v2066
      %v2068 = vpop.f32.mrf.mxu0
      %v2069 = vadd.f32 0.0, %v2068
      %2070 = vmatmul.bf16.gmra.mxu0 %v2013
      %v2071 = vpop.f32.mrf.mxu0
      %v2072 = vadd.f32 0.0, %v2071
      %v2073 = vpop.f32.mrf.mxu0
      %v2074 = vadd.f32 0.0, %v2073
      %2075 = vmatmul.bf16.gmra.mxu0 %v2016
      %v2076 = vpop.f32.mrf.mxu0
      %v2077 = vadd.f32 0.0, %v2076
      %v2078 = vpop.f32.mrf.mxu0
      %v2079 = vadd.f32 0.0, %v2078
      %2080 = vmatmul.bf16.gmra.mxu0 %v2019
      %v2081 = vpop.f32.mrf.mxu0
      %v2082 = vadd.f32 0.0, %v2081
      %v2083 = vpop.f32.mrf.mxu0
      %v2084 = vadd.f32 0.0, %v2083
      %2085 = vmatmul.bf16.gmra.mxu0 %v2022
      %v2086 = vpop.f32.mrf.mxu0
      %v2087 = vadd.f32 0.0, %v2086
      %v2088 = vpop.f32.mrf.mxu0
      %v2089 = vadd.f32 0.0, %v2088
      %2090 = vmatmul.bf16.gmra.mxu0 %v2025
      %v2091 = vpop.f32.mrf.mxu0
      %v2092 = vadd.f32 0.0, %v2091
      %v2093 = vpop.f32.mrf.mxu0
      %v2094 = vadd.f32 0.0, %v2093
      %2095 = vmatmul.bf16.gmra.mxu0 %v2028
      %v2096 = vpop.f32.mrf.mxu0
      %v2097 = vadd.f32 0.0, %v2096
      %v2098 = vpop.f32.mrf.mxu0
      %v2099 = vadd.f32 0.0, %v2098
      %2100 = vmatmul.bf16.gmra.mxu0 %v2031
      %v2101 = vpop.f32.mrf.mxu0
      %v2102 = vadd.f32 0.0, %v2101
      %v2103 = vpop.f32.mrf.mxu0
      %v2104 = vadd.f32 0.0, %v2103
      %2105 = vmatmul.bf16.gmra.mxu0 %v2034
      %v2106 = vpop.f32.mrf.mxu0
      %v2107 = vadd.f32 0.0, %v2106
      %v2108 = vpop.f32.mrf.mxu0
      %v2109 = vadd.f32 0.0, %v2108
      %2110 = vmatmul.bf16.gmra.mxu0 %v2037
      %v2111 = vpop.f32.mrf.mxu0
      %v2112 = vadd.f32 0.0, %v2111
      %v2113 = vpop.f32.mrf.mxu0
      %v2114 = vadd.f32 0.0, %v2113
      %2115 = vmatmul.bf16.gmra.mxu0 %v2040
      %v2116 = vpop.f32.mrf.mxu0
      %v2117 = vadd.f32 0.0, %v2116
      %v2118 = vpop.f32.mrf.mxu0
      %v2119 = vadd.f32 0.0, %v2118
      %2120 = vmatmul.bf16.gmra.mxu0 %v2043
      %v2121 = vpop.f32.mrf.mxu0
      %v2122 = vadd.f32 0.0, %v2121
      %v2123 = vpop.f32.mrf.mxu0
      %v2124 = vadd.f32 0.0, %v2123
      %2125 = vmatmul.bf16.gmra.mxu0 %v2046
      %v2126 = vpop.f32.mrf.mxu0
      %v2127 = vadd.f32 0.0, %v2126
      %v2128 = vpop.f32.mrf.mxu0
      %v2129 = vadd.f32 0.0, %v2128
      %2130 = vmatmul.bf16.gmra.mxu0 %v2049
      %v2131 = vpop.f32.mrf.mxu0
      %v2132 = vadd.f32 0.0, %v2131
      %v2133 = vpop.f32.mrf.mxu0
      %v2134 = vadd.f32 0.0, %v2133
      %2135 = vmatmul.bf16.gmra.mxu0 %v2052
      %v2136 = vpop.f32.mrf.mxu0
      %v2137 = vadd.f32 0.0, %v2136
      %v2138 = vpop.f32.mrf.mxu0
      %v2139 = vadd.f32 0.0, %v2138
      %2140 = vmatmul.bf16.gmra.mxu0 %v2055
      %v2141 = vpop.f32.mrf.mxu0
      %v2142 = vadd.f32 0.0, %v2141
      %v2143 = vpop.f32.mrf.mxu0
      %v2144 = vadd.f32 0.0, %v2143
      %2145 = vdwg.mxu0
      %v2146 = vadd.f32 %v1896, %v2067
      %v2147 = vadd.f32 %v1897, %v2069
      %v2148 = vadd.f32 %v1898, %v2072
      %v2149 = vadd.f32 %v1899, %v2074
      %v2150 = vadd.f32 %v1900, %v2077
      %v2151 = vadd.f32 %v1901, %v2079
      %v2152 = vadd.f32 %v1902, %v2082
      %v2153 = vadd.f32 %v1903, %v2084
      %v2154 = vadd.f32 %v1904, %v2087
      %v2155 = vadd.f32 %v1905, %v2089
      %v2156 = vadd.f32 %v1906, %v2092
      %v2157 = vadd.f32 %v1907, %v2094
      %v2158 = vadd.f32 %v1908, %v2097
      %v2159 = vadd.f32 %v1909, %v2099
      %v2160 = vadd.f32 %v1910, %v2102
      %v2161 = vadd.f32 %v1911, %v2104
      %v2162 = vadd.f32 %v1912, %v2107
      %v2163 = vadd.f32 %v1913, %v2109
      %v2164 = vadd.f32 %v1914, %v2112
      %v2165 = vadd.f32 %v1915, %v2114
      %v2166 = vadd.f32 %v1916, %v2117
      %v2167 = vadd.f32 %v1917, %v2119
      %v2168 = vadd.f32 %v1918, %v2122
      %v2169 = vadd.f32 %v1919, %v2124
      %v2170 = vadd.f32 %v1920, %v2127
      %v2171 = vadd.f32 %v1921, %v2129
      %v2172 = vadd.f32 %v1922, %v2132
      %v2173 = vadd.f32 %v1923, %v2134
      %v2174 = vadd.f32 %v1924, %v2137
      %v2175 = vadd.f32 %v1925, %v2139
      %v2176 = vadd.f32 %v1926, %v2142
      %v2177 = vadd.f32 %v1927, %v2144
      %v2178 = vld [vmem:[%s1677 + $0x2] sm:$0xff]
      %v2179 = vld [vmem:[%s1677 + $0xa] sm:$0xff]
      %v2180 = vld [vmem:[%s1677 + $0x1a] sm:$0xff]
      %v2181 = vld [vmem:[%s1677 + $0x22] sm:$0xff]
      %v2182 = vld [vmem:[%s1677 + $0x32] sm:$0xff]
      %v2183 = vld [vmem:[%s1677 + $0x3a] sm:$0xff]
      %v2184 = vld [vmem:[%s1677 + $0x4a] sm:$0xff]
      %v2185 = vld [vmem:[%s1677 + $0x52] sm:$0xff]
      %v2186 = vld [vmem:[%s1677 + $0x62] sm:$0xff]
      %v2187 = vld [vmem:[%s1677 + $0x6a] sm:$0xff]
      %v2188 = vld [vmem:[%s1677 + $0x7a] sm:$0xff]
      %v2189 = vld [vmem:[%s1677 + $0x82] sm:$0xff]
      %v2190 = vld [vmem:[%s1677 + $0x92] sm:$0xff]
      %v2191 = vld [vmem:[%s1677 + $0x9a] sm:$0xff]
      %v2192 = vld [vmem:[%s1677 + $0xaa] sm:$0xff]
      %v2193 = vld [vmem:[%s1677 + $0xb2] sm:$0xff]
      %v2194 = vld [vmem:[%s1677 + $0xc2] sm:$0xff]
      %v2195 = vld [vmem:[%s1677 + $0xca] sm:$0xff]
      %v2196 = vld [vmem:[%s1677 + $0xda] sm:$0xff]
      %v2197 = vld [vmem:[%s1677 + $0xe2] sm:$0xff]
      %v2198 = vld [vmem:[%s1677 + $0xf2] sm:$0xff]
      %v2199 = vld [vmem:[%s1677 + $0xfa] sm:$0xff]
      %v2200 = vld [vmem:[%s1677 + $0x10a] sm:$0xff]
      %v2201 = vld [vmem:[%s1677 + $0x112] sm:$0xff]
      %v2202 = vld [vmem:[%s1677 + $0x122] sm:$0xff]
      %v2203 = vld [vmem:[%s1677 + $0x12a] sm:$0xff]
      %v2204 = vld [vmem:[%s1677 + $0x13a] sm:$0xff]
      %v2205 = vld [vmem:[%s1677 + $0x142] sm:$0xff]
      %v2206 = vld [vmem:[%s1677 + $0x152] sm:$0xff]
      %v2207 = vld [vmem:[%s1677 + $0x15a] sm:$0xff]
      %v2208 = vld [vmem:[%s1677 + $0x16a] sm:$0xff]
      %v2209 = vld [vmem:[%s1677 + $0x172] sm:$0xff]
      %v2210 = vpack.c.bf16 %v2179, %v2178
      %v2211 = vpack.c.bf16 %v2181, %v2180
      %v2212 = vpack.c.bf16 %v2183, %v2182
      %v2213 = vpack.c.bf16 %v2185, %v2184
      %v2214 = vpack.c.bf16 %v2187, %v2186
      %v2215 = vpack.c.bf16 %v2189, %v2188
      %v2216 = vpack.c.bf16 %v2191, %v2190
      %v2217 = vpack.c.bf16 %v2193, %v2192
      %v2218 = vpack.c.bf16 %v2195, %v2194
      %v2219 = vpack.c.bf16 %v2197, %v2196
      %v2220 = vpack.c.bf16 %v2199, %v2198
      %v2221 = vpack.c.bf16 %v2201, %v2200
      %v2222 = vpack.c.bf16 %v2203, %v2202
      %v2223 = vpack.c.bf16 %v2205, %v2204
      %v2224 = vpack.c.bf16 %v2207, %v2206
      %v2225 = vpack.c.bf16 %v2209, %v2208
      %s2226 = scalar_lea.vmem %s1, 256
      %v2227 = vld [vmem:[%s2226] sm:$0xf]
      %v2228 = vld [vmem:[%s2226 + $0x4] sm:$0xf]
      %v2229 = vld [vmem:[%s2226 + $0x8] sm:$0xf]
      %v2230 = vld [vmem:[%s2226 + $0xc] sm:$0xf]
      %v2231 = vld [vmem:[%s2226 + $0x10] sm:$0xf]
      %v2232 = vld [vmem:[%s2226 + $0x14] sm:$0xf]
      %v2233 = vld [vmem:[%s2226 + $0x18] sm:$0xf]
      %v2234 = vld [vmem:[%s2226 + $0x1c] sm:$0xf]
      %v2243 = vunpack.c.l.b16 %v2227
      %v2244 = vunpack.c.l.b16 %v2228
      %v2245 = vunpack.c.l.b16 %v2229
      %v2246 = vunpack.c.l.b16 %v2230
      %v2247 = vunpack.c.l.b16 %v2231
      %v2248 = vunpack.c.l.b16 %v2232
      %v2249 = vunpack.c.l.b16 %v2233
      %v2250 = vunpack.c.l.b16 %v2234
      %v2251 = vpack.c.b16 %v2244, %v2243
      %v2252 = vpack.c.b16 %v2246, %v2245
      %v2253 = vpack.c.b16 %v2248, %v2247
      %v2254 = vpack.c.b16 %v2250, %v2249
      %v2260 = vsel %vm256, %v2210, 0
      %v2263 = vsel %vm256, %v2211, 0
      %v2266 = vsel %vm256, %v2212, 0
      %v2269 = vsel %vm256, %v2213, 0
      %v2272 = vsel %vm256, %v2214, 0
      %v2275 = vsel %vm256, %v2215, 0
      %v2278 = vsel %vm256, %v2216, 0
      %v2281 = vsel %vm256, %v2217, 0
      %v2284 = vsel %vm256, %v2218, 0
      %v2287 = vsel %vm256, %v2219, 0
      %v2290 = vsel %vm256, %v2220, 0
      %v2293 = vsel %vm256, %v2221, 0
      %v2296 = vsel %vm256, %v2222, 0
      %v2299 = vsel %vm256, %v2223, 0
      %v2302 = vsel %vm256, %v2224, 0
      %v2305 = vsel %vm256, %v2225, 0
      %2307 = vmatpush.bf16.msra.mxu0 0
      %2308 = vmatpush.bf16.msra.mxu0 0
      %2309 = vmatpush.bf16.msra.mxu0 0
      %2310 = vmatpush.bf16.msra.mxu0 0
      %2311 = vmatpush.bf16.msra.mxu0 %v2254
      %2312 = vmatpush.bf16.msra.mxu0 %v2253
      %2313 = vmatpush.bf16.msra.mxu0 %v2252
      %2314 = vmatpush.bf16.msra.mxu0 %v2251
      %2315 = vmatmul.bf16.gmra.mxu0 %v2260
      %v2316 = vpop.f32.mrf.mxu0
      %v2317 = vadd.f32 0.0, %v2316
      %v2318 = vpop.f32.mrf.mxu0
      %v2319 = vadd.f32 0.0, %v2318
      %2320 = vmatmul.bf16.gmra.mxu0 %v2263
      %v2321 = vpop.f32.mrf.mxu0
      %v2322 = vadd.f32 0.0, %v2321
      %v2323 = vpop.f32.mrf.mxu0
      %v2324 = vadd.f32 0.0, %v2323
      %2325 = vmatmul.bf16.gmra.mxu0 %v2266
      %v2326 = vpop.f32.mrf.mxu0
      %v2327 = vadd.f32 0.0, %v2326
      %v2328 = vpop.f32.mrf.mxu0
      %v2329 = vadd.f32 0.0, %v2328
      %2330 = vmatmul.bf16.gmra.mxu0 %v2269
      %v2331 = vpop.f32.mrf.mxu0
      %v2332 = vadd.f32 0.0, %v2331
      %v2333 = vpop.f32.mrf.mxu0
      %v2334 = vadd.f32 0.0, %v2333
      %2335 = vmatmul.bf16.gmra.mxu0 %v2272
      %v2336 = vpop.f32.mrf.mxu0
      %v2337 = vadd.f32 0.0, %v2336
      %v2338 = vpop.f32.mrf.mxu0
      %v2339 = vadd.f32 0.0, %v2338
      %2340 = vmatmul.bf16.gmra.mxu0 %v2275
      %v2341 = vpop.f32.mrf.mxu0
      %v2342 = vadd.f32 0.0, %v2341
      %v2343 = vpop.f32.mrf.mxu0
      %v2344 = vadd.f32 0.0, %v2343
      %2345 = vmatmul.bf16.gmra.mxu0 %v2278
      %v2346 = vpop.f32.mrf.mxu0
      %v2347 = vadd.f32 0.0, %v2346
      %v2348 = vpop.f32.mrf.mxu0
      %v2349 = vadd.f32 0.0, %v2348
      %2350 = vmatmul.bf16.gmra.mxu0 %v2281
      %v2351 = vpop.f32.mrf.mxu0
      %v2352 = vadd.f32 0.0, %v2351
      %v2353 = vpop.f32.mrf.mxu0
      %v2354 = vadd.f32 0.0, %v2353
      %2355 = vmatmul.bf16.gmra.mxu0 %v2284
      %v2356 = vpop.f32.mrf.mxu0
      %v2357 = vadd.f32 0.0, %v2356
      %v2358 = vpop.f32.mrf.mxu0
      %v2359 = vadd.f32 0.0, %v2358
      %2360 = vmatmul.bf16.gmra.mxu0 %v2287
      %v2361 = vpop.f32.mrf.mxu0
      %v2362 = vadd.f32 0.0, %v2361
      %v2363 = vpop.f32.mrf.mxu0
      %v2364 = vadd.f32 0.0, %v2363
      %2365 = vmatmul.bf16.gmra.mxu0 %v2290
      %v2366 = vpop.f32.mrf.mxu0
      %v2367 = vadd.f32 0.0, %v2366
      %v2368 = vpop.f32.mrf.mxu0
      %v2369 = vadd.f32 0.0, %v2368
      %2370 = vmatmul.bf16.gmra.mxu0 %v2293
      %v2371 = vpop.f32.mrf.mxu0
      %v2372 = vadd.f32 0.0, %v2371
      %v2373 = vpop.f32.mrf.mxu0
      %v2374 = vadd.f32 0.0, %v2373
      %2375 = vmatmul.bf16.gmra.mxu0 %v2296
      %v2376 = vpop.f32.mrf.mxu0
      %v2377 = vadd.f32 0.0, %v2376
      %v2378 = vpop.f32.mrf.mxu0
      %v2379 = vadd.f32 0.0, %v2378
      %2380 = vmatmul.bf16.gmra.mxu0 %v2299
      %v2381 = vpop.f32.mrf.mxu0
      %v2382 = vadd.f32 0.0, %v2381
      %v2383 = vpop.f32.mrf.mxu0
      %v2384 = vadd.f32 0.0, %v2383
      %2385 = vmatmul.bf16.gmra.mxu0 %v2302
      %v2386 = vpop.f32.mrf.mxu0
      %v2387 = vadd.f32 0.0, %v2386
      %v2388 = vpop.f32.mrf.mxu0
      %v2389 = vadd.f32 0.0, %v2388
      %2390 = vmatmul.bf16.gmra.mxu0 %v2305
      %v2391 = vpop.f32.mrf.mxu0
      %v2392 = vadd.f32 0.0, %v2391
      %v2393 = vpop.f32.mrf.mxu0
      %v2394 = vadd.f32 0.0, %v2393
      %2395 = vdwg.mxu0
      %v2396 = vadd.f32 %v2146, %v2317
      %v2397 = vadd.f32 %v2147, %v2319
      %v2398 = vadd.f32 %v2148, %v2322
      %v2399 = vadd.f32 %v2149, %v2324
      %v2400 = vadd.f32 %v2150, %v2327
      %v2401 = vadd.f32 %v2151, %v2329
      %v2402 = vadd.f32 %v2152, %v2332
      %v2403 = vadd.f32 %v2153, %v2334
      %v2404 = vadd.f32 %v2154, %v2337
      %v2405 = vadd.f32 %v2155, %v2339
      %v2406 = vadd.f32 %v2156, %v2342
      %v2407 = vadd.f32 %v2157, %v2344
      %v2408 = vadd.f32 %v2158, %v2347
      %v2409 = vadd.f32 %v2159, %v2349
      %v2410 = vadd.f32 %v2160, %v2352
      %v2411 = vadd.f32 %v2161, %v2354
      %v2412 = vadd.f32 %v2162, %v2357
      %v2413 = vadd.f32 %v2163, %v2359
      %v2414 = vadd.f32 %v2164, %v2362
      %v2415 = vadd.f32 %v2165, %v2364
      %v2416 = vadd.f32 %v2166, %v2367
      %v2417 = vadd.f32 %v2167, %v2369
      %v2418 = vadd.f32 %v2168, %v2372
      %v2419 = vadd.f32 %v2169, %v2374
      %v2420 = vadd.f32 %v2170, %v2377
      %v2421 = vadd.f32 %v2171, %v2379
      %v2422 = vadd.f32 %v2172, %v2382
      %v2423 = vadd.f32 %v2173, %v2384
      %v2424 = vadd.f32 %v2174, %v2387
      %v2425 = vadd.f32 %v2175, %v2389
      %v2426 = vadd.f32 %v2176, %v2392
      %v2427 = vadd.f32 %v2177, %v2394
      %v2428 = vmax.f32 %v2396, 0.0
      %v2429 = vmax.f32 %v2397, 0.0
      %v2430 = vmax.f32 %v2398, 0.0
      %v2431 = vmax.f32 %v2399, 0.0
      %v2432 = vmax.f32 %v2400, 0.0
      %v2433 = vmax.f32 %v2401, 0.0
      %v2434 = vmax.f32 %v2402, 0.0
      %v2435 = vmax.f32 %v2403, 0.0
      %v2436 = vmax.f32 %v2404, 0.0
      %v2437 = vmax.f32 %v2405, 0.0
      %v2438 = vmax.f32 %v2406, 0.0
      %v2439 = vmax.f32 %v2407, 0.0
      %v2440 = vmax.f32 %v2408, 0.0
      %v2441 = vmax.f32 %v2409, 0.0
      %v2442 = vmax.f32 %v2410, 0.0
      %v2443 = vmax.f32 %v2411, 0.0
      %v2444 = vmax.f32 %v2412, 0.0
      %v2445 = vmax.f32 %v2413, 0.0
      %v2446 = vmax.f32 %v2414, 0.0
      %v2447 = vmax.f32 %v2415, 0.0
      %v2448 = vmax.f32 %v2416, 0.0
      %v2449 = vmax.f32 %v2417, 0.0
      %v2450 = vmax.f32 %v2418, 0.0
      %v2451 = vmax.f32 %v2419, 0.0
      %v2452 = vmax.f32 %v2420, 0.0
      %v2453 = vmax.f32 %v2421, 0.0
      %v2454 = vmax.f32 %v2422, 0.0
      %v2455 = vmax.f32 %v2423, 0.0
      %v2456 = vmax.f32 %v2424, 0.0
      %v2457 = vmax.f32 %v2425, 0.0
      %v2458 = vmax.f32 %v2426, 0.0
      %v2459 = vmax.f32 %v2427, 0.0
      %2460 = vst.msk [vmem:[%s170] sm:$0xff] %vm256, %v2428
      %2461 = vst.msk [vmem:[%s170 + $0x8] sm:$0xff] %vm256, %v2429
      %2462 = vst.msk [vmem:[%s170 + $0x10] sm:$0xff] %vm256, %v2430
      %2463 = vst.msk [vmem:[%s170 + $0x18] sm:$0xff] %vm256, %v2431
      %2464 = vst.msk [vmem:[%s170 + $0x20] sm:$0xff] %vm256, %v2432
      %2465 = vst.msk [vmem:[%s170 + $0x28] sm:$0xff] %vm256, %v2433
      %2466 = vst.msk [vmem:[%s170 + $0x30] sm:$0xff] %vm256, %v2434
      %2467 = vst.msk [vmem:[%s170 + $0x38] sm:$0xff] %vm256, %v2435
      %2468 = vst.msk [vmem:[%s170 + $0x40] sm:$0xff] %vm256, %v2436
      %2469 = vst.msk [vmem:[%s170 + $0x48] sm:$0xff] %vm256, %v2437
      %2470 = vst.msk [vmem:[%s170 + $0x50] sm:$0xff] %vm256, %v2438
      %2471 = vst.msk [vmem:[%s170 + $0x58] sm:$0xff] %vm256, %v2439
      %2472 = vst.msk [vmem:[%s170 + $0x60] sm:$0xff] %vm256, %v2440
      %2473 = vst.msk [vmem:[%s170 + $0x68] sm:$0xff] %vm256, %v2441
      %2474 = vst.msk [vmem:[%s170 + $0x70] sm:$0xff] %vm256, %v2442
      %2475 = vst.msk [vmem:[%s170 + $0x78] sm:$0xff] %vm256, %v2443
      %2476 = vst.msk [vmem:[%s170 + $0x80] sm:$0xff] %vm256, %v2444
      %2477 = vst.msk [vmem:[%s170 + $0x88] sm:$0xff] %vm256, %v2445
      %2478 = vst.msk [vmem:[%s170 + $0x90] sm:$0xff] %vm256, %v2446
      %2479 = vst.msk [vmem:[%s170 + $0x98] sm:$0xff] %vm256, %v2447
      %2480 = vst.msk [vmem:[%s170 + $0xa0] sm:$0xff] %vm256, %v2448
      %2481 = vst.msk [vmem:[%s170 + $0xa8] sm:$0xff] %vm256, %v2449
      %2482 = vst.msk [vmem:[%s170 + $0xb0] sm:$0xff] %vm256, %v2450
      %2483 = vst.msk [vmem:[%s170 + $0xb8] sm:$0xff] %vm256, %v2451
      %2484 = vst.msk [vmem:[%s170 + $0xc0] sm:$0xff] %vm256, %v2452
      %2485 = vst.msk [vmem:[%s170 + $0xc8] sm:$0xff] %vm256, %v2453
      %2486 = vst.msk [vmem:[%s170 + $0xd0] sm:$0xff] %vm256, %v2454
      %2487 = vst.msk [vmem:[%s170 + $0xd8] sm:$0xff] %vm256, %v2455
      %2488 = vst.msk [vmem:[%s170 + $0xe0] sm:$0xff] %vm256, %v2456
      %2489 = vst.msk [vmem:[%s170 + $0xe8] sm:$0xff] %vm256, %v2457
      %2490 = vst.msk [vmem:[%s170 + $0xf0] sm:$0xff] %vm256, %v2458
      %2491 = vst.msk [vmem:[%s170 + $0xf8] sm:$0xff] %vm256, %v2459
      %p2492 = scmp.lt.s32.totalorder %s14, 1
      %s2493 = scalar_select %p2492, %s14, 1
      %s2494 = smul.addr %s2493, 32
      %s2495 = smul.addr %s2494, 8
      %s2496 = scalar_lea.vmem %s3, %s2495
      // Predicated region
      $region33: #{feature_extractor_pallas.8} parent=31 // pred_check
        %p2497 = pneg %p100
      $region34: #{feature_extractor_pallas.8} parent=31 // pred_check_branch
        %2499 = sbr.rel (%p2497) target = $region36
      $region35: #{feature_extractor_pallas.8} parent=31 // pred_region
        _
      $region36: #{feature_extractor_pallas.8} parent=31 // pred_fallthru
        _
    $region32: #{feature_extractor_pallas.8} parent=5 // pred_fallthru
      _
    %p2500 = scmp.le.s32.totalorder 2, %s9
    // Predicated region
    $region37: #{feature_extractor_pallas.8} parent=5 // pred_check
      %p2501 = pneg %p2500
    $region38: #{feature_extractor_pallas.8} parent=5 // pred_check_branch
      %2503 = sbr.rel (%p2501) target = $region40
    $region39: #{feature_extractor_pallas.8} parent=5 // pred_region
      %s2504 = ssub.s32 %s9, 2
      // Predicated region
      $region41: #{feature_extractor_pallas.8} parent=39 // pred_check
        %p2505 = pneg %p106
      $region42: #{feature_extractor_pallas.8} parent=39 // pred_check_branch
        %2507 = sbr.rel (%p2505) target = $region44
      $region43: #{feature_extractor_pallas.8} parent=39 // pred_region
        %p2508 = scmp.lt.s32.totalorder %s15, 1
        %s2509 = scalar_select %p2508, %s15, 1
        %s2510 = smul.addr %s2509, 32
        %s2511 = smul.addr %s2510, 8
        %s2512 = scalar_lea.vmem %s3, %s2511
      $region44: #{feature_extractor_pallas.8} parent=39 // pred_fallthru
        _
    $region40: #{feature_extractor_pallas.8} parent=5 // pred_fallthru
      _
  $region6: #{feature_extractor_pallas.8} parent=0 // loop_footer
    %s13 = sadd.s32 1, %s9
  $region7: #{feature_extractor_pallas.8} parent=0 // loop_footer_branch
    %8 = sbr.rel target = $region3
  $region8: #{feature_extractor_pallas.8} parent=0 // loop_exit
    _

// kernel: feature_extractor_pallas.12
$region0: #{feature_extractor_pallas.12}
  #allocation0 [shape = 'u32[]', space=smem, size = 0x4, offset = 0x4, fixed_abs, tag = 'smem constant byte address 0x4 - core index']
  #allocation1 [shape = 'u32[72,128]{1,0:T(1,128)}', space=vmem, size = 0x9000, scoped, tag = 'internal scratch']
  %s0 = inlined_call_operand.vmem [shape: f32[2,8,4,256], index: 0, kind: input, shape index: {}]
  %s1 = inlined_call_operand.vmem [shape: f32[2,4,4,128], index: 1, kind: output, shape index: {}]
  %s2 = sld [smem:[#allocation0]]
  $region37: #{feature_extractor_pallas.12} parent=0
    _
  %s4 = ssub.s32 1, %s2
  %s5 = scalar_select 0, %s4, %s2
  loop: start=0, step=1, limit=4
  $region2: #{feature_extractor_pallas.12} parent=0 // loop_pre_header
    _
  $region3: #{feature_extractor_pallas.12} parent=0 // loop_header
    %s7 = sphi 0, %s11
    %p8 = scmp.ge.s32.totalorder %s7, 4
    %s17 = sphi 0, %s19
    %s20 = sphi 0, %s17
    %s21 = sphi 0, %s20
    %s37 = sphi 0, %s21
    %s43 = sphi 0, %s45
    %s46 = sphi 0, %s43
    %s47 = sphi 0, %s46
    %s63 = sphi 0, %s47
  $region4: #{feature_extractor_pallas.12} parent=0 // loop_header_branch
    %10 = sbr.rel (%p8) target = $region8
  $region5: #{feature_extractor_pallas.12} parent=0 // loop_body
    %s12 = ssub.s32 %s7, 1
    %s13 = ssub.s32 %s7, 2
    %s14 = sadd.s32 %s7, 1
    %s15 = ssub.s32 %s7, %s14
    %p16 = scmp.eq.s32.totalorder %s15, 0
    %s18 = sadd.s32 %s17, 1
    %s19 = scalar_select %p16, %s17, %s18
    %p22 = pneg %p16
    %p23 = scmp.eq.s32.totalorder %s7, 1
    %p24 = por %p22, %p23
    %p25 = scmp.ne.s32.totalorder %s17, %s20
    %p26 = scmp.eq.s32.totalorder %s7, 0
    %p27 = por %p25, %p26
    %p28 = scmp.ne.s32.totalorder %s17, %s20
    %p29 = scmp.eq.s32.totalorder %s12, 1
    %p30 = por %p28, %p29
    %p31 = scmp.ne.s32.totalorder %s20, %s21
    %p32 = scmp.eq.s32.totalorder %s12, 0
    %p33 = por %p31, %p32
    %p34 = scmp.ne.s32.totalorder %s20, %s21
    %p35 = scmp.eq.s32.totalorder %s13, 1
    %p36 = por %p34, %p35
    %p38 = scmp.ne.s32.totalorder %s21, %s37
    %p39 = scmp.eq.s32.totalorder %s13, 0
    %p40 = por %p38, %p39
    %s41 = ssub.s32 %s7, %s14
    %p42 = scmp.eq.s32.totalorder %s41, 0
    %s44 = sadd.s32 %s43, 1
    %s45 = scalar_select %p42, %s43, %s44
    %p48 = pneg %p42
    %p49 = scmp.eq.s32.totalorder %s7, 1
    %p50 = por %p48, %p49
    %p51 = scmp.ne.s32.totalorder %s43, %s46
    %p52 = scmp.eq.s32.totalorder %s7, 0
    %p53 = por %p51, %p52
    %p54 = scmp.ne.s32.totalorder %s43, %s46
    %p55 = scmp.eq.s32.totalorder %s12, 1
    %p56 = por %p54, %p55
    %p57 = scmp.ne.s32.totalorder %s46, %s47
    %p58 = scmp.eq.s32.totalorder %s12, 0
    %p59 = por %p57, %p58
    %p60 = scmp.ne.s32.totalorder %s46, %s47
    %p61 = scmp.eq.s32.totalorder %s13, 1
    %p62 = por %p60, %p61
    %p64 = scmp.ne.s32.totalorder %s47, %s63
    %p65 = scmp.eq.s32.totalorder %s13, 0
    %p66 = por %p64, %p65
    %p67 = scmp.le.s32.totalorder 1, %s7
    %p68 = scmp.lt.s32.totalorder %s7, 3
    %p69 = pnand %p67, %p68
    %p70 = pneg %p69
    // Predicated region
    $region9: #{feature_extractor_pallas.12} parent=5 // pred_check
      _
    $region10: #{feature_extractor_pallas.12} parent=5 // pred_check_branch
      %72 = sbr.rel (%p69) target = $region12
    $region11: #{feature_extractor_pallas.12} parent=5 // pred_region
      %s73 = ssub.s32 %s7, 1
    $region12: #{feature_extractor_pallas.12} parent=5 // pred_fallthru
      _
    %p74 = scmp.lt.s32.totalorder %s7, 2
    // Predicated region
    $region13: #{feature_extractor_pallas.12} parent=5 // pred_check
      %p75 = pneg %p74
    $region14: #{feature_extractor_pallas.12} parent=5 // pred_check_branch
      %77 = sbr.rel (%p75) target = $region16
    $region15: #{feature_extractor_pallas.12} parent=5 // pred_region
      // Predicated region
      $region17: #{feature_extractor_pallas.12} parent=15 // pred_check
        %p78 = pneg %p27
      $region18: #{feature_extractor_pallas.12} parent=15 // pred_check_branch
        %80 = sbr.rel (%p78) target = $region20
      $region19: #{feature_extractor_pallas.12} parent=15 // pred_region
        %p81 = scmp.lt.s32.totalorder %s7, 1
        %s82 = scalar_select %p81, %s7, 1
        %s83 = smul.addr %s82, 16
        %s84 = smul.addr %s83, 4
        %s85 = scalar_lea.vmem %s0, %s84
      $region20: #{feature_extractor_pallas.12} parent=15 // pred_fallthru
        _
    $region16: #{feature_extractor_pallas.12} parent=5 // pred_fallthru
      _
    %p86 = scmp.le.s32.totalorder 1, %s7
    %p87 = scmp.lt.s32.totalorder %s7, 3
    %p88 = pnand %p86, %p87
    %p89 = pneg %p88
    // Predicated region
    $region21: #{feature_extractor_pallas.12} parent=5 // pred_check
      _
    $region22: #{feature_extractor_pallas.12} parent=5 // pred_check_branch
      %91 = sbr.rel (%p88) target = $region24
    $region23: #{feature_extractor_pallas.12} parent=5 // pred_region
      %s92 = ssub.s32 %s7, 1
      %p93 = scmp.lt.s32.totalorder %s12, 1
      %s94 = scalar_select %p93, %s12, 1
      %s95 = smul.addr %s94, 16
      %s96 = smul.addr %s95, 4
      %s97 = scalar_lea.vmem %s0, %s96
      %p98 = pneg %p33
      %p99 = pneg %p30
      %p100 = pneg %p59
      %p101 = pneg %p56
      %p102 = scmp.lt.s32.totalorder %s12, 1
      %s103 = scalar_select %p102, %s12, 1
      %s104 = smul.addr %s103, 4
      %s105 = smul.addr %s104, 4
      %s106 = scalar_lea.vmem %s1, %s105
      %p107 = scmp.lt.s32.totalorder %s12, 1
      %s108 = scalar_select %p107, %s12, 1
      %s109 = smul.addr %s108, 16
      %s110 = smul.addr %s109, 4
      %s111 = scalar_lea.vmem %s0, %s110
      %p112 = scmp.lt.s32.totalorder %s12, 1
      %s113 = scalar_select %p112, %s12, 1
      %s114 = smul.addr %s113, 4
      %s115 = smul.addr %s114, 4
      %s116 = scalar_lea.vmem %s1, %s115
      %v117 = vld [vmem:[%s111] sm:$0xff]
      %s118 = scalar_lea.vmem %s111, 8
      %v119 = vld [vmem:[%s118] sm:$0xff]
      %v120 = vmax.f32 %v117, %v119
      %v122 = vrot.slane %v120, 4
      %v124 = vmax.f32 %v120, %v122
      %125 = vst [vmem:[%s116] sm:$0xf] %v124
      %s126 = scalar_lea.vmem %s111, 16
      %v127 = vld [vmem:[%s126] sm:$0xff]
      %s128 = scalar_lea.vmem %s111, 24
      %v129 = vld [vmem:[%s128] sm:$0xff]
      %v130 = vmax.f32 %v127, %v129
      %v132 = vrot.slane %v130, 4
      %v134 = vmax.f32 %v130, %v132
      %s135 = scalar_lea.vmem %s116, 4
      %136 = vst [vmem:[%s135] sm:$0xf] %v134
      %s137 = scalar_lea.vmem %s111, 32
      %v138 = vld [vmem:[%s137] sm:$0xff]
      %s139 = scalar_lea.vmem %s111, 40
      %v140 = vld [vmem:[%s139] sm:$0xff]
      %v141 = vmax.f32 %v138, %v140
      %v143 = vrot.slane %v141, 4
      %v145 = vmax.f32 %v141, %v143
      %s146 = scalar_lea.vmem %s116, 8
      %147 = vst [vmem:[%s146] sm:$0xf] %v145
      %s148 = scalar_lea.vmem %s111, 48
      %v149 = vld [vmem:[%s148] sm:$0xff]
      %s150 = scalar_lea.vmem %s111, 56
      %v151 = vld [vmem:[%s150] sm:$0xff]
      %v152 = vmax.f32 %v149, %v151
      %v154 = vrot.slane %v152, 4
      %v156 = vmax.f32 %v152, %v154
      %s157 = scalar_lea.vmem %s116, 12
      %158 = vst [vmem:[%s157] sm:$0xf] %v156
      %p159 = scmp.lt.s32.totalorder %s12, 1
      %s160 = scalar_select %p159, %s12, 1
      %s161 = smul.addr %s160, 4
      %s162 = smul.addr %s161, 4
      %s163 = scalar_lea.vmem %s1, %s162
      // Predicated region
      $region25: #{feature_extractor_pallas.12} parent=23 // pred_check
        %p164 = pneg %p56
      $region26: #{feature_extractor_pallas.12} parent=23 // pred_check_branch
        %166 = sbr.rel (%p164) target = $region28
      $region27: #{feature_extractor_pallas.12} parent=23 // pred_region
        _
      $region28: #{feature_extractor_pallas.12} parent=23 // pred_fallthru
        _
    $region24: #{feature_extractor_pallas.12} parent=5 // pred_fallthru
      _
    %p167 = scmp.le.s32.totalorder 2, %s7
    // Predicated region
    $region29: #{feature_extractor_pallas.12} parent=5 // pred_check
      %p168 = pneg %p167
    $region30: #{feature_extractor_pallas.12} parent=5 // pred_check_branch
      %170 = sbr.rel (%p168) target = $region32
    $region31: #{feature_extractor_pallas.12} parent=5 // pred_region
      %s171 = ssub.s32 %s7, 2
      // Predicated region
      $region33: #{feature_extractor_pallas.12} parent=31 // pred_check
        %p172 = pneg %p62
      $region34: #{feature_extractor_pallas.12} parent=31 // pred_check_branch
        %174 = sbr.rel (%p172) target = $region36
      $region35: #{feature_extractor_pallas.12} parent=31 // pred_region
        %p175 = scmp.lt.s32.totalorder %s13, 1
        %s176 = scalar_select %p175, %s13, 1
        %s177 = smul.addr %s176, 4
        %s178 = smul.addr %s177, 4
        %s179 = scalar_lea.vmem %s1, %s178
      $region36: #{feature_extractor_pallas.12} parent=31 // pred_fallthru
        _
    $region32: #{feature_extractor_pallas.12} parent=5 // pred_fallthru
      _
  $region6: #{feature_extractor_pallas.12} parent=0 // loop_footer
    %s11 = sadd.s32 1, %s7
  $region7: #{feature_extractor_pallas.12} parent=0 // loop_footer_branch
    %6 = sbr.rel target = $region3
  $region8: #{feature_extractor_pallas.12} parent=0 // loop_exit
    _

// kernel: feature_extractor_pallas.11
$region0: #{feature_extractor_pallas.11}
  #allocation0 [shape = 'u32[]', space=smem, size = 0x4, offset = 0x4, fixed_abs, tag = 'smem constant byte address 0x4 - core index']
  #allocation1 [shape = 'u32[72,128]{1,0:T(1,128)}', space=vmem, size = 0x9000, scoped, tag = 'internal scratch']
  %s0 = inlined_call_operand.vmem [shape: f32[2,10,10,128], index: 0, kind: input, shape index: {}]
  %s1 = inlined_call_operand.vmem [shape: bf16[9,128,128], index: 1, kind: input, shape index: {}]
  %s2 = inlined_call_operand.vmem [shape: f32[1,128], index: 2, kind: input, shape index: {}]
  %s3 = inlined_call_operand.vmem [shape: f32[2,8,8,128], index: 3, kind: output, shape index: {}]
  %s4 = sld [smem:[#allocation0]]
  $region45: #{feature_extractor_pallas.11} parent=0
    _
  %s6 = ssub.s32 1, %s4
  %s7 = scalar_select 0, %s6, %s4
  loop: start=0, step=1, limit=4
  $region2: #{feature_extractor_pallas.11} parent=0 // loop_pre_header
    _
  $region3: #{feature_extractor_pallas.11} parent=0 // loop_header
    %s9 = sphi 0, %s13
    %p10 = scmp.ge.s32.totalorder %s9, 4
    %s19 = sphi 0, %s21
    %s22 = sphi 0, %s19
    %s23 = sphi 0, %s22
    %s39 = sphi 0, %s23
    %s43 = sphi 0, %s43
    %s45 = sphi 0, %s43
    %s46 = sphi 0, %s45
    %s60 = sphi 0, %s46
    %s64 = sphi 0, %s64
    %s66 = sphi 0, %s64
    %s67 = sphi 0, %s66
    %s81 = sphi 0, %s67
    %s87 = sphi 0, %s89
    %s90 = sphi 0, %s87
    %s91 = sphi 0, %s90
    %s107 = sphi 0, %s91
  $region4: #{feature_extractor_pallas.11} parent=0 // loop_header_branch
    %12 = sbr.rel (%p10) target = $region8
  $region5: #{feature_extractor_pallas.11} parent=0 // loop_body
    %s14 = ssub.s32 %s9, 1
    %s15 = ssub.s32 %s9, 2
    %s16 = sadd.s32 %s9, 1
    %s17 = ssub.s32 %s9, %s16
    %p18 = scmp.eq.s32.totalorder %s17, 0
    %s20 = sadd.s32 %s19, 1
    %s21 = scalar_select %p18, %s19, %s20
    %p24 = pneg %p18
    %p25 = scmp.eq.s32.totalorder %s9, 1
    %p26 = por %p24, %p25
    %p27 = scmp.ne.s32.totalorder %s19, %s22
    %p28 = scmp.eq.s32.totalorder %s9, 0
    %p29 = por %p27, %p28
    %p30 = scmp.ne.s32.totalorder %s19, %s22
    %p31 = scmp.eq.s32.totalorder %s14, 1
    %p32 = por %p30, %p31
    %p33 = scmp.ne.s32.totalorder %s22, %s23
    %p34 = scmp.eq.s32.totalorder %s14, 0
    %p35 = por %p33, %p34
    %p36 = scmp.ne.s32.totalorder %s22, %s23
    %p37 = scmp.eq.s32.totalorder %s15, 1
    %p38 = por %p36, %p37
    %p40 = scmp.ne.s32.totalorder %s23, %s39
    %p41 = scmp.eq.s32.totalorder %s15, 0
    %p42 = por %p40, %p41
    %s44 = sadd.s32 %s43, 1
    %p47 = scmp.eq.s32.totalorder %s9, 1
    %p48 = scmp.ne.s32.totalorder %s43, %s45
    %p49 = scmp.eq.s32.totalorder %s9, 0
    %p50 = por %p48, %p49
    %p51 = scmp.ne.s32.totalorder %s43, %s45
    %p52 = scmp.eq.s32.totalorder %s14, 1
    %p53 = por %p51, %p52
    %p54 = scmp.ne.s32.totalorder %s45, %s46
    %p55 = scmp.eq.s32.totalorder %s14, 0
    %p56 = por %p54, %p55
    %p57 = scmp.ne.s32.totalorder %s45, %s46
    %p58 = scmp.eq.s32.totalorder %s15, 1
    %p59 = por %p57, %p58
    %p61 = scmp.ne.s32.totalorder %s46, %s60
    %p62 = scmp.eq.s32.totalorder %s15, 0
    %p63 = por %p61, %p62
    %s65 = sadd.s32 %s64, 1
    %p68 = scmp.eq.s32.totalorder %s9, 1
    %p69 = scmp.ne.s32.totalorder %s64, %s66
    %p70 = scmp.eq.s32.totalorder %s9, 0
    %p71 = por %p69, %p70
    %p72 = scmp.ne.s32.totalorder %s64, %s66
    %p73 = scmp.eq.s32.totalorder %s14, 1
    %p74 = por %p72, %p73
    %p75 = scmp.ne.s32.totalorder %s66, %s67
    %p76 = scmp.eq.s32.totalorder %s14, 0
    %p77 = por %p75, %p76
    %p78 = scmp.ne.s32.totalorder %s66, %s67
    %p79 = scmp.eq.s32.totalorder %s15, 1
    %p80 = por %p78, %p79
    %p82 = scmp.ne.s32.totalorder %s67, %s81
    %p83 = scmp.eq.s32.totalorder %s15, 0
    %p84 = por %p82, %p83
    %s85 = ssub.s32 %s9, %s16
    %p86 = scmp.eq.s32.totalorder %s85, 0
    %s88 = sadd.s32 %s87, 1
    %s89 = scalar_select %p86, %s87, %s88
    %p92 = pneg %p86
    %p93 = scmp.eq.s32.totalorder %s9, 1
    %p94 = por %p92, %p93
    %p95 = scmp.ne.s32.totalorder %s87, %s90
    %p96 = scmp.eq.s32.totalorder %s9, 0
    %p97 = por %p95, %p96
    %p98 = scmp.ne.s32.totalorder %s87, %s90
    %p99 = scmp.eq.s32.totalorder %s14, 1
    %p100 = por %p98, %p99
    %p101 = scmp.ne.s32.totalorder %s90, %s91
    %p102 = scmp.eq.s32.totalorder %s14, 0
    %p103 = por %p101, %p102
    %p104 = scmp.ne.s32.totalorder %s90, %s91
    %p105 = scmp.eq.s32.totalorder %s15, 1
    %p106 = por %p104, %p105
    %p108 = scmp.ne.s32.totalorder %s91, %s107
    %p109 = scmp.eq.s32.totalorder %s15, 0
    %p110 = por %p108, %p109
    %p111 = scmp.le.s32.totalorder 1, %s9
    %p112 = scmp.lt.s32.totalorder %s9, 3
    %p113 = pnand %p111, %p112
    %p114 = pneg %p113
    // Predicated region
    $region9: #{feature_extractor_pallas.11} parent=5 // pred_check
      _
    $region10: #{feature_extractor_pallas.11} parent=5 // pred_check_branch
      %116 = sbr.rel (%p113) target = $region12
    $region11: #{feature_extractor_pallas.11} parent=5 // pred_region
      %s117 = ssub.s32 %s9, 1
      // Predicated region
      $region13: #{feature_extractor_pallas.11} parent=11 // pred_check
        %p118 = pneg %p56
      $region14: #{feature_extractor_pallas.11} parent=11 // pred_check_branch
        %120 = sbr.rel (%p118) target = $region16
      $region15: #{feature_extractor_pallas.11} parent=11 // pred_region
        _
      $region16: #{feature_extractor_pallas.11} parent=11 // pred_fallthru
        _
      // Predicated region
      $region17: #{feature_extractor_pallas.11} parent=11 // pred_check
        %p121 = pneg %p77
      $region18: #{feature_extractor_pallas.11} parent=11 // pred_check_branch
        %123 = sbr.rel (%p121) target = $region20
      $region19: #{feature_extractor_pallas.11} parent=11 // pred_region
        _
      $region20: #{feature_extractor_pallas.11} parent=11 // pred_fallthru
        _
    $region12: #{feature_extractor_pallas.11} parent=5 // pred_fallthru
      _
    %p124 = scmp.lt.s32.totalorder %s9, 2
    // Predicated region
    $region21: #{feature_extractor_pallas.11} parent=5 // pred_check
      %p125 = pneg %p124
    $region22: #{feature_extractor_pallas.11} parent=5 // pred_check_branch
      %127 = sbr.rel (%p125) target = $region24
    $region23: #{feature_extractor_pallas.11} parent=5 // pred_region
      // Predicated region
      $region25: #{feature_extractor_pallas.11} parent=23 // pred_check
        %p128 = pneg %p29
      $region26: #{feature_extractor_pallas.11} parent=23 // pred_check_branch
        %130 = sbr.rel (%p128) target = $region28
      $region27: #{feature_extractor_pallas.11} parent=23 // pred_region
        %p131 = scmp.lt.s32.totalorder %s9, 1
        %s132 = scalar_select %p131, %s9, 1
        %s133 = smul.addr %s132, 20
        %s134 = smul.addr %s133, 8
        %s135 = scalar_lea.vmem %s0, %s134
      $region28: #{feature_extractor_pallas.11} parent=23 // pred_fallthru
        _
    $region24: #{feature_extractor_pallas.11} parent=5 // pred_fallthru
      _
    %p136 = scmp.le.s32.totalorder 1, %s9
    %p137 = scmp.lt.s32.totalorder %s9, 3
    %p138 = pnand %p136, %p137
    %p139 = pneg %p138
    // Predicated region
    $region29: #{feature_extractor_pallas.11} parent=5 // pred_check
      _
    $region30: #{feature_extractor_pallas.11} parent=5 // pred_check_branch
      %141 = sbr.rel (%p138) target = $region32
    $region31: #{feature_extractor_pallas.11} parent=5 // pred_region
      %s142 = ssub.s32 %s9, 1
      %p143 = scmp.lt.s32.totalorder %s14, 1
      %s144 = scalar_select %p143, %s14, 1
      %s145 = smul.addr %s144, 20
      %s146 = smul.addr %s145, 8
      %s147 = scalar_lea.vmem %s0, %s146
      %p148 = pneg %p35
      %p149 = pneg %p32
      %p150 = pneg %p56
      %p151 = pneg %p53
      %p152 = pneg %p77
      %p153 = pneg %p74
      %p154 = pneg %p103
      %p155 = pneg %p100
      %p156 = scmp.lt.s32.totalorder %s14, 1
      %s157 = scalar_select %p156, %s14, 1
      %s158 = smul.addr %s157, 8
      %s159 = smul.addr %s158, 8
      %s160 = scalar_lea.vmem %s3, %s159
      %p161 = scmp.lt.s32.totalorder %s14, 1
      %s162 = scalar_select %p161, %s14, 1
      %s163 = smul.addr %s162, 20
      %s164 = smul.addr %s163, 8
      %s165 = scalar_lea.vmem %s0, %s164
      %p166 = scmp.lt.s32.totalorder %s14, 1
      %s167 = scalar_select %p166, %s14, 1
      %s168 = smul.addr %s167, 8
      %s169 = smul.addr %s168, 8
      %s170 = scalar_lea.vmem %s3, %s169
      %v171 = vld [vmem:[%s2] sm:$0x1]
      %v173 = vperm.slane %v171, 0
      %v175 = vld [vmem:[%s165] sm:$0xff]
      %v176 = vld [vmem:[%s165 + $0x10] sm:$0xff]
      %v177 = vld [vmem:[%s165 + $0x20] sm:$0xff]
      %v178 = vld [vmem:[%s165 + $0x30] sm:$0xff]
      %v179 = vld [vmem:[%s165 + $0x40] sm:$0xff]
      %v180 = vld [vmem:[%s165 + $0x50] sm:$0xff]
      %v181 = vld [vmem:[%s165 + $0x60] sm:$0xff]
      %v182 = vld [vmem:[%s165 + $0x70] sm:$0xff]
      %v183 = vpack.c.bf16 %v176, %v175
      %v184 = vpack.c.bf16 %v178, %v177
      %v185 = vpack.c.bf16 %v180, %v179
      %v186 = vpack.c.bf16 %v182, %v181
      %v187 = vld [vmem:[%s1] sm:$0xf]
      %v188 = vld [vmem:[%s1 + $0x4] sm:$0xf]
      %v189 = vld [vmem:[%s1 + $0x8] sm:$0xf]
      %v190 = vld [vmem:[%s1 + $0xc] sm:$0xf]
      %v191 = vld [vmem:[%s1 + $0x10] sm:$0xf]
      %v192 = vld [vmem:[%s1 + $0x14] sm:$0xf]
      %v193 = vld [vmem:[%s1 + $0x18] sm:$0xf]
      %v194 = vld [vmem:[%s1 + $0x1c] sm:$0xf]
      %v195 = vld [vmem:[%s1 + $0x20] sm:$0xf]
      %v196 = vld [vmem:[%s1 + $0x24] sm:$0xf]
      %v197 = vld [vmem:[%s1 + $0x28] sm:$0xf]
      %v198 = vld [vmem:[%s1 + $0x2c] sm:$0xf]
      %v199 = vld [vmem:[%s1 + $0x30] sm:$0xf]
      %v200 = vld [vmem:[%s1 + $0x34] sm:$0xf]
      %v201 = vld [vmem:[%s1 + $0x38] sm:$0xf]
      %v202 = vld [vmem:[%s1 + $0x3c] sm:$0xf]
      %v219 = vunpack.c.l.b16 %v187
      %v220 = vunpack.c.l.b16 %v188
      %v221 = vunpack.c.l.b16 %v189
      %v222 = vunpack.c.l.b16 %v190
      %v223 = vunpack.c.l.b16 %v191
      %v224 = vunpack.c.l.b16 %v192
      %v225 = vunpack.c.l.b16 %v193
      %v226 = vunpack.c.l.b16 %v194
      %v227 = vunpack.c.l.b16 %v195
      %v228 = vunpack.c.l.b16 %v196
      %v229 = vunpack.c.l.b16 %v197
      %v230 = vunpack.c.l.b16 %v198
      %v231 = vunpack.c.l.b16 %v199
      %v232 = vunpack.c.l.b16 %v200
      %v233 = vunpack.c.l.b16 %v201
      %v234 = vunpack.c.l.b16 %v202
      %v235 = vpack.c.b16 %v220, %v219
      %v236 = vpack.c.b16 %v222, %v221
      %v237 = vpack.c.b16 %v224, %v223
      %v238 = vpack.c.b16 %v226, %v225
      %v239 = vpack.c.b16 %v228, %v227
      %v240 = vpack.c.b16 %v230, %v229
      %v241 = vpack.c.b16 %v232, %v231
      %v242 = vpack.c.b16 %v234, %v233
      %251 = vmatpush.bf16.msra.mxu0 %v242
      %252 = vmatpush.bf16.msra.mxu0 %v241
      %253 = vmatpush.bf16.msra.mxu0 %v240
      %254 = vmatpush.bf16.msra.mxu0 %v239
      %255 = vmatpush.bf16.msra.mxu0 %v238
      %256 = vmatpush.bf16.msra.mxu0 %v237
      %257 = vmatpush.bf16.msra.mxu0 %v236
      %258 = vmatpush.bf16.msra.mxu0 %v235
      %259 = vmatmul.bf16.gmra.mxu0 %v183
      %v260 = vpop.f32.mrf.mxu0
      %v261 = vadd.f32 0.0, %v260
      %v262 = vpop.f32.mrf.mxu0
      %v263 = vadd.f32 0.0, %v262
      %264 = vmatmul.bf16.gmra.mxu0 %v184
      %v265 = vpop.f32.mrf.mxu0
      %v266 = vadd.f32 0.0, %v265
      %v267 = vpop.f32.mrf.mxu0
      %v268 = vadd.f32 0.0, %v267
      %269 = vmatmul.bf16.gmra.mxu0 %v185
      %v270 = vpop.f32.mrf.mxu0
      %v271 = vadd.f32 0.0, %v270
      %v272 = vpop.f32.mrf.mxu0
      %v273 = vadd.f32 0.0, %v272
      %274 = vmatmul.bf16.gmra.mxu0 %v186
      %v275 = vpop.f32.mrf.mxu0
      %v276 = vadd.f32 0.0, %v275
      %v277 = vpop.f32.mrf.mxu0
      %v278 = vadd.f32 0.0, %v277
      %279 = vdwg.mxu0
      %v280 = vadd.f32 %v173, %v261
      %v281 = vadd.f32 %v173, %v263
      %v282 = vadd.f32 %v173, %v266
      %v283 = vadd.f32 %v173, %v268
      %v284 = vadd.f32 %v173, %v271
      %v285 = vadd.f32 %v173, %v273
      %v286 = vadd.f32 %v173, %v276
      %v287 = vadd.f32 %v173, %v278
      %v288 = vld [vmem:[%s165 + $0x1] sm:$0xff]
      %v289 = vld [vmem:[%s165 + $0x11] sm:$0xff]
      %v290 = vld [vmem:[%s165 + $0x21] sm:$0xff]
      %v291 = vld [vmem:[%s165 + $0x31] sm:$0xff]
      %v292 = vld [vmem:[%s165 + $0x41] sm:$0xff]
      %v293 = vld [vmem:[%s165 + $0x51] sm:$0xff]
      %v294 = vld [vmem:[%s165 + $0x61] sm:$0xff]
      %v295 = vld [vmem:[%s165 + $0x71] sm:$0xff]
      %v296 = vpack.c.bf16 %v289, %v288
      %v297 = vpack.c.bf16 %v291, %v290
      %v298 = vpack.c.bf16 %v293, %v292
      %v299 = vpack.c.bf16 %v295, %v294
      %s300 = scalar_lea.vmem %s1, 64
      %v301 = vld [vmem:[%s300] sm:$0xf]
      %v302 = vld [vmem:[%s300 + $0x4] sm:$0xf]
      %v303 = vld [vmem:[%s300 + $0x8] sm:$0xf]
      %v304 = vld [vmem:[%s300 + $0xc] sm:$0xf]
      %v305 = vld [vmem:[%s300 + $0x10] sm:$0xf]
      %v306 = vld [vmem:[%s300 + $0x14] sm:$0xf]
      %v307 = vld [vmem:[%s300 + $0x18] sm:$0xf]
      %v308 = vld [vmem:[%s300 + $0x1c] sm:$0xf]
      %v309 = vld [vmem:[%s300 + $0x20] sm:$0xf]
      %v310 = vld [vmem:[%s300 + $0x24] sm:$0xf]
      %v311 = vld [vmem:[%s300 + $0x28] sm:$0xf]
      %v312 = vld [vmem:[%s300 + $0x2c] sm:$0xf]
      %v313 = vld [vmem:[%s300 + $0x30] sm:$0xf]
      %v314 = vld [vmem:[%s300 + $0x34] sm:$0xf]
      %v315 = vld [vmem:[%s300 + $0x38] sm:$0xf]
      %v316 = vld [vmem:[%s300 + $0x3c] sm:$0xf]
      %v333 = vunpack.c.l.b16 %v301
      %v334 = vunpack.c.l.b16 %v302
      %v335 = vunpack.c.l.b16 %v303
      %v336 = vunpack.c.l.b16 %v304
      %v337 = vunpack.c.l.b16 %v305
      %v338 = vunpack.c.l.b16 %v306
      %v339 = vunpack.c.l.b16 %v307
      %v340 = vunpack.c.l.b16 %v308
      %v341 = vunpack.c.l.b16 %v309
      %v342 = vunpack.c.l.b16 %v310
      %v343 = vunpack.c.l.b16 %v311
      %v344 = vunpack.c.l.b16 %v312
      %v345 = vunpack.c.l.b16 %v313
      %v346 = vunpack.c.l.b16 %v314
      %v347 = vunpack.c.l.b16 %v315
      %v348 = vunpack.c.l.b16 %v316
      %v349 = vpack.c.b16 %v334, %v333
      %v350 = vpack.c.b16 %v336, %v335
      %v351 = vpack.c.b16 %v338, %v337
      %v352 = vpack.c.b16 %v340, %v339
      %v353 = vpack.c.b16 %v342, %v341
      %v354 = vpack.c.b16 %v344, %v343
      %v355 = vpack.c.b16 %v346, %v345
      %v356 = vpack.c.b16 %v348, %v347
      %365 = vmatpush.bf16.msra.mxu0 %v356
      %366 = vmatpush.bf16.msra.mxu0 %v355
      %367 = vmatpush.bf16.msra.mxu0 %v354
      %368 = vmatpush.bf16.msra.mxu0 %v353
      %369 = vmatpush.bf16.msra.mxu0 %v352
      %370 = vmatpush.bf16.msra.mxu0 %v351
      %371 = vmatpush.bf16.msra.mxu0 %v350
      %372 = vmatpush.bf16.msra.mxu0 %v349
      %373 = vmatmul.bf16.gmra.mxu0 %v296
      %v374 = vpop.f32.mrf.mxu0
      %v375 = vadd.f32 0.0, %v374
      %v376 = vpop.f32.mrf.mxu0
      %v377 = vadd.f32 0.0, %v376
      %378 = vmatmul.bf16.gmra.mxu0 %v297
      %v379 = vpop.f32.mrf.mxu0
      %v380 = vadd.f32 0.0, %v379
      %v381 = vpop.f32.mrf.mxu0
      %v382 = vadd.f32 0.0, %v381
      %383 = vmatmul.bf16.gmra.mxu0 %v298
      %v384 = vpop.f32.mrf.mxu0
      %v385 = vadd.f32 0.0, %v384
      %v386 = vpop.f32.mrf.mxu0
      %v387 = vadd.f32 0.0, %v386
      %388 = vmatmul.bf16.gmra.mxu0 %v299
      %v389 = vpop.f32.mrf.mxu0
      %v390 = vadd.f32 0.0, %v389
      %v391 = vpop.f32.mrf.mxu0
      %v392 = vadd.f32 0.0, %v391
      %393 = vdwg.mxu0
      %v394 = vadd.f32 %v280, %v375
      %v395 = vadd.f32 %v281, %v377
      %v396 = vadd.f32 %v282, %v380
      %v397 = vadd.f32 %v283, %v382
      %v398 = vadd.f32 %v284, %v385
      %v399 = vadd.f32 %v285, %v387
      %v400 = vadd.f32 %v286, %v390
      %v401 = vadd.f32 %v287, %v392
      %v402 = vld [vmem:[%s165 + $0x2] sm:$0xff]
      %v403 = vld [vmem:[%s165 + $0x12] sm:$0xff]
      %v404 = vld [vmem:[%s165 + $0x22] sm:$0xff]
      %v405 = vld [vmem:[%s165 + $0x32] sm:$0xff]
      %v406 = vld [vmem:[%s165 + $0x42] sm:$0xff]
      %v407 = vld [vmem:[%s165 + $0x52] sm:$0xff]
      %v408 = vld [vmem:[%s165 + $0x62] sm:$0xff]
      %v409 = vld [vmem:[%s165 + $0x72] sm:$0xff]
      %v410 = vpack.c.bf16 %v403, %v402
      %v411 = vpack.c.bf16 %v405, %v404
      %v412 = vpack.c.bf16 %v407, %v406
      %v413 = vpack.c.bf16 %v409, %v408
      %s414 = scalar_lea.vmem %s1, 128
      %v415 = vld [vmem:[%s414] sm:$0xf]
      %v416 = vld [vmem:[%s414 + $0x4] sm:$0xf]
      %v417 = vld [vmem:[%s414 + $0x8] sm:$0xf]
      %v418 = vld [vmem:[%s414 + $0xc] sm:$0xf]
      %v419 = vld [vmem:[%s414 + $0x10] sm:$0xf]
      %v420 = vld [vmem:[%s414 + $0x14] sm:$0xf]
      %v421 = vld [vmem:[%s414 + $0x18] sm:$0xf]
      %v422 = vld [vmem:[%s414 + $0x1c] sm:$0xf]
      %v423 = vld [vmem:[%s414 + $0x20] sm:$0xf]
      %v424 = vld [vmem:[%s414 + $0x24] sm:$0xf]
      %v425 = vld [vmem:[%s414 + $0x28] sm:$0xf]
      %v426 = vld [vmem:[%s414 + $0x2c] sm:$0xf]
      %v427 = vld [vmem:[%s414 + $0x30] sm:$0xf]
      %v428 = vld [vmem:[%s414 + $0x34] sm:$0xf]
      %v429 = vld [vmem:[%s414 + $0x38] sm:$0xf]
      %v430 = vld [vmem:[%s414 + $0x3c] sm:$0xf]
      %v447 = vunpack.c.l.b16 %v415
      %v448 = vunpack.c.l.b16 %v416
      %v449 = vunpack.c.l.b16 %v417
      %v450 = vunpack.c.l.b16 %v418
      %v451 = vunpack.c.l.b16 %v419
      %v452 = vunpack.c.l.b16 %v420
      %v453 = vunpack.c.l.b16 %v421
      %v454 = vunpack.c.l.b16 %v422
      %v455 = vunpack.c.l.b16 %v423
      %v456 = vunpack.c.l.b16 %v424
      %v457 = vunpack.c.l.b16 %v425
      %v458 = vunpack.c.l.b16 %v426
      %v459 = vunpack.c.l.b16 %v427
      %v460 = vunpack.c.l.b16 %v428
      %v461 = vunpack.c.l.b16 %v429
      %v462 = vunpack.c.l.b16 %v430
      %v463 = vpack.c.b16 %v448, %v447
      %v464 = vpack.c.b16 %v450, %v449
      %v465 = vpack.c.b16 %v452, %v451
      %v466 = vpack.c.b16 %v454, %v453
      %v467 = vpack.c.b16 %v456, %v455
      %v468 = vpack.c.b16 %v458, %v457
      %v469 = vpack.c.b16 %v460, %v459
      %v470 = vpack.c.b16 %v462, %v461
      %479 = vmatpush.bf16.msra.mxu0 %v470
      %480 = vmatpush.bf16.msra.mxu0 %v469
      %481 = vmatpush.bf16.msra.mxu0 %v468
      %482 = vmatpush.bf16.msra.mxu0 %v467
      %483 = vmatpush.bf16.msra.mxu0 %v466
      %484 = vmatpush.bf16.msra.mxu0 %v465
      %485 = vmatpush.bf16.msra.mxu0 %v464
      %486 = vmatpush.bf16.msra.mxu0 %v463
      %487 = vmatmul.bf16.gmra.mxu0 %v410
      %v488 = vpop.f32.mrf.mxu0
      %v489 = vadd.f32 0.0, %v488
      %v490 = vpop.f32.mrf.mxu0
      %v491 = vadd.f32 0.0, %v490
      %492 = vmatmul.bf16.gmra.mxu0 %v411
      %v493 = vpop.f32.mrf.mxu0
      %v494 = vadd.f32 0.0, %v493
      %v495 = vpop.f32.mrf.mxu0
      %v496 = vadd.f32 0.0, %v495
      %497 = vmatmul.bf16.gmra.mxu0 %v412
      %v498 = vpop.f32.mrf.mxu0
      %v499 = vadd.f32 0.0, %v498
      %v500 = vpop.f32.mrf.mxu0
      %v501 = vadd.f32 0.0, %v500
      %502 = vmatmul.bf16.gmra.mxu0 %v413
      %v503 = vpop.f32.mrf.mxu0
      %v504 = vadd.f32 0.0, %v503
      %v505 = vpop.f32.mrf.mxu0
      %v506 = vadd.f32 0.0, %v505
      %507 = vdwg.mxu0
      %v508 = vadd.f32 %v394, %v489
      %v509 = vadd.f32 %v395, %v491
      %v510 = vadd.f32 %v396, %v494
      %v511 = vadd.f32 %v397, %v496
      %v512 = vadd.f32 %v398, %v499
      %v513 = vadd.f32 %v399, %v501
      %v514 = vadd.f32 %v400, %v504
      %v515 = vadd.f32 %v401, %v506
      %s516 = scalar_lea.vmem %s165, 16
      %v517 = vld [vmem:[%s516] sm:$0xff]
      %v518 = vld [vmem:[%s516 + $0x10] sm:$0xff]
      %v519 = vld [vmem:[%s516 + $0x20] sm:$0xff]
      %v520 = vld [vmem:[%s516 + $0x30] sm:$0xff]
      %v521 = vld [vmem:[%s516 + $0x40] sm:$0xff]
      %v522 = vld [vmem:[%s516 + $0x50] sm:$0xff]
      %v523 = vld [vmem:[%s516 + $0x60] sm:$0xff]
      %v524 = vld [vmem:[%s516 + $0x70] sm:$0xff]
      %v525 = vpack.c.bf16 %v518, %v517
      %v526 = vpack.c.bf16 %v520, %v519
      %v527 = vpack.c.bf16 %v522, %v521
      %v528 = vpack.c.bf16 %v524, %v523
      %s529 = scalar_lea.vmem %s1, 192
      %v530 = vld [vmem:[%s529] sm:$0xf]
      %v531 = vld [vmem:[%s529 + $0x4] sm:$0xf]
      %v532 = vld [vmem:[%s529 + $0x8] sm:$0xf]
      %v533 = vld [vmem:[%s529 + $0xc] sm:$0xf]
      %v534 = vld [vmem:[%s529 + $0x10] sm:$0xf]
      %v535 = vld [vmem:[%s529 + $0x14] sm:$0xf]
      %v536 = vld [vmem:[%s529 + $0x18] sm:$0xf]
      %v537 = vld [vmem:[%s529 + $0x1c] sm:$0xf]
      %v538 = vld [vmem:[%s529 + $0x20] sm:$0xf]
      %v539 = vld [vmem:[%s529 + $0x24] sm:$0xf]
      %v540 = vld [vmem:[%s529 + $0x28] sm:$0xf]
      %v541 = vld [vmem:[%s529 + $0x2c] sm:$0xf]
      %v542 = vld [vmem:[%s529 + $0x30] sm:$0xf]
      %v543 = vld [vmem:[%s529 + $0x34] sm:$0xf]
      %v544 = vld [vmem:[%s529 + $0x38] sm:$0xf]
      %v545 = vld [vmem:[%s529 + $0x3c] sm:$0xf]
      %v562 = vunpack.c.l.b16 %v530
      %v563 = vunpack.c.l.b16 %v531
      %v564 = vunpack.c.l.b16 %v532
      %v565 = vunpack.c.l.b16 %v533
      %v566 = vunpack.c.l.b16 %v534
      %v567 = vunpack.c.l.b16 %v535
      %v568 = vunpack.c.l.b16 %v536
      %v569 = vunpack.c.l.b16 %v537
      %v570 = vunpack.c.l.b16 %v538
      %v571 = vunpack.c.l.b16 %v539
      %v572 = vunpack.c.l.b16 %v540
      %v573 = vunpack.c.l.b16 %v541
      %v574 = vunpack.c.l.b16 %v542
      %v575 = vunpack.c.l.b16 %v543
      %v576 = vunpack.c.l.b16 %v544
      %v577 = vunpack.c.l.b16 %v545
      %v578 = vpack.c.b16 %v563, %v562
      %v579 = vpack.c.b16 %v565, %v564
      %v580 = vpack.c.b16 %v567, %v566
      %v581 = vpack.c.b16 %v569, %v568
      %v582 = vpack.c.b16 %v571, %v570
      %v583 = vpack.c.b16 %v573, %v572
      %v584 = vpack.c.b16 %v575, %v574
      %v585 = vpack.c.b16 %v577, %v576
      %594 = vmatpush.bf16.msra.mxu0 %v585
      %595 = vmatpush.bf16.msra.mxu0 %v584
      %596 = vmatpush.bf16.msra.mxu0 %v583
      %597 = vmatpush.bf16.msra.mxu0 %v582
      %598 = vmatpush.bf16.msra.mxu0 %v581
      %599 = vmatpush.bf16.msra.mxu0 %v580
      %600 = vmatpush.bf16.msra.mxu0 %v579
      %601 = vmatpush.bf16.msra.mxu0 %v578
      %602 = vmatmul.bf16.gmra.mxu0 %v525
      %v603 = vpop.f32.mrf.mxu0
      %v604 = vadd.f32 0.0, %v603
      %v605 = vpop.f32.mrf.mxu0
      %v606 = vadd.f32 0.0, %v605
      %607 = vmatmul.bf16.gmra.mxu0 %v526
      %v608 = vpop.f32.mrf.mxu0
      %v609 = vadd.f32 0.0, %v608
      %v610 = vpop.f32.mrf.mxu0
      %v611 = vadd.f32 0.0, %v610
      %612 = vmatmul.bf16.gmra.mxu0 %v527
      %v613 = vpop.f32.mrf.mxu0
      %v614 = vadd.f32 0.0, %v613
      %v615 = vpop.f32.mrf.mxu0
      %v616 = vadd.f32 0.0, %v615
      %617 = vmatmul.bf16.gmra.mxu0 %v528
      %v618 = vpop.f32.mrf.mxu0
      %v619 = vadd.f32 0.0, %v618
      %v620 = vpop.f32.mrf.mxu0
      %v621 = vadd.f32 0.0, %v620
      %622 = vdwg.mxu0
      %v623 = vadd.f32 %v508, %v604
      %v624 = vadd.f32 %v509, %v606
      %v625 = vadd.f32 %v510, %v609
      %v626 = vadd.f32 %v511, %v611
      %v627 = vadd.f32 %v512, %v614
      %v628 = vadd.f32 %v513, %v616
      %v629 = vadd.f32 %v514, %v619
      %v630 = vadd.f32 %v515, %v621
      %v631 = vld [vmem:[%s516 + $0x1] sm:$0xff]
      %v632 = vld [vmem:[%s516 + $0x11] sm:$0xff]
      %v633 = vld [vmem:[%s516 + $0x21] sm:$0xff]
      %v634 = vld [vmem:[%s516 + $0x31] sm:$0xff]
      %v635 = vld [vmem:[%s516 + $0x41] sm:$0xff]
      %v636 = vld [vmem:[%s516 + $0x51] sm:$0xff]
      %v637 = vld [vmem:[%s516 + $0x61] sm:$0xff]
      %v638 = vld [vmem:[%s516 + $0x71] sm:$0xff]
      %v639 = vpack.c.bf16 %v632, %v631
      %v640 = vpack.c.bf16 %v634, %v633
      %v641 = vpack.c.bf16 %v636, %v635
      %v642 = vpack.c.bf16 %v638, %v637
      %s643 = scalar_lea.vmem %s1, 256
      %v644 = vld [vmem:[%s643] sm:$0xf]
      %v645 = vld [vmem:[%s643 + $0x4] sm:$0xf]
      %v646 = vld [vmem:[%s643 + $0x8] sm:$0xf]
      %v647 = vld [vmem:[%s643 + $0xc] sm:$0xf]
      %v648 = vld [vmem:[%s643 + $0x10] sm:$0xf]
      %v649 = vld [vmem:[%s643 + $0x14] sm:$0xf]
      %v650 = vld [vmem:[%s643 + $0x18] sm:$0xf]
      %v651 = vld [vmem:[%s643 + $0x1c] sm:$0xf]
      %v652 = vld [vmem:[%s643 + $0x20] sm:$0xf]
      %v653 = vld [vmem:[%s643 + $0x24] sm:$0xf]
      %v654 = vld [vmem:[%s643 + $0x28] sm:$0xf]
      %v655 = vld [vmem:[%s643 + $0x2c] sm:$0xf]
      %v656 = vld [vmem:[%s643 + $0x30] sm:$0xf]
      %v657 = vld [vmem:[%s643 + $0x34] sm:$0xf]
      %v658 = vld [vmem:[%s643 + $0x38] sm:$0xf]
      %v659 = vld [vmem:[%s643 + $0x3c] sm:$0xf]
      %v676 = vunpack.c.l.b16 %v644
      %v677 = vunpack.c.l.b16 %v645
      %v678 = vunpack.c.l.b16 %v646
      %v679 = vunpack.c.l.b16 %v647
      %v680 = vunpack.c.l.b16 %v648
      %v681 = vunpack.c.l.b16 %v649
      %v682 = vunpack.c.l.b16 %v650
      %v683 = vunpack.c.l.b16 %v651
      %v684 = vunpack.c.l.b16 %v652
      %v685 = vunpack.c.l.b16 %v653
      %v686 = vunpack.c.l.b16 %v654
      %v687 = vunpack.c.l.b16 %v655
      %v688 = vunpack.c.l.b16 %v656
      %v689 = vunpack.c.l.b16 %v657
      %v690 = vunpack.c.l.b16 %v658
      %v691 = vunpack.c.l.b16 %v659
      %v692 = vpack.c.b16 %v677, %v676
      %v693 = vpack.c.b16 %v679, %v678
      %v694 = vpack.c.b16 %v681, %v680
      %v695 = vpack.c.b16 %v683, %v682
      %v696 = vpack.c.b16 %v685, %v684
      %v697 = vpack.c.b16 %v687, %v686
      %v698 = vpack.c.b16 %v689, %v688
      %v699 = vpack.c.b16 %v691, %v690
      %708 = vmatpush.bf16.msra.mxu0 %v699
      %709 = vmatpush.bf16.msra.mxu0 %v698
      %710 = vmatpush.bf16.msra.mxu0 %v697
      %711 = vmatpush.bf16.msra.mxu0 %v696
      %712 = vmatpush.bf16.msra.mxu0 %v695
      %713 = vmatpush.bf16.msra.mxu0 %v694
      %714 = vmatpush.bf16.msra.mxu0 %v693
      %715 = vmatpush.bf16.msra.mxu0 %v692
      %716 = vmatmul.bf16.gmra.mxu0 %v639
      %v717 = vpop.f32.mrf.mxu0
      %v718 = vadd.f32 0.0, %v717
      %v719 = vpop.f32.mrf.mxu0
      %v720 = vadd.f32 0.0, %v719
      %721 = vmatmul.bf16.gmra.mxu0 %v640
      %v722 = vpop.f32.mrf.mxu0
      %v723 = vadd.f32 0.0, %v722
      %v724 = vpop.f32.mrf.mxu0
      %v725 = vadd.f32 0.0, %v724
      %726 = vmatmul.bf16.gmra.mxu0 %v641
      %v727 = vpop.f32.mrf.mxu0
      %v728 = vadd.f32 0.0, %v727
      %v729 = vpop.f32.mrf.mxu0
      %v730 = vadd.f32 0.0, %v729
      %731 = vmatmul.bf16.gmra.mxu0 %v642
      %v732 = vpop.f32.mrf.mxu0
      %v733 = vadd.f32 0.0, %v732
      %v734 = vpop.f32.mrf.mxu0
      %v735 = vadd.f32 0.0, %v734
      %736 = vdwg.mxu0
      %v737 = vadd.f32 %v623, %v718
      %v738 = vadd.f32 %v624, %v720
      %v739 = vadd.f32 %v625, %v723
      %v740 = vadd.f32 %v626, %v725
      %v741 = vadd.f32 %v627, %v728
      %v742 = vadd.f32 %v628, %v730
      %v743 = vadd.f32 %v629, %v733
      %v744 = vadd.f32 %v630, %v735
      %v745 = vld [vmem:[%s516 + $0x2] sm:$0xff]
      %v746 = vld [vmem:[%s516 + $0x12] sm:$0xff]
      %v747 = vld [vmem:[%s516 + $0x22] sm:$0xff]
      %v748 = vld [vmem:[%s516 + $0x32] sm:$0xff]
      %v749 = vld [vmem:[%s516 + $0x42] sm:$0xff]
      %v750 = vld [vmem:[%s516 + $0x52] sm:$0xff]
      %v751 = vld [vmem:[%s516 + $0x62] sm:$0xff]
      %v752 = vld [vmem:[%s516 + $0x72] sm:$0xff]
      %v753 = vpack.c.bf16 %v746, %v745
      %v754 = vpack.c.bf16 %v748, %v747
      %v755 = vpack.c.bf16 %v750, %v749
      %v756 = vpack.c.bf16 %v752, %v751
      %s757 = scalar_lea.vmem %s1, 320
      %v758 = vld [vmem:[%s757] sm:$0xf]
      %v759 = vld [vmem:[%s757 + $0x4] sm:$0xf]
      %v760 = vld [vmem:[%s757 + $0x8] sm:$0xf]
      %v761 = vld [vmem:[%s757 + $0xc] sm:$0xf]
      %v762 = vld [vmem:[%s757 + $0x10] sm:$0xf]
      %v763 = vld [vmem:[%s757 + $0x14] sm:$0xf]
      %v764 = vld [vmem:[%s757 + $0x18] sm:$0xf]
      %v765 = vld [vmem:[%s757 + $0x1c] sm:$0xf]
      %v766 = vld [vmem:[%s757 + $0x20] sm:$0xf]
      %v767 = vld [vmem:[%s757 + $0x24] sm:$0xf]
      %v768 = vld [vmem:[%s757 + $0x28] sm:$0xf]
      %v769 = vld [vmem:[%s757 + $0x2c] sm:$0xf]
      %v770 = vld [vmem:[%s757 + $0x30] sm:$0xf]
      %v771 = vld [vmem:[%s757 + $0x34] sm:$0xf]
      %v772 = vld [vmem:[%s757 + $0x38] sm:$0xf]
      %v773 = vld [vmem:[%s757 + $0x3c] sm:$0xf]
      %v790 = vunpack.c.l.b16 %v758
      %v791 = vunpack.c.l.b16 %v759
      %v792 = vunpack.c.l.b16 %v760
      %v793 = vunpack.c.l.b16 %v761
      %v794 = vunpack.c.l.b16 %v762
      %v795 = vunpack.c.l.b16 %v763
      %v796 = vunpack.c.l.b16 %v764
      %v797 = vunpack.c.l.b16 %v765
      %v798 = vunpack.c.l.b16 %v766
      %v799 = vunpack.c.l.b16 %v767
      %v800 = vunpack.c.l.b16 %v768
      %v801 = vunpack.c.l.b16 %v769
      %v802 = vunpack.c.l.b16 %v770
      %v803 = vunpack.c.l.b16 %v771
      %v804 = vunpack.c.l.b16 %v772
      %v805 = vunpack.c.l.b16 %v773
      %v806 = vpack.c.b16 %v791, %v790
      %v807 = vpack.c.b16 %v793, %v792
      %v808 = vpack.c.b16 %v795, %v794
      %v809 = vpack.c.b16 %v797, %v796
      %v810 = vpack.c.b16 %v799, %v798
      %v811 = vpack.c.b16 %v801, %v800
      %v812 = vpack.c.b16 %v803, %v802
      %v813 = vpack.c.b16 %v805, %v804
      %822 = vmatpush.bf16.msra.mxu0 %v813
      %823 = vmatpush.bf16.msra.mxu0 %v812
      %824 = vmatpush.bf16.msra.mxu0 %v811
      %825 = vmatpush.bf16.msra.mxu0 %v810
      %826 = vmatpush.bf16.msra.mxu0 %v809
      %827 = vmatpush.bf16.msra.mxu0 %v808
      %828 = vmatpush.bf16.msra.mxu0 %v807
      %829 = vmatpush.bf16.msra.mxu0 %v806
      %830 = vmatmul.bf16.gmra.mxu0 %v753
      %v831 = vpop.f32.mrf.mxu0
      %v832 = vadd.f32 0.0, %v831
      %v833 = vpop.f32.mrf.mxu0
      %v834 = vadd.f32 0.0, %v833
      %835 = vmatmul.bf16.gmra.mxu0 %v754
      %v836 = vpop.f32.mrf.mxu0
      %v837 = vadd.f32 0.0, %v836
      %v838 = vpop.f32.mrf.mxu0
      %v839 = vadd.f32 0.0, %v838
      %840 = vmatmul.bf16.gmra.mxu0 %v755
      %v841 = vpop.f32.mrf.mxu0
      %v842 = vadd.f32 0.0, %v841
      %v843 = vpop.f32.mrf.mxu0
      %v844 = vadd.f32 0.0, %v843
      %845 = vmatmul.bf16.gmra.mxu0 %v756
      %v846 = vpop.f32.mrf.mxu0
      %v847 = vadd.f32 0.0, %v846
      %v848 = vpop.f32.mrf.mxu0
      %v849 = vadd.f32 0.0, %v848
      %850 = vdwg.mxu0
      %v851 = vadd.f32 %v737, %v832
      %v852 = vadd.f32 %v738, %v834
      %v853 = vadd.f32 %v739, %v837
      %v854 = vadd.f32 %v740, %v839
      %v855 = vadd.f32 %v741, %v842
      %v856 = vadd.f32 %v742, %v844
      %v857 = vadd.f32 %v743, %v847
      %v858 = vadd.f32 %v744, %v849
      %s859 = scalar_lea.vmem %s165, 32
      %v860 = vld [vmem:[%s859] sm:$0xff]
      %v861 = vld [vmem:[%s859 + $0x10] sm:$0xff]
      %v862 = vld [vmem:[%s859 + $0x20] sm:$0xff]
      %v863 = vld [vmem:[%s859 + $0x30] sm:$0xff]
      %v864 = vld [vmem:[%s859 + $0x40] sm:$0xff]
      %v865 = vld [vmem:[%s859 + $0x50] sm:$0xff]
      %v866 = vld [vmem:[%s859 + $0x60] sm:$0xff]
      %v867 = vld [vmem:[%s859 + $0x70] sm:$0xff]
      %v868 = vpack.c.bf16 %v861, %v860
      %v869 = vpack.c.bf16 %v863, %v862
      %v870 = vpack.c.bf16 %v865, %v864
      %v871 = vpack.c.bf16 %v867, %v866
      %s872 = scalar_lea.vmem %s1, 384
      %v873 = vld [vmem:[%s872] sm:$0xf]
      %v874 = vld [vmem:[%s872 + $0x4] sm:$0xf]
      %v875 = vld [vmem:[%s872 + $0x8] sm:$0xf]
      %v876 = vld [vmem:[%s872 + $0xc] sm:$0xf]
      %v877 = vld [vmem:[%s872 + $0x10] sm:$0xf]
      %v878 = vld [vmem:[%s872 + $0x14] sm:$0xf]
      %v879 = vld [vmem:[%s872 + $0x18] sm:$0xf]
      %v880 = vld [vmem:[%s872 + $0x1c] sm:$0xf]
      %v881 = vld [vmem:[%s872 + $0x20] sm:$0xf]
      %v882 = vld [vmem:[%s872 + $0x24] sm:$0xf]
      %v883 = vld [vmem:[%s872 + $0x28] sm:$0xf]
      %v884 = vld [vmem:[%s872 + $0x2c] sm:$0xf]
      %v885 = vld [vmem:[%s872 + $0x30] sm:$0xf]
      %v886 = vld [vmem:[%s872 + $0x34] sm:$0xf]
      %v887 = vld [vmem:[%s872 + $0x38] sm:$0xf]
      %v888 = vld [vmem:[%s872 + $0x3c] sm:$0xf]
      %v905 = vunpack.c.l.b16 %v873
      %v906 = vunpack.c.l.b16 %v874
      %v907 = vunpack.c.l.b16 %v875
      %v908 = vunpack.c.l.b16 %v876
      %v909 = vunpack.c.l.b16 %v877
      %v910 = vunpack.c.l.b16 %v878
      %v911 = vunpack.c.l.b16 %v879
      %v912 = vunpack.c.l.b16 %v880
      %v913 = vunpack.c.l.b16 %v881
      %v914 = vunpack.c.l.b16 %v882
      %v915 = vunpack.c.l.b16 %v883
      %v916 = vunpack.c.l.b16 %v884
      %v917 = vunpack.c.l.b16 %v885
      %v918 = vunpack.c.l.b16 %v886
      %v919 = vunpack.c.l.b16 %v887
      %v920 = vunpack.c.l.b16 %v888
      %v921 = vpack.c.b16 %v906, %v905
      %v922 = vpack.c.b16 %v908, %v907
      %v923 = vpack.c.b16 %v910, %v909
      %v924 = vpack.c.b16 %v912, %v911
      %v925 = vpack.c.b16 %v914, %v913
      %v926 = vpack.c.b16 %v916, %v915
      %v927 = vpack.c.b16 %v918, %v917
      %v928 = vpack.c.b16 %v920, %v919
      %937 = vmatpush.bf16.msra.mxu0 %v928
      %938 = vmatpush.bf16.msra.mxu0 %v927
      %939 = vmatpush.bf16.msra.mxu0 %v926
      %940 = vmatpush.bf16.msra.mxu0 %v925
      %941 = vmatpush.bf16.msra.mxu0 %v924
      %942 = vmatpush.bf16.msra.mxu0 %v923
      %943 = vmatpush.bf16.msra.mxu0 %v922
      %944 = vmatpush.bf16.msra.mxu0 %v921
      %945 = vmatmul.bf16.gmra.mxu0 %v868
      %v946 = vpop.f32.mrf.mxu0
      %v947 = vadd.f32 0.0, %v946
      %v948 = vpop.f32.mrf.mxu0
      %v949 = vadd.f32 0.0, %v948
      %950 = vmatmul.bf16.gmra.mxu0 %v869
      %v951 = vpop.f32.mrf.mxu0
      %v952 = vadd.f32 0.0, %v951
      %v953 = vpop.f32.mrf.mxu0
      %v954 = vadd.f32 0.0, %v953
      %955 = vmatmul.bf16.gmra.mxu0 %v870
      %v956 = vpop.f32.mrf.mxu0
      %v957 = vadd.f32 0.0, %v956
      %v958 = vpop.f32.mrf.mxu0
      %v959 = vadd.f32 0.0, %v958
      %960 = vmatmul.bf16.gmra.mxu0 %v871
      %v961 = vpop.f32.mrf.mxu0
      %v962 = vadd.f32 0.0, %v961
      %v963 = vpop.f32.mrf.mxu0
      %v964 = vadd.f32 0.0, %v963
      %965 = vdwg.mxu0
      %v966 = vadd.f32 %v851, %v947
      %v967 = vadd.f32 %v852, %v949
      %v968 = vadd.f32 %v853, %v952
      %v969 = vadd.f32 %v854, %v954
      %v970 = vadd.f32 %v855, %v957
      %v971 = vadd.f32 %v856, %v959
      %v972 = vadd.f32 %v857, %v962
      %v973 = vadd.f32 %v858, %v964
      %v974 = vld [vmem:[%s859 + $0x1] sm:$0xff]
      %v975 = vld [vmem:[%s859 + $0x11] sm:$0xff]
      %v976 = vld [vmem:[%s859 + $0x21] sm:$0xff]
      %v977 = vld [vmem:[%s859 + $0x31] sm:$0xff]
      %v978 = vld [vmem:[%s859 + $0x41] sm:$0xff]
      %v979 = vld [vmem:[%s859 + $0x51] sm:$0xff]
      %v980 = vld [vmem:[%s859 + $0x61] sm:$0xff]
      %v981 = vld [vmem:[%s859 + $0x71] sm:$0xff]
      %v982 = vpack.c.bf16 %v975, %v974
      %v983 = vpack.c.bf16 %v977, %v976
      %v984 = vpack.c.bf16 %v979, %v978
      %v985 = vpack.c.bf16 %v981, %v980
      %s986 = scalar_lea.vmem %s1, 448
      %v987 = vld [vmem:[%s986] sm:$0xf]
      %v988 = vld [vmem:[%s986 + $0x4] sm:$0xf]
      %v989 = vld [vmem:[%s986 + $0x8] sm:$0xf]
      %v990 = vld [vmem:[%s986 + $0xc] sm:$0xf]
      %v991 = vld [vmem:[%s986 + $0x10] sm:$0xf]
      %v992 = vld [vmem:[%s986 + $0x14] sm:$0xf]
      %v993 = vld [vmem:[%s986 + $0x18] sm:$0xf]
      %v994 = vld [vmem:[%s986 + $0x1c] sm:$0xf]
      %v995 = vld [vmem:[%s986 + $0x20] sm:$0xf]
      %v996 = vld [vmem:[%s986 + $0x24] sm:$0xf]
      %v997 = vld [vmem:[%s986 + $0x28] sm:$0xf]
      %v998 = vld [vmem:[%s986 + $0x2c] sm:$0xf]
      %v999 = vld [vmem:[%s986 + $0x30] sm:$0xf]
      %v1000 = vld [vmem:[%s986 + $0x34] sm:$0xf]
      %v1001 = vld [vmem:[%s986 + $0x38] sm:$0xf]
      %v1002 = vld [vmem:[%s986 + $0x3c] sm:$0xf]
      %v1019 = vunpack.c.l.b16 %v987
      %v1020 = vunpack.c.l.b16 %v988
      %v1021 = vunpack.c.l.b16 %v989
      %v1022 = vunpack.c.l.b16 %v990
      %v1023 = vunpack.c.l.b16 %v991
      %v1024 = vunpack.c.l.b16 %v992
      %v1025 = vunpack.c.l.b16 %v993
      %v1026 = vunpack.c.l.b16 %v994
      %v1027 = vunpack.c.l.b16 %v995
      %v1028 = vunpack.c.l.b16 %v996
      %v1029 = vunpack.c.l.b16 %v997
      %v1030 = vunpack.c.l.b16 %v998
      %v1031 = vunpack.c.l.b16 %v999
      %v1032 = vunpack.c.l.b16 %v1000
      %v1033 = vunpack.c.l.b16 %v1001
      %v1034 = vunpack.c.l.b16 %v1002
      %v1035 = vpack.c.b16 %v1020, %v1019
      %v1036 = vpack.c.b16 %v1022, %v1021
      %v1037 = vpack.c.b16 %v1024, %v1023
      %v1038 = vpack.c.b16 %v1026, %v1025
      %v1039 = vpack.c.b16 %v1028, %v1027
      %v1040 = vpack.c.b16 %v1030, %v1029
      %v1041 = vpack.c.b16 %v1032, %v1031
      %v1042 = vpack.c.b16 %v1034, %v1033
      %1051 = vmatpush.bf16.msra.mxu0 %v1042
      %1052 = vmatpush.bf16.msra.mxu0 %v1041
      %1053 = vmatpush.bf16.msra.mxu0 %v1040
      %1054 = vmatpush.bf16.msra.mxu0 %v1039
      %1055 = vmatpush.bf16.msra.mxu0 %v1038
      %1056 = vmatpush.bf16.msra.mxu0 %v1037
      %1057 = vmatpush.bf16.msra.mxu0 %v1036
      %1058 = vmatpush.bf16.msra.mxu0 %v1035
      %1059 = vmatmul.bf16.gmra.mxu0 %v982
      %v1060 = vpop.f32.mrf.mxu0
      %v1061 = vadd.f32 0.0, %v1060
      %v1062 = vpop.f32.mrf.mxu0
      %v1063 = vadd.f32 0.0, %v1062
      %1064 = vmatmul.bf16.gmra.mxu0 %v983
      %v1065 = vpop.f32.mrf.mxu0
      %v1066 = vadd.f32 0.0, %v1065
      %v1067 = vpop.f32.mrf.mxu0
      %v1068 = vadd.f32 0.0, %v1067
      %1069 = vmatmul.bf16.gmra.mxu0 %v984
      %v1070 = vpop.f32.mrf.mxu0
      %v1071 = vadd.f32 0.0, %v1070
      %v1072 = vpop.f32.mrf.mxu0
      %v1073 = vadd.f32 0.0, %v1072
      %1074 = vmatmul.bf16.gmra.mxu0 %v985
      %v1075 = vpop.f32.mrf.mxu0
      %v1076 = vadd.f32 0.0, %v1075
      %v1077 = vpop.f32.mrf.mxu0
      %v1078 = vadd.f32 0.0, %v1077
      %1079 = vdwg.mxu0
      %v1080 = vadd.f32 %v966, %v1061
      %v1081 = vadd.f32 %v967, %v1063
      %v1082 = vadd.f32 %v968, %v1066
      %v1083 = vadd.f32 %v969, %v1068
      %v1084 = vadd.f32 %v970, %v1071
      %v1085 = vadd.f32 %v971, %v1073
      %v1086 = vadd.f32 %v972, %v1076
      %v1087 = vadd.f32 %v973, %v1078
      %v1088 = vld [vmem:[%s859 + $0x2] sm:$0xff]
      %v1089 = vld [vmem:[%s859 + $0x12] sm:$0xff]
      %v1090 = vld [vmem:[%s859 + $0x22] sm:$0xff]
      %v1091 = vld [vmem:[%s859 + $0x32] sm:$0xff]
      %v1092 = vld [vmem:[%s859 + $0x42] sm:$0xff]
      %v1093 = vld [vmem:[%s859 + $0x52] sm:$0xff]
      %v1094 = vld [vmem:[%s859 + $0x62] sm:$0xff]
      %v1095 = vld [vmem:[%s859 + $0x72] sm:$0xff]
      %v1096 = vpack.c.bf16 %v1089, %v1088
      %v1097 = vpack.c.bf16 %v1091, %v1090
      %v1098 = vpack.c.bf16 %v1093, %v1092
      %v1099 = vpack.c.bf16 %v1095, %v1094
      %s1100 = scalar_lea.vmem %s1, 512
      %v1101 = vld [vmem:[%s1100] sm:$0xf]
      %v1102 = vld [vmem:[%s1100 + $0x4] sm:$0xf]
      %v1103 = vld [vmem:[%s1100 + $0x8] sm:$0xf]
      %v1104 = vld [vmem:[%s1100 + $0xc] sm:$0xf]
      %v1105 = vld [vmem:[%s1100 + $0x10] sm:$0xf]
      %v1106 = vld [vmem:[%s1100 + $0x14] sm:$0xf]
      %v1107 = vld [vmem:[%s1100 + $0x18] sm:$0xf]
      %v1108 = vld [vmem:[%s1100 + $0x1c] sm:$0xf]
      %v1109 = vld [vmem:[%s1100 + $0x20] sm:$0xf]
      %v1110 = vld [vmem:[%s1100 + $0x24] sm:$0xf]
      %v1111 = vld [vmem:[%s1100 + $0x28] sm:$0xf]
      %v1112 = vld [vmem:[%s1100 + $0x2c] sm:$0xf]
      %v1113 = vld [vmem:[%s1100 + $0x30] sm:$0xf]
      %v1114 = vld [vmem:[%s1100 + $0x34] sm:$0xf]
      %v1115 = vld [vmem:[%s1100 + $0x38] sm:$0xf]
      %v1116 = vld [vmem:[%s1100 + $0x3c] sm:$0xf]
      %v1133 = vunpack.c.l.b16 %v1101
      %v1134 = vunpack.c.l.b16 %v1102
      %v1135 = vunpack.c.l.b16 %v1103
      %v1136 = vunpack.c.l.b16 %v1104
      %v1137 = vunpack.c.l.b16 %v1105
      %v1138 = vunpack.c.l.b16 %v1106
      %v1139 = vunpack.c.l.b16 %v1107
      %v1140 = vunpack.c.l.b16 %v1108
      %v1141 = vunpack.c.l.b16 %v1109
      %v1142 = vunpack.c.l.b16 %v1110
      %v1143 = vunpack.c.l.b16 %v1111
      %v1144 = vunpack.c.l.b16 %v1112
      %v1145 = vunpack.c.l.b16 %v1113
      %v1146 = vunpack.c.l.b16 %v1114
      %v1147 = vunpack.c.l.b16 %v1115
      %v1148 = vunpack.c.l.b16 %v1116
      %v1149 = vpack.c.b16 %v1134, %v1133
      %v1150 = vpack.c.b16 %v1136, %v1135
      %v1151 = vpack.c.b16 %v1138, %v1137
      %v1152 = vpack.c.b16 %v1140, %v1139
      %v1153 = vpack.c.b16 %v1142, %v1141
      %v1154 = vpack.c.b16 %v1144, %v1143
      %v1155 = vpack.c.b16 %v1146, %v1145
      %v1156 = vpack.c.b16 %v1148, %v1147
      %1165 = vmatpush.bf16.msra.mxu0 %v1156
      %1166 = vmatpush.bf16.msra.mxu0 %v1155
      %1167 = vmatpush.bf16.msra.mxu0 %v1154
      %1168 = vmatpush.bf16.msra.mxu0 %v1153
      %1169 = vmatpush.bf16.msra.mxu0 %v1152
      %1170 = vmatpush.bf16.msra.mxu0 %v1151
      %1171 = vmatpush.bf16.msra.mxu0 %v1150
      %1172 = vmatpush.bf16.msra.mxu0 %v1149
      %1173 = vmatmul.bf16.gmra.mxu0 %v1096
      %v1174 = vpop.f32.mrf.mxu0
      %v1175 = vadd.f32 0.0, %v1174
      %v1176 = vpop.f32.mrf.mxu0
      %v1177 = vadd.f32 0.0, %v1176
      %1178 = vmatmul.bf16.gmra.mxu0 %v1097
      %v1179 = vpop.f32.mrf.mxu0
      %v1180 = vadd.f32 0.0, %v1179
      %v1181 = vpop.f32.mrf.mxu0
      %v1182 = vadd.f32 0.0, %v1181
      %1183 = vmatmul.bf16.gmra.mxu0 %v1098
      %v1184 = vpop.f32.mrf.mxu0
      %v1185 = vadd.f32 0.0, %v1184
      %v1186 = vpop.f32.mrf.mxu0
      %v1187 = vadd.f32 0.0, %v1186
      %1188 = vmatmul.bf16.gmra.mxu0 %v1099
      %v1189 = vpop.f32.mrf.mxu0
      %v1190 = vadd.f32 0.0, %v1189
      %v1191 = vpop.f32.mrf.mxu0
      %v1192 = vadd.f32 0.0, %v1191
      %1193 = vdwg.mxu0
      %v1194 = vadd.f32 %v1080, %v1175
      %v1195 = vadd.f32 %v1081, %v1177
      %v1196 = vadd.f32 %v1082, %v1180
      %v1197 = vadd.f32 %v1083, %v1182
      %v1198 = vadd.f32 %v1084, %v1185
      %v1199 = vadd.f32 %v1085, %v1187
      %v1200 = vadd.f32 %v1086, %v1190
      %v1201 = vadd.f32 %v1087, %v1192
      %v1202 = vmax.f32 %v1194, 0.0
      %v1203 = vmax.f32 %v1195, 0.0
      %v1204 = vmax.f32 %v1196, 0.0
      %v1205 = vmax.f32 %v1197, 0.0
      %v1206 = vmax.f32 %v1198, 0.0
      %v1207 = vmax.f32 %v1199, 0.0
      %v1208 = vmax.f32 %v1200, 0.0
      %v1209 = vmax.f32 %v1201, 0.0
      %1210 = vst [vmem:[%s170] sm:$0xff] %v1202
      %1211 = vst [vmem:[%s170 + $0x8] sm:$0xff] %v1203
      %1212 = vst [vmem:[%s170 + $0x10] sm:$0xff] %v1204
      %1213 = vst [vmem:[%s170 + $0x18] sm:$0xff] %v1205
      %1214 = vst [vmem:[%s170 + $0x20] sm:$0xff] %v1206
      %1215 = vst [vmem:[%s170 + $0x28] sm:$0xff] %v1207
      %1216 = vst [vmem:[%s170 + $0x30] sm:$0xff] %v1208
      %1217 = vst [vmem:[%s170 + $0x38] sm:$0xff] %v1209
      %p1218 = scmp.lt.s32.totalorder %s14, 1
      %s1219 = scalar_select %p1218, %s14, 1
      %s1220 = smul.addr %s1219, 8
      %s1221 = smul.addr %s1220, 8
      %s1222 = scalar_lea.vmem %s3, %s1221
      // Predicated region
      $region33: #{feature_extractor_pallas.11} parent=31 // pred_check
        %p1223 = pneg %p100
      $region34: #{feature_extractor_pallas.11} parent=31 // pred_check_branch
        %1225 = sbr.rel (%p1223) target = $region36
      $region35: #{feature_extractor_pallas.11} parent=31 // pred_region
        _
      $region36: #{feature_extractor_pallas.11} parent=31 // pred_fallthru
        _
    $region32: #{feature_extractor_pallas.11} parent=5 // pred_fallthru
      _
    %p1226 = scmp.le.s32.totalorder 2, %s9
    // Predicated region
    $region37: #{feature_extractor_pallas.11} parent=5 // pred_check
      %p1227 = pneg %p1226
    $region38: #{feature_extractor_pallas.11} parent=5 // pred_check_branch
      %1229 = sbr.rel (%p1227) target = $region40
    $region39: #{feature_extractor_pallas.11} parent=5 // pred_region
      %s1230 = ssub.s32 %s9, 2
      // Predicated region
      $region41: #{feature_extractor_pallas.11} parent=39 // pred_check
        %p1231 = pneg %p106
      $region42: #{feature_extractor_pallas.11} parent=39 // pred_check_branch
        %1233 = sbr.rel (%p1231) target = $region44
      $region43: #{feature_extractor_pallas.11} parent=39 // pred_region
        %p1234 = scmp.lt.s32.totalorder %s15, 1
        %s1235 = scalar_select %p1234, %s15, 1
        %s1236 = smul.addr %s1235, 8
        %s1237 = smul.addr %s1236, 8
        %s1238 = scalar_lea.vmem %s3, %s1237
      $region44: #{feature_extractor_pallas.11} parent=39 // pred_fallthru
        _
    $region40: #{feature_extractor_pallas.11} parent=5 // pred_fallthru
      _
  $region6: #{feature_extractor_pallas.11} parent=0 // loop_footer
    %s13 = sadd.s32 1, %s9
  $region7: #{feature_extractor_pallas.11} parent=0 // loop_footer_branch
    %8 = sbr.rel target = $region3
  $region8: #{feature_extractor_pallas.11} parent=0 // loop_exit
    _

// kernel: feature_extractor_pallas.13
$region0: #{feature_extractor_pallas.13}
  #allocation0 [shape = 'u32[]', space=smem, size = 0x4, offset = 0x4, fixed_abs, tag = 'smem constant byte address 0x4 - core index']
  #allocation1 [shape = 'u32[72,128]{1,0:T(1,128)}', space=vmem, size = 0x9000, scoped, tag = 'internal scratch']
  %s0 = inlined_call_operand.vmem [shape: f32[2,6,6,128], index: 0, kind: input, shape index: {}]
  %s1 = inlined_call_operand.vmem [shape: bf16[9,128,256], index: 1, kind: input, shape index: {}]
  %s2 = inlined_call_operand.vmem [shape: f32[1,256], index: 2, kind: input, shape index: {}]
  %s3 = inlined_call_operand.hbm [shape: f32[2,4,4,256], index: 3, kind: output, shape index: {}]
  %s4 = sld [smem:[#allocation0]]
  $region45: #{feature_extractor_pallas.13} parent=0
    _
  %s6 = ssub.s32 1, %s4
  %s7 = scalar_select 0, %s6, %s4
  $region1: #{feature_extractor_pallas.13} parent=0
    #allocation2 [shape = 'u8[32768]{0}', space=vmem, size = 0x8000, scoped, tag = 'output window, operand 0']
    #allocation3 [shape = 's32[2]{0}', space=sflag, size = 0x8, scoped, tag = 'scoped memory for feature_extractor_pallas.13']
    %8 = vsyncpa [#allocation3], 0
    %s9 = scalar_lea.sflag [#allocation3], 1
    %10 = vsyncpa %s9, 0
    loop: start=0, step=1, limit=4
    $region2: #{feature_extractor_pallas.13} parent=1 // loop_pre_header
      _
    $region3: #{feature_extractor_pallas.13} parent=1 // loop_header
      %s12 = sphi 0, %s16
      %p13 = scmp.ge.s32.totalorder %s12, 4
      %s22 = sphi 0, %s24
      %s25 = sphi 0, %s22
      %s26 = sphi 0, %s25
      %s42 = sphi 0, %s26
      %s46 = sphi 0, %s46
      %s48 = sphi 0, %s46
      %s49 = sphi 0, %s48
      %s63 = sphi 0, %s49
      %s67 = sphi 0, %s67
      %s69 = sphi 0, %s67
      %s70 = sphi 0, %s69
      %s84 = sphi 0, %s70
      %s90 = sphi 0, %s92
      %s93 = sphi 0, %s90
      %s94 = sphi 0, %s93
      %s110 = sphi 0, %s94
    $region4: #{feature_extractor_pallas.13} parent=1 // loop_header_branch
      %15 = sbr.rel (%p13) target = $region8
    $region5: #{feature_extractor_pallas.13} parent=1 // loop_body
      %s17 = ssub.s32 %s12, 1
      %s18 = ssub.s32 %s12, 2
      %s19 = sadd.s32 %s12, 1
      %s20 = ssub.s32 %s12, %s19
      %p21 = scmp.eq.s32.totalorder %s20, 0
      %s23 = sadd.s32 %s22, 1
      %s24 = scalar_select %p21, %s22, %s23
      %p27 = pneg %p21
      %p28 = scmp.eq.s32.totalorder %s12, 1
      %p29 = por %p27, %p28
      %p30 = scmp.ne.s32.totalorder %s22, %s25
      %p31 = scmp.eq.s32.totalorder %s12, 0
      %p32 = por %p30, %p31
      %p33 = scmp.ne.s32.totalorder %s22, %s25
      %p34 = scmp.eq.s32.totalorder %s17, 1
      %p35 = por %p33, %p34
      %p36 = scmp.ne.s32.totalorder %s25, %s26
      %p37 = scmp.eq.s32.totalorder %s17, 0
      %p38 = por %p36, %p37
      %p39 = scmp.ne.s32.totalorder %s25, %s26
      %p40 = scmp.eq.s32.totalorder %s18, 1
      %p41 = por %p39, %p40
      %p43 = scmp.ne.s32.totalorder %s26, %s42
      %p44 = scmp.eq.s32.totalorder %s18, 0
      %p45 = por %p43, %p44
      %s47 = sadd.s32 %s46, 1
      %p50 = scmp.eq.s32.totalorder %s12, 1
      %p51 = scmp.ne.s32.totalorder %s46, %s48
      %p52 = scmp.eq.s32.totalorder %s12, 0
      %p53 = por %p51, %p52
      %p54 = scmp.ne.s32.totalorder %s46, %s48
      %p55 = scmp.eq.s32.totalorder %s17, 1
      %p56 = por %p54, %p55
      %p57 = scmp.ne.s32.totalorder %s48, %s49
      %p58 = scmp.eq.s32.totalorder %s17, 0
      %p59 = por %p57, %p58
      %p60 = scmp.ne.s32.totalorder %s48, %s49
      %p61 = scmp.eq.s32.totalorder %s18, 1
      %p62 = por %p60, %p61
      %p64 = scmp.ne.s32.totalorder %s49, %s63
      %p65 = scmp.eq.s32.totalorder %s18, 0
      %p66 = por %p64, %p65
      %s68 = sadd.s32 %s67, 1
      %p71 = scmp.eq.s32.totalorder %s12, 1
      %p72 = scmp.ne.s32.totalorder %s67, %s69
      %p73 = scmp.eq.s32.totalorder %s12, 0
      %p74 = por %p72, %p73
      %p75 = scmp.ne.s32.totalorder %s67, %s69
      %p76 = scmp.eq.s32.totalorder %s17, 1
      %p77 = por %p75, %p76
      %p78 = scmp.ne.s32.totalorder %s69, %s70
      %p79 = scmp.eq.s32.totalorder %s17, 0
      %p80 = por %p78, %p79
      %p81 = scmp.ne.s32.totalorder %s69, %s70
      %p82 = scmp.eq.s32.totalorder %s18, 1
      %p83 = por %p81, %p82
      %p85 = scmp.ne.s32.totalorder %s70, %s84
      %p86 = scmp.eq.s32.totalorder %s18, 0
      %p87 = por %p85, %p86
      %s88 = ssub.s32 %s12, %s19
      %p89 = scmp.eq.s32.totalorder %s88, 0
      %s91 = sadd.s32 %s90, 1
      %s92 = scalar_select %p89, %s90, %s91
      %p95 = pneg %p89
      %p96 = scmp.eq.s32.totalorder %s12, 1
      %p97 = por %p95, %p96
      %p98 = scmp.ne.s32.totalorder %s90, %s93
      %p99 = scmp.eq.s32.totalorder %s12, 0
      %p100 = por %p98, %p99
      %p101 = scmp.ne.s32.totalorder %s90, %s93
      %p102 = scmp.eq.s32.totalorder %s17, 1
      %p103 = por %p101, %p102
      %p104 = scmp.ne.s32.totalorder %s93, %s94
      %p105 = scmp.eq.s32.totalorder %s17, 0
      %p106 = por %p104, %p105
      %p107 = scmp.ne.s32.totalorder %s93, %s94
      %p108 = scmp.eq.s32.totalorder %s18, 1
      %p109 = por %p107, %p108
      %p111 = scmp.ne.s32.totalorder %s94, %s110
      %p112 = scmp.eq.s32.totalorder %s18, 0
      %p113 = por %p111, %p112
      %p114 = scmp.le.s32.totalorder 1, %s12
      %p115 = scmp.lt.s32.totalorder %s12, 3
      %p116 = pnand %p114, %p115
      %p117 = pneg %p116
      // Predicated region
      $region9: #{feature_extractor_pallas.13} parent=5 // pred_check
        _
      $region10: #{feature_extractor_pallas.13} parent=5 // pred_check_branch
        %119 = sbr.rel (%p116) target = $region12
      $region11: #{feature_extractor_pallas.13} parent=5 // pred_region
        %s120 = ssub.s32 %s12, 1
        // Predicated region
        $region13: #{feature_extractor_pallas.13} parent=11 // pred_check
          %p121 = pneg %p59
        $region14: #{feature_extractor_pallas.13} parent=11 // pred_check_branch
          %123 = sbr.rel (%p121) target = $region16
        $region15: #{feature_extractor_pallas.13} parent=11 // pred_region
          _
        $region16: #{feature_extractor_pallas.13} parent=11 // pred_fallthru
          _
        // Predicated region
        $region17: #{feature_extractor_pallas.13} parent=11 // pred_check
          %p124 = pneg %p80
        $region18: #{feature_extractor_pallas.13} parent=11 // pred_check_branch
          %126 = sbr.rel (%p124) target = $region20
        $region19: #{feature_extractor_pallas.13} parent=11 // pred_region
          _
        $region20: #{feature_extractor_pallas.13} parent=11 // pred_fallthru
          _
      $region12: #{feature_extractor_pallas.13} parent=5 // pred_fallthru
        _
      %p127 = scmp.lt.s32.totalorder %s12, 2
      // Predicated region
      $region21: #{feature_extractor_pallas.13} parent=5 // pred_check
        %p128 = pneg %p127
      $region22: #{feature_extractor_pallas.13} parent=5 // pred_check_branch
        %130 = sbr.rel (%p128) target = $region24
      $region23: #{feature_extractor_pallas.13} parent=5 // pred_region
        // Predicated region
        $region25: #{feature_extractor_pallas.13} parent=23 // pred_check
          %p131 = pneg %p32
        $region26: #{feature_extractor_pallas.13} parent=23 // pred_check_branch
          %133 = sbr.rel (%p131) target = $region28
        $region27: #{feature_extractor_pallas.13} parent=23 // pred_region
          %p134 = scmp.lt.s32.totalorder %s12, 1
          %s135 = scalar_select %p134, %s12, 1
          %s136 = smul.addr %s135, 6
          %s137 = smul.addr %s136, 8
          %s138 = scalar_lea.vmem %s0, %s137
        $region28: #{feature_extractor_pallas.13} parent=23 // pred_fallthru
          _
      $region24: #{feature_extractor_pallas.13} parent=5 // pred_fallthru
        _
      %p139 = scmp.le.s32.totalorder 1, %s12
      %p140 = scmp.lt.s32.totalorder %s12, 3
      %p141 = pnand %p139, %p140
      %p142 = pneg %p141
      // Predicated region
      $region29: #{feature_extractor_pallas.13} parent=5 // pred_check
        _
      $region30: #{feature_extractor_pallas.13} parent=5 // pred_check_branch
        %144 = sbr.rel (%p141) target = $region32
      $region31: #{feature_extractor_pallas.13} parent=5 // pred_region
        %s145 = ssub.s32 %s12, 1
        %p146 = scmp.lt.s32.totalorder %s17, 1
        %s147 = scalar_select %p146, %s17, 1
        %s148 = smul.addr %s147, 6
        %s149 = smul.addr %s148, 8
        %s150 = scalar_lea.vmem %s0, %s149
        %p151 = pneg %p38
        %p152 = pneg %p35
        %p153 = pneg %p59
        %p154 = pneg %p56
        %p155 = pneg %p80
        %p156 = pneg %p77
        %p157 = pneg %p106
        %p158 = pneg %p103
        %s159 = sand.u32 %s93, 1
        %s160 = scalar_lea.sflag [#allocation3], %s159
        %s161 = sand.u32 %s93, 1
        %s162 = smul.addr %s161, 32
        %s163 = scalar_lea.vmem [#allocation2], %s162
        %p164 = scmp.lt.s32.totalorder %s17, 1
        %s165 = scalar_select %p164, %s17, 1
        %s166 = smul.addr %s165, 6
        %s167 = smul.addr %s166, 8
        %s168 = scalar_lea.vmem %s0, %s167
        %v169 = vld [vmem:[%s2] sm:$0x3]
        %v171 = vperm.slane %v169, 0
        %v172 = vperm.slane %v169, 1
        %v175 = vld [vmem:[%s168] sm:$0xf]
        %v176 = vld [vmem:[%s168 + $0x8] sm:$0xf]
        %v177 = vld [vmem:[%s168 + $0x10] sm:$0xf]
        %v178 = vld [vmem:[%s168 + $0x18] sm:$0xf]
        %183 = vst [vmem:[#allocation1] ss:$2 sm:$0xff] %v175
        %s184 = scalar_lea.vmem [#allocation1], 1
        %185 = vst [vmem:[%s184] ss:$2 sm:$0xff] %v176
        %s186 = scalar_lea.vmem [#allocation1], 16
        %187 = vst [vmem:[%s186] ss:$2 sm:$0xff] %v177
        %s188 = scalar_lea.vmem [#allocation1], 17
        %189 = vst [vmem:[%s188] ss:$2 sm:$0xff] %v178
        %v190 = vld.sshfl [vmem:[#allocation1] sm:$0xff pattern:$0x75316420]
        %v191 = vld.sshfl [vmem:[#allocation1 + $0x10] sm:$0xff pattern:$0x75316420]
        %v194 = vpack.c.bf16 %v191, %v190
        %v195 = vld [vmem:[%s1] sm:$0xff]
        %v196 = vld [vmem:[%s1 + $0x8] sm:$0xff]
        %v197 = vld [vmem:[%s1 + $0x10] sm:$0xff]
        %v198 = vld [vmem:[%s1 + $0x18] sm:$0xff]
        %v199 = vld [vmem:[%s1 + $0x20] sm:$0xff]
        %v200 = vld [vmem:[%s1 + $0x28] sm:$0xff]
        %v201 = vld [vmem:[%s1 + $0x30] sm:$0xff]
        %v202 = vld [vmem:[%s1 + $0x38] sm:$0xff]
        %v203 = vld [vmem:[%s1 + $0x40] sm:$0xff]
        %v204 = vld [vmem:[%s1 + $0x48] sm:$0xff]
        %v205 = vld [vmem:[%s1 + $0x50] sm:$0xff]
        %v206 = vld [vmem:[%s1 + $0x58] sm:$0xff]
        %v207 = vld [vmem:[%s1 + $0x60] sm:$0xff]
        %v208 = vld [vmem:[%s1 + $0x68] sm:$0xff]
        %v209 = vld [vmem:[%s1 + $0x70] sm:$0xff]
        %v210 = vld [vmem:[%s1 + $0x78] sm:$0xff]
        %v227 = vunpack.c.l.b16 %v195
        %v228 = vunpack.c.h.b16 %v195
        %v229 = vunpack.c.l.b16 %v196
        %v230 = vunpack.c.h.b16 %v196
        %v231 = vunpack.c.l.b16 %v197
        %v232 = vunpack.c.h.b16 %v197
        %v233 = vunpack.c.l.b16 %v198
        %v234 = vunpack.c.h.b16 %v198
        %v235 = vunpack.c.l.b16 %v199
        %v236 = vunpack.c.h.b16 %v199
        %v237 = vunpack.c.l.b16 %v200
        %v238 = vunpack.c.h.b16 %v200
        %v239 = vunpack.c.l.b16 %v201
        %v240 = vunpack.c.h.b16 %v201
        %v241 = vunpack.c.l.b16 %v202
        %v242 = vunpack.c.h.b16 %v202
        %v243 = vunpack.c.l.b16 %v203
        %v244 = vunpack.c.h.b16 %v203
        %v245 = vunpack.c.l.b16 %v204
        %v246 = vunpack.c.h.b16 %v204
        %v247 = vunpack.c.l.b16 %v205
        %v248 = vunpack.c.h.b16 %v205
        %v249 = vunpack.c.l.b16 %v206
        %v250 = vunpack.c.h.b16 %v206
        %v251 = vunpack.c.l.b16 %v207
        %v252 = vunpack.c.h.b16 %v207
        %v253 = vunpack.c.l.b16 %v208
        %v254 = vunpack.c.h.b16 %v208
        %v255 = vunpack.c.l.b16 %v209
        %v256 = vunpack.c.h.b16 %v209
        %v257 = vunpack.c.l.b16 %v210
        %v258 = vunpack.c.h.b16 %v210
        %v259 = vpack.c.b16 %v229, %v227
        %v260 = vpack.c.b16 %v230, %v228
        %v261 = vpack.c.b16 %v233, %v231
        %v262 = vpack.c.b16 %v234, %v232
        %v263 = vpack.c.b16 %v237, %v235
        %v264 = vpack.c.b16 %v238, %v236
        %v265 = vpack.c.b16 %v241, %v239
        %v266 = vpack.c.b16 %v242, %v240
        %v267 = vpack.c.b16 %v245, %v243
        %v268 = vpack.c.b16 %v246, %v244
        %v269 = vpack.c.b16 %v249, %v247
        %v270 = vpack.c.b16 %v250, %v248
        %v271 = vpack.c.b16 %v253, %v251
        %v272 = vpack.c.b16 %v254, %v252
        %v273 = vpack.c.b16 %v257, %v255
        %v274 = vpack.c.b16 %v258, %v256
        %291 = vmatpush.bf16.msra.mxu0 %v273
        %292 = vmatpush.bf16.msra.mxu0 %v271
        %293 = vmatpush.bf16.msra.mxu0 %v269
        %294 = vmatpush.bf16.msra.mxu0 %v267
        %295 = vmatpush.bf16.msra.mxu0 %v265
        %296 = vmatpush.bf16.msra.mxu0 %v263
        %297 = vmatpush.bf16.msra.mxu0 %v261
        %298 = vmatpush.bf16.msra.mxu0 %v259
        %299 = vmatmul.bf16.gmra.mxu0 %v194
        %v300 = vpop.f32.mrf.mxu0
        %v301 = vadd.f32 0.0, %v300
        %v302 = vpop.f32.mrf.mxu0
        %v303 = vadd.f32 0.0, %v302
        %304 = vdwg.mxu0
        %305 = vmatpush.bf16.msra.mxu0 %v274
        %306 = vmatpush.bf16.msra.mxu0 %v272
        %307 = vmatpush.bf16.msra.mxu0 %v270
        %308 = vmatpush.bf16.msra.mxu0 %v268
        %309 = vmatpush.bf16.msra.mxu0 %v266
        %310 = vmatpush.bf16.msra.mxu0 %v264
        %311 = vmatpush.bf16.msra.mxu0 %v262
        %312 = vmatpush.bf16.msra.mxu0 %v260
        %313 = vmatmul.bf16.gmra.mxu0 %v194
        %v314 = vpop.f32.mrf.mxu0
        %v315 = vadd.f32 0.0, %v314
        %v316 = vpop.f32.mrf.mxu0
        %v317 = vadd.f32 0.0, %v316
        %318 = vdwg.mxu0
        %v319 = vadd.f32 %v171, %v301
        %v320 = vadd.f32 %v172, %v315
        %v321 = vadd.f32 %v171, %v303
        %v322 = vadd.f32 %v172, %v317
        %v323 = vld [vmem:[%s168 + $0x1] sm:$0xf]
        %v324 = vld [vmem:[%s168 + $0x9] sm:$0xf]
        %v325 = vld [vmem:[%s168 + $0x11] sm:$0xf]
        %v326 = vld [vmem:[%s168 + $0x19] sm:$0xf]
        %331 = vst [vmem:[#allocation1] ss:$2 sm:$0xff] %v323
        %s332 = scalar_lea.vmem [#allocation1], 1
        %333 = vst [vmem:[%s332] ss:$2 sm:$0xff] %v324
        %s334 = scalar_lea.vmem [#allocation1], 16
        %335 = vst [vmem:[%s334] ss:$2 sm:$0xff] %v325
        %s336 = scalar_lea.vmem [#allocation1], 17
        %337 = vst [vmem:[%s336] ss:$2 sm:$0xff] %v326
        %v338 = vld.sshfl [vmem:[#allocation1] sm:$0xff pattern:$0x75316420]
        %v339 = vld.sshfl [vmem:[#allocation1 + $0x10] sm:$0xff pattern:$0x75316420]
        %v342 = vpack.c.bf16 %v339, %v338
        %s343 = scalar_lea.vmem %s1, 128
        %v344 = vld [vmem:[%s343] sm:$0xff]
        %v345 = vld [vmem:[%s343 + $0x8] sm:$0xff]
        %v346 = vld [vmem:[%s343 + $0x10] sm:$0xff]
        %v347 = vld [vmem:[%s343 + $0x18] sm:$0xff]
        %v348 = vld [vmem:[%s343 + $0x20] sm:$0xff]
        %v349 = vld [vmem:[%s343 + $0x28] sm:$0xff]
        %v350 = vld [vmem:[%s343 + $0x30] sm:$0xff]
        %v351 = vld [vmem:[%s343 + $0x38] sm:$0xff]
        %v352 = vld [vmem:[%s343 + $0x40] sm:$0xff]
        %v353 = vld [vmem:[%s343 + $0x48] sm:$0xff]
        %v354 = vld [vmem:[%s343 + $0x50] sm:$0xff]
        %v355 = vld [vmem:[%s343 + $0x58] sm:$0xff]
        %v356 = vld [vmem:[%s343 + $0x60] sm:$0xff]
        %v357 = vld [vmem:[%s343 + $0x68] sm:$0xff]
        %v358 = vld [vmem:[%s343 + $0x70] sm:$0xff]
        %v359 = vld [vmem:[%s343 + $0x78] sm:$0xff]
        %v376 = vunpack.c.l.b16 %v344
        %v377 = vunpack.c.h.b16 %v344
        %v378 = vunpack.c.l.b16 %v345
        %v379 = vunpack.c.h.b16 %v345
        %v380 = vunpack.c.l.b16 %v346
        %v381 = vunpack.c.h.b16 %v346
        %v382 = vunpack.c.l.b16 %v347
        %v383 = vunpack.c.h.b16 %v347
        %v384 = vunpack.c.l.b16 %v348
        %v385 = vunpack.c.h.b16 %v348
        %v386 = vunpack.c.l.b16 %v349
        %v387 = vunpack.c.h.b16 %v349
        %v388 = vunpack.c.l.b16 %v350
        %v389 = vunpack.c.h.b16 %v350
        %v390 = vunpack.c.l.b16 %v351
        %v391 = vunpack.c.h.b16 %v351
        %v392 = vunpack.c.l.b16 %v352
        %v393 = vunpack.c.h.b16 %v352
        %v394 = vunpack.c.l.b16 %v353
        %v395 = vunpack.c.h.b16 %v353
        %v396 = vunpack.c.l.b16 %v354
        %v397 = vunpack.c.h.b16 %v354
        %v398 = vunpack.c.l.b16 %v355
        %v399 = vunpack.c.h.b16 %v355
        %v400 = vunpack.c.l.b16 %v356
        %v401 = vunpack.c.h.b16 %v356
        %v402 = vunpack.c.l.b16 %v357
        %v403 = vunpack.c.h.b16 %v357
        %v404 = vunpack.c.l.b16 %v358
        %v405 = vunpack.c.h.b16 %v358
        %v406 = vunpack.c.l.b16 %v359
        %v407 = vunpack.c.h.b16 %v359
        %v408 = vpack.c.b16 %v378, %v376
        %v409 = vpack.c.b16 %v379, %v377
        %v410 = vpack.c.b16 %v382, %v380
        %v411 = vpack.c.b16 %v383, %v381
        %v412 = vpack.c.b16 %v386, %v384
        %v413 = vpack.c.b16 %v387, %v385
        %v414 = vpack.c.b16 %v390, %v388
        %v415 = vpack.c.b16 %v391, %v389
        %v416 = vpack.c.b16 %v394, %v392
        %v417 = vpack.c.b16 %v395, %v393
        %v418 = vpack.c.b16 %v398, %v396
        %v419 = vpack.c.b16 %v399, %v397
        %v420 = vpack.c.b16 %v402, %v400
        %v421 = vpack.c.b16 %v403, %v401
        %v422 = vpack.c.b16 %v406, %v404
        %v423 = vpack.c.b16 %v407, %v405
        %440 = vmatpush.bf16.msra.mxu0 %v422
        %441 = vmatpush.bf16.msra.mxu0 %v420
        %442 = vmatpush.bf16.msra.mxu0 %v418
        %443 = vmatpush.bf16.msra.mxu0 %v416
        %444 = vmatpush.bf16.msra.mxu0 %v414
        %445 = vmatpush.bf16.msra.mxu0 %v412
        %446 = vmatpush.bf16.msra.mxu0 %v410
        %447 = vmatpush.bf16.msra.mxu0 %v408
        %448 = vmatmul.bf16.gmra.mxu0 %v342
        %v449 = vpop.f32.mrf.mxu0
        %v450 = vadd.f32 0.0, %v449
        %v451 = vpop.f32.mrf.mxu0
        %v452 = vadd.f32 0.0, %v451
        %453 = vdwg.mxu0
        %454 = vmatpush.bf16.msra.mxu0 %v423
        %455 = vmatpush.bf16.msra.mxu0 %v421
        %456 = vmatpush.bf16.msra.mxu0 %v419
        %457 = vmatpush.bf16.msra.mxu0 %v417
        %458 = vmatpush.bf16.msra.mxu0 %v415
        %459 = vmatpush.bf16.msra.mxu0 %v413
        %460 = vmatpush.bf16.msra.mxu0 %v411
        %461 = vmatpush.bf16.msra.mxu0 %v409
        %462 = vmatmul.bf16.gmra.mxu0 %v342
        %v463 = vpop.f32.mrf.mxu0
        %v464 = vadd.f32 0.0, %v463
        %v465 = vpop.f32.mrf.mxu0
        %v466 = vadd.f32 0.0, %v465
        %467 = vdwg.mxu0
        %v468 = vadd.f32 %v319, %v450
        %v469 = vadd.f32 %v320, %v464
        %v470 = vadd.f32 %v321, %v452
        %v471 = vadd.f32 %v322, %v466
        %v472 = vld [vmem:[%s168 + $0x2] sm:$0xf]
        %v473 = vld [vmem:[%s168 + $0xa] sm:$0xf]
        %v474 = vld [vmem:[%s168 + $0x12] sm:$0xf]
        %v475 = vld [vmem:[%s168 + $0x1a] sm:$0xf]
        %480 = vst [vmem:[#allocation1] ss:$2 sm:$0xff] %v472
        %s481 = scalar_lea.vmem [#allocation1], 1
        %482 = vst [vmem:[%s481] ss:$2 sm:$0xff] %v473
        %s483 = scalar_lea.vmem [#allocation1], 16
        %484 = vst [vmem:[%s483] ss:$2 sm:$0xff] %v474
        %s485 = scalar_lea.vmem [#allocation1], 17
        %486 = vst [vmem:[%s485] ss:$2 sm:$0xff] %v475
        %v487 = vld.sshfl [vmem:[#allocation1] sm:$0xff pattern:$0x75316420]
        %v488 = vld.sshfl [vmem:[#allocation1 + $0x10] sm:$0xff pattern:$0x75316420]
        %v491 = vpack.c.bf16 %v488, %v487
        %s492 = scalar_lea.vmem %s1, 256
        %v493 = vld [vmem:[%s492] sm:$0xff]
        %v494 = vld [vmem:[%s492 + $0x8] sm:$0xff]
        %v495 = vld [vmem:[%s492 + $0x10] sm:$0xff]
        %v496 = vld [vmem:[%s492 + $0x18] sm:$0xff]
        %v497 = vld [vmem:[%s492 + $0x20] sm:$0xff]
        %v498 = vld [vmem:[%s492 + $0x28] sm:$0xff]
        %v499 = vld [vmem:[%s492 + $0x30] sm:$0xff]
        %v500 = vld [vmem:[%s492 + $0x38] sm:$0xff]
        %v501 = vld [vmem:[%s492 + $0x40] sm:$0xff]
        %v502 = vld [vmem:[%s492 + $0x48] sm:$0xff]
        %v503 = vld [vmem:[%s492 + $0x50] sm:$0xff]
        %v504 = vld [vmem:[%s492 + $0x58] sm:$0xff]
        %v505 = vld [vmem:[%s492 + $0x60] sm:$0xff]
        %v506 = vld [vmem:[%s492 + $0x68] sm:$0xff]
        %v507 = vld [vmem:[%s492 + $0x70] sm:$0xff]
        %v508 = vld [vmem:[%s492 + $0x78] sm:$0xff]
        %v525 = vunpack.c.l.b16 %v493
        %v526 = vunpack.c.h.b16 %v493
        %v527 = vunpack.c.l.b16 %v494
        %v528 = vunpack.c.h.b16 %v494
        %v529 = vunpack.c.l.b16 %v495
        %v530 = vunpack.c.h.b16 %v495
        %v531 = vunpack.c.l.b16 %v496
        %v532 = vunpack.c.h.b16 %v496
        %v533 = vunpack.c.l.b16 %v497
        %v534 = vunpack.c.h.b16 %v497
        %v535 = vunpack.c.l.b16 %v498
        %v536 = vunpack.c.h.b16 %v498
        %v537 = vunpack.c.l.b16 %v499
        %v538 = vunpack.c.h.b16 %v499
        %v539 = vunpack.c.l.b16 %v500
        %v540 = vunpack.c.h.b16 %v500
        %v541 = vunpack.c.l.b16 %v501
        %v542 = vunpack.c.h.b16 %v501
        %v543 = vunpack.c.l.b16 %v502
        %v544 = vunpack.c.h.b16 %v502
        %v545 = vunpack.c.l.b16 %v503
        %v546 = vunpack.c.h.b16 %v503
        %v547 = vunpack.c.l.b16 %v504
        %v548 = vunpack.c.h.b16 %v504
        %v549 = vunpack.c.l.b16 %v505
        %v550 = vunpack.c.h.b16 %v505
        %v551 = vunpack.c.l.b16 %v506
        %v552 = vunpack.c.h.b16 %v506
        %v553 = vunpack.c.l.b16 %v507
        %v554 = vunpack.c.h.b16 %v507
        %v555 = vunpack.c.l.b16 %v508
        %v556 = vunpack.c.h.b16 %v508
        %v557 = vpack.c.b16 %v527, %v525
        %v558 = vpack.c.b16 %v528, %v526
        %v559 = vpack.c.b16 %v531, %v529
        %v560 = vpack.c.b16 %v532, %v530
        %v561 = vpack.c.b16 %v535, %v533
        %v562 = vpack.c.b16 %v536, %v534
        %v563 = vpack.c.b16 %v539, %v537
        %v564 = vpack.c.b16 %v540, %v538
        %v565 = vpack.c.b16 %v543, %v541
        %v566 = vpack.c.b16 %v544, %v542
        %v567 = vpack.c.b16 %v547, %v545
        %v568 = vpack.c.b16 %v548, %v546
        %v569 = vpack.c.b16 %v551, %v549
        %v570 = vpack.c.b16 %v552, %v550
        %v571 = vpack.c.b16 %v555, %v553
        %v572 = vpack.c.b16 %v556, %v554
        %589 = vmatpush.bf16.msra.mxu0 %v571
        %590 = vmatpush.bf16.msra.mxu0 %v569
        %591 = vmatpush.bf16.msra.mxu0 %v567
        %592 = vmatpush.bf16.msra.mxu0 %v565
        %593 = vmatpush.bf16.msra.mxu0 %v563
        %594 = vmatpush.bf16.msra.mxu0 %v561
        %595 = vmatpush.bf16.msra.mxu0 %v559
        %596 = vmatpush.bf16.msra.mxu0 %v557
        %597 = vmatmul.bf16.gmra.mxu0 %v491
        %v598 = vpop.f32.mrf.mxu0
        %v599 = vadd.f32 0.0, %v598
        %v600 = vpop.f32.mrf.mxu0
        %v601 = vadd.f32 0.0, %v600
        %602 = vdwg.mxu0
        %603 = vmatpush.bf16.msra.mxu0 %v572
        %604 = vmatpush.bf16.msra.mxu0 %v570
        %605 = vmatpush.bf16.msra.mxu0 %v568
        %606 = vmatpush.bf16.msra.mxu0 %v566
        %607 = vmatpush.bf16.msra.mxu0 %v564
        %608 = vmatpush.bf16.msra.mxu0 %v562
        %609 = vmatpush.bf16.msra.mxu0 %v560
        %610 = vmatpush.bf16.msra.mxu0 %v558
        %611 = vmatmul.bf16.gmra.mxu0 %v491
        %v612 = vpop.f32.mrf.mxu0
        %v613 = vadd.f32 0.0, %v612
        %v614 = vpop.f32.mrf.mxu0
        %v615 = vadd.f32 0.0, %v614
        %616 = vdwg.mxu0
        %v617 = vadd.f32 %v468, %v599
        %v618 = vadd.f32 %v469, %v613
        %v619 = vadd.f32 %v470, %v601
        %v620 = vadd.f32 %v471, %v615
        %s621 = scalar_lea.vmem %s168, 8
        %v622 = vld [vmem:[%s621] sm:$0xf]
        %v623 = vld [vmem:[%s621 + $0x8] sm:$0xf]
        %v624 = vld [vmem:[%s621 + $0x10] sm:$0xf]
        %v625 = vld [vmem:[%s621 + $0x18] sm:$0xf]
        %630 = vst [vmem:[#allocation1] ss:$2 sm:$0xff] %v622
        %s631 = scalar_lea.vmem [#allocation1], 1
        %632 = vst [vmem:[%s631] ss:$2 sm:$0xff] %v623
        %s633 = scalar_lea.vmem [#allocation1], 16
        %634 = vst [vmem:[%s633] ss:$2 sm:$0xff] %v624
        %s635 = scalar_lea.vmem [#allocation1], 17
        %636 = vst [vmem:[%s635] ss:$2 sm:$0xff] %v625
        %v637 = vld.sshfl [vmem:[#allocation1] sm:$0xff pattern:$0x75316420]
        %v638 = vld.sshfl [vmem:[#allocation1 + $0x10] sm:$0xff pattern:$0x75316420]
        %v641 = vpack.c.bf16 %v638, %v637
        %s642 = scalar_lea.vmem %s1, 384
        %v643 = vld [vmem:[%s642] sm:$0xff]
        %v644 = vld [vmem:[%s642 + $0x8] sm:$0xff]
        %v645 = vld [vmem:[%s642 + $0x10] sm:$0xff]
        %v646 = vld [vmem:[%s642 + $0x18] sm:$0xff]
        %v647 = vld [vmem:[%s642 + $0x20] sm:$0xff]
        %v648 = vld [vmem:[%s642 + $0x28] sm:$0xff]
        %v649 = vld [vmem:[%s642 + $0x30] sm:$0xff]
        %v650 = vld [vmem:[%s642 + $0x38] sm:$0xff]
        %v651 = vld [vmem:[%s642 + $0x40] sm:$0xff]
        %v652 = vld [vmem:[%s642 + $0x48] sm:$0xff]
        %v653 = vld [vmem:[%s642 + $0x50] sm:$0xff]
        %v654 = vld [vmem:[%s642 + $0x58] sm:$0xff]
        %v655 = vld [vmem:[%s642 + $0x60] sm:$0xff]
        %v656 = vld [vmem:[%s642 + $0x68] sm:$0xff]
        %v657 = vld [vmem:[%s642 + $0x70] sm:$0xff]
        %v658 = vld [vmem:[%s642 + $0x78] sm:$0xff]
        %v675 = vunpack.c.l.b16 %v643
        %v676 = vunpack.c.h.b16 %v643
        %v677 = vunpack.c.l.b16 %v644
        %v678 = vunpack.c.h.b16 %v644
        %v679 = vunpack.c.l.b16 %v645
        %v680 = vunpack.c.h.b16 %v645
        %v681 = vunpack.c.l.b16 %v646
        %v682 = vunpack.c.h.b16 %v646
        %v683 = vunpack.c.l.b16 %v647
        %v684 = vunpack.c.h.b16 %v647
        %v685 = vunpack.c.l.b16 %v648
        %v686 = vunpack.c.h.b16 %v648
        %v687 = vunpack.c.l.b16 %v649
        %v688 = vunpack.c.h.b16 %v649
        %v689 = vunpack.c.l.b16 %v650
        %v690 = vunpack.c.h.b16 %v650
        %v691 = vunpack.c.l.b16 %v651
        %v692 = vunpack.c.h.b16 %v651
        %v693 = vunpack.c.l.b16 %v652
        %v694 = vunpack.c.h.b16 %v652
        %v695 = vunpack.c.l.b16 %v653
        %v696 = vunpack.c.h.b16 %v653
        %v697 = vunpack.c.l.b16 %v654
        %v698 = vunpack.c.h.b16 %v654
        %v699 = vunpack.c.l.b16 %v655
        %v700 = vunpack.c.h.b16 %v655
        %v701 = vunpack.c.l.b16 %v656
        %v702 = vunpack.c.h.b16 %v656
        %v703 = vunpack.c.l.b16 %v657
        %v704 = vunpack.c.h.b16 %v657
        %v705 = vunpack.c.l.b16 %v658
        %v706 = vunpack.c.h.b16 %v658
        %v707 = vpack.c.b16 %v677, %v675
        %v708 = vpack.c.b16 %v678, %v676
        %v709 = vpack.c.b16 %v681, %v679
        %v710 = vpack.c.b16 %v682, %v680
        %v711 = vpack.c.b16 %v685, %v683
        %v712 = vpack.c.b16 %v686, %v684
        %v713 = vpack.c.b16 %v689, %v687
        %v714 = vpack.c.b16 %v690, %v688
        %v715 = vpack.c.b16 %v693, %v691
        %v716 = vpack.c.b16 %v694, %v692
        %v717 = vpack.c.b16 %v697, %v695
        %v718 = vpack.c.b16 %v698, %v696
        %v719 = vpack.c.b16 %v701, %v699
        %v720 = vpack.c.b16 %v702, %v700
        %v721 = vpack.c.b16 %v705, %v703
        %v722 = vpack.c.b16 %v706, %v704
        %739 = vmatpush.bf16.msra.mxu0 %v721
        %740 = vmatpush.bf16.msra.mxu0 %v719
        %741 = vmatpush.bf16.msra.mxu0 %v717
        %742 = vmatpush.bf16.msra.mxu0 %v715
        %743 = vmatpush.bf16.msra.mxu0 %v713
        %744 = vmatpush.bf16.msra.mxu0 %v711
        %745 = vmatpush.bf16.msra.mxu0 %v709
        %746 = vmatpush.bf16.msra.mxu0 %v707
        %747 = vmatmul.bf16.gmra.mxu0 %v641
        %v748 = vpop.f32.mrf.mxu0
        %v749 = vadd.f32 0.0, %v748
        %v750 = vpop.f32.mrf.mxu0
        %v751 = vadd.f32 0.0, %v750
        %752 = vdwg.mxu0
        %753 = vmatpush.bf16.msra.mxu0 %v722
        %754 = vmatpush.bf16.msra.mxu0 %v720
        %755 = vmatpush.bf16.msra.mxu0 %v718
        %756 = vmatpush.bf16.msra.mxu0 %v716
        %757 = vmatpush.bf16.msra.mxu0 %v714
        %758 = vmatpush.bf16.msra.mxu0 %v712
        %759 = vmatpush.bf16.msra.mxu0 %v710
        %760 = vmatpush.bf16.msra.mxu0 %v708
        %761 = vmatmul.bf16.gmra.mxu0 %v641
        %v762 = vpop.f32.mrf.mxu0
        %v763 = vadd.f32 0.0, %v762
        %v764 = vpop.f32.mrf.mxu0
        %v765 = vadd.f32 0.0, %v764
        %766 = vdwg.mxu0
        %v767 = vadd.f32 %v617, %v749
        %v768 = vadd.f32 %v618, %v763
        %v769 = vadd.f32 %v619, %v751
        %v770 = vadd.f32 %v620, %v765
        %v771 = vld [vmem:[%s621 + $0x1] sm:$0xf]
        %v772 = vld [vmem:[%s621 + $0x9] sm:$0xf]
        %v773 = vld [vmem:[%s621 + $0x11] sm:$0xf]
        %v774 = vld [vmem:[%s621 + $0x19] sm:$0xf]
        %779 = vst [vmem:[#allocation1] ss:$2 sm:$0xff] %v771
        %s780 = scalar_lea.vmem [#allocation1], 1
        %781 = vst [vmem:[%s780] ss:$2 sm:$0xff] %v772
        %s782 = scalar_lea.vmem [#allocation1], 16
        %783 = vst [vmem:[%s782] ss:$2 sm:$0xff] %v773
        %s784 = scalar_lea.vmem [#allocation1], 17
        %785 = vst [vmem:[%s784] ss:$2 sm:$0xff] %v774
        %v786 = vld.sshfl [vmem:[#allocation1] sm:$0xff pattern:$0x75316420]
        %v787 = vld.sshfl [vmem:[#allocation1 + $0x10] sm:$0xff pattern:$0x75316420]
        %v790 = vpack.c.bf16 %v787, %v786
        %s791 = scalar_lea.vmem %s1, 512
        %v792 = vld [vmem:[%s791] sm:$0xff]
        %v793 = vld [vmem:[%s791 + $0x8] sm:$0xff]
        %v794 = vld [vmem:[%s791 + $0x10] sm:$0xff]
        %v795 = vld [vmem:[%s791 + $0x18] sm:$0xff]
        %v796 = vld [vmem:[%s791 + $0x20] sm:$0xff]
        %v797 = vld [vmem:[%s791 + $0x28] sm:$0xff]
        %v798 = vld [vmem:[%s791 + $0x30] sm:$0xff]
        %v799 = vld [vmem:[%s791 + $0x38] sm:$0xff]
        %v800 = vld [vmem:[%s791 + $0x40] sm:$0xff]
        %v801 = vld [vmem:[%s791 + $0x48] sm:$0xff]
        %v802 = vld [vmem:[%s791 + $0x50] sm:$0xff]
        %v803 = vld [vmem:[%s791 + $0x58] sm:$0xff]
        %v804 = vld [vmem:[%s791 + $0x60] sm:$0xff]
        %v805 = vld [vmem:[%s791 + $0x68] sm:$0xff]
        %v806 = vld [vmem:[%s791 + $0x70] sm:$0xff]
        %v807 = vld [vmem:[%s791 + $0x78] sm:$0xff]
        %v824 = vunpack.c.l.b16 %v792
        %v825 = vunpack.c.h.b16 %v792
        %v826 = vunpack.c.l.b16 %v793
        %v827 = vunpack.c.h.b16 %v793
        %v828 = vunpack.c.l.b16 %v794
        %v829 = vunpack.c.h.b16 %v794
        %v830 = vunpack.c.l.b16 %v795
        %v831 = vunpack.c.h.b16 %v795
        %v832 = vunpack.c.l.b16 %v796
        %v833 = vunpack.c.h.b16 %v796
        %v834 = vunpack.c.l.b16 %v797
        %v835 = vunpack.c.h.b16 %v797
        %v836 = vunpack.c.l.b16 %v798
        %v837 = vunpack.c.h.b16 %v798
        %v838 = vunpack.c.l.b16 %v799
        %v839 = vunpack.c.h.b16 %v799
        %v840 = vunpack.c.l.b16 %v800
        %v841 = vunpack.c.h.b16 %v800
        %v842 = vunpack.c.l.b16 %v801
        %v843 = vunpack.c.h.b16 %v801
        %v844 = vunpack.c.l.b16 %v802
        %v845 = vunpack.c.h.b16 %v802
        %v846 = vunpack.c.l.b16 %v803
        %v847 = vunpack.c.h.b16 %v803
        %v848 = vunpack.c.l.b16 %v804
        %v849 = vunpack.c.h.b16 %v804
        %v850 = vunpack.c.l.b16 %v805
        %v851 = vunpack.c.h.b16 %v805
        %v852 = vunpack.c.l.b16 %v806
        %v853 = vunpack.c.h.b16 %v806
        %v854 = vunpack.c.l.b16 %v807
        %v855 = vunpack.c.h.b16 %v807
        %v856 = vpack.c.b16 %v826, %v824
        %v857 = vpack.c.b16 %v827, %v825
        %v858 = vpack.c.b16 %v830, %v828
        %v859 = vpack.c.b16 %v831, %v829
        %v860 = vpack.c.b16 %v834, %v832
        %v861 = vpack.c.b16 %v835, %v833
        %v862 = vpack.c.b16 %v838, %v836
        %v863 = vpack.c.b16 %v839, %v837
        %v864 = vpack.c.b16 %v842, %v840
        %v865 = vpack.c.b16 %v843, %v841
        %v866 = vpack.c.b16 %v846, %v844
        %v867 = vpack.c.b16 %v847, %v845
        %v868 = vpack.c.b16 %v850, %v848
        %v869 = vpack.c.b16 %v851, %v849
        %v870 = vpack.c.b16 %v854, %v852
        %v871 = vpack.c.b16 %v855, %v853
        %888 = vmatpush.bf16.msra.mxu0 %v870
        %889 = vmatpush.bf16.msra.mxu0 %v868
        %890 = vmatpush.bf16.msra.mxu0 %v866
        %891 = vmatpush.bf16.msra.mxu0 %v864
        %892 = vmatpush.bf16.msra.mxu0 %v862
        %893 = vmatpush.bf16.msra.mxu0 %v860
        %894 = vmatpush.bf16.msra.mxu0 %v858
        %895 = vmatpush.bf16.msra.mxu0 %v856
        %896 = vmatmul.bf16.gmra.mxu0 %v790
        %v897 = vpop.f32.mrf.mxu0
        %v898 = vadd.f32 0.0, %v897
        %v899 = vpop.f32.mrf.mxu0
        %v900 = vadd.f32 0.0, %v899
        %901 = vdwg.mxu0
        %902 = vmatpush.bf16.msra.mxu0 %v871
        %903 = vmatpush.bf16.msra.mxu0 %v869
        %904 = vmatpush.bf16.msra.mxu0 %v867
        %905 = vmatpush.bf16.msra.mxu0 %v865
        %906 = vmatpush.bf16.msra.mxu0 %v863
        %907 = vmatpush.bf16.msra.mxu0 %v861
        %908 = vmatpush.bf16.msra.mxu0 %v859
        %909 = vmatpush.bf16.msra.mxu0 %v857
        %910 = vmatmul.bf16.gmra.mxu0 %v790
        %v911 = vpop.f32.mrf.mxu0
        %v912 = vadd.f32 0.0, %v911
        %v913 = vpop.f32.mrf.mxu0
        %v914 = vadd.f32 0.0, %v913
        %915 = vdwg.mxu0
        %v916 = vadd.f32 %v767, %v898
        %v917 = vadd.f32 %v768, %v912
        %v918 = vadd.f32 %v769, %v900
        %v919 = vadd.f32 %v770, %v914
        %v920 = vld [vmem:[%s621 + $0x2] sm:$0xf]
        %v921 = vld [vmem:[%s621 + $0xa] sm:$0xf]
        %v922 = vld [vmem:[%s621 + $0x12] sm:$0xf]
        %v923 = vld [vmem:[%s621 + $0x1a] sm:$0xf]
        %928 = vst [vmem:[#allocation1] ss:$2 sm:$0xff] %v920
        %s929 = scalar_lea.vmem [#allocation1], 1
        %930 = vst [vmem:[%s929] ss:$2 sm:$0xff] %v921
        %s931 = scalar_lea.vmem [#allocation1], 16
        %932 = vst [vmem:[%s931] ss:$2 sm:$0xff] %v922
        %s933 = scalar_lea.vmem [#allocation1], 17
        %934 = vst [vmem:[%s933] ss:$2 sm:$0xff] %v923
        %v935 = vld.sshfl [vmem:[#allocation1] sm:$0xff pattern:$0x75316420]
        %v936 = vld.sshfl [vmem:[#allocation1 + $0x10] sm:$0xff pattern:$0x75316420]
        %v939 = vpack.c.bf16 %v936, %v935
        %s940 = scalar_lea.vmem %s1, 640
        %v941 = vld [vmem:[%s940] sm:$0xff]
        %v942 = vld [vmem:[%s940 + $0x8] sm:$0xff]
        %v943 = vld [vmem:[%s940 + $0x10] sm:$0xff]
        %v944 = vld [vmem:[%s940 + $0x18] sm:$0xff]
        %v945 = vld [vmem:[%s940 + $0x20] sm:$0xff]
        %v946 = vld [vmem:[%s940 + $0x28] sm:$0xff]
        %v947 = vld [vmem:[%s940 + $0x30] sm:$0xff]
        %v948 = vld [vmem:[%s940 + $0x38] sm:$0xff]
        %v949 = vld [vmem:[%s940 + $0x40] sm:$0xff]
        %v950 = vld [vmem:[%s940 + $0x48] sm:$0xff]
        %v951 = vld [vmem:[%s940 + $0x50] sm:$0xff]
        %v952 = vld [vmem:[%s940 + $0x58] sm:$0xff]
        %v953 = vld [vmem:[%s940 + $0x60] sm:$0xff]
        %v954 = vld [vmem:[%s940 + $0x68] sm:$0xff]
        %v955 = vld [vmem:[%s940 + $0x70] sm:$0xff]
        %v956 = vld [vmem:[%s940 + $0x78] sm:$0xff]
        %v973 = vunpack.c.l.b16 %v941
        %v974 = vunpack.c.h.b16 %v941
        %v975 = vunpack.c.l.b16 %v942
        %v976 = vunpack.c.h.b16 %v942
        %v977 = vunpack.c.l.b16 %v943
        %v978 = vunpack.c.h.b16 %v943
        %v979 = vunpack.c.l.b16 %v944
        %v980 = vunpack.c.h.b16 %v944
        %v981 = vunpack.c.l.b16 %v945
        %v982 = vunpack.c.h.b16 %v945
        %v983 = vunpack.c.l.b16 %v946
        %v984 = vunpack.c.h.b16 %v946
        %v985 = vunpack.c.l.b16 %v947
        %v986 = vunpack.c.h.b16 %v947
        %v987 = vunpack.c.l.b16 %v948
        %v988 = vunpack.c.h.b16 %v948
        %v989 = vunpack.c.l.b16 %v949
        %v990 = vunpack.c.h.b16 %v949
        %v991 = vunpack.c.l.b16 %v950
        %v992 = vunpack.c.h.b16 %v950
        %v993 = vunpack.c.l.b16 %v951
        %v994 = vunpack.c.h.b16 %v951
        %v995 = vunpack.c.l.b16 %v952
        %v996 = vunpack.c.h.b16 %v952
        %v997 = vunpack.c.l.b16 %v953
        %v998 = vunpack.c.h.b16 %v953
        %v999 = vunpack.c.l.b16 %v954
        %v1000 = vunpack.c.h.b16 %v954
        %v1001 = vunpack.c.l.b16 %v955
        %v1002 = vunpack.c.h.b16 %v955
        %v1003 = vunpack.c.l.b16 %v956
        %v1004 = vunpack.c.h.b16 %v956
        %v1005 = vpack.c.b16 %v975, %v973
        %v1006 = vpack.c.b16 %v976, %v974
        %v1007 = vpack.c.b16 %v979, %v977
        %v1008 = vpack.c.b16 %v980, %v978
        %v1009 = vpack.c.b16 %v983, %v981
        %v1010 = vpack.c.b16 %v984, %v982
        %v1011 = vpack.c.b16 %v987, %v985
        %v1012 = vpack.c.b16 %v988, %v986
        %v1013 = vpack.c.b16 %v991, %v989
        %v1014 = vpack.c.b16 %v992, %v990
        %v1015 = vpack.c.b16 %v995, %v993
        %v1016 = vpack.c.b16 %v996, %v994
        %v1017 = vpack.c.b16 %v999, %v997
        %v1018 = vpack.c.b16 %v1000, %v998
        %v1019 = vpack.c.b16 %v1003, %v1001
        %v1020 = vpack.c.b16 %v1004, %v1002
        %1037 = vmatpush.bf16.msra.mxu0 %v1019
        %1038 = vmatpush.bf16.msra.mxu0 %v1017
        %1039 = vmatpush.bf16.msra.mxu0 %v1015
        %1040 = vmatpush.bf16.msra.mxu0 %v1013
        %1041 = vmatpush.bf16.msra.mxu0 %v1011
        %1042 = vmatpush.bf16.msra.mxu0 %v1009
        %1043 = vmatpush.bf16.msra.mxu0 %v1007
        %1044 = vmatpush.bf16.msra.mxu0 %v1005
        %1045 = vmatmul.bf16.gmra.mxu0 %v939
        %v1046 = vpop.f32.mrf.mxu0
        %v1047 = vadd.f32 0.0, %v1046
        %v1048 = vpop.f32.mrf.mxu0
        %v1049 = vadd.f32 0.0, %v1048
        %1050 = vdwg.mxu0
        %1051 = vmatpush.bf16.msra.mxu0 %v1020
        %1052 = vmatpush.bf16.msra.mxu0 %v1018
        %1053 = vmatpush.bf16.msra.mxu0 %v1016
        %1054 = vmatpush.bf16.msra.mxu0 %v1014
        %1055 = vmatpush.bf16.msra.mxu0 %v1012
        %1056 = vmatpush.bf16.msra.mxu0 %v1010
        %1057 = vmatpush.bf16.msra.mxu0 %v1008
        %1058 = vmatpush.bf16.msra.mxu0 %v1006
        %1059 = vmatmul.bf16.gmra.mxu0 %v939
        %v1060 = vpop.f32.mrf.mxu0
        %v1061 = vadd.f32 0.0, %v1060
        %v1062 = vpop.f32.mrf.mxu0
        %v1063 = vadd.f32 0.0, %v1062
        %1064 = vdwg.mxu0
        %v1065 = vadd.f32 %v916, %v1047
        %v1066 = vadd.f32 %v917, %v1061
        %v1067 = vadd.f32 %v918, %v1049
        %v1068 = vadd.f32 %v919, %v1063
        %s1069 = scalar_lea.vmem %s168, 16
        %v1070 = vld [vmem:[%s1069] sm:$0xf]
        %v1071 = vld [vmem:[%s1069 + $0x8] sm:$0xf]
        %v1072 = vld [vmem:[%s1069 + $0x10] sm:$0xf]
        %v1073 = vld [vmem:[%s1069 + $0x18] sm:$0xf]
        %1078 = vst [vmem:[#allocation1] ss:$2 sm:$0xff] %v1070
        %s1079 = scalar_lea.vmem [#allocation1], 1
        %1080 = vst [vmem:[%s1079] ss:$2 sm:$0xff] %v1071
        %s1081 = scalar_lea.vmem [#allocation1], 16
        %1082 = vst [vmem:[%s1081] ss:$2 sm:$0xff] %v1072
        %s1083 = scalar_lea.vmem [#allocation1], 17
        %1084 = vst [vmem:[%s1083] ss:$2 sm:$0xff] %v1073
        %v1085 = vld.sshfl [vmem:[#allocation1] sm:$0xff pattern:$0x75316420]
        %v1086 = vld.sshfl [vmem:[#allocation1 + $0x10] sm:$0xff pattern:$0x75316420]
        %v1089 = vpack.c.bf16 %v1086, %v1085
        %s1090 = scalar_lea.vmem %s1, 768
        %v1091 = vld [vmem:[%s1090] sm:$0xff]
        %v1092 = vld [vmem:[%s1090 + $0x8] sm:$0xff]
        %v1093 = vld [vmem:[%s1090 + $0x10] sm:$0xff]
        %v1094 = vld [vmem:[%s1090 + $0x18] sm:$0xff]
        %v1095 = vld [vmem:[%s1090 + $0x20] sm:$0xff]
        %v1096 = vld [vmem:[%s1090 + $0x28] sm:$0xff]
        %v1097 = vld [vmem:[%s1090 + $0x30] sm:$0xff]
        %v1098 = vld [vmem:[%s1090 + $0x38] sm:$0xff]
        %v1099 = vld [vmem:[%s1090 + $0x40] sm:$0xff]
        %v1100 = vld [vmem:[%s1090 + $0x48] sm:$0xff]
        %v1101 = vld [vmem:[%s1090 + $0x50] sm:$0xff]
        %v1102 = vld [vmem:[%s1090 + $0x58] sm:$0xff]
        %v1103 = vld [vmem:[%s1090 + $0x60] sm:$0xff]
        %v1104 = vld [vmem:[%s1090 + $0x68] sm:$0xff]
        %v1105 = vld [vmem:[%s1090 + $0x70] sm:$0xff]
        %v1106 = vld [vmem:[%s1090 + $0x78] sm:$0xff]
        %v1123 = vunpack.c.l.b16 %v1091
        %v1124 = vunpack.c.h.b16 %v1091
        %v1125 = vunpack.c.l.b16 %v1092
        %v1126 = vunpack.c.h.b16 %v1092
        %v1127 = vunpack.c.l.b16 %v1093
        %v1128 = vunpack.c.h.b16 %v1093
        %v1129 = vunpack.c.l.b16 %v1094
        %v1130 = vunpack.c.h.b16 %v1094
        %v1131 = vunpack.c.l.b16 %v1095
        %v1132 = vunpack.c.h.b16 %v1095
        %v1133 = vunpack.c.l.b16 %v1096
        %v1134 = vunpack.c.h.b16 %v1096
        %v1135 = vunpack.c.l.b16 %v1097
        %v1136 = vunpack.c.h.b16 %v1097
        %v1137 = vunpack.c.l.b16 %v1098
        %v1138 = vunpack.c.h.b16 %v1098
        %v1139 = vunpack.c.l.b16 %v1099
        %v1140 = vunpack.c.h.b16 %v1099
        %v1141 = vunpack.c.l.b16 %v1100
        %v1142 = vunpack.c.h.b16 %v1100
        %v1143 = vunpack.c.l.b16 %v1101
        %v1144 = vunpack.c.h.b16 %v1101
        %v1145 = vunpack.c.l.b16 %v1102
        %v1146 = vunpack.c.h.b16 %v1102
        %v1147 = vunpack.c.l.b16 %v1103
        %v1148 = vunpack.c.h.b16 %v1103
        %v1149 = vunpack.c.l.b16 %v1104
        %v1150 = vunpack.c.h.b16 %v1104
        %v1151 = vunpack.c.l.b16 %v1105
        %v1152 = vunpack.c.h.b16 %v1105
        %v1153 = vunpack.c.l.b16 %v1106
        %v1154 = vunpack.c.h.b16 %v1106
        %v1155 = vpack.c.b16 %v1125, %v1123
        %v1156 = vpack.c.b16 %v1126, %v1124
        %v1157 = vpack.c.b16 %v1129, %v1127
        %v1158 = vpack.c.b16 %v1130, %v1128
        %v1159 = vpack.c.b16 %v1133, %v1131
        %v1160 = vpack.c.b16 %v1134, %v1132
        %v1161 = vpack.c.b16 %v1137, %v1135
        %v1162 = vpack.c.b16 %v1138, %v1136
        %v1163 = vpack.c.b16 %v1141, %v1139
        %v1164 = vpack.c.b16 %v1142, %v1140
        %v1165 = vpack.c.b16 %v1145, %v1143
        %v1166 = vpack.c.b16 %v1146, %v1144
        %v1167 = vpack.c.b16 %v1149, %v1147
        %v1168 = vpack.c.b16 %v1150, %v1148
        %v1169 = vpack.c.b16 %v1153, %v1151
        %v1170 = vpack.c.b16 %v1154, %v1152
        %1187 = vmatpush.bf16.msra.mxu0 %v1169
        %1188 = vmatpush.bf16.msra.mxu0 %v1167
        %1189 = vmatpush.bf16.msra.mxu0 %v1165
        %1190 = vmatpush.bf16.msra.mxu0 %v1163
        %1191 = vmatpush.bf16.msra.mxu0 %v1161
        %1192 = vmatpush.bf16.msra.mxu0 %v1159
        %1193 = vmatpush.bf16.msra.mxu0 %v1157
        %1194 = vmatpush.bf16.msra.mxu0 %v1155
        %1195 = vmatmul.bf16.gmra.mxu0 %v1089
        %v1196 = vpop.f32.mrf.mxu0
        %v1197 = vadd.f32 0.0, %v1196
        %v1198 = vpop.f32.mrf.mxu0
        %v1199 = vadd.f32 0.0, %v1198
        %1200 = vdwg.mxu0
        %1201 = vmatpush.bf16.msra.mxu0 %v1170
        %1202 = vmatpush.bf16.msra.mxu0 %v1168
        %1203 = vmatpush.bf16.msra.mxu0 %v1166
        %1204 = vmatpush.bf16.msra.mxu0 %v1164
        %1205 = vmatpush.bf16.msra.mxu0 %v1162
        %1206 = vmatpush.bf16.msra.mxu0 %v1160
        %1207 = vmatpush.bf16.msra.mxu0 %v1158
        %1208 = vmatpush.bf16.msra.mxu0 %v1156
        %1209 = vmatmul.bf16.gmra.mxu0 %v1089
        %v1210 = vpop.f32.mrf.mxu0
        %v1211 = vadd.f32 0.0, %v1210
        %v1212 = vpop.f32.mrf.mxu0
        %v1213 = vadd.f32 0.0, %v1212
        %1214 = vdwg.mxu0
        %v1215 = vadd.f32 %v1065, %v1197
        %v1216 = vadd.f32 %v1066, %v1211
        %v1217 = vadd.f32 %v1067, %v1199
        %v1218 = vadd.f32 %v1068, %v1213
        %v1219 = vld [vmem:[%s1069 + $0x1] sm:$0xf]
        %v1220 = vld [vmem:[%s1069 + $0x9] sm:$0xf]
        %v1221 = vld [vmem:[%s1069 + $0x11] sm:$0xf]
        %v1222 = vld [vmem:[%s1069 + $0x19] sm:$0xf]
        %1227 = vst [vmem:[#allocation1] ss:$2 sm:$0xff] %v1219
        %s1228 = scalar_lea.vmem [#allocation1], 1
        %1229 = vst [vmem:[%s1228] ss:$2 sm:$0xff] %v1220
        %s1230 = scalar_lea.vmem [#allocation1], 16
        %1231 = vst [vmem:[%s1230] ss:$2 sm:$0xff] %v1221
        %s1232 = scalar_lea.vmem [#allocation1], 17
        %1233 = vst [vmem:[%s1232] ss:$2 sm:$0xff] %v1222
        %v1234 = vld.sshfl [vmem:[#allocation1] sm:$0xff pattern:$0x75316420]
        %v1235 = vld.sshfl [vmem:[#allocation1 + $0x10] sm:$0xff pattern:$0x75316420]
        %v1238 = vpack.c.bf16 %v1235, %v1234
        %s1239 = scalar_lea.vmem %s1, 896
        %v1240 = vld [vmem:[%s1239] sm:$0xff]
        %v1241 = vld [vmem:[%s1239 + $0x8] sm:$0xff]
        %v1242 = vld [vmem:[%s1239 + $0x10] sm:$0xff]
        %v1243 = vld [vmem:[%s1239 + $0x18] sm:$0xff]
        %v1244 = vld [vmem:[%s1239 + $0x20] sm:$0xff]
        %v1245 = vld [vmem:[%s1239 + $0x28] sm:$0xff]
        %v1246 = vld [vmem:[%s1239 + $0x30] sm:$0xff]
        %v1247 = vld [vmem:[%s1239 + $0x38] sm:$0xff]
        %v1248 = vld [vmem:[%s1239 + $0x40] sm:$0xff]
        %v1249 = vld [vmem:[%s1239 + $0x48] sm:$0xff]
        %v1250 = vld [vmem:[%s1239 + $0x50] sm:$0xff]
        %v1251 = vld [vmem:[%s1239 + $0x58] sm:$0xff]
        %v1252 = vld [vmem:[%s1239 + $0x60] sm:$0xff]
        %v1253 = vld [vmem:[%s1239 + $0x68] sm:$0xff]
        %v1254 = vld [vmem:[%s1239 + $0x70] sm:$0xff]
        %v1255 = vld [vmem:[%s1239 + $0x78] sm:$0xff]
        %v1272 = vunpack.c.l.b16 %v1240
        %v1273 = vunpack.c.h.b16 %v1240
        %v1274 = vunpack.c.l.b16 %v1241
        %v1275 = vunpack.c.h.b16 %v1241
        %v1276 = vunpack.c.l.b16 %v1242
        %v1277 = vunpack.c.h.b16 %v1242
        %v1278 = vunpack.c.l.b16 %v1243
        %v1279 = vunpack.c.h.b16 %v1243
        %v1280 = vunpack.c.l.b16 %v1244
        %v1281 = vunpack.c.h.b16 %v1244
        %v1282 = vunpack.c.l.b16 %v1245
        %v1283 = vunpack.c.h.b16 %v1245
        %v1284 = vunpack.c.l.b16 %v1246
        %v1285 = vunpack.c.h.b16 %v1246
        %v1286 = vunpack.c.l.b16 %v1247
        %v1287 = vunpack.c.h.b16 %v1247
        %v1288 = vunpack.c.l.b16 %v1248
        %v1289 = vunpack.c.h.b16 %v1248
        %v1290 = vunpack.c.l.b16 %v1249
        %v1291 = vunpack.c.h.b16 %v1249
        %v1292 = vunpack.c.l.b16 %v1250
        %v1293 = vunpack.c.h.b16 %v1250
        %v1294 = vunpack.c.l.b16 %v1251
        %v1295 = vunpack.c.h.b16 %v1251
        %v1296 = vunpack.c.l.b16 %v1252
        %v1297 = vunpack.c.h.b16 %v1252
        %v1298 = vunpack.c.l.b16 %v1253
        %v1299 = vunpack.c.h.b16 %v1253
        %v1300 = vunpack.c.l.b16 %v1254
        %v1301 = vunpack.c.h.b16 %v1254
        %v1302 = vunpack.c.l.b16 %v1255
        %v1303 = vunpack.c.h.b16 %v1255
        %v1304 = vpack.c.b16 %v1274, %v1272
        %v1305 = vpack.c.b16 %v1275, %v1273
        %v1306 = vpack.c.b16 %v1278, %v1276
        %v1307 = vpack.c.b16 %v1279, %v1277
        %v1308 = vpack.c.b16 %v1282, %v1280
        %v1309 = vpack.c.b16 %v1283, %v1281
        %v1310 = vpack.c.b16 %v1286, %v1284
        %v1311 = vpack.c.b16 %v1287, %v1285
        %v1312 = vpack.c.b16 %v1290, %v1288
        %v1313 = vpack.c.b16 %v1291, %v1289
        %v1314 = vpack.c.b16 %v1294, %v1292
        %v1315 = vpack.c.b16 %v1295, %v1293
        %v1316 = vpack.c.b16 %v1298, %v1296
        %v1317 = vpack.c.b16 %v1299, %v1297
        %v1318 = vpack.c.b16 %v1302, %v1300
        %v1319 = vpack.c.b16 %v1303, %v1301
        %1336 = vmatpush.bf16.msra.mxu0 %v1318
        %1337 = vmatpush.bf16.msra.mxu0 %v1316
        %1338 = vmatpush.bf16.msra.mxu0 %v1314
        %1339 = vmatpush.bf16.msra.mxu0 %v1312
        %1340 = vmatpush.bf16.msra.mxu0 %v1310
        %1341 = vmatpush.bf16.msra.mxu0 %v1308
        %1342 = vmatpush.bf16.msra.mxu0 %v1306
        %1343 = vmatpush.bf16.msra.mxu0 %v1304
        %1344 = vmatmul.bf16.gmra.mxu0 %v1238
        %v1345 = vpop.f32.mrf.mxu0
        %v1346 = vadd.f32 0.0, %v1345
        %v1347 = vpop.f32.mrf.mxu0
        %v1348 = vadd.f32 0.0, %v1347
        %1349 = vdwg.mxu0
        %1350 = vmatpush.bf16.msra.mxu0 %v1319
        %1351 = vmatpush.bf16.msra.mxu0 %v1317
        %1352 = vmatpush.bf16.msra.mxu0 %v1315
        %1353 = vmatpush.bf16.msra.mxu0 %v1313
        %1354 = vmatpush.bf16.msra.mxu0 %v1311
        %1355 = vmatpush.bf16.msra.mxu0 %v1309
        %1356 = vmatpush.bf16.msra.mxu0 %v1307
        %1357 = vmatpush.bf16.msra.mxu0 %v1305
        %1358 = vmatmul.bf16.gmra.mxu0 %v1238
        %v1359 = vpop.f32.mrf.mxu0
        %v1360 = vadd.f32 0.0, %v1359
        %v1361 = vpop.f32.mrf.mxu0
        %v1362 = vadd.f32 0.0, %v1361
        %1363 = vdwg.mxu0
        %v1364 = vadd.f32 %v1215, %v1346
        %v1365 = vadd.f32 %v1216, %v1360
        %v1366 = vadd.f32 %v1217, %v1348
        %v1367 = vadd.f32 %v1218, %v1362
        %v1368 = vld [vmem:[%s1069 + $0x2] sm:$0xf]
        %v1369 = vld [vmem:[%s1069 + $0xa] sm:$0xf]
        %v1370 = vld [vmem:[%s1069 + $0x12] sm:$0xf]
        %v1371 = vld [vmem:[%s1069 + $0x1a] sm:$0xf]
        %1376 = vst [vmem:[#allocation1] ss:$2 sm:$0xff] %v1368
        %s1377 = scalar_lea.vmem [#allocation1], 1
        %1378 = vst [vmem:[%s1377] ss:$2 sm:$0xff] %v1369
        %s1379 = scalar_lea.vmem [#allocation1], 16
        %1380 = vst [vmem:[%s1379] ss:$2 sm:$0xff] %v1370
        %s1381 = scalar_lea.vmem [#allocation1], 17
        %1382 = vst [vmem:[%s1381] ss:$2 sm:$0xff] %v1371
        %v1383 = vld.sshfl [vmem:[#allocation1] sm:$0xff pattern:$0x75316420]
        %v1384 = vld.sshfl [vmem:[#allocation1 + $0x10] sm:$0xff pattern:$0x75316420]
        %v1387 = vpack.c.bf16 %v1384, %v1383
        %s1388 = scalar_lea.vmem %s1, 1024
        %v1389 = vld [vmem:[%s1388] sm:$0xff]
        %v1390 = vld [vmem:[%s1388 + $0x8] sm:$0xff]
        %v1391 = vld [vmem:[%s1388 + $0x10] sm:$0xff]
        %v1392 = vld [vmem:[%s1388 + $0x18] sm:$0xff]
        %v1393 = vld [vmem:[%s1388 + $0x20] sm:$0xff]
        %v1394 = vld [vmem:[%s1388 + $0x28] sm:$0xff]
        %v1395 = vld [vmem:[%s1388 + $0x30] sm:$0xff]
        %v1396 = vld [vmem:[%s1388 + $0x38] sm:$0xff]
        %v1397 = vld [vmem:[%s1388 + $0x40] sm:$0xff]
        %v1398 = vld [vmem:[%s1388 + $0x48] sm:$0xff]
        %v1399 = vld [vmem:[%s1388 + $0x50] sm:$0xff]
        %v1400 = vld [vmem:[%s1388 + $0x58] sm:$0xff]
        %v1401 = vld [vmem:[%s1388 + $0x60] sm:$0xff]
        %v1402 = vld [vmem:[%s1388 + $0x68] sm:$0xff]
        %v1403 = vld [vmem:[%s1388 + $0x70] sm:$0xff]
        %v1404 = vld [vmem:[%s1388 + $0x78] sm:$0xff]
        %v1421 = vunpack.c.l.b16 %v1389
        %v1422 = vunpack.c.h.b16 %v1389
        %v1423 = vunpack.c.l.b16 %v1390
        %v1424 = vunpack.c.h.b16 %v1390
        %v1425 = vunpack.c.l.b16 %v1391
        %v1426 = vunpack.c.h.b16 %v1391
        %v1427 = vunpack.c.l.b16 %v1392
        %v1428 = vunpack.c.h.b16 %v1392
        %v1429 = vunpack.c.l.b16 %v1393
        %v1430 = vunpack.c.h.b16 %v1393
        %v1431 = vunpack.c.l.b16 %v1394
        %v1432 = vunpack.c.h.b16 %v1394
        %v1433 = vunpack.c.l.b16 %v1395
        %v1434 = vunpack.c.h.b16 %v1395
        %v1435 = vunpack.c.l.b16 %v1396
        %v1436 = vunpack.c.h.b16 %v1396
        %v1437 = vunpack.c.l.b16 %v1397
        %v1438 = vunpack.c.h.b16 %v1397
        %v1439 = vunpack.c.l.b16 %v1398
        %v1440 = vunpack.c.h.b16 %v1398
        %v1441 = vunpack.c.l.b16 %v1399
        %v1442 = vunpack.c.h.b16 %v1399
        %v1443 = vunpack.c.l.b16 %v1400
        %v1444 = vunpack.c.h.b16 %v1400
        %v1445 = vunpack.c.l.b16 %v1401
        %v1446 = vunpack.c.h.b16 %v1401
        %v1447 = vunpack.c.l.b16 %v1402
        %v1448 = vunpack.c.h.b16 %v1402
        %v1449 = vunpack.c.l.b16 %v1403
        %v1450 = vunpack.c.h.b16 %v1403
        %v1451 = vunpack.c.l.b16 %v1404
        %v1452 = vunpack.c.h.b16 %v1404
        %v1453 = vpack.c.b16 %v1423, %v1421
        %v1454 = vpack.c.b16 %v1424, %v1422
        %v1455 = vpack.c.b16 %v1427, %v1425
        %v1456 = vpack.c.b16 %v1428, %v1426
        %v1457 = vpack.c.b16 %v1431, %v1429
        %v1458 = vpack.c.b16 %v1432, %v1430
        %v1459 = vpack.c.b16 %v1435, %v1433
        %v1460 = vpack.c.b16 %v1436, %v1434
        %v1461 = vpack.c.b16 %v1439, %v1437
        %v1462 = vpack.c.b16 %v1440, %v1438
        %v1463 = vpack.c.b16 %v1443, %v1441
        %v1464 = vpack.c.b16 %v1444, %v1442
        %v1465 = vpack.c.b16 %v1447, %v1445
        %v1466 = vpack.c.b16 %v1448, %v1446
        %v1467 = vpack.c.b16 %v1451, %v1449
        %v1468 = vpack.c.b16 %v1452, %v1450
        %1485 = vmatpush.bf16.msra.mxu0 %v1467
        %1486 = vmatpush.bf16.msra.mxu0 %v1465
        %1487 = vmatpush.bf16.msra.mxu0 %v1463
        %1488 = vmatpush.bf16.msra.mxu0 %v1461
        %1489 = vmatpush.bf16.msra.mxu0 %v1459
        %1490 = vmatpush.bf16.msra.mxu0 %v1457
        %1491 = vmatpush.bf16.msra.mxu0 %v1455
        %1492 = vmatpush.bf16.msra.mxu0 %v1453
        %1493 = vmatmul.bf16.gmra.mxu0 %v1387
        %v1494 = vpop.f32.mrf.mxu0
        %v1495 = vadd.f32 0.0, %v1494
        %v1496 = vpop.f32.mrf.mxu0
        %v1497 = vadd.f32 0.0, %v1496
        %1498 = vdwg.mxu0
        %1499 = vmatpush.bf16.msra.mxu0 %v1468
        %1500 = vmatpush.bf16.msra.mxu0 %v1466
        %1501 = vmatpush.bf16.msra.mxu0 %v1464
        %1502 = vmatpush.bf16.msra.mxu0 %v1462
        %1503 = vmatpush.bf16.msra.mxu0 %v1460
        %1504 = vmatpush.bf16.msra.mxu0 %v1458
        %1505 = vmatpush.bf16.msra.mxu0 %v1456
        %1506 = vmatpush.bf16.msra.mxu0 %v1454
        %1507 = vmatmul.bf16.gmra.mxu0 %v1387
        %v1508 = vpop.f32.mrf.mxu0
        %v1509 = vadd.f32 0.0, %v1508
        %v1510 = vpop.f32.mrf.mxu0
        %v1511 = vadd.f32 0.0, %v1510
        %1512 = vdwg.mxu0
        %v1513 = vadd.f32 %v1364, %v1495
        %v1514 = vadd.f32 %v1365, %v1509
        %v1515 = vadd.f32 %v1366, %v1497
        %v1516 = vadd.f32 %v1367, %v1511
        %v1517 = vmax.f32 %v1513, 0.0
        %v1518 = vmax.f32 %v1514, 0.0
        %v1519 = vmax.f32 %v1515, 0.0
        %v1520 = vmax.f32 %v1516, 0.0
        %v1525 = vrot.slane %v1518, 4
        %v1526 = vrot.slane %v1520, 4
        %vm1527 = vcmask 1043456
        %v1528 = vsel %vm1527, %v1517, %v1525
        %v1529 = vsel %vm1527, %v1525, %v1517
        %v1530 = vrot.slane %v1529, 4
        %v1531 = vsel %vm1527, %v1519, %v1526
        %v1532 = vsel %vm1527, %v1526, %v1519
        %v1533 = vrot.slane %v1532, 4
        %1538 = vst [vmem:[%s163] sm:$0xff] %v1528
        %1539 = vst [vmem:[%s163 + $0x8] sm:$0xff] %v1530
        %1540 = vst [vmem:[%s163 + $0x10] sm:$0xff] %v1531
        %1541 = vst [vmem:[%s163 + $0x18] sm:$0xff] %v1533
        %s1542 = sand.u32 %s93, 1
        %s1543 = scalar_lea.sflag [#allocation3], %s1542
        %s1544 = sand.u32 %s93, 1
        %s1545 = smul.addr %s1544, 32
        %s1546 = scalar_lea.vmem [#allocation2], %s1545
        // Predicated region
        $region33: #{feature_extractor_pallas.13} parent=31 // pred_check
          %p1547 = pneg %p103
        $region34: #{feature_extractor_pallas.13} parent=31 // pred_check_branch
          %1549 = sbr.rel (%p1547) target = $region36
        $region35: #{feature_extractor_pallas.13} parent=31 // pred_region
          %1551 = vsyncadd %s1543, 0
          %s1552 = smul.addr %s17, 8
          %s1553 = smul.addr %s1552, 4
          %s1554 = scalar_lea.hbm %s3, %s1553
          %s1555 = sshll.u32 %s1546, 4
          %s1556 = int_to_ptr.vmem [resolvable:$true] %s1555
          %s1557 = sshll.u32 %s1554, 4
          %s1558 = int_to_ptr.hbm [resolvable:$true] %s1557
          %1563 = dma.vmem_to_hbm [thread:$0]  %s1556, 512, %s1558, %s1543, 128, 128, 8
        $region36: #{feature_extractor_pallas.13} parent=31 // pred_fallthru
          _
      $region32: #{feature_extractor_pallas.13} parent=5 // pred_fallthru
        _
      %p1564 = scmp.le.s32.totalorder 2, %s12
      // Predicated region
      $region37: #{feature_extractor_pallas.13} parent=5 // pred_check
        %p1565 = pneg %p1564
      $region38: #{feature_extractor_pallas.13} parent=5 // pred_check_branch
        %1567 = sbr.rel (%p1565) target = $region40
      $region39: #{feature_extractor_pallas.13} parent=5 // pred_region
        %s1568 = ssub.s32 %s12, 2
        // Predicated region
        $region41: #{feature_extractor_pallas.13} parent=39 // pred_check
          %p1569 = pneg %p109
        $region42: #{feature_extractor_pallas.13} parent=39 // pred_check_branch
          %1571 = sbr.rel (%p1569) target = $region44
        $region43: #{feature_extractor_pallas.13} parent=39 // pred_region
          %s1572 = sand.u32 %s94, 1
          %s1573 = scalar_lea.sflag [#allocation3], %s1572
          %s1574 = sand.u32 %s94, 1
          %s1575 = smul.addr %s1574, 32
          %s1576 = scalar_lea.vmem [#allocation2], %s1575
          %1578 = dma.done %s1573, 512
        $region44: #{feature_extractor_pallas.13} parent=39 // pred_fallthru
          _
      $region40: #{feature_extractor_pallas.13} parent=5 // pred_fallthru
        _
    $region6: #{feature_extractor_pallas.13} parent=1 // loop_footer
      %s16 = sadd.s32 1, %s12
    $region7: #{feature_extractor_pallas.13} parent=1 // loop_footer_branch
      %11 = sbr.rel target = $region3
    $region8: #{feature_extractor_pallas.13} parent=1 // loop_exit
      _
    %1579 = vsyncpa [#allocation3], 1
    %s1580 = scalar_lea.sflag [#allocation3], 1
    %1581 = vsyncpa %s1580, 1

</llo_original>
